<compile_context>
chip_gen: v5e
topology: v5e:2x2
jax: 0.10.0
libtpu: 0.0.40
codegen_flags: <defaults>
</compile_context>

<pallas_src>
import functools
from collections import namedtuple

import jax
import jax.numpy as jnp
from jax.experimental import pallas as pl
from jax.experimental.pallas import tpu as pltpu

LANE = 128


def _round_up(x, m):
    return (x + m - 1) // m * m


def _default_vmem_limit():
    try:
        cap = int(pltpu.get_tpu_info().vmem_capacity_bytes)
    except Exception:
        cap = 64 * 1024 * 1024
    # ~3/4 of physical, capped at 100 MiB (128 MiB parts), floor 32 MiB.
    return max(32 * 1024 * 1024, min(cap * 3 // 4, 100 * 1024 * 1024))


_VMEM_LIMIT = _default_vmem_limit()

# Activation slab: bf16 channels-last data with zero spatial border of (ph, pw)
# and channels zero-padded to a multiple of 128.  c/h/w are the logical dims.
Slab = namedtuple("Slab", ["data", "c", "h", "w", "ph", "pw"])


# ------------------------------- Pallas kernels ----------------------------- #

def _conv_kernel(x_ref, w_ref, sc_ref, sh_ref, y_ref, s_ref, ss_ref, *,
                 KH, KW, SH, SW, H, W, Ho, Wo, ph, pw, po_h, po_w,
                 fuse_in, relu_in):
    """One padded image x one Cout tile.

    x_ref : (1, Hp, Wp, Cin_p)   bf16  spatially pre-padded NHWC image block
    w_ref : (KH*KW*Cin_p, TCO)   bf16  taps packed into the contraction dim
    sc_ref/sh_ref : (1,1,Cin_p)  f32   fused input-BN scale/shift (if fuse_in)
    y_ref : (1, Ho+2po_h, Wo+2po_w, TCO) bf16  output (interior = conv result)
    s_ref/ss_ref : (1,1,TCO)     f32   per-block channel sum / sumsq (for BN)
    """
    Hp, Wp, cin = x_ref.shape[1], x_ref.shape[2], x_ref.shape[3]
    tco = w_ref.shape[1]

    if fuse_in:
        # Fused BatchNorm-normalize (+ReLU) of the *previous* layer, applied to
        # the loaded block; the border mask keeps zero padding exactly zero.
        x = x_ref[0].astype(jnp.float32)
        x = x * sc_ref[...] + sh_ref[...]
        if relu_in:
            x = jnp.maximum(x, 0.0)
        if ph > 0 or pw > 0:
            hh = jax.lax.broadcasted_iota(jnp.int32, (Hp, Wp, cin), 0)
            ww = jax.lax.broadcasted_iota(jnp.int32, (Hp, Wp, cin), 1)
            interior = ((hh >= ph) & (hh < ph + H) &
                        (ww >= pw) & (ww < pw + W))
            x = jnp.where(interior, x, 0.0)
        xb = x.astype(jnp.bfloat16)          # single cast, hoisted out of taps
    else:
        xb = x_ref[0]                        # already bf16, border already zero

    # Pack the KH*KW shifted windows along the contraction dim -> one deep
    # matmul instead of KH*KW under-filled matmuls + acc read-modify-writes.
    patches = []
    for kh in range(KH):
        for kw in range(KW):
            if SH == 1 and SW == 1:
                p = xb[kh:kh + Ho, kw:kw + Wo, :]
            else:
                p = jax.lax.slice(
                    xb, (kh, kw, 0),
                    (kh + (Ho - 1) * SH + 1, kw + (Wo - 1) * SW + 1, cin),
                    (SH, SW, 1))
            patches.append(p.reshape(Ho * Wo, cin))
    big = patches[0] if len(patches) == 1 else jnp.concatenate(patches, axis=-1)

    acc = jnp.dot(big, w_ref[...], preferred_element_type=jnp.float32)

    # Channel statistics for a following BatchNorm (no extra read of y needed).
    s_ref[...] = jnp.sum(acc, axis=0, keepdims=True).reshape(1, 1, tco)
    ss_ref[...] = jnp.sum(acc * acc, axis=0, keepdims=True).reshape(1, 1, tco)

    yb = acc.astype(y_ref.dtype).reshape(1, Ho, Wo, tco)
    if po_h == 0 and po_w == 0:
        y_ref[...] = yb
    else:
        # Write directly into the interior of the next conv's padded slab.
        y_ref[...] = jnp.zeros_like(y_ref)
        y_ref[:, po_h:po_h + Ho, po_w:po_w + Wo, :] = yb


def _scale_shift_act_kernel(x_ref, sc_ref, sh_ref, o_ref, *, relu):
    """Fused BatchNorm-normalize (+ optional ReLU): y = x*scale + shift."""
    y = x_ref[...].astype(jnp.float32) * sc_ref[...] + sh_ref[...]
    if relu:
        y = jnp.maximum(y, 0.0)
    o_ref[...] = y.astype(o_ref.dtype)


def _stats_kernel(x_ref, s_ref, ss_ref):
    """Per-channel sum / sumsq accumulated over the (arbitrary) M grid axis."""
    @pl.when(pl.program_id(0) == 0)
    def _():
        s_ref[...] = jnp.zeros_like(s_ref)
        ss_ref[...] = jnp.zeros_like(ss_ref)
    x = x_ref[...].astype(jnp.float32)
    s_ref[...] += jnp.sum(x, axis=0, keepdims=True)
    ss_ref[...] += jnp.sum(x * x, axis=0, keepdims=True)


# ------------------------------ pallas_call wrappers ------------------------ #

def _conv2d_call(xdata, w_packed, scale, shift, *, KH, KW, SH, SW,
                 H, W, ph, pw, Ho, Wo, po_h, po_w, cout_p, fuse_in, relu_in):
    N, Hp, Wp, cin_p = xdata.shape
    TCO = 256 if cout_p % 256 == 0 else 128     # always divides cout_p
    n_co = cout_p // TCO
    Hop, Wop = Ho + 2 * po_h, Wo + 2 * po_w

    kern = functools.partial(
        _conv_kernel, KH=KH, KW=KW, SH=SH, SW=SW, H=H, W=W, Ho=Ho, Wo=Wo,
        ph=ph, pw=pw, po_h=po_h, po_w=po_w, fuse_in=fuse_in, relu_in=relu_in)

    flops = 2 * N * Ho * Wo * KH * KW * cin_p * cout_p
    bytes_acc = (2 * N * Hp * Wp * cin_p + 2 * N * Hop * Wop * cout_p
                 + 2 * KH * KW * cin_p * cout_p + 8 * N * cout_p + 8 * cin_p)

    y, s, ss = pl.pallas_call(
        kern,
        grid=(N, n_co),
        in_specs=[
            pl.BlockSpec((1, Hp, Wp, cin_p), lambda n, j: (n, 0, 0, 0)),
            pl.BlockSpec((KH * KW * cin_p, TCO), lambda n, j: (0, j)),
            pl.BlockSpec((1, 1, cin_p), lambda n, j: (0, 0, 0)),
            pl.BlockSpec((1, 1, cin_p), lambda n, j: (0, 0, 0)),
        ],
        out_specs=[
            pl.BlockSpec((1, Hop, Wop, TCO), lambda n, j: (n, 0, 0, j)),
            pl.BlockSpec((1, 1, TCO), lambda n, j: (n, 0, j)),
            pl.BlockSpec((1, 1, TCO), lambda n, j: (n, 0, j)),
        ],
        out_shape=[
            jax.ShapeDtypeStruct((N, Hop, Wop, cout_p), jnp.bfloat16),
            jax.ShapeDtypeStruct((N, 1, cout_p), jnp.float32),
            jax.ShapeDtypeStruct((N, 1, cout_p), jnp.float32),
        ],
        compiler_params=pltpu.CompilerParams(
            dimension_semantics=("parallel", "parallel"),
            vmem_limit_bytes=_VMEM_LIMIT),
        cost_estimate=pl.CostEstimate(flops=flops, transcendentals=0,
                                      bytes_accessed=bytes_acc),
    )(xdata, w_packed, scale, shift)
    return y, s, ss


def _pick_rows(M, C):
    """Largest row-tile (multiple of 8) dividing M within a VMEM budget."""
    budget_rows = max(8, _VMEM_LIMIT // (16 * C))
    for t in (4096, 2048, 1024, 512, 256, 128, 64, 32, 16, 8):
        if t <= budget_rows and M % t == 0:
            return t
    return 8


def _scale_shift_act(x2d, scale, shift, relu):
    """(M, Cp) bf16 slab -> scale/shift (+ReLU), tiled over M, lane-dense Cp."""
    M, C = x2d.shape
    Mp = _round_up(M, 8)
    if Mp != M:
        x2d = jnp.pad(x2d, ((0, Mp - M), (0, 0)))
    TM = _pick_rows(Mp, C)
    kern = functools.partial(_scale_shift_act_kernel, relu=relu)
    out = pl.pallas_call(
        kern,
        grid=(Mp // TM,),
        in_specs=[
            pl.BlockSpec((TM, C), lambda i: (i, 0)),
            pl.BlockSpec((1, C), lambda i: (0, 0)),
            pl.BlockSpec((1, C), lambda i: (0, 0)),
        ],
        out_specs=pl.BlockSpec((TM, C), lambda i: (i, 0)),
        out_shape=jax.ShapeDtypeStruct((Mp, C), jnp.bfloat16),
        compiler_params=pltpu.CompilerParams(
            dimension_semantics=("parallel",),
            vmem_limit_bytes=_VMEM_LIMIT),
    )(x2d, scale.astype(jnp.float32), shift.astype(jnp.float32))
    return out[:M] if Mp != M else out


def _channel_stats(x2d):
    """Per-channel (sum, sumsq) over the M axis (fallback when no conv stats)."""
    M, C = x2d.shape
    Mp = _round_up(M, 8)
    if Mp != M:                    # zero rows do not perturb the sums
        x2d = jnp.pad(x2d, ((0, Mp - M), (0, 0)))
    TM = _pick_rows(Mp, C)
    s, ss = pl.pallas_call(
        _stats_kernel,
        grid=(Mp // TM,),
        in_specs=[pl.BlockSpec((TM, C), lambda i: (i, 0))],
        out_specs=[pl.BlockSpec((1, C), lambda i: (0, 0)),
                   pl.BlockSpec((1, C), lambda i: (0, 0))],
        out_shape=[jax.ShapeDtypeStruct((1, C), jnp.float32),
                   jax.ShapeDtypeStruct((1, C), jnp.float32)],
        compiler_params=pltpu.CompilerParams(
            dimension_semantics=("arbitrary",),
            vmem_limit_bytes=_VMEM_LIMIT),
    )(x2d)
    return s, ss


# -------------------------- layout glue (module boundary) ------------------- #

def _nchw_to_slab(x, ph=0, pw=0):
    N, C, H, W = x.shape
    Cp = _round_up(C, LANE)
    y = jnp.transpose(x, (0, 2, 3, 1)).astype(jnp.bfloat16)
    y = jnp.pad(y, ((0, 0), (ph, ph), (pw, pw), (0, Cp - C)))
    return Slab(y, C, H, W, ph, pw)


def _slab_to_nchw(slab):
    d = slab.data[:, slab.ph:slab.ph + slab.h, slab.pw:slab.pw + slab.w, :slab.c]
    return jnp.transpose(d, (0, 3, 1, 2)).astype(jnp.float32)


def _strip(slab):
    if slab.ph == 0 and slab.pw == 0:
        return slab
    d = slab.data[:, slab.ph:slab.ph + slab.h, slab.pw:slab.pw + slab.w, :]
    return Slab(d, slab.c, slab.h, slab.w, 0, 0)


def _repad_slab(slab, ph, pw):
    """Host-side fallback: adjust the spatial border to exactly (ph, pw)."""
    if slab.ph == ph and slab.pw == pw:
        return slab
    inner = _strip(slab)
    d = jnp.pad(inner.data, ((0, 0), (ph, ph), (pw, pw), (0, 0)))
    return Slab(d, slab.c, slab.h, slab.w, ph, pw)


def _materialize(slab, pending):
    """Apply a pending per-channel affine (+ReLU) to the slab interior."""
    slab = _strip(slab)
    if pending is None:
        return slab
    scale, shift, relu = pending
    n, h, w, cp = slab.data.shape
    m = n * h * w
    out2d = _scale_shift_act(slab.data.reshape(m, cp),
                             scale.reshape(1, cp), shift.reshape(1, cp), relu)
    return Slab(out2d.reshape(n, h, w, cp), slab.c, h, w, 0, 0)


# ----------------------------- Node / Sequential glue ------------------------ #

class Conv2dNode:
    """nn.Conv2d(bias=False, groups=1, dilation=1) basicOp ('common' stage)."""

    def __init__(self, weight, stride=1, padding=0):
        self.weight = jnp.asarray(weight, jnp.float32)   # (Cout, Cin, KH, KW)
        self.stride = (stride, stride) if isinstance(stride, int) else tuple(stride)
        self.padding = (padding, padding) if isinstance(padding, int) else tuple(padding)
        Cout, Cin, KH, KW = self.weight.shape
        self.cin, self.cout, self.KH, self.KW = Cin, Cout, KH, KW
        self.cin_p = _round_up(Cin, LANE)
        self.cout_p = _round_up(Cout, LANE)
        w = jnp.transpose(self.weight, (2, 3, 1, 0)).reshape(KH * KW, Cin, Cout)
        w = jnp.pad(w, ((0, 0), (0, self.cin_p - Cin), (0, self.cout_p - Cout)))
        # Taps packed into the contraction dim -> one deep matmul in-kernel.
        self.w_packed = w.reshape(KH * KW * self.cin_p,
                                  self.cout_p).astype(jnp.bfloat16)

    def forward_slab(self, slab, pending=None, out_pad=(0, 0)):
        assert slab.c == self.cin, "channel mismatch"
        ph, pw = self.padding
        sh, sw = self.stride
        slab = _repad_slab(slab, ph, pw)
        N = slab.data.shape[0]
        H, W = slab.h, slab.w
        Hp, Wp = H + 2 * ph, W + 2 * pw
        Ho = (Hp - self.KH) // sh + 1
        Wo = (Wp - self.KW) // sw + 1
        if pending is None:
            scale = jnp.zeros((1, 1, self.cin_p), jnp.float32)
            shift = scale
            fuse_in, relu_in = False, False
        else:
            scale = pending[0].reshape(1, 1, self.cin_p)
            shift = pending[1].reshape(1, 1, self.cin_p)
            fuse_in, relu_in = True, pending[2]
        y, s, ss = _conv2d_call(
            slab.data, self.w_packed, scale, shift,
            KH=self.KH, KW=self.KW, SH=sh, SW=sw, H=H, W=W, ph=ph, pw=pw,
            Ho=Ho, Wo=Wo, po_h=out_pad[0], po_w=out_pad[1],
            cout_p=self.cout_p, fuse_in=fuse_in, relu_in=relu_in)
        new_slab = Slab(y, self.cout, Ho, Wo, out_pad[0], out_pad[1])
        return new_slab, s, ss, N * Ho * Wo

    def __call__(self, x, stage='common', task=None, tau=5, hard=False):
        slab = _nchw_to_slab(x, self.padding[0], self.padding[1])
        new_slab, _, _, _ = self.forward_slab(slab, None, (0, 0))
        return _slab_to_nchw(new_slab)


class BN2dNode:
    """nn.BatchNorm2d basicOp, training-mode batch statistics, affine=True."""

    def __init__(self, gamma, beta, eps=1e-5):
        self.gamma = jnp.asarray(gamma, jnp.float32)
        self.beta = jnp.asarray(beta, jnp.float32)
        self.eps = eps
        C = self.gamma.shape[0]
        self.c = C
        self.cp = _round_up(C, LANE)
        # zero-padded affine params -> padded channels stay exactly zero
        self.g_pad = jnp.pad(self.gamma, (0, self.cp - C))
        self.b_pad = jnp.pad(self.beta, (0, self.cp - C))

    def scale_shift(self, mean_p, var_p):
        inv = jax.lax.rsqrt(var_p + self.eps)
        scale = self.g_pad * inv
        shift = self.b_pad - mean_p * scale
        return scale, shift

    def __call__(self, x, stage='common', task=None, tau=5, hard=False):
        slab = _nchw_to_slab(x)
        m = x.shape[0] * x.shape[2] * x.shape[3]
        x2d = slab.data.reshape(m, self.cp)
        s, ss = _channel_stats(x2d)
        mean = s[0] / m
        var = jnp.maximum(ss[0] / m - mean * mean, 0.0)
        scale, shift = self.scale_shift(mean, var)
        out2d = _scale_shift_act(x2d, scale.reshape(1, -1),
                                 shift.reshape(1, -1), relu=False)
        return _slab_to_nchw(Slab(out2d.reshape(slab.data.shape),
                                  self.c, slab.h, slab.w, 0, 0))


class ReLUNode:
    """Plain-module branch of Sequential.forward (like nn.ReLU)."""

    def __call__(self, x):
        slab = _nchw_to_slab(x)
        cp = slab.data.shape[-1]
        m = x.shape[0] * x.shape[2] * x.shape[3]
        out2d = _scale_shift_act(slab.data.reshape(m, cp),
                                 jnp.ones((1, cp), jnp.float32),
                                 jnp.zeros((1, cp), jnp.float32), relu=True)
        return _slab_to_nchw(Slab(out2d.reshape(slab.data.shape),
                                  slab.c, slab.h, slab.w, 0, 0))


class Sequential:
    """Mirror of the PyTorch MTL Sequential wrapper's forward loop ('common')."""

    def __init__(self, nodes):
        self.models = list(nodes)

    def __call__(self, x, stage='common', task=None, tau=5, hard=False,
                 policy_idx=None):
        # Build the input slab already padded for the first conv so no extra
        # HBM pass is spent on spatial padding.
        ph = pw = 0
        for node in self.models:
            if isinstance(node, Conv2dNode):
                ph, pw = node.padding
                break
            if not isinstance(node, (BN2dNode, ReLUNode)):
                break
        slab = _nchw_to_slab(x, ph, pw)
        slab, pending, _ = self._forward_slab(slab, None, None,
                                              stage, task, tau, hard)
        slab = _materialize(slab, pending)
        return _slab_to_nchw(slab)

    # pending: per-channel (scale, shift, relu) not yet applied to slab.data
    # stats:   (sum, sumsq, M) of the raw slab data, emitted by the last conv
    def _forward_slab(self, slab, pending, stats, stage, task, tau, hard):
        nodes = self.models
        for i, node in enumerate(nodes):
            if isinstance(node, Conv2dNode):
                # Output pad = padding of the conv that will consume this
                # output through a chain of fusable BN/ReLU nodes only.
                out_pad = (0, 0)
                for nxt in nodes[i + 1:]:
                    if isinstance(nxt, Conv2dNode):
                        out_pad = nxt.padding
                        break
                    if not isinstance(nxt, (BN2dNode, ReLUNode)):
                        break
                slab, s, ss, m = node.forward_slab(slab, pending, out_pad)
                pending, stats = None, (s, ss, m)
            elif isinstance(node, BN2dNode):
                if pending is None and stats is not None:
                    s, ss, m = stats
                    tot = jnp.sum(s[:, 0, :], axis=0)
                    totsq = jnp.sum(ss[:, 0, :], axis=0)
                    mean = tot / m
                    var = jnp.maximum(totsq / m - mean * mean, 0.0)
                else:
                    # Fallback: materialize, then one stats pass.
                    slab = _materialize(slab, pending)
                    pending = None
                    m = slab.data.shape[0] * slab.h * slab.w
                    cp = slab.data.shape[-1]
                    s1, ss1 = _channel_stats(slab.data.reshape(m, cp))
                    mean = s1[0] / m
                    var = jnp.maximum(ss1[0] / m - mean * mean, 0.0)
                scale, shift = node.scale_shift(mean, var)
                pending, stats = (scale, shift, False), None
            elif isinstance(node, ReLUNode):
                if pending is None:
                    cp = slab.data.shape[-1]
                    pending = (jnp.ones((cp,), jnp.float32),
                               jnp.zeros((cp,), jnp.float32), True)
                else:
                    pending = (pending[0], pending[1], True)
            elif isinstance(node, Sequential):
                slab = _materialize(slab, pending)
                slab, pending, stats = node._forward_slab(
                    slab, None, None, stage, task, tau, hard)
            else:
                # generic plain module: fall back to an NCHW call
                slab = _materialize(slab, pending)
                pending, stats = None, None
                x = node(_slab_to_nchw(slab))
                slab = _nchw_to_slab(x)
        return slab, pending, stats


# ------------------------------ pure-JAX reference --------------------------- #

def _reference_forward(x, w1, g1, b1, w2, g2, b2, eps=1e-5):
    def conv(x, w):
        return jax.lax.conv_general_dilated(
            x.astype(jnp.bfloat16), w.astype(jnp.bfloat16),
            window_strides=(1, 1), padding=[(1, 1), (1, 1)],
            dimension_numbers=('NCHW', 'OIHW', 'NCHW'),
            preferred_element_type=jnp.float32)

    def bn(x, g, b):
        mean = jnp.mean(x, axis=(0, 2, 3), keepdims=True)
        var = jnp.mean((x - mean) ** 2, axis=(0, 2, 3), keepdims=True)
        return ((x - mean) * jax.lax.rsqrt(var + eps)
                * g.reshape(1, -1, 1, 1) + b.reshape(1, -1, 1, 1))

    y = conv(x, w1)
    y = jnp.maximum(bn(y, g1, b1), 0.0)
    y = conv(y, w2)
    return bn(y, g2, b2)


# ------------------------------------- main ---------------------------------- #

if __name__ == "__main__":
    key = jax.random.PRNGKey(0)
    k1, k2, k3, k4, k5, k6, k7 = jax.random.split(key, 7)

    N, Cin, H, W = 2, 4, 16, 16
    C1, C2 = 8, 8

    x = jax.random.normal(k1, (N, Cin, H, W), dtype=jnp.float32)
    w1 = 0.1 * jax.random.normal(k2, (C1, Cin, 3, 3), dtype=jnp.float32)
    g1 = 1.0 + 0.1 * jax.random.normal(k3, (C1,), dtype=jnp.float32)
    b1 = 0.1 * jax.random.normal(k4, (C1,), dtype=jnp.float32)
    w2 = 0.1 * jax.random.normal(k5, (C2, C1, 3, 3), dtype=jnp.float32)
    g2 = 1.0 + 0.1 * jax.random.normal(k6, (C2,), dtype=jnp.float32)
    b2 = 0.1 * jax.random.normal(k7, (C2,), dtype=jnp.float32)

    seq = Sequential([
        Conv2dNode(w1, stride=1, padding=1),   # (2,4,16,16) -> (2,8,16,16)
        BN2dNode(g1, b1),
        ReLUNode(),                            # plain-module branch of forward()
        Conv2dNode(w2, stride=1, padding=1),   # (2,8,16,16) -> (2,8,16,16)
        BN2dNode(g2, b2),
    ])

    fwd = jax.jit(lambda inp: seq(inp, stage='common'))
    out = jax.block_until_ready(fwd(x))

    assert out.shape == (N, C2, H, W)
    assert bool(jnp.isfinite(out).all())

    ref = jax.block_until_ready(_reference_forward(x, w1, g1, b1, w2, g2, b2))
    assert bool(jnp.allclose(out, ref, atol=5e-2, rtol=5e-2)), \
        float(jnp.max(jnp.abs(out - ref)))

    print("KERNEL_OK")
</pallas_src>

<mosaic_0001>
module attributes {stable_mosaic.version = 11 : i64} {
  func.func @_conv_kernel(%arg0: i32, %arg1: i32, %arg2: memref<1x18x18x128xbf16, #tpu.memory_space<vmem>>, %arg3: memref<1152x128xbf16, #tpu.memory_space<vmem>>, %arg4: memref<1x1x128xf32, #tpu.memory_space<vmem>>, %arg5: memref<1x1x128xf32, #tpu.memory_space<vmem>>, %arg6: memref<1x18x18x128xbf16, #tpu.memory_space<vmem>>, %arg7: memref<1x1x128xf32, #tpu.memory_space<vmem>>, %arg8: memref<1x1x128xf32, #tpu.memory_space<vmem>>) attributes {dimension_semantics = [#tpu.dimension_semantics<parallel>, #tpu.dimension_semantics<parallel>], iteration_bounds = array<i64: 2, 1>, scalar_prefetch = 0 : i64, scratch_operands = 0 : i64, tpu.core_type = #tpu.core_type<tc>, window_params = [{transform_indices = @transform_0, window_bounds = array<i64: 1, 18, 18, 128>}, {transform_indices = @transform_1, window_bounds = array<i64: 1152, 128>}, {pipeline_mode = #tpu.pipeline_mode<synchronous>, transform_indices = @transform_2, window_bounds = array<i64: 1, 1, 128>}, {pipeline_mode = #tpu.pipeline_mode<synchronous>, transform_indices = @transform_3, window_bounds = array<i64: 1, 1, 128>}, {transform_indices = @transform_4, window_bounds = array<i64: 1, 18, 18, 128>}, {transform_indices = @transform_5, window_bounds = array<i64: 1, 1, 128>}, {transform_indices = @transform_6, window_bounds = array<i64: 1, 1, 128>}]} {
    %c0 = arith.constant 0 : index
    %c0_0 = arith.constant 0 : index
    %c0_1 = arith.constant 0 : index
    %c0_2 = arith.constant 0 : index
    %0 = vector.load %arg2[%c0, %c0_0, %c0_1, %c0_2] : memref<1x18x18x128xbf16, #tpu.memory_space<vmem>>, vector<1x18x18x128xbf16>
    %1 = vector.shape_cast %0 : vector<1x18x18x128xbf16> to vector<18x18x128xbf16>
    %2 = vector.extract_strided_slice %1 {offsets = [0, 0, 0], sizes = [16, 16, 128], strides = [1, 1, 1]} : vector<18x18x128xbf16> to vector<16x16x128xbf16>
    %3 = vector.shape_cast %2 : vector<16x16x128xbf16> to vector<256x128xbf16>
    %4 = vector.extract_strided_slice %1 {offsets = [0, 1, 0], sizes = [16, 16, 128], strides = [1, 1, 1]} : vector<18x18x128xbf16> to vector<16x16x128xbf16>
    %5 = vector.shape_cast %4 : vector<16x16x128xbf16> to vector<256x128xbf16>
    %6 = vector.extract_strided_slice %1 {offsets = [0, 2, 0], sizes = [16, 16, 128], strides = [1, 1, 1]} : vector<18x18x128xbf16> to vector<16x16x128xbf16>
    %7 = vector.shape_cast %6 : vector<16x16x128xbf16> to vector<256x128xbf16>
    %8 = vector.extract_strided_slice %1 {offsets = [1, 0, 0], sizes = [16, 16, 128], strides = [1, 1, 1]} : vector<18x18x128xbf16> to vector<16x16x128xbf16>
    %9 = vector.shape_cast %8 : vector<16x16x128xbf16> to vector<256x128xbf16>
    %10 = vector.extract_strided_slice %1 {offsets = [1, 1, 0], sizes = [16, 16, 128], strides = [1, 1, 1]} : vector<18x18x128xbf16> to vector<16x16x128xbf16>
    %11 = vector.shape_cast %10 : vector<16x16x128xbf16> to vector<256x128xbf16>
    %12 = vector.extract_strided_slice %1 {offsets = [1, 2, 0], sizes = [16, 16, 128], strides = [1, 1, 1]} : vector<18x18x128xbf16> to vector<16x16x128xbf16>
    %13 = vector.shape_cast %12 : vector<16x16x128xbf16> to vector<256x128xbf16>
    %14 = vector.extract_strided_slice %1 {offsets = [2, 0, 0], sizes = [16, 16, 128], strides = [1, 1, 1]} : vector<18x18x128xbf16> to vector<16x16x128xbf16>
    %15 = vector.shape_cast %14 : vector<16x16x128xbf16> to vector<256x128xbf16>
    %16 = vector.extract_strided_slice %1 {offsets = [2, 1, 0], sizes = [16, 16, 128], strides = [1, 1, 1]} : vector<18x18x128xbf16> to vector<16x16x128xbf16>
    %17 = vector.shape_cast %16 : vector<16x16x128xbf16> to vector<256x128xbf16>
    %18 = vector.extract_strided_slice %1 {offsets = [2, 2, 0], sizes = [16, 16, 128], strides = [1, 1, 1]} : vector<18x18x128xbf16> to vector<16x16x128xbf16>
    %19 = vector.shape_cast %18 : vector<16x16x128xbf16> to vector<256x128xbf16>
    %20 = tpu.concatenate %3, %5, %7, %9, %11, %13, %15, %17, %19 in 1 : vector<256x128xbf16>, vector<256x128xbf16>, vector<256x128xbf16>, vector<256x128xbf16>, vector<256x128xbf16>, vector<256x128xbf16>, vector<256x128xbf16>, vector<256x128xbf16>, vector<256x128xbf16> -> vector<256x1152xbf16>
    %c0_3 = arith.constant 0 : index
    %c0_4 = arith.constant 0 : index
    %21 = vector.load %arg3[%c0_3, %c0_4] : memref<1152x128xbf16, #tpu.memory_space<vmem>>, vector<1152x128xbf16>
    %cst = arith.constant dense<0.000000e+00> : vector<256x128xf32>
    %22 = tpu.matmul %20, %21, %cst {dimension_numbers = #tpu.dot_dimension_numbers<[1], [0], [0], [1], [0, 0, 1, 1], [], []>} : vector<256x1152xbf16>, vector<1152x128xbf16>, vector<256x128xf32> -> vector<256x128xf32>
    %cst_5 = arith.constant dense<0.000000e+00> : vector<128xf32>
    %23 = vector.multi_reduction <add>, %22, %cst_5 [0] : vector<256x128xf32> to vector<128xf32>
    %24 = vector.shape_cast %23 : vector<128xf32> to vector<1x128xf32>
    %25 = vector.shape_cast %24 : vector<1x128xf32> to vector<1x1x128xf32>
    %c0_6 = arith.constant 0 : index
    %c0_7 = arith.constant 0 : index
    %c0_8 = arith.constant 0 : index
    %26 = vector.load %arg7[%c0_6, %c0_7, %c0_8] : memref<1x1x128xf32, #tpu.memory_space<vmem>>, vector<1x1x128xf32>
    tpu.vector_store %arg7[%c0_6, %c0_7, %c0_8], %25 {strides = array<i32>} : memref<1x1x128xf32, #tpu.memory_space<vmem>>, vector<1x1x128xf32>,
    %27 = arith.mulf %22, %22 : vector<256x128xf32>
    %cst_9 = arith.constant dense<0.000000e+00> : vector<128xf32>
    %28 = vector.multi_reduction <add>, %27, %cst_9 [0] : vector<256x128xf32> to vector<128xf32>
    %29 = vector.shape_cast %28 : vector<128xf32> to vector<1x128xf32>
    %30 = vector.shape_cast %29 : vector<1x128xf32> to vector<1x1x128xf32>
    %c0_10 = arith.constant 0 : index
    %c0_11 = arith.constant 0 : index
    %c0_12 = arith.constant 0 : index
    %31 = vector.load %arg8[%c0_10, %c0_11, %c0_12] : memref<1x1x128xf32, #tpu.memory_space<vmem>>, vector<1x1x128xf32>
    tpu.vector_store %arg8[%c0_10, %c0_11, %c0_12], %30 {strides = array<i32>} : memref<1x1x128xf32, #tpu.memory_space<vmem>>, vector<1x1x128xf32>,
    %32 = arith.truncf %22 : vector<256x128xf32> to vector<256x128xbf16>
    %33 = vector.shape_cast %32 : vector<256x128xbf16> to vector<1x16x16x128xbf16>
    %cst_13 = arith.constant 0.000000e+00 : bf16
    %34 = vector.broadcast %cst_13 : bf16 to vector<1x18x18x128xbf16>
    %c0_14 = arith.constant 0 : index
    %c0_15 = arith.constant 0 : index
    %c0_16 = arith.constant 0 : index
    %c0_17 = arith.constant 0 : index
    %35 = vector.load %arg6[%c0_14, %c0_15, %c0_16, %c0_17] : memref<1x18x18x128xbf16, #tpu.memory_space<vmem>>, vector<1x18x18x128xbf16>
    tpu.vector_store %arg6[%c0_14, %c0_15, %c0_16, %c0_17], %34 {strides = array<i32>} : memref<1x18x18x128xbf16, #tpu.memory_space<vmem>>, vector<1x18x18x128xbf16>,
    %c0_18 = arith.constant 0 : index
    %c1 = arith.constant 1 : index
    %c1_19 = arith.constant 1 : index
    %c0_20 = arith.constant 0 : index
    %36 = vector.load %arg6[%c0_18, %c1, %c1_19, %c0_20] : memref<1x18x18x128xbf16, #tpu.memory_space<vmem>>, vector<1x16x16x128xbf16>
    tpu.vector_store %arg6[%c0_18, %c1, %c1_19, %c0_20], %33 {strides = array<i32>} : memref<1x18x18x128xbf16, #tpu.memory_space<vmem>>, vector<1x16x16x128xbf16>,
    return
  }
  func.func @transform_0(%arg0: i32, %arg1: i32) -> (i32, i32, i32, i32) {
    %c0_i32 = arith.constant 0 : i32
    %c0_i32_0 = arith.constant 0 : i32
    %c0_i32_1 = arith.constant 0 : i32
    %c0_i32_2 = arith.constant 0 : i32
    return %arg0, %c0_i32, %c0_i32_0, %c0_i32_1 : i32, i32, i32, i32
  }
  func.func @transform_1(%arg0: i32, %arg1: i32) -> (i32, i32) {
    %c0_i32 = arith.constant 0 : i32
    %c0_i32_0 = arith.constant 0 : i32
    return %c0_i32, %arg1 : i32, i32
  }
  func.func @transform_2(%arg0: i32, %arg1: i32) -> (i32, i32, i32) {
    %c0_i32 = arith.constant 0 : i32
    %c0_i32_0 = arith.constant 0 : i32
    %c0_i32_1 = arith.constant 0 : i32
    %c0_i32_2 = arith.constant 0 : i32
    return %c0_i32, %c0_i32_0, %c0_i32_1 : i32, i32, i32
  }
  func.func @transform_3(%arg0: i32, %arg1: i32) -> (i32, i32, i32) {
    %c0_i32 = arith.constant 0 : i32
    %c0_i32_0 = arith.constant 0 : i32
    %c0_i32_1 = arith.constant 0 : i32
    %c0_i32_2 = arith.constant 0 : i32
    return %c0_i32, %c0_i32_0, %c0_i32_1 : i32, i32, i32
  }
  func.func @transform_4(%arg0: i32, %arg1: i32) -> (i32, i32, i32, i32) {
    %c0_i32 = arith.constant 0 : i32
    %c0_i32_0 = arith.constant 0 : i32
    %c0_i32_1 = arith.constant 0 : i32
    return %arg0, %c0_i32, %c0_i32_0, %arg1 : i32, i32, i32, i32
  }
  func.func @transform_5(%arg0: i32, %arg1: i32) -> (i32, i32, i32) {
    %c0_i32 = arith.constant 0 : i32
    %c0_i32_0 = arith.constant 0 : i32
    return %arg0, %c0_i32, %arg1 : i32, i32, i32
  }
  func.func @transform_6(%arg0: i32, %arg1: i32) -> (i32, i32, i32) {
    %c0_i32 = arith.constant 0 : i32
    %c0_i32_0 = arith.constant 0 : i32
    return %arg0, %c0_i32, %arg1 : i32, i32, i32
  }
}

module attributes {stable_mosaic.version = 11 : i64} {
  func.func @_conv_kernel(%arg0: i32, %arg1: i32, %arg2: memref<1x18x18x128xbf16, #tpu.memory_space<vmem>>, %arg3: memref<1152x128xbf16, #tpu.memory_space<vmem>>, %arg4: memref<1x1x128xf32, #tpu.memory_space<vmem>>, %arg5: memref<1x1x128xf32, #tpu.memory_space<vmem>>, %arg6: memref<1x16x16x128xbf16, #tpu.memory_space<vmem>>, %arg7: memref<1x1x128xf32, #tpu.memory_space<vmem>>, %arg8: memref<1x1x128xf32, #tpu.memory_space<vmem>>) attributes {dimension_semantics = [#tpu.dimension_semantics<parallel>, #tpu.dimension_semantics<parallel>], iteration_bounds = array<i64: 2, 1>, scalar_prefetch = 0 : i64, scratch_operands = 0 : i64, tpu.core_type = #tpu.core_type<tc>, window_params = [{transform_indices = @transform_0, window_bounds = array<i64: 1, 18, 18, 128>}, {transform_indices = @transform_1, window_bounds = array<i64: 1152, 128>}, {pipeline_mode = #tpu.pipeline_mode<synchronous>, transform_indices = @transform_2, window_bounds = array<i64: 1, 1, 128>}, {pipeline_mode = #tpu.pipeline_mode<synchronous>, transform_indices = @transform_3, window_bounds = array<i64: 1, 1, 128>}, {transform_indices = @transform_4, window_bounds = array<i64: 1, 16, 16, 128>}, {transform_indices = @transform_5, window_bounds = array<i64: 1, 1, 128>}, {transform_indices = @transform_6, window_bounds = array<i64: 1, 1, 128>}]} {
    %c0 = arith.constant 0 : index
    %c0_0 = arith.constant 0 : index
    %c0_1 = arith.constant 0 : index
    %c0_2 = arith.constant 0 : index
    %0 = vector.load %arg2[%c0, %c0_0, %c0_1, %c0_2] : memref<1x18x18x128xbf16, #tpu.memory_space<vmem>>, vector<1x18x18x128xbf16>
    %1 = vector.shape_cast %0 : vector<1x18x18x128xbf16> to vector<18x18x128xbf16>
    %2 = arith.extf %1 : vector<18x18x128xbf16> to vector<18x18x128xf32>
    %c0_3 = arith.constant 0 : index
    %c0_4 = arith.constant 0 : index
    %c0_5 = arith.constant 0 : index
    %3 = vector.load %arg4[%c0_3, %c0_4, %c0_5] : memref<1x1x128xf32, #tpu.memory_space<vmem>>, vector<1x1x128xf32>
    %4 = vector.broadcast %3 : vector<1x1x128xf32> to vector<18x18x128xf32>
    %5 = arith.mulf %2, %4 : vector<18x18x128xf32>
    %c0_6 = arith.constant 0 : index
    %c0_7 = arith.constant 0 : index
    %c0_8 = arith.constant 0 : index
    %6 = vector.load %arg5[%c0_6, %c0_7, %c0_8] : memref<1x1x128xf32, #tpu.memory_space<vmem>>, vector<1x1x128xf32>
    %7 = vector.broadcast %6 : vector<1x1x128xf32> to vector<18x18x128xf32>
    %8 = arith.addf %5, %7 : vector<18x18x128xf32>
    %cst = arith.constant 0.000000e+00 : f32
    %9 = vector.broadcast %cst : f32 to vector<18x18x128xf32>
    %10 = arith.maximumf %8, %9 : vector<18x18x128xf32>
    %11 = tpu.iota {dimensions = array<i32: 0>} : vector<18x18x128xi32>
    %12 = tpu.iota {dimensions = array<i32: 1>} : vector<18x18x128xi32>
    %c1_i32 = arith.constant 1 : i32
    %13 = vector.broadcast %c1_i32 : i32 to vector<18x18x128xi32>
    %14 = arith.cmpi sge, %11, %13 : vector<18x18x128xi32>
    %c17_i32 = arith.constant 17 : i32
    %15 = vector.broadcast %c17_i32 : i32 to vector<18x18x128xi32>
    %16 = arith.cmpi slt, %11, %15 : vector<18x18x128xi32>
    %17 = arith.andi %14, %16 : vector<18x18x128xi1>
    %c1_i32_9 = arith.constant 1 : i32
    %18 = vector.broadcast %c1_i32_9 : i32 to vector<18x18x128xi32>
    %19 = arith.cmpi sge, %12, %18 : vector<18x18x128xi32>
    %20 = arith.andi %17, %19 : vector<18x18x128xi1>
    %c17_i32_10 = arith.constant 17 : i32
    %21 = vector.broadcast %c17_i32_10 : i32 to vector<18x18x128xi32>
    %22 = arith.cmpi slt, %12, %21 : vector<18x18x128xi32>
    %23 = arith.andi %20, %22 : vector<18x18x128xi1>
    %cst_11 = arith.constant 0.000000e+00 : f32
    %24 = vector.broadcast %cst_11 : f32 to vector<18x18x128xf32>
    %25 = arith.select %23, %10, %24 : vector<18x18x128xi1>, vector<18x18x128xf32>
    %26 = arith.truncf %25 : vector<18x18x128xf32> to vector<18x18x128xbf16>
    %27 = vector.extract_strided_slice %26 {offsets = [0, 0, 0], sizes = [16, 16, 128], strides = [1, 1, 1]} : vector<18x18x128xbf16> to vector<16x16x128xbf16>
    %28 = vector.shape_cast %27 : vector<16x16x128xbf16> to vector<256x128xbf16>
    %29 = vector.extract_strided_slice %26 {offsets = [0, 1, 0], sizes = [16, 16, 128], strides = [1, 1, 1]} : vector<18x18x128xbf16> to vector<16x16x128xbf16>
    %30 = vector.shape_cast %29 : vector<16x16x128xbf16> to vector<256x128xbf16>
    %31 = vector.extract_strided_slice %26 {offsets = [0, 2, 0], sizes = [16, 16, 128], strides = [1, 1, 1]} : vector<18x18x128xbf16> to vector<16x16x128xbf16>
    %32 = vector.shape_cast %31 : vector<16x16x128xbf16> to vector<256x128xbf16>
    %33 = vector.extract_strided_slice %26 {offsets = [1, 0, 0], sizes = [16, 16, 128], strides = [1, 1, 1]} : vector<18x18x128xbf16> to vector<16x16x128xbf16>
    %34 = vector.shape_cast %33 : vector<16x16x128xbf16> to vector<256x128xbf16>
    %35 = vector.extract_strided_slice %26 {offsets = [1, 1, 0], sizes = [16, 16, 128], strides = [1, 1, 1]} : vector<18x18x128xbf16> to vector<16x16x128xbf16>
    %36 = vector.shape_cast %35 : vector<16x16x128xbf16> to vector<256x128xbf16>
    %37 = vector.extract_strided_slice %26 {offsets = [1, 2, 0], sizes = [16, 16, 128], strides = [1, 1, 1]} : vector<18x18x128xbf16> to vector<16x16x128xbf16>
    %38 = vector.shape_cast %37 : vector<16x16x128xbf16> to vector<256x128xbf16>
    %39 = vector.extract_strided_slice %26 {offsets = [2, 0, 0], sizes = [16, 16, 128], strides = [1, 1, 1]} : vector<18x18x128xbf16> to vector<16x16x128xbf16>
    %40 = vector.shape_cast %39 : vector<16x16x128xbf16> to vector<256x128xbf16>
    %41 = vector.extract_strided_slice %26 {offsets = [2, 1, 0], sizes = [16, 16, 128], strides = [1, 1, 1]} : vector<18x18x128xbf16> to vector<16x16x128xbf16>
    %42 = vector.shape_cast %41 : vector<16x16x128xbf16> to vector<256x128xbf16>
    %43 = vector.extract_strided_slice %26 {offsets = [2, 2, 0], sizes = [16, 16, 128], strides = [1, 1, 1]} : vector<18x18x128xbf16> to vector<16x16x128xbf16>
    %44 = vector.shape_cast %43 : vector<16x16x128xbf16> to vector<256x128xbf16>
    %45 = tpu.concatenate %28, %30, %32, %34, %36, %38, %40, %42, %44 in 1 : vector<256x128xbf16>, vector<256x128xbf16>, vector<256x128xbf16>, vector<256x128xbf16>, vector<256x128xbf16>, vector<256x128xbf16>, vector<256x128xbf16>, vector<256x128xbf16>, vector<256x128xbf16> -> vector<256x1152xbf16>
    %c0_12 = arith.constant 0 : index
    %c0_13 = arith.constant 0 : index
    %46 = vector.load %arg3[%c0_12, %c0_13] : memref<1152x128xbf16, #tpu.memory_space<vmem>>, vector<1152x128xbf16>
    %cst_14 = arith.constant dense<0.000000e+00> : vector<256x128xf32>
    %47 = tpu.matmul %45, %46, %cst_14 {dimension_numbers = #tpu.dot_dimension_numbers<[1], [0], [0], [1], [0, 0, 1, 1], [], []>} : vector<256x1152xbf16>, vector<1152x128xbf16>, vector<256x128xf32> -> vector<256x128xf32>
    %cst_15 = arith.constant dense<0.000000e+00> : vector<128xf32>
    %48 = vector.multi_reduction <add>, %47, %cst_15 [0] : vector<256x128xf32> to vector<128xf32>
    %49 = vector.shape_cast %48 : vector<128xf32> to vector<1x128xf32>
    %50 = vector.shape_cast %49 : vector<1x128xf32> to vector<1x1x128xf32>
    %c0_16 = arith.constant 0 : index
    %c0_17 = arith.constant 0 : index
    %c0_18 = arith.constant 0 : index
    %51 = vector.load %arg7[%c0_16, %c0_17, %c0_18] : memref<1x1x128xf32, #tpu.memory_space<vmem>>, vector<1x1x128xf32>
    tpu.vector_store %arg7[%c0_16, %c0_17, %c0_18], %50 {strides = array<i32>} : memref<1x1x128xf32, #tpu.memory_space<vmem>>, vector<1x1x128xf32>,
    %52 = arith.mulf %47, %47 : vector<256x128xf32>
    %cst_19 = arith.constant dense<0.000000e+00> : vector<128xf32>
    %53 = vector.multi_reduction <add>, %52, %cst_19 [0] : vector<256x128xf32> to vector<128xf32>
    %54 = vector.shape_cast %53 : vector<128xf32> to vector<1x128xf32>
    %55 = vector.shape_cast %54 : vector<1x128xf32> to vector<1x1x128xf32>
    %c0_20 = arith.constant 0 : index
    %c0_21 = arith.constant 0 : index
    %c0_22 = arith.constant 0 : index
    %56 = vector.load %arg8[%c0_20, %c0_21, %c0_22] : memref<1x1x128xf32, #tpu.memory_space<vmem>>, vector<1x1x128xf32>
    tpu.vector_store %arg8[%c0_20, %c0_21, %c0_22], %55 {strides = array<i32>} : memref<1x1x128xf32, #tpu.memory_space<vmem>>, vector<1x1x128xf32>,
    %57 = arith.truncf %47 : vector<256x128xf32> to vector<256x128xbf16>
    %58 = vector.shape_cast %57 : vector<256x128xbf16> to vector<1x16x16x128xbf16>
    %c0_23 = arith.constant 0 : index
    %c0_24 = arith.constant 0 : index
    %c0_25 = arith.constant 0 : index
    %c0_26 = arith.constant 0 : index
    %59 = vector.load %arg6[%c0_23, %c0_24, %c0_25, %c0_26] : memref<1x16x16x128xbf16, #tpu.memory_space<vmem>>, vector<1x16x16x128xbf16>
    tpu.vector_store %arg6[%c0_23, %c0_24, %c0_25, %c0_26], %58 {strides = array<i32>} : memref<1x16x16x128xbf16, #tpu.memory_space<vmem>>, vector<1x16x16x128xbf16>,
    return
  }
  func.func @transform_0(%arg0: i32, %arg1: i32) -> (i32, i32, i32, i32) {
    %c0_i32 = arith.constant 0 : i32
    %c0_i32_0 = arith.constant 0 : i32
    %c0_i32_1 = arith.constant 0 : i32
    %c0_i32_2 = arith.constant 0 : i32
    return %arg0, %c0_i32, %c0_i32_0, %c0_i32_1 : i32, i32, i32, i32
  }
  func.func @transform_1(%arg0: i32, %arg1: i32) -> (i32, i32) {
    %c0_i32 = arith.constant 0 : i32
    %c0_i32_0 = arith.constant 0 : i32
    return %c0_i32, %arg1 : i32, i32
  }
  func.func @transform_2(%arg0: i32, %arg1: i32) -> (i32, i32, i32) {
    %c0_i32 = arith.constant 0 : i32
    %c0_i32_0 = arith.constant 0 : i32
    %c0_i32_1 = arith.constant 0 : i32
    %c0_i32_2 = arith.constant 0 : i32
    return %c0_i32, %c0_i32_0, %c0_i32_1 : i32, i32, i32
  }
  func.func @transform_3(%arg0: i32, %arg1: i32) -> (i32, i32, i32) {
    %c0_i32 = arith.constant 0 : i32
    %c0_i32_0 = arith.constant 0 : i32
    %c0_i32_1 = arith.constant 0 : i32
    %c0_i32_2 = arith.constant 0 : i32
    return %c0_i32, %c0_i32_0, %c0_i32_1 : i32, i32, i32
  }
  func.func @transform_4(%arg0: i32, %arg1: i32) -> (i32, i32, i32, i32) {
    %c0_i32 = arith.constant 0 : i32
    %c0_i32_0 = arith.constant 0 : i32
    %c0_i32_1 = arith.constant 0 : i32
    return %arg0, %c0_i32, %c0_i32_0, %arg1 : i32, i32, i32, i32
  }
  func.func @transform_5(%arg0: i32, %arg1: i32) -> (i32, i32, i32) {
    %c0_i32 = arith.constant 0 : i32
    %c0_i32_0 = arith.constant 0 : i32
    return %arg0, %c0_i32, %arg1 : i32, i32, i32
  }
  func.func @transform_6(%arg0: i32, %arg1: i32) -> (i32, i32, i32) {
    %c0_i32 = arith.constant 0 : i32
    %c0_i32_0 = arith.constant 0 : i32
    return %arg0, %c0_i32, %arg1 : i32, i32, i32
  }
}

module attributes {stable_mosaic.version = 11 : i64} {
  func.func @_scale_shift_act_kernel(%arg0: i32, %arg1: memref<512x128xbf16, #tpu.memory_space<vmem>>, %arg2: memref<1x128xf32, #tpu.memory_space<vmem>>, %arg3: memref<1x128xf32, #tpu.memory_space<vmem>>, %arg4: memref<512x128xbf16, #tpu.memory_space<vmem>>) attributes {dimension_semantics = [#tpu.dimension_semantics<parallel>], iteration_bounds = array<i64: 1>, scalar_prefetch = 0 : i64, scratch_operands = 0 : i64, tpu.core_type = #tpu.core_type<tc>, window_params = [{transform_indices = @transform_0, window_bounds = array<i64: 512, 128>}, {pipeline_mode = #tpu.pipeline_mode<synchronous>, transform_indices = @transform_1, window_bounds = array<i64: 1, 128>}, {pipeline_mode = #tpu.pipeline_mode<synchronous>, transform_indices = @transform_2, window_bounds = array<i64: 1, 128>}, {transform_indices = @transform_3, window_bounds = array<i64: 512, 128>}]} {
    %c0 = arith.constant 0 : index
    %c0_0 = arith.constant 0 : index
    %0 = vector.load %arg1[%c0, %c0_0] : memref<512x128xbf16, #tpu.memory_space<vmem>>, vector<512x128xbf16>
    %1 = arith.extf %0 : vector<512x128xbf16> to vector<512x128xf32>
    %c0_1 = arith.constant 0 : index
    %c0_2 = arith.constant 0 : index
    %2 = vector.load %arg2[%c0_1, %c0_2] : memref<1x128xf32, #tpu.memory_space<vmem>>, vector<1x128xf32>
    %3 = vector.broadcast %2 : vector<1x128xf32> to vector<512x128xf32>
    %4 = arith.mulf %1, %3 : vector<512x128xf32>
    %c0_3 = arith.constant 0 : index
    %c0_4 = arith.constant 0 : index
    %5 = vector.load %arg3[%c0_3, %c0_4] : memref<1x128xf32, #tpu.memory_space<vmem>>, vector<1x128xf32>
    %6 = vector.broadcast %5 : vector<1x128xf32> to vector<512x128xf32>
    %7 = arith.addf %4, %6 : vector<512x128xf32>
    %8 = arith.truncf %7 : vector<512x128xf32> to vector<512x128xbf16>
    %c0_5 = arith.constant 0 : index
    %c0_6 = arith.constant 0 : index
    %9 = vector.load %arg4[%c0_5, %c0_6] : memref<512x128xbf16, #tpu.memory_space<vmem>>, vector<512x128xbf16>
    tpu.vector_store %arg4[%c0_5, %c0_6], %8 {strides = array<i32>} : memref<512x128xbf16, #tpu.memory_space<vmem>>, vector<512x128xbf16>,
    return
  }
  func.func @transform_0(%arg0: i32) -> (i32, i32) {
    %c0_i32 = arith.constant 0 : i32
    %c0_i32_0 = arith.constant 0 : i32
    return %arg0, %c0_i32 : i32, i32
  }
  func.func @transform_1(%arg0: i32) -> (i32, i32) {
    %c0_i32 = arith.constant 0 : i32
    %c0_i32_0 = arith.constant 0 : i32
    %c0_i32_1 = arith.constant 0 : i32
    return %c0_i32, %c0_i32_0 : i32, i32
  }
  func.func @transform_2(%arg0: i32) -> (i32, i32) {
    %c0_i32 = arith.constant 0 : i32
    %c0_i32_0 = arith.constant 0 : i32
    %c0_i32_1 = arith.constant 0 : i32
    return %c0_i32, %c0_i32_0 : i32, i32
  }
  func.func @transform_3(%arg0: i32) -> (i32, i32) {
    %c0_i32 = arith.constant 0 : i32
    %c0_i32_0 = arith.constant 0 : i32
    return %arg0, %c0_i32 : i32, i32
  }
}

</mosaic_0001>

<llo_original>
// kernel: _lambda_.5
$region0: #{_lambda_.5}
  #allocation0 [shape = 'u32[]', space=smem, size = 0x4, offset = 0x4, fixed_abs, tag = 'smem constant byte address 0x4 - core index']
  #allocation1 [shape = 'u32[72,128]{1,0:T(1,128)}', space=vmem, size = 0x9000, scoped, tag = 'internal scratch']
  %s0 = inlined_call_operand.vmem [shape: bf16[512,128], index: 0, kind: input, shape index: {}]
  %s1 = inlined_call_operand.vmem [shape: f32[1,128], index: 1, kind: input, shape index: {}]
  %s2 = inlined_call_operand.vmem [shape: f32[1,128], index: 2, kind: input, shape index: {}]
  %s3 = inlined_call_operand.vmem [shape: bf16[512,128], index: 3, kind: output, shape index: {}]
  %s4 = sld [smem:[#allocation0]]
  $region22: #{_lambda_.5} parent=0
    _
  %s6 = ssub.s32 1, %s4
  %s7 = scalar_select 0, %s6, %s4
  // Predicated region
  $region2: #{_lambda_.5} parent=0 // pred_check
    _
  $region3: #{_lambda_.5} parent=0 // pred_check_branch
    %9 = sbr.rel (0) target = $region5
  $region4: #{_lambda_.5} parent=0 // pred_region
    _
  $region5: #{_lambda_.5} parent=0 // pred_fallthru
    _
  // Predicated region
  $region6: #{_lambda_.5} parent=0 // pred_check
    _
  $region7: #{_lambda_.5} parent=0 // pred_check_branch
    %11 = sbr.rel (0) target = $region9
  $region8: #{_lambda_.5} parent=0 // pred_region
    _
  $region9: #{_lambda_.5} parent=0 // pred_fallthru
    _
  // Predicated region
  $region10: #{_lambda_.5} parent=0 // pred_check
    _
  $region11: #{_lambda_.5} parent=0 // pred_check_branch
    %13 = sbr.rel (0) target = $region13
  $region12: #{_lambda_.5} parent=0 // pred_region
    _
  $region13: #{_lambda_.5} parent=0 // pred_fallthru
    _
  %v14 = vld [vmem:[%s0] sm:$0xf]
  %v15 = vld [vmem:[%s0 + $0x4] sm:$0xf]
  %v16 = vld [vmem:[%s0 + $0x8] sm:$0xf]
  %v17 = vld [vmem:[%s0 + $0xc] sm:$0xf]
  %v18 = vld [vmem:[%s0 + $0x10] sm:$0xf]
  %v19 = vld [vmem:[%s0 + $0x14] sm:$0xf]
  %v20 = vld [vmem:[%s0 + $0x18] sm:$0xf]
  %v21 = vld [vmem:[%s0 + $0x1c] sm:$0xf]
  %v22 = vld [vmem:[%s0 + $0x20] sm:$0xf]
  %v23 = vld [vmem:[%s0 + $0x24] sm:$0xf]
  %v24 = vld [vmem:[%s0 + $0x28] sm:$0xf]
  %v25 = vld [vmem:[%s0 + $0x2c] sm:$0xf]
  %v26 = vld [vmem:[%s0 + $0x30] sm:$0xf]
  %v27 = vld [vmem:[%s0 + $0x34] sm:$0xf]
  %v28 = vld [vmem:[%s0 + $0x38] sm:$0xf]
  %v29 = vld [vmem:[%s0 + $0x3c] sm:$0xf]
  %v30 = vld [vmem:[%s0 + $0x40] sm:$0xf]
  %v31 = vld [vmem:[%s0 + $0x44] sm:$0xf]
  %v32 = vld [vmem:[%s0 + $0x48] sm:$0xf]
  %v33 = vld [vmem:[%s0 + $0x4c] sm:$0xf]
  %v34 = vld [vmem:[%s0 + $0x50] sm:$0xf]
  %v35 = vld [vmem:[%s0 + $0x54] sm:$0xf]
  %v36 = vld [vmem:[%s0 + $0x58] sm:$0xf]
  %v37 = vld [vmem:[%s0 + $0x5c] sm:$0xf]
  %v38 = vld [vmem:[%s0 + $0x60] sm:$0xf]
  %v39 = vld [vmem:[%s0 + $0x64] sm:$0xf]
  %v40 = vld [vmem:[%s0 + $0x68] sm:$0xf]
  %v41 = vld [vmem:[%s0 + $0x6c] sm:$0xf]
  %v42 = vld [vmem:[%s0 + $0x70] sm:$0xf]
  %v43 = vld [vmem:[%s0 + $0x74] sm:$0xf]
  %v44 = vld [vmem:[%s0 + $0x78] sm:$0xf]
  %v45 = vld [vmem:[%s0 + $0x7c] sm:$0xf]
  %v46 = vld [vmem:[%s0 + $0x80] sm:$0xf]
  %v47 = vld [vmem:[%s0 + $0x84] sm:$0xf]
  %v48 = vld [vmem:[%s0 + $0x88] sm:$0xf]
  %v49 = vld [vmem:[%s0 + $0x8c] sm:$0xf]
  %v50 = vld [vmem:[%s0 + $0x90] sm:$0xf]
  %v51 = vld [vmem:[%s0 + $0x94] sm:$0xf]
  %v52 = vld [vmem:[%s0 + $0x98] sm:$0xf]
  %v53 = vld [vmem:[%s0 + $0x9c] sm:$0xf]
  %v54 = vld [vmem:[%s0 + $0xa0] sm:$0xf]
  %v55 = vld [vmem:[%s0 + $0xa4] sm:$0xf]
  %v56 = vld [vmem:[%s0 + $0xa8] sm:$0xf]
  %v57 = vld [vmem:[%s0 + $0xac] sm:$0xf]
  %v58 = vld [vmem:[%s0 + $0xb0] sm:$0xf]
  %v59 = vld [vmem:[%s0 + $0xb4] sm:$0xf]
  %v60 = vld [vmem:[%s0 + $0xb8] sm:$0xf]
  %v61 = vld [vmem:[%s0 + $0xbc] sm:$0xf]
  %v62 = vld [vmem:[%s0 + $0xc0] sm:$0xf]
  %v63 = vld [vmem:[%s0 + $0xc4] sm:$0xf]
  %v64 = vld [vmem:[%s0 + $0xc8] sm:$0xf]
  %v65 = vld [vmem:[%s0 + $0xcc] sm:$0xf]
  %v66 = vld [vmem:[%s0 + $0xd0] sm:$0xf]
  %v67 = vld [vmem:[%s0 + $0xd4] sm:$0xf]
  %v68 = vld [vmem:[%s0 + $0xd8] sm:$0xf]
  %v69 = vld [vmem:[%s0 + $0xdc] sm:$0xf]
  %v70 = vld [vmem:[%s0 + $0xe0] sm:$0xf]
  %v71 = vld [vmem:[%s0 + $0xe4] sm:$0xf]
  %v72 = vld [vmem:[%s0 + $0xe8] sm:$0xf]
  %v73 = vld [vmem:[%s0 + $0xec] sm:$0xf]
  %v74 = vld [vmem:[%s0 + $0xf0] sm:$0xf]
  %v75 = vld [vmem:[%s0 + $0xf4] sm:$0xf]
  %v76 = vld [vmem:[%s0 + $0xf8] sm:$0xf]
  %v77 = vld [vmem:[%s0 + $0xfc] sm:$0xf]
  %v78 = vunpack.c.l.bf16 %v14
  %v79 = vunpack.c.l.bf16 %v15
  %v80 = vunpack.c.l.bf16 %v16
  %v81 = vunpack.c.l.bf16 %v17
  %v82 = vunpack.c.l.bf16 %v18
  %v83 = vunpack.c.l.bf16 %v19
  %v84 = vunpack.c.l.bf16 %v20
  %v85 = vunpack.c.l.bf16 %v21
  %v86 = vunpack.c.l.bf16 %v22
  %v87 = vunpack.c.l.bf16 %v23
  %v88 = vunpack.c.l.bf16 %v24
  %v89 = vunpack.c.l.bf16 %v25
  %v90 = vunpack.c.l.bf16 %v26
  %v91 = vunpack.c.l.bf16 %v27
  %v92 = vunpack.c.l.bf16 %v28
  %v93 = vunpack.c.l.bf16 %v29
  %v94 = vunpack.c.l.bf16 %v30
  %v95 = vunpack.c.l.bf16 %v31
  %v96 = vunpack.c.l.bf16 %v32
  %v97 = vunpack.c.l.bf16 %v33
  %v98 = vunpack.c.l.bf16 %v34
  %v99 = vunpack.c.l.bf16 %v35
  %v100 = vunpack.c.l.bf16 %v36
  %v101 = vunpack.c.l.bf16 %v37
  %v102 = vunpack.c.l.bf16 %v38
  %v103 = vunpack.c.l.bf16 %v39
  %v104 = vunpack.c.l.bf16 %v40
  %v105 = vunpack.c.l.bf16 %v41
  %v106 = vunpack.c.l.bf16 %v42
  %v107 = vunpack.c.l.bf16 %v43
  %v108 = vunpack.c.l.bf16 %v44
  %v109 = vunpack.c.l.bf16 %v45
  %v110 = vunpack.c.l.bf16 %v46
  %v111 = vunpack.c.l.bf16 %v47
  %v112 = vunpack.c.l.bf16 %v48
  %v113 = vunpack.c.l.bf16 %v49
  %v114 = vunpack.c.l.bf16 %v50
  %v115 = vunpack.c.l.bf16 %v51
  %v116 = vunpack.c.l.bf16 %v52
  %v117 = vunpack.c.l.bf16 %v53
  %v118 = vunpack.c.l.bf16 %v54
  %v119 = vunpack.c.l.bf16 %v55
  %v120 = vunpack.c.l.bf16 %v56
  %v121 = vunpack.c.l.bf16 %v57
  %v122 = vunpack.c.l.bf16 %v58
  %v123 = vunpack.c.l.bf16 %v59
  %v124 = vunpack.c.l.bf16 %v60
  %v125 = vunpack.c.l.bf16 %v61
  %v126 = vunpack.c.l.bf16 %v62
  %v127 = vunpack.c.l.bf16 %v63
  %v128 = vunpack.c.l.bf16 %v64
  %v129 = vunpack.c.l.bf16 %v65
  %v130 = vunpack.c.l.bf16 %v66
  %v131 = vunpack.c.l.bf16 %v67
  %v132 = vunpack.c.l.bf16 %v68
  %v133 = vunpack.c.l.bf16 %v69
  %v134 = vunpack.c.l.bf16 %v70
  %v135 = vunpack.c.l.bf16 %v71
  %v136 = vunpack.c.l.bf16 %v72
  %v137 = vunpack.c.l.bf16 %v73
  %v138 = vunpack.c.l.bf16 %v74
  %v139 = vunpack.c.l.bf16 %v75
  %v140 = vunpack.c.l.bf16 %v76
  %v141 = vunpack.c.l.bf16 %v77
  %v142 = vld [vmem:[%s1] sm:$0x1]
  %v144 = vperm.slane %v142, 0
  %v146 = vmul.f32 %v78, %v144
  %v147 = vmul.f32 %v79, %v144
  %v148 = vmul.f32 %v80, %v144
  %v149 = vmul.f32 %v81, %v144
  %v150 = vmul.f32 %v82, %v144
  %v151 = vmul.f32 %v83, %v144
  %v152 = vmul.f32 %v84, %v144
  %v153 = vmul.f32 %v85, %v144
  %v154 = vmul.f32 %v86, %v144
  %v155 = vmul.f32 %v87, %v144
  %v156 = vmul.f32 %v88, %v144
  %v157 = vmul.f32 %v89, %v144
  %v158 = vmul.f32 %v90, %v144
  %v159 = vmul.f32 %v91, %v144
  %v160 = vmul.f32 %v92, %v144
  %v161 = vmul.f32 %v93, %v144
  %v162 = vmul.f32 %v94, %v144
  %v163 = vmul.f32 %v95, %v144
  %v164 = vmul.f32 %v96, %v144
  %v165 = vmul.f32 %v97, %v144
  %v166 = vmul.f32 %v98, %v144
  %v167 = vmul.f32 %v99, %v144
  %v168 = vmul.f32 %v100, %v144
  %v169 = vmul.f32 %v101, %v144
  %v170 = vmul.f32 %v102, %v144
  %v171 = vmul.f32 %v103, %v144
  %v172 = vmul.f32 %v104, %v144
  %v173 = vmul.f32 %v105, %v144
  %v174 = vmul.f32 %v106, %v144
  %v175 = vmul.f32 %v107, %v144
  %v176 = vmul.f32 %v108, %v144
  %v177 = vmul.f32 %v109, %v144
  %v178 = vmul.f32 %v110, %v144
  %v179 = vmul.f32 %v111, %v144
  %v180 = vmul.f32 %v112, %v144
  %v181 = vmul.f32 %v113, %v144
  %v182 = vmul.f32 %v114, %v144
  %v183 = vmul.f32 %v115, %v144
  %v184 = vmul.f32 %v116, %v144
  %v185 = vmul.f32 %v117, %v144
  %v186 = vmul.f32 %v118, %v144
  %v187 = vmul.f32 %v119, %v144
  %v188 = vmul.f32 %v120, %v144
  %v189 = vmul.f32 %v121, %v144
  %v190 = vmul.f32 %v122, %v144
  %v191 = vmul.f32 %v123, %v144
  %v192 = vmul.f32 %v124, %v144
  %v193 = vmul.f32 %v125, %v144
  %v194 = vmul.f32 %v126, %v144
  %v195 = vmul.f32 %v127, %v144
  %v196 = vmul.f32 %v128, %v144
  %v197 = vmul.f32 %v129, %v144
  %v198 = vmul.f32 %v130, %v144
  %v199 = vmul.f32 %v131, %v144
  %v200 = vmul.f32 %v132, %v144
  %v201 = vmul.f32 %v133, %v144
  %v202 = vmul.f32 %v134, %v144
  %v203 = vmul.f32 %v135, %v144
  %v204 = vmul.f32 %v136, %v144
  %v205 = vmul.f32 %v137, %v144
  %v206 = vmul.f32 %v138, %v144
  %v207 = vmul.f32 %v139, %v144
  %v208 = vmul.f32 %v140, %v144
  %v209 = vmul.f32 %v141, %v144
  %v210 = vld [vmem:[%s2] sm:$0x1]
  %v212 = vperm.slane %v210, 0
  %v214 = vadd.f32 %v146, %v212
  %v215 = vadd.f32 %v147, %v212
  %v216 = vadd.f32 %v148, %v212
  %v217 = vadd.f32 %v149, %v212
  %v218 = vadd.f32 %v150, %v212
  %v219 = vadd.f32 %v151, %v212
  %v220 = vadd.f32 %v152, %v212
  %v221 = vadd.f32 %v153, %v212
  %v222 = vadd.f32 %v154, %v212
  %v223 = vadd.f32 %v155, %v212
  %v224 = vadd.f32 %v156, %v212
  %v225 = vadd.f32 %v157, %v212
  %v226 = vadd.f32 %v158, %v212
  %v227 = vadd.f32 %v159, %v212
  %v228 = vadd.f32 %v160, %v212
  %v229 = vadd.f32 %v161, %v212
  %v230 = vadd.f32 %v162, %v212
  %v231 = vadd.f32 %v163, %v212
  %v232 = vadd.f32 %v164, %v212
  %v233 = vadd.f32 %v165, %v212
  %v234 = vadd.f32 %v166, %v212
  %v235 = vadd.f32 %v167, %v212
  %v236 = vadd.f32 %v168, %v212
  %v237 = vadd.f32 %v169, %v212
  %v238 = vadd.f32 %v170, %v212
  %v239 = vadd.f32 %v171, %v212
  %v240 = vadd.f32 %v172, %v212
  %v241 = vadd.f32 %v173, %v212
  %v242 = vadd.f32 %v174, %v212
  %v243 = vadd.f32 %v175, %v212
  %v244 = vadd.f32 %v176, %v212
  %v245 = vadd.f32 %v177, %v212
  %v246 = vadd.f32 %v178, %v212
  %v247 = vadd.f32 %v179, %v212
  %v248 = vadd.f32 %v180, %v212
  %v249 = vadd.f32 %v181, %v212
  %v250 = vadd.f32 %v182, %v212
  %v251 = vadd.f32 %v183, %v212
  %v252 = vadd.f32 %v184, %v212
  %v253 = vadd.f32 %v185, %v212
  %v254 = vadd.f32 %v186, %v212
  %v255 = vadd.f32 %v187, %v212
  %v256 = vadd.f32 %v188, %v212
  %v257 = vadd.f32 %v189, %v212
  %v258 = vadd.f32 %v190, %v212
  %v259 = vadd.f32 %v191, %v212
  %v260 = vadd.f32 %v192, %v212
  %v261 = vadd.f32 %v193, %v212
  %v262 = vadd.f32 %v194, %v212
  %v263 = vadd.f32 %v195, %v212
  %v264 = vadd.f32 %v196, %v212
  %v265 = vadd.f32 %v197, %v212
  %v266 = vadd.f32 %v198, %v212
  %v267 = vadd.f32 %v199, %v212
  %v268 = vadd.f32 %v200, %v212
  %v269 = vadd.f32 %v201, %v212
  %v270 = vadd.f32 %v202, %v212
  %v271 = vadd.f32 %v203, %v212
  %v272 = vadd.f32 %v204, %v212
  %v273 = vadd.f32 %v205, %v212
  %v274 = vadd.f32 %v206, %v212
  %v275 = vadd.f32 %v207, %v212
  %v276 = vadd.f32 %v208, %v212
  %v277 = vadd.f32 %v209, %v212
  %v278 = vpack.c.bf16 %v214, %v214
  %v279 = vpack.c.bf16 %v215, %v215
  %v280 = vpack.c.bf16 %v216, %v216
  %v281 = vpack.c.bf16 %v217, %v217
  %v282 = vpack.c.bf16 %v218, %v218
  %v283 = vpack.c.bf16 %v219, %v219
  %v284 = vpack.c.bf16 %v220, %v220
  %v285 = vpack.c.bf16 %v221, %v221
  %v286 = vpack.c.bf16 %v222, %v222
  %v287 = vpack.c.bf16 %v223, %v223
  %v288 = vpack.c.bf16 %v224, %v224
  %v289 = vpack.c.bf16 %v225, %v225
  %v290 = vpack.c.bf16 %v226, %v226
  %v291 = vpack.c.bf16 %v227, %v227
  %v292 = vpack.c.bf16 %v228, %v228
  %v293 = vpack.c.bf16 %v229, %v229
  %v294 = vpack.c.bf16 %v230, %v230
  %v295 = vpack.c.bf16 %v231, %v231
  %v296 = vpack.c.bf16 %v232, %v232
  %v297 = vpack.c.bf16 %v233, %v233
  %v298 = vpack.c.bf16 %v234, %v234
  %v299 = vpack.c.bf16 %v235, %v235
  %v300 = vpack.c.bf16 %v236, %v236
  %v301 = vpack.c.bf16 %v237, %v237
  %v302 = vpack.c.bf16 %v238, %v238
  %v303 = vpack.c.bf16 %v239, %v239
  %v304 = vpack.c.bf16 %v240, %v240
  %v305 = vpack.c.bf16 %v241, %v241
  %v306 = vpack.c.bf16 %v242, %v242
  %v307 = vpack.c.bf16 %v243, %v243
  %v308 = vpack.c.bf16 %v244, %v244
  %v309 = vpack.c.bf16 %v245, %v245
  %v310 = vpack.c.bf16 %v246, %v246
  %v311 = vpack.c.bf16 %v247, %v247
  %v312 = vpack.c.bf16 %v248, %v248
  %v313 = vpack.c.bf16 %v249, %v249
  %v314 = vpack.c.bf16 %v250, %v250
  %v315 = vpack.c.bf16 %v251, %v251
  %v316 = vpack.c.bf16 %v252, %v252
  %v317 = vpack.c.bf16 %v253, %v253
  %v318 = vpack.c.bf16 %v254, %v254
  %v319 = vpack.c.bf16 %v255, %v255
  %v320 = vpack.c.bf16 %v256, %v256
  %v321 = vpack.c.bf16 %v257, %v257
  %v322 = vpack.c.bf16 %v258, %v258
  %v323 = vpack.c.bf16 %v259, %v259
  %v324 = vpack.c.bf16 %v260, %v260
  %v325 = vpack.c.bf16 %v261, %v261
  %v326 = vpack.c.bf16 %v262, %v262
  %v327 = vpack.c.bf16 %v263, %v263
  %v328 = vpack.c.bf16 %v264, %v264
  %v329 = vpack.c.bf16 %v265, %v265
  %v330 = vpack.c.bf16 %v266, %v266
  %v331 = vpack.c.bf16 %v267, %v267
  %v332 = vpack.c.bf16 %v268, %v268
  %v333 = vpack.c.bf16 %v269, %v269
  %v334 = vpack.c.bf16 %v270, %v270
  %v335 = vpack.c.bf16 %v271, %v271
  %v336 = vpack.c.bf16 %v272, %v272
  %v337 = vpack.c.bf16 %v273, %v273
  %v338 = vpack.c.bf16 %v274, %v274
  %v339 = vpack.c.bf16 %v275, %v275
  %v340 = vpack.c.bf16 %v276, %v276
  %v341 = vpack.c.bf16 %v277, %v277
  %342 = vst [vmem:[%s3] sm:$0xf] %v278
  %343 = vst [vmem:[%s3 + $0x4] sm:$0xf] %v279
  %344 = vst [vmem:[%s3 + $0x8] sm:$0xf] %v280
  %345 = vst [vmem:[%s3 + $0xc] sm:$0xf] %v281
  %346 = vst [vmem:[%s3 + $0x10] sm:$0xf] %v282
  %347 = vst [vmem:[%s3 + $0x14] sm:$0xf] %v283
  %348 = vst [vmem:[%s3 + $0x18] sm:$0xf] %v284
  %349 = vst [vmem:[%s3 + $0x1c] sm:$0xf] %v285
  %350 = vst [vmem:[%s3 + $0x20] sm:$0xf] %v286
  %351 = vst [vmem:[%s3 + $0x24] sm:$0xf] %v287
  %352 = vst [vmem:[%s3 + $0x28] sm:$0xf] %v288
  %353 = vst [vmem:[%s3 + $0x2c] sm:$0xf] %v289
  %354 = vst [vmem:[%s3 + $0x30] sm:$0xf] %v290
  %355 = vst [vmem:[%s3 + $0x34] sm:$0xf] %v291
  %356 = vst [vmem:[%s3 + $0x38] sm:$0xf] %v292
  %357 = vst [vmem:[%s3 + $0x3c] sm:$0xf] %v293
  %358 = vst [vmem:[%s3 + $0x40] sm:$0xf] %v294
  %359 = vst [vmem:[%s3 + $0x44] sm:$0xf] %v295
  %360 = vst [vmem:[%s3 + $0x48] sm:$0xf] %v296
  %361 = vst [vmem:[%s3 + $0x4c] sm:$0xf] %v297
  %362 = vst [vmem:[%s3 + $0x50] sm:$0xf] %v298
  %363 = vst [vmem:[%s3 + $0x54] sm:$0xf] %v299
  %364 = vst [vmem:[%s3 + $0x58] sm:$0xf] %v300
  %365 = vst [vmem:[%s3 + $0x5c] sm:$0xf] %v301
  %366 = vst [vmem:[%s3 + $0x60] sm:$0xf] %v302
  %367 = vst [vmem:[%s3 + $0x64] sm:$0xf] %v303
  %368 = vst [vmem:[%s3 + $0x68] sm:$0xf] %v304
  %369 = vst [vmem:[%s3 + $0x6c] sm:$0xf] %v305
  %370 = vst [vmem:[%s3 + $0x70] sm:$0xf] %v306
  %371 = vst [vmem:[%s3 + $0x74] sm:$0xf] %v307
  %372 = vst [vmem:[%s3 + $0x78] sm:$0xf] %v308
  %373 = vst [vmem:[%s3 + $0x7c] sm:$0xf] %v309
  %374 = vst [vmem:[%s3 + $0x80] sm:$0xf] %v310
  %375 = vst [vmem:[%s3 + $0x84] sm:$0xf] %v311
  %376 = vst [vmem:[%s3 + $0x88] sm:$0xf] %v312
  %377 = vst [vmem:[%s3 + $0x8c] sm:$0xf] %v313
  %378 = vst [vmem:[%s3 + $0x90] sm:$0xf] %v314
  %379 = vst [vmem:[%s3 + $0x94] sm:$0xf] %v315
  %380 = vst [vmem:[%s3 + $0x98] sm:$0xf] %v316
  %381 = vst [vmem:[%s3 + $0x9c] sm:$0xf] %v317
  %382 = vst [vmem:[%s3 + $0xa0] sm:$0xf] %v318
  %383 = vst [vmem:[%s3 + $0xa4] sm:$0xf] %v319
  %384 = vst [vmem:[%s3 + $0xa8] sm:$0xf] %v320
  %385 = vst [vmem:[%s3 + $0xac] sm:$0xf] %v321
  %386 = vst [vmem:[%s3 + $0xb0] sm:$0xf] %v322
  %387 = vst [vmem:[%s3 + $0xb4] sm:$0xf] %v323
  %388 = vst [vmem:[%s3 + $0xb8] sm:$0xf] %v324
  %389 = vst [vmem:[%s3 + $0xbc] sm:$0xf] %v325
  %390 = vst [vmem:[%s3 + $0xc0] sm:$0xf] %v326
  %391 = vst [vmem:[%s3 + $0xc4] sm:$0xf] %v327
  %392 = vst [vmem:[%s3 + $0xc8] sm:$0xf] %v328
  %393 = vst [vmem:[%s3 + $0xcc] sm:$0xf] %v329
  %394 = vst [vmem:[%s3 + $0xd0] sm:$0xf] %v330
  %395 = vst [vmem:[%s3 + $0xd4] sm:$0xf] %v331
  %396 = vst [vmem:[%s3 + $0xd8] sm:$0xf] %v332
  %397 = vst [vmem:[%s3 + $0xdc] sm:$0xf] %v333
  %398 = vst [vmem:[%s3 + $0xe0] sm:$0xf] %v334
  %399 = vst [vmem:[%s3 + $0xe4] sm:$0xf] %v335
  %400 = vst [vmem:[%s3 + $0xe8] sm:$0xf] %v336
  %401 = vst [vmem:[%s3 + $0xec] sm:$0xf] %v337
  %402 = vst [vmem:[%s3 + $0xf0] sm:$0xf] %v338
  %403 = vst [vmem:[%s3 + $0xf4] sm:$0xf] %v339
  %404 = vst [vmem:[%s3 + $0xf8] sm:$0xf] %v340
  %405 = vst [vmem:[%s3 + $0xfc] sm:$0xf] %v341
  // Predicated region
  $region14: #{_lambda_.5} parent=0 // pred_check
    _
  $region15: #{_lambda_.5} parent=0 // pred_check_branch
    %407 = sbr.rel (0) target = $region17
  $region16: #{_lambda_.5} parent=0 // pred_region
    _
  $region17: #{_lambda_.5} parent=0 // pred_fallthru
    _
  // Predicated region
  $region18: #{_lambda_.5} parent=0 // pred_check
    _
  $region19: #{_lambda_.5} parent=0 // pred_check_branch
    %409 = sbr.rel (0) target = $region21
  $region20: #{_lambda_.5} parent=0 // pred_region
    _
  $region21: #{_lambda_.5} parent=0 // pred_fallthru
    _

// kernel: _lambda_.4
$region0: #{_lambda_.4}
  #allocation0 [shape = 'u32[]', space=smem, size = 0x4, offset = 0x4, fixed_abs, tag = 'smem constant byte address 0x4 - core index']
  #allocation1 [shape = 'u32[72,128]{1,0:T(1,128)}', space=vmem, size = 0x9000, scoped, tag = 'internal scratch']
  %s0 = inlined_call_operand.vmem [shape: bf16[2,18,18,128], index: 0, kind: input, shape index: {}]
  %s1 = inlined_call_operand.vmem [shape: bf16[1152,128], index: 1, kind: input, shape index: {}]
  %s2 = inlined_call_operand.vmem [shape: f32[1,1,128], index: 2, kind: input, shape index: {}]
  %s3 = inlined_call_operand.vmem [shape: f32[1,1,128], index: 3, kind: input, shape index: {}]
  %s4 = inlined_call_operand.vmem [shape: bf16[2,16,16,128], index: 4, kind: output, shape index: {0}]
  %s5 = inlined_call_operand.vmem [shape: f32[2,1,128], index: 5, kind: output, shape index: {1}]
  %s6 = inlined_call_operand.vmem [shape: f32[2,1,128], index: 6, kind: output, shape index: {2}]
  %7 = xla_tuple %s4, %s5, %s6
  %s8 = sld [smem:[#allocation0]]
  $region65: #{_lambda_.4} parent=0
    _
  %s10 = ssub.s32 1, %s8
  %s11 = scalar_select 0, %s10, %s8
  loop: start=0, step=1, limit=4
  $region2: #{_lambda_.4} parent=0 // loop_pre_header
    _
  $region3: #{_lambda_.4} parent=0 // loop_header
    %s13 = sphi 0, %s17
    %p14 = scmp.ge.s32.totalorder %s13, 4
    %s20 = sphi 0, %s32
    %s21 = sphi 0, %s28
    %s22 = sphi 0, %s20
    %s23 = sphi 0, %s21
    %s24 = sphi 0, %s22
    %s25 = sphi 0, %s23
    %s35 = sphi 0, %s37
    %s38 = sphi 0, %s35
    %s39 = sphi 0, %s38
    %s55 = sphi 0, %s39
    %s61 = sphi 0, %s63
    %s64 = sphi 0, %s61
    %s65 = sphi 0, %s64
    %s81 = sphi 0, %s65
    %s85 = sphi 0, %s85
    %s87 = sphi 0, %s85
    %s88 = sphi 0, %s87
    %s102 = sphi 0, %s88
    %s106 = sphi 0, %s106
    %s108 = sphi 0, %s106
    %s109 = sphi 0, %s108
    %s123 = sphi 0, %s109
    %s131 = sphi 0, %s133
    %s134 = sphi 0, %s131
    %s135 = sphi 0, %s134
    %s151 = sphi 0, %s135
    %s159 = sphi 0, %s161
    %s162 = sphi 0, %s159
    %s163 = sphi 0, %s162
    %s179 = sphi 0, %s163
    %s187 = sphi 0, %s189
    %s190 = sphi 0, %s187
    %s191 = sphi 0, %s190
    %s207 = sphi 0, %s191
  $region4: #{_lambda_.4} parent=0 // loop_header_branch
    %16 = sbr.rel (%p14) target = $region8
  $region5: #{_lambda_.4} parent=0 // loop_body
    %s18 = ssub.s32 %s13, 1
    %s19 = ssub.s32 %s13, 2
    %s26 = sadd.s32 1, %s21
    %p27 = scmp.ge.s32.totalorder %s26, 1
    %s28 = scalar_select %p27, 0, %s26
    %s29 = sadd.s32 1, %s20
    %s30 = scalar_select %p27, %s29, %s20
    %p31 = scmp.ge.s32.totalorder %s30, 2
    %s32 = scalar_select %p31, 0, %s30
    %s33 = ssub.s32 %s20, %s32
    %p34 = scmp.eq.s32.totalorder %s33, 0
    %s36 = sadd.s32 %s35, 1
    %s37 = scalar_select %p34, %s35, %s36
    %p40 = pneg %p34
    %p41 = scmp.eq.s32.totalorder %s13, 1
    %p42 = por %p40, %p41
    %p43 = scmp.ne.s32.totalorder %s35, %s38
    %p44 = scmp.eq.s32.totalorder %s13, 0
    %p45 = por %p43, %p44
    %p46 = scmp.ne.s32.totalorder %s35, %s38
    %p47 = scmp.eq.s32.totalorder %s18, 1
    %p48 = por %p46, %p47
    %p49 = scmp.ne.s32.totalorder %s38, %s39
    %p50 = scmp.eq.s32.totalorder %s18, 0
    %p51 = por %p49, %p50
    %p52 = scmp.ne.s32.totalorder %s38, %s39
    %p53 = scmp.eq.s32.totalorder %s19, 1
    %p54 = por %p52, %p53
    %p56 = scmp.ne.s32.totalorder %s39, %s55
    %p57 = scmp.eq.s32.totalorder %s19, 0
    %p58 = por %p56, %p57
    %s59 = ssub.s32 %s21, %s28
    %p60 = scmp.eq.s32.totalorder %s59, 0
    %s62 = sadd.s32 %s61, 1
    %s63 = scalar_select %p60, %s61, %s62
    %p66 = pneg %p60
    %p67 = scmp.eq.s32.totalorder %s13, 1
    %p68 = por %p66, %p67
    %p69 = scmp.ne.s32.totalorder %s61, %s64
    %p70 = scmp.eq.s32.totalorder %s13, 0
    %p71 = por %p69, %p70
    %p72 = scmp.ne.s32.totalorder %s61, %s64
    %p73 = scmp.eq.s32.totalorder %s18, 1
    %p74 = por %p72, %p73
    %p75 = scmp.ne.s32.totalorder %s64, %s65
    %p76 = scmp.eq.s32.totalorder %s18, 0
    %p77 = por %p75, %p76
    %p78 = scmp.ne.s32.totalorder %s64, %s65
    %p79 = scmp.eq.s32.totalorder %s19, 1
    %p80 = por %p78, %p79
    %p82 = scmp.ne.s32.totalorder %s65, %s81
    %p83 = scmp.eq.s32.totalorder %s19, 0
    %p84 = por %p82, %p83
    %s86 = sadd.s32 %s85, 1
    %p89 = scmp.eq.s32.totalorder %s13, 1
    %p90 = scmp.ne.s32.totalorder %s85, %s87
    %p91 = scmp.eq.s32.totalorder %s13, 0
    %p92 = por %p90, %p91
    %p93 = scmp.ne.s32.totalorder %s85, %s87
    %p94 = scmp.eq.s32.totalorder %s18, 1
    %p95 = por %p93, %p94
    %p96 = scmp.ne.s32.totalorder %s87, %s88
    %p97 = scmp.eq.s32.totalorder %s18, 0
    %p98 = por %p96, %p97
    %p99 = scmp.ne.s32.totalorder %s87, %s88
    %p100 = scmp.eq.s32.totalorder %s19, 1
    %p101 = por %p99, %p100
    %p103 = scmp.ne.s32.totalorder %s88, %s102
    %p104 = scmp.eq.s32.totalorder %s19, 0
    %p105 = por %p103, %p104
    %s107 = sadd.s32 %s106, 1
    %p110 = scmp.eq.s32.totalorder %s13, 1
    %p111 = scmp.ne.s32.totalorder %s106, %s108
    %p112 = scmp.eq.s32.totalorder %s13, 0
    %p113 = por %p111, %p112
    %p114 = scmp.ne.s32.totalorder %s106, %s108
    %p115 = scmp.eq.s32.totalorder %s18, 1
    %p116 = por %p114, %p115
    %p117 = scmp.ne.s32.totalorder %s108, %s109
    %p118 = scmp.eq.s32.totalorder %s18, 0
    %p119 = por %p117, %p118
    %p120 = scmp.ne.s32.totalorder %s108, %s109
    %p121 = scmp.eq.s32.totalorder %s19, 1
    %p122 = por %p120, %p121
    %p124 = scmp.ne.s32.totalorder %s109, %s123
    %p125 = scmp.eq.s32.totalorder %s19, 0
    %p126 = por %p124, %p125
    %s127 = ssub.s32 %s20, %s32
    %s128 = ssub.s32 %s21, %s28
    %s129 = sor.u32 %s127, %s128
    %p130 = scmp.eq.s32.totalorder %s129, 0
    %s132 = sadd.s32 %s131, 1
    %s133 = scalar_select %p130, %s131, %s132
    %p136 = pneg %p130
    %p137 = scmp.eq.s32.totalorder %s13, 1
    %p138 = por %p136, %p137
    %p139 = scmp.ne.s32.totalorder %s131, %s134
    %p140 = scmp.eq.s32.totalorder %s13, 0
    %p141 = por %p139, %p140
    %p142 = scmp.ne.s32.totalorder %s131, %s134
    %p143 = scmp.eq.s32.totalorder %s18, 1
    %p144 = por %p142, %p143
    %p145 = scmp.ne.s32.totalorder %s134, %s135
    %p146 = scmp.eq.s32.totalorder %s18, 0
    %p147 = por %p145, %p146
    %p148 = scmp.ne.s32.totalorder %s134, %s135
    %p149 = scmp.eq.s32.totalorder %s19, 1
    %p150 = por %p148, %p149
    %p152 = scmp.ne.s32.totalorder %s135, %s151
    %p153 = scmp.eq.s32.totalorder %s19, 0
    %p154 = por %p152, %p153
    %s155 = ssub.s32 %s20, %s32
    %s156 = ssub.s32 %s21, %s28
    %s157 = sor.u32 %s155, %s156
    %p158 = scmp.eq.s32.totalorder %s157, 0
    %s160 = sadd.s32 %s159, 1
    %s161 = scalar_select %p158, %s159, %s160
    %p164 = pneg %p158
    %p165 = scmp.eq.s32.totalorder %s13, 1
    %p166 = por %p164, %p165
    %p167 = scmp.ne.s32.totalorder %s159, %s162
    %p168 = scmp.eq.s32.totalorder %s13, 0
    %p169 = por %p167, %p168
    %p170 = scmp.ne.s32.totalorder %s159, %s162
    %p171 = scmp.eq.s32.totalorder %s18, 1
    %p172 = por %p170, %p171
    %p173 = scmp.ne.s32.totalorder %s162, %s163
    %p174 = scmp.eq.s32.totalorder %s18, 0
    %p175 = por %p173, %p174
    %p176 = scmp.ne.s32.totalorder %s162, %s163
    %p177 = scmp.eq.s32.totalorder %s19, 1
    %p178 = por %p176, %p177
    %p180 = scmp.ne.s32.totalorder %s163, %s179
    %p181 = scmp.eq.s32.totalorder %s19, 0
    %p182 = por %p180, %p181
    %s183 = ssub.s32 %s20, %s32
    %s184 = ssub.s32 %s21, %s28
    %s185 = sor.u32 %s183, %s184
    %p186 = scmp.eq.s32.totalorder %s185, 0
    %s188 = sadd.s32 %s187, 1
    %s189 = scalar_select %p186, %s187, %s188
    %p192 = pneg %p186
    %p193 = scmp.eq.s32.totalorder %s13, 1
    %p194 = por %p192, %p193
    %p195 = scmp.ne.s32.totalorder %s187, %s190
    %p196 = scmp.eq.s32.totalorder %s13, 0
    %p197 = por %p195, %p196
    %p198 = scmp.ne.s32.totalorder %s187, %s190
    %p199 = scmp.eq.s32.totalorder %s18, 1
    %p200 = por %p198, %p199
    %p201 = scmp.ne.s32.totalorder %s190, %s191
    %p202 = scmp.eq.s32.totalorder %s18, 0
    %p203 = por %p201, %p202
    %p204 = scmp.ne.s32.totalorder %s190, %s191
    %p205 = scmp.eq.s32.totalorder %s19, 1
    %p206 = por %p204, %p205
    %p208 = scmp.ne.s32.totalorder %s191, %s207
    %p209 = scmp.eq.s32.totalorder %s19, 0
    %p210 = por %p208, %p209
    %p211 = scmp.le.s32.totalorder 1, %s13
    %p212 = scmp.lt.s32.totalorder %s13, 3
    %p213 = pnand %p211, %p212
    %p214 = pneg %p213
    // Predicated region
    $region9: #{_lambda_.4} parent=5 // pred_check
      _
    $region10: #{_lambda_.4} parent=5 // pred_check_branch
      %216 = sbr.rel (%p213) target = $region12
    $region11: #{_lambda_.4} parent=5 // pred_region
      %s217 = ssub.s32 %s13, 1
      // Predicated region
      $region13: #{_lambda_.4} parent=11 // pred_check
        %p218 = pneg %p77
      $region14: #{_lambda_.4} parent=11 // pred_check_branch
        %220 = sbr.rel (%p218) target = $region16
      $region15: #{_lambda_.4} parent=11 // pred_region
        %p221 = scmp.lt.s32.totalorder %s23, 0
        %s222 = scalar_select %p221, %s23, 0
        %s223 = smul.addr %s222, 4
        %s224 = scalar_lea.vmem %s1, %s223
      $region16: #{_lambda_.4} parent=11 // pred_fallthru
        _
      // Predicated region
      $region17: #{_lambda_.4} parent=11 // pred_check
        %p225 = pneg %p98
      $region18: #{_lambda_.4} parent=11 // pred_check_branch
        %227 = sbr.rel (%p225) target = $region20
      $region19: #{_lambda_.4} parent=11 // pred_region
        _
      $region20: #{_lambda_.4} parent=11 // pred_fallthru
        _
      // Predicated region
      $region21: #{_lambda_.4} parent=11 // pred_check
        %p228 = pneg %p119
      $region22: #{_lambda_.4} parent=11 // pred_check_branch
        %230 = sbr.rel (%p228) target = $region24
      $region23: #{_lambda_.4} parent=11 // pred_region
        _
      $region24: #{_lambda_.4} parent=11 // pred_fallthru
        _
    $region12: #{_lambda_.4} parent=5 // pred_fallthru
      _
    %p231 = scmp.lt.s32.totalorder %s13, 2
    // Predicated region
    $region25: #{_lambda_.4} parent=5 // pred_check
      %p232 = pneg %p231
    $region26: #{_lambda_.4} parent=5 // pred_check_branch
      %234 = sbr.rel (%p232) target = $region28
    $region27: #{_lambda_.4} parent=5 // pred_region
      // Predicated region
      $region29: #{_lambda_.4} parent=27 // pred_check
        %p235 = pneg %p45
      $region30: #{_lambda_.4} parent=27 // pred_check_branch
        %237 = sbr.rel (%p235) target = $region32
      $region31: #{_lambda_.4} parent=27 // pred_region
        %p238 = scmp.lt.s32.totalorder %s20, 1
        %s239 = scalar_select %p238, %s20, 1
        %s240 = smul.addr %s239, 54
        %s241 = smul.addr %s240, 4
        %s242 = scalar_lea.vmem %s0, %s241
      $region32: #{_lambda_.4} parent=27 // pred_fallthru
        _
    $region28: #{_lambda_.4} parent=5 // pred_fallthru
      _
    %p243 = scmp.le.s32.totalorder 1, %s13
    %p244 = scmp.lt.s32.totalorder %s13, 3
    %p245 = pnand %p243, %p244
    %p246 = pneg %p245
    // Predicated region
    $region33: #{_lambda_.4} parent=5 // pred_check
      _
    $region34: #{_lambda_.4} parent=5 // pred_check_branch
      %248 = sbr.rel (%p245) target = $region36
    $region35: #{_lambda_.4} parent=5 // pred_region
      %s249 = ssub.s32 %s13, 1
      %p250 = scmp.lt.s32.totalorder %s22, 1
      %s251 = scalar_select %p250, %s22, 1
      %s252 = smul.addr %s251, 54
      %s253 = smul.addr %s252, 4
      %s254 = scalar_lea.vmem %s0, %s253
      %p255 = pneg %p51
      %p256 = pneg %p48
      %p257 = scmp.lt.s32.totalorder %s23, 0
      %s258 = scalar_select %p257, %s23, 0
      %s259 = smul.addr %s258, 4
      %s260 = scalar_lea.vmem %s1, %s259
      %p261 = pneg %p77
      %p262 = pneg %p74
      %p263 = pneg %p98
      %p264 = pneg %p95
      %p265 = pneg %p119
      %p266 = pneg %p116
      %p267 = pneg %p147
      %p268 = pneg %p144
      %p269 = scmp.lt.s32.totalorder %s22, 1
      %s270 = scalar_select %p269, %s22, 1
      %p271 = scmp.lt.s32.totalorder %s23, 0
      %s272 = scalar_select %p271, %s23, 0
      %s273 = smul.addr %s270, 32
      %s274 = sadd.s32 %s272, %s273
      %s275 = smul.addr %s274, 4
      %s276 = scalar_lea.vmem %s4, %s275
      %p277 = pneg %p175
      %p278 = pneg %p172
      %p279 = scmp.lt.s32.totalorder %s22, 1
      %s280 = scalar_select %p279, %s22, 1
      %p281 = scmp.lt.s32.totalorder %s23, 0
      %s282 = scalar_select %p281, %s23, 0
      %s283 = sadd.s32 %s282, %s280
      %s284 = scalar_lea.vmem %s5, %s283
      %p285 = pneg %p203
      %p286 = pneg %p200
      %p287 = scmp.lt.s32.totalorder %s22, 1
      %s288 = scalar_select %p287, %s22, 1
      %p289 = scmp.lt.s32.totalorder %s23, 0
      %s290 = scalar_select %p289, %s23, 0
      %s291 = sadd.s32 %s290, %s288
      %s292 = scalar_lea.vmem %s6, %s291
      %p293 = scmp.lt.s32.totalorder %s22, 1
      %s294 = scalar_select %p293, %s22, 1
      %s295 = smul.addr %s294, 54
      %s296 = smul.addr %s295, 4
      %s297 = scalar_lea.vmem %s0, %s296
      %p298 = scmp.lt.s32.totalorder %s23, 0
      %s299 = scalar_select %p298, %s23, 0
      %s300 = smul.addr %s299, 4
      %s301 = scalar_lea.vmem %s1, %s300
      %p302 = scmp.lt.s32.totalorder %s22, 1
      %s303 = scalar_select %p302, %s22, 1
      %p304 = scmp.lt.s32.totalorder %s23, 0
      %s305 = scalar_select %p304, %s23, 0
      %s306 = smul.addr %s303, 32
      %s307 = sadd.s32 %s305, %s306
      %s308 = smul.addr %s307, 4
      %s309 = scalar_lea.vmem %s4, %s308
      %p310 = scmp.lt.s32.totalorder %s22, 1
      %s311 = scalar_select %p310, %s22, 1
      %p312 = scmp.lt.s32.totalorder %s23, 0
      %s313 = scalar_select %p312, %s23, 0
      %s314 = sadd.s32 %s313, %s311
      %s315 = scalar_lea.vmem %s5, %s314
      %p316 = scmp.lt.s32.totalorder %s22, 1
      %s317 = scalar_select %p316, %s22, 1
      %p318 = scmp.lt.s32.totalorder %s23, 0
      %s319 = scalar_select %p318, %s23, 0
      %s320 = sadd.s32 %s319, %s317
      %s321 = scalar_lea.vmem %s6, %s320
      %v322 = vld [vmem:[%s297] sm:$0xf]
      %v323 = vld [vmem:[%s297 + $0x4] sm:$0xf]
      %v324 = vld [vmem:[%s297 + $0x8] sm:$0x1]
      %v325 = vld [vmem:[%s297 + $0xc] sm:$0xf]
      %v326 = vld [vmem:[%s297 + $0x10] sm:$0xf]
      %v327 = vld [vmem:[%s297 + $0x14] sm:$0x1]
      %v328 = vld [vmem:[%s297 + $0x18] sm:$0xf]
      %v329 = vld [vmem:[%s297 + $0x1c] sm:$0xf]
      %v330 = vld [vmem:[%s297 + $0x20] sm:$0x1]
      %v331 = vld [vmem:[%s297 + $0x24] sm:$0xf]
      %v332 = vld [vmem:[%s297 + $0x28] sm:$0xf]
      %v333 = vld [vmem:[%s297 + $0x2c] sm:$0x1]
      %v334 = vld [vmem:[%s297 + $0x30] sm:$0xf]
      %v335 = vld [vmem:[%s297 + $0x34] sm:$0xf]
      %v336 = vld [vmem:[%s297 + $0x38] sm:$0x1]
      %v337 = vld [vmem:[%s297 + $0x3c] sm:$0xf]
      %v338 = vld [vmem:[%s297 + $0x40] sm:$0xf]
      %v339 = vld [vmem:[%s297 + $0x44] sm:$0x1]
      %v340 = vld [vmem:[%s297 + $0x48] sm:$0xf]
      %v341 = vld [vmem:[%s297 + $0x4c] sm:$0xf]
      %v342 = vld [vmem:[%s297 + $0x50] sm:$0x1]
      %v343 = vld [vmem:[%s297 + $0x54] sm:$0xf]
      %v344 = vld [vmem:[%s297 + $0x58] sm:$0xf]
      %v345 = vld [vmem:[%s297 + $0x5c] sm:$0x1]
      %v346 = vld [vmem:[%s297 + $0x60] sm:$0xf]
      %v347 = vld [vmem:[%s297 + $0x64] sm:$0xf]
      %v348 = vld [vmem:[%s297 + $0x68] sm:$0x1]
      %v349 = vld [vmem:[%s297 + $0x6c] sm:$0xf]
      %v350 = vld [vmem:[%s297 + $0x70] sm:$0xf]
      %v351 = vld [vmem:[%s297 + $0x74] sm:$0x1]
      %v352 = vld [vmem:[%s297 + $0x78] sm:$0xf]
      %v353 = vld [vmem:[%s297 + $0x7c] sm:$0xf]
      %v354 = vld [vmem:[%s297 + $0x80] sm:$0x1]
      %v355 = vld [vmem:[%s297 + $0x84] sm:$0xf]
      %v356 = vld [vmem:[%s297 + $0x88] sm:$0xf]
      %v357 = vld [vmem:[%s297 + $0x8c] sm:$0x1]
      %v358 = vld [vmem:[%s297 + $0x90] sm:$0xf]
      %v359 = vld [vmem:[%s297 + $0x94] sm:$0xf]
      %v360 = vld [vmem:[%s297 + $0x98] sm:$0x1]
      %v361 = vld [vmem:[%s297 + $0x9c] sm:$0xf]
      %v362 = vld [vmem:[%s297 + $0xa0] sm:$0xf]
      %v363 = vld [vmem:[%s297 + $0xa4] sm:$0x1]
      %v364 = vld [vmem:[%s297 + $0xa8] sm:$0xf]
      %v365 = vld [vmem:[%s297 + $0xac] sm:$0xf]
      %v366 = vld [vmem:[%s297 + $0xb0] sm:$0x1]
      %v367 = vld [vmem:[%s297 + $0xb4] sm:$0xf]
      %v368 = vld [vmem:[%s297 + $0xb8] sm:$0xf]
      %v369 = vld [vmem:[%s297 + $0xbc] sm:$0x1]
      %v370 = vld [vmem:[%s297 + $0xc0] sm:$0xf]
      %v371 = vld [vmem:[%s297 + $0xc4] sm:$0xf]
      %v372 = vld [vmem:[%s297 + $0xc8] sm:$0x1]
      %v373 = vld [vmem:[%s297 + $0xcc] sm:$0xf]
      %v374 = vld [vmem:[%s297 + $0xd0] sm:$0xf]
      %v375 = vld [vmem:[%s297 + $0xd4] sm:$0x1]
      %v376 = vunpack.c.l.bf16 %v322
      %v377 = vunpack.c.l.bf16 %v323
      %v378 = vunpack.c.l.bf16 %v324
      %v379 = vunpack.c.l.bf16 %v325
      %v380 = vunpack.c.l.bf16 %v326
      %v381 = vunpack.c.l.bf16 %v327
      %v382 = vunpack.c.l.bf16 %v328
      %v383 = vunpack.c.l.bf16 %v329
      %v384 = vunpack.c.l.bf16 %v330
      %v385 = vunpack.c.l.bf16 %v331
      %v386 = vunpack.c.l.bf16 %v332
      %v387 = vunpack.c.l.bf16 %v333
      %v388 = vunpack.c.l.bf16 %v334
      %v389 = vunpack.c.l.bf16 %v335
      %v390 = vunpack.c.l.bf16 %v336
      %v391 = vunpack.c.l.bf16 %v337
      %v392 = vunpack.c.l.bf16 %v338
      %v393 = vunpack.c.l.bf16 %v339
      %v394 = vunpack.c.l.bf16 %v340
      %v395 = vunpack.c.l.bf16 %v341
      %v396 = vunpack.c.l.bf16 %v342
      %v397 = vunpack.c.l.bf16 %v343
      %v398 = vunpack.c.l.bf16 %v344
      %v399 = vunpack.c.l.bf16 %v345
      %v400 = vunpack.c.l.bf16 %v346
      %v401 = vunpack.c.l.bf16 %v347
      %v402 = vunpack.c.l.bf16 %v348
      %v403 = vunpack.c.l.bf16 %v349
      %v404 = vunpack.c.l.bf16 %v350
      %v405 = vunpack.c.l.bf16 %v351
      %v406 = vunpack.c.l.bf16 %v352
      %v407 = vunpack.c.l.bf16 %v353
      %v408 = vunpack.c.l.bf16 %v354
      %v409 = vunpack.c.l.bf16 %v355
      %v410 = vunpack.c.l.bf16 %v356
      %v411 = vunpack.c.l.bf16 %v357
      %v412 = vunpack.c.l.bf16 %v358
      %v413 = vunpack.c.l.bf16 %v359
      %v414 = vunpack.c.l.bf16 %v360
      %v415 = vunpack.c.l.bf16 %v361
      %v416 = vunpack.c.l.bf16 %v362
      %v417 = vunpack.c.l.bf16 %v363
      %v418 = vunpack.c.l.bf16 %v364
      %v419 = vunpack.c.l.bf16 %v365
      %v420 = vunpack.c.l.bf16 %v366
      %v421 = vunpack.c.l.bf16 %v367
      %v422 = vunpack.c.l.bf16 %v368
      %v423 = vunpack.c.l.bf16 %v369
      %v424 = vunpack.c.l.bf16 %v370
      %v425 = vunpack.c.l.bf16 %v371
      %v426 = vunpack.c.l.bf16 %v372
      %v427 = vunpack.c.l.bf16 %v373
      %v428 = vunpack.c.l.bf16 %v374
      %v429 = vunpack.c.l.bf16 %v375
      %v430 = vld [vmem:[%s2] sm:$0x1]
      %v432 = vperm.slane %v430, 0
      %v434 = vmul.f32 %v376, %v432
      %v435 = vmul.f32 %v377, %v432
      %v436 = vmul.f32 %v378, %v432
      %v437 = vmul.f32 %v379, %v432
      %v438 = vmul.f32 %v380, %v432
      %v439 = vmul.f32 %v381, %v432
      %v440 = vmul.f32 %v382, %v432
      %v441 = vmul.f32 %v383, %v432
      %v442 = vmul.f32 %v384, %v432
      %v443 = vmul.f32 %v385, %v432
      %v444 = vmul.f32 %v386, %v432
      %v445 = vmul.f32 %v387, %v432
      %v446 = vmul.f32 %v388, %v432
      %v447 = vmul.f32 %v389, %v432
      %v448 = vmul.f32 %v390, %v432
      %v449 = vmul.f32 %v391, %v432
      %v450 = vmul.f32 %v392, %v432
      %v451 = vmul.f32 %v393, %v432
      %v452 = vmul.f32 %v394, %v432
      %v453 = vmul.f32 %v395, %v432
      %v454 = vmul.f32 %v396, %v432
      %v455 = vmul.f32 %v397, %v432
      %v456 = vmul.f32 %v398, %v432
      %v457 = vmul.f32 %v399, %v432
      %v458 = vmul.f32 %v400, %v432
      %v459 = vmul.f32 %v401, %v432
      %v460 = vmul.f32 %v402, %v432
      %v461 = vmul.f32 %v403, %v432
      %v462 = vmul.f32 %v404, %v432
      %v463 = vmul.f32 %v405, %v432
      %v464 = vmul.f32 %v406, %v432
      %v465 = vmul.f32 %v407, %v432
      %v466 = vmul.f32 %v408, %v432
      %v467 = vmul.f32 %v409, %v432
      %v468 = vmul.f32 %v410, %v432
      %v469 = vmul.f32 %v411, %v432
      %v470 = vmul.f32 %v412, %v432
      %v471 = vmul.f32 %v413, %v432
      %v472 = vmul.f32 %v414, %v432
      %v473 = vmul.f32 %v415, %v432
      %v474 = vmul.f32 %v416, %v432
      %v475 = vmul.f32 %v417, %v432
      %v476 = vmul.f32 %v418, %v432
      %v477 = vmul.f32 %v419, %v432
      %v478 = vmul.f32 %v420, %v432
      %v479 = vmul.f32 %v421, %v432
      %v480 = vmul.f32 %v422, %v432
      %v481 = vmul.f32 %v423, %v432
      %v482 = vmul.f32 %v424, %v432
      %v483 = vmul.f32 %v425, %v432
      %v484 = vmul.f32 %v426, %v432
      %v485 = vmul.f32 %v427, %v432
      %v486 = vmul.f32 %v428, %v432
      %v487 = vmul.f32 %v429, %v432
      %v488 = vld [vmem:[%s3] sm:$0x1]
      %v490 = vperm.slane %v488, 0
      %v492 = vadd.f32 %v434, %v490
      %v493 = vadd.f32 %v435, %v490
      %v494 = vadd.f32 %v436, %v490
      %v495 = vadd.f32 %v437, %v490
      %v496 = vadd.f32 %v438, %v490
      %v497 = vadd.f32 %v439, %v490
      %v498 = vadd.f32 %v440, %v490
      %v499 = vadd.f32 %v441, %v490
      %v500 = vadd.f32 %v442, %v490
      %v501 = vadd.f32 %v443, %v490
      %v502 = vadd.f32 %v444, %v490
      %v503 = vadd.f32 %v445, %v490
      %v504 = vadd.f32 %v446, %v490
      %v505 = vadd.f32 %v447, %v490
      %v506 = vadd.f32 %v448, %v490
      %v507 = vadd.f32 %v449, %v490
      %v508 = vadd.f32 %v450, %v490
      %v509 = vadd.f32 %v451, %v490
      %v510 = vadd.f32 %v452, %v490
      %v511 = vadd.f32 %v453, %v490
      %v512 = vadd.f32 %v454, %v490
      %v513 = vadd.f32 %v455, %v490
      %v514 = vadd.f32 %v456, %v490
      %v515 = vadd.f32 %v457, %v490
      %v516 = vadd.f32 %v458, %v490
      %v517 = vadd.f32 %v459, %v490
      %v518 = vadd.f32 %v460, %v490
      %v519 = vadd.f32 %v461, %v490
      %v520 = vadd.f32 %v462, %v490
      %v521 = vadd.f32 %v463, %v490
      %v522 = vadd.f32 %v464, %v490
      %v523 = vadd.f32 %v465, %v490
      %v524 = vadd.f32 %v466, %v490
      %v525 = vadd.f32 %v467, %v490
      %v526 = vadd.f32 %v468, %v490
      %v527 = vadd.f32 %v469, %v490
      %v528 = vadd.f32 %v470, %v490
      %v529 = vadd.f32 %v471, %v490
      %v530 = vadd.f32 %v472, %v490
      %v531 = vadd.f32 %v473, %v490
      %v532 = vadd.f32 %v474, %v490
      %v533 = vadd.f32 %v475, %v490
      %v534 = vadd.f32 %v476, %v490
      %v535 = vadd.f32 %v477, %v490
      %v536 = vadd.f32 %v478, %v490
      %v537 = vadd.f32 %v479, %v490
      %v538 = vadd.f32 %v480, %v490
      %v539 = vadd.f32 %v481, %v490
      %v540 = vadd.f32 %v482, %v490
      %v541 = vadd.f32 %v483, %v490
      %v542 = vadd.f32 %v484, %v490
      %v543 = vadd.f32 %v485, %v490
      %v544 = vadd.f32 %v486, %v490
      %v545 = vadd.f32 %v487, %v490
      %v546 = vmax.f32 %v492, 0.0
      %v547 = vmax.f32 %v493, 0.0
      %v548 = vmax.f32 %v494, 0.0
      %v549 = vmax.f32 %v495, 0.0
      %v550 = vmax.f32 %v496, 0.0
      %v551 = vmax.f32 %v497, 0.0
      %v552 = vmax.f32 %v498, 0.0
      %v553 = vmax.f32 %v499, 0.0
      %v554 = vmax.f32 %v500, 0.0
      %v555 = vmax.f32 %v501, 0.0
      %v556 = vmax.f32 %v502, 0.0
      %v557 = vmax.f32 %v503, 0.0
      %v558 = vmax.f32 %v504, 0.0
      %v559 = vmax.f32 %v505, 0.0
      %v560 = vmax.f32 %v506, 0.0
      %v561 = vmax.f32 %v507, 0.0
      %v562 = vmax.f32 %v508, 0.0
      %v563 = vmax.f32 %v509, 0.0
      %v564 = vmax.f32 %v510, 0.0
      %v565 = vmax.f32 %v511, 0.0
      %v566 = vmax.f32 %v512, 0.0
      %v567 = vmax.f32 %v513, 0.0
      %v568 = vmax.f32 %v514, 0.0
      %v569 = vmax.f32 %v515, 0.0
      %v570 = vmax.f32 %v516, 0.0
      %v571 = vmax.f32 %v517, 0.0
      %v572 = vmax.f32 %v518, 0.0
      %v573 = vmax.f32 %v519, 0.0
      %v574 = vmax.f32 %v520, 0.0
      %v575 = vmax.f32 %v521, 0.0
      %v576 = vmax.f32 %v522, 0.0
      %v577 = vmax.f32 %v523, 0.0
      %v578 = vmax.f32 %v524, 0.0
      %v579 = vmax.f32 %v525, 0.0
      %v580 = vmax.f32 %v526, 0.0
      %v581 = vmax.f32 %v527, 0.0
      %v582 = vmax.f32 %v528, 0.0
      %v583 = vmax.f32 %v529, 0.0
      %v584 = vmax.f32 %v530, 0.0
      %v585 = vmax.f32 %v531, 0.0
      %v586 = vmax.f32 %v532, 0.0
      %v587 = vmax.f32 %v533, 0.0
      %v588 = vmax.f32 %v534, 0.0
      %v589 = vmax.f32 %v535, 0.0
      %v590 = vmax.f32 %v536, 0.0
      %v591 = vmax.f32 %v537, 0.0
      %v592 = vmax.f32 %v538, 0.0
      %v593 = vmax.f32 %v539, 0.0
      %v594 = vmax.f32 %v540, 0.0
      %v595 = vmax.f32 %v541, 0.0
      %v596 = vmax.f32 %v542, 0.0
      %v597 = vmax.f32 %v543, 0.0
      %v598 = vmax.f32 %v544, 0.0
      %v599 = vmax.f32 %v545, 0.0
      %v600 = vlaneseq
      %v601 = vshrl.u32 %v600, 7
      %v602 = vadd.s32 %v601, 8
      %v603 = vadd.s32 %v601, 16
      %vm604 = vcmp.ge.s32.totalorder %v601, 1
      %vm605 = vcmp.ge.s32.totalorder %v602, 1
      %vm606 = vcmp.ge.s32.totalorder %v603, 1
      %vm607 = vmand 0, %vm604
      %vm608 = vmand 0, %vm605
      %vm609 = vmand 0, %vm606
      %vm610 = vmand 1, %vm604
      %vm611 = vmand 1, %vm605
      %vm612 = vmand 1, %vm606
      %vm613 = vcmp.lt.s32.totalorder %v601, 17
      %vm614 = vcmp.lt.s32.totalorder %v602, 17
      %vm615 = vcmp.lt.s32.totalorder %v603, 17
      %vm616 = vmand %vm607, %vm613
      %vm617 = vmand %vm608, %vm614
      %vm618 = vmand %vm609, %vm615
      %vm619 = vmand %vm610, %vm613
      %vm620 = vmand %vm611, %vm614
      %vm621 = vmand %vm612, %vm615
      %v622 = vsel %vm616, %v546, 0.0
      %v623 = vsel %vm617, %v547, 0.0
      %v624 = vsel %vm618, %v548, 0.0
      %v625 = vsel %vm619, %v549, 0.0
      %v626 = vsel %vm620, %v550, 0.0
      %v627 = vsel %vm621, %v551, 0.0
      %v628 = vsel %vm619, %v552, 0.0
      %v629 = vsel %vm620, %v553, 0.0
      %v630 = vsel %vm621, %v554, 0.0
      %v631 = vsel %vm619, %v555, 0.0
      %v632 = vsel %vm620, %v556, 0.0
      %v633 = vsel %vm621, %v557, 0.0
      %v634 = vsel %vm619, %v558, 0.0
      %v635 = vsel %vm620, %v559, 0.0
      %v636 = vsel %vm621, %v560, 0.0
      %v637 = vsel %vm619, %v561, 0.0
      %v638 = vsel %vm620, %v562, 0.0
      %v639 = vsel %vm621, %v563, 0.0
      %v640 = vsel %vm619, %v564, 0.0
      %v641 = vsel %vm620, %v565, 0.0
      %v642 = vsel %vm621, %v566, 0.0
      %v643 = vsel %vm619, %v567, 0.0
      %v644 = vsel %vm620, %v568, 0.0
      %v645 = vsel %vm621, %v569, 0.0
      %v646 = vsel %vm619, %v570, 0.0
      %v647 = vsel %vm620, %v571, 0.0
      %v648 = vsel %vm621, %v572, 0.0
      %v649 = vsel %vm619, %v573, 0.0
      %v650 = vsel %vm620, %v574, 0.0
      %v651 = vsel %vm621, %v575, 0.0
      %v652 = vsel %vm619, %v576, 0.0
      %v653 = vsel %vm620, %v577, 0.0
      %v654 = vsel %vm621, %v578, 0.0
      %v655 = vsel %vm619, %v579, 0.0
      %v656 = vsel %vm620, %v580, 0.0
      %v657 = vsel %vm621, %v581, 0.0
      %v658 = vsel %vm619, %v582, 0.0
      %v659 = vsel %vm620, %v583, 0.0
      %v660 = vsel %vm621, %v584, 0.0
      %v661 = vsel %vm619, %v585, 0.0
      %v662 = vsel %vm620, %v586, 0.0
      %v663 = vsel %vm621, %v587, 0.0
      %v664 = vsel %vm619, %v588, 0.0
      %v665 = vsel %vm620, %v589, 0.0
      %v666 = vsel %vm621, %v590, 0.0
      %v667 = vsel %vm619, %v591, 0.0
      %v668 = vsel %vm620, %v592, 0.0
      %v669 = vsel %vm621, %v593, 0.0
      %v670 = vsel %vm619, %v594, 0.0
      %v671 = vsel %vm620, %v595, 0.0
      %v672 = vsel %vm621, %v596, 0.0
      %v673 = vsel %vm616, %v597, 0.0
      %v674 = vsel %vm617, %v598, 0.0
      %v675 = vsel %vm618, %v599, 0.0
      %v676 = vpack.c.bf16 %v622, %v622
      %v677 = vpack.c.bf16 %v623, %v623
      %v678 = vpack.c.bf16 %v624, %v624
      %v679 = vpack.c.bf16 %v625, %v625
      %v680 = vpack.c.bf16 %v626, %v626
      %v681 = vpack.c.bf16 %v627, %v627
      %v682 = vpack.c.bf16 %v628, %v628
      %v683 = vpack.c.bf16 %v629, %v629
      %v684 = vpack.c.bf16 %v630, %v630
      %v685 = vpack.c.bf16 %v631, %v631
      %v686 = vpack.c.bf16 %v632, %v632
      %v687 = vpack.c.bf16 %v633, %v633
      %v688 = vpack.c.bf16 %v634, %v634
      %v689 = vpack.c.bf16 %v635, %v635
      %v690 = vpack.c.bf16 %v636, %v636
      %v691 = vpack.c.bf16 %v637, %v637
      %v692 = vpack.c.bf16 %v638, %v638
      %v693 = vpack.c.bf16 %v639, %v639
      %v694 = vpack.c.bf16 %v640, %v640
      %v695 = vpack.c.bf16 %v641, %v641
      %v696 = vpack.c.bf16 %v642, %v642
      %v697 = vpack.c.bf16 %v643, %v643
      %v698 = vpack.c.bf16 %v644, %v644
      %v699 = vpack.c.bf16 %v645, %v645
      %v700 = vpack.c.bf16 %v646, %v646
      %v701 = vpack.c.bf16 %v647, %v647
      %v702 = vpack.c.bf16 %v648, %v648
      %v703 = vpack.c.bf16 %v649, %v649
      %v704 = vpack.c.bf16 %v650, %v650
      %v705 = vpack.c.bf16 %v651, %v651
      %v706 = vpack.c.bf16 %v652, %v652
      %v707 = vpack.c.bf16 %v653, %v653
      %v708 = vpack.c.bf16 %v654, %v654
      %v709 = vpack.c.bf16 %v655, %v655
      %v710 = vpack.c.bf16 %v656, %v656
      %v711 = vpack.c.bf16 %v657, %v657
      %v712 = vpack.c.bf16 %v658, %v658
      %v713 = vpack.c.bf16 %v659, %v659
      %v714 = vpack.c.bf16 %v660, %v660
      %v715 = vpack.c.bf16 %v661, %v661
      %v716 = vpack.c.bf16 %v662, %v662
      %v717 = vpack.c.bf16 %v663, %v663
      %v718 = vpack.c.bf16 %v664, %v664
      %v719 = vpack.c.bf16 %v665, %v665
      %v720 = vpack.c.bf16 %v666, %v666
      %v721 = vpack.c.bf16 %v667, %v667
      %v722 = vpack.c.bf16 %v668, %v668
      %v723 = vpack.c.bf16 %v669, %v669
      %v724 = vpack.c.bf16 %v670, %v670
      %v725 = vpack.c.bf16 %v671, %v671
      %v726 = vpack.c.bf16 %v672, %v672
      %v727 = vpack.c.bf16 %v673, %v673
      %v728 = vpack.c.bf16 %v674, %v674
      %v729 = vpack.c.bf16 %v675, %v675
      %vm730 = vsmask.f32 3328
      %vm731 = vsmask.f32 7440
      %vm732 = vmor %vm730, %vm731
      %v734 = vshrl.u32 %v676, 16
      %v736 = vrot.slane %v734, 4
      %v737 = vshll.u32 %v676, 16
      %v739 = vrot.slane %v737, 5
      %v740 = vor.u32 %v736, %v739
      %v741 = vrot.slane %v740, 4
      %v743 = vshll.u32 %v677, 16
      %v745 = vrot.slane %v743, 5
      %v746 = vsel %vm732, %v741, %v745
      %v747 = vshrl.u32 %v677, 16
      %v749 = vrot.slane %v747, 4
      %v750 = vor.u32 %v749, %v745
      %v751 = vrot.slane %v750, 4
      %v753 = vshll.u32 %v678, 16
      %v755 = vrot.slane %v753, 5
      %v756 = vsel %vm732, %v751, %v755
      %v758 = vshrl.u32 %v679, 16
      %v760 = vrot.slane %v758, 4
      %v761 = vshll.u32 %v679, 16
      %v763 = vrot.slane %v761, 5
      %v764 = vor.u32 %v760, %v763
      %v765 = vrot.slane %v764, 4
      %v767 = vshll.u32 %v680, 16
      %v769 = vrot.slane %v767, 5
      %v770 = vsel %vm732, %v765, %v769
      %v771 = vshrl.u32 %v680, 16
      %v773 = vrot.slane %v771, 4
      %v774 = vor.u32 %v773, %v769
      %v775 = vrot.slane %v774, 4
      %v777 = vshll.u32 %v681, 16
      %v779 = vrot.slane %v777, 5
      %v780 = vsel %vm732, %v775, %v779
      %v782 = vshrl.u32 %v682, 16
      %v784 = vrot.slane %v782, 4
      %v785 = vshll.u32 %v682, 16
      %v787 = vrot.slane %v785, 5
      %v788 = vor.u32 %v784, %v787
      %v789 = vrot.slane %v788, 4
      %v791 = vshll.u32 %v683, 16
      %v793 = vrot.slane %v791, 5
      %v794 = vsel %vm732, %v789, %v793
      %v795 = vshrl.u32 %v683, 16
      %v797 = vrot.slane %v795, 4
      %v798 = vor.u32 %v797, %v793
      %v799 = vrot.slane %v798, 4
      %v801 = vshll.u32 %v684, 16
      %v803 = vrot.slane %v801, 5
      %v804 = vsel %vm732, %v799, %v803
      %v806 = vshrl.u32 %v685, 16
      %v808 = vrot.slane %v806, 4
      %v809 = vshll.u32 %v685, 16
      %v811 = vrot.slane %v809, 5
      %v812 = vor.u32 %v808, %v811
      %v813 = vrot.slane %v812, 4
      %v815 = vshll.u32 %v686, 16
      %v817 = vrot.slane %v815, 5
      %v818 = vsel %vm732, %v813, %v817
      %v819 = vshrl.u32 %v686, 16
      %v821 = vrot.slane %v819, 4
      %v822 = vor.u32 %v821, %v817
      %v823 = vrot.slane %v822, 4
      %v825 = vshll.u32 %v687, 16
      %v827 = vrot.slane %v825, 5
      %v828 = vsel %vm732, %v823, %v827
      %v830 = vshrl.u32 %v688, 16
      %v832 = vrot.slane %v830, 4
      %v833 = vshll.u32 %v688, 16
      %v835 = vrot.slane %v833, 5
      %v836 = vor.u32 %v832, %v835
      %v837 = vrot.slane %v836, 4
      %v839 = vshll.u32 %v689, 16
      %v841 = vrot.slane %v839, 5
      %v842 = vsel %vm732, %v837, %v841
      %v843 = vshrl.u32 %v689, 16
      %v845 = vrot.slane %v843, 4
      %v846 = vor.u32 %v845, %v841
      %v847 = vrot.slane %v846, 4
      %v849 = vshll.u32 %v690, 16
      %v851 = vrot.slane %v849, 5
      %v852 = vsel %vm732, %v847, %v851
      %v854 = vshrl.u32 %v691, 16
      %v856 = vrot.slane %v854, 4
      %v857 = vshll.u32 %v691, 16
      %v859 = vrot.slane %v857, 5
      %v860 = vor.u32 %v856, %v859
      %v861 = vrot.slane %v860, 4
      %v863 = vshll.u32 %v692, 16
      %v865 = vrot.slane %v863, 5
      %v866 = vsel %vm732, %v861, %v865
      %v867 = vshrl.u32 %v692, 16
      %v869 = vrot.slane %v867, 4
      %v870 = vor.u32 %v869, %v865
      %v871 = vrot.slane %v870, 4
      %v873 = vshll.u32 %v693, 16
      %v875 = vrot.slane %v873, 5
      %v876 = vsel %vm732, %v871, %v875
      %v878 = vshrl.u32 %v694, 16
      %v880 = vrot.slane %v878, 4
      %v881 = vshll.u32 %v694, 16
      %v883 = vrot.slane %v881, 5
      %v884 = vor.u32 %v880, %v883
      %v885 = vrot.slane %v884, 4
      %v887 = vshll.u32 %v695, 16
      %v889 = vrot.slane %v887, 5
      %v890 = vsel %vm732, %v885, %v889
      %v891 = vshrl.u32 %v695, 16
      %v893 = vrot.slane %v891, 4
      %v894 = vor.u32 %v893, %v889
      %v895 = vrot.slane %v894, 4
      %v897 = vshll.u32 %v696, 16
      %v899 = vrot.slane %v897, 5
      %v900 = vsel %vm732, %v895, %v899
      %v902 = vshrl.u32 %v697, 16
      %v904 = vrot.slane %v902, 4
      %v905 = vshll.u32 %v697, 16
      %v907 = vrot.slane %v905, 5
      %v908 = vor.u32 %v904, %v907
      %v909 = vrot.slane %v908, 4
      %v911 = vshll.u32 %v698, 16
      %v913 = vrot.slane %v911, 5
      %v914 = vsel %vm732, %v909, %v913
      %v915 = vshrl.u32 %v698, 16
      %v917 = vrot.slane %v915, 4
      %v918 = vor.u32 %v917, %v913
      %v919 = vrot.slane %v918, 4
      %v921 = vshll.u32 %v699, 16
      %v923 = vrot.slane %v921, 5
      %v924 = vsel %vm732, %v919, %v923
      %v926 = vshrl.u32 %v700, 16
      %v928 = vrot.slane %v926, 4
      %v929 = vshll.u32 %v700, 16
      %v931 = vrot.slane %v929, 5
      %v932 = vor.u32 %v928, %v931
      %v933 = vrot.slane %v932, 4
      %v935 = vshll.u32 %v701, 16
      %v937 = vrot.slane %v935, 5
      %v938 = vsel %vm732, %v933, %v937
      %v939 = vshrl.u32 %v701, 16
      %v941 = vrot.slane %v939, 4
      %v942 = vor.u32 %v941, %v937
      %v943 = vrot.slane %v942, 4
      %v945 = vshll.u32 %v702, 16
      %v947 = vrot.slane %v945, 5
      %v948 = vsel %vm732, %v943, %v947
      %v950 = vshrl.u32 %v703, 16
      %v952 = vrot.slane %v950, 4
      %v953 = vshll.u32 %v703, 16
      %v955 = vrot.slane %v953, 5
      %v956 = vor.u32 %v952, %v955
      %v957 = vrot.slane %v956, 4
      %v959 = vshll.u32 %v704, 16
      %v961 = vrot.slane %v959, 5
      %v962 = vsel %vm732, %v957, %v961
      %v963 = vshrl.u32 %v704, 16
      %v965 = vrot.slane %v963, 4
      %v966 = vor.u32 %v965, %v961
      %v967 = vrot.slane %v966, 4
      %v969 = vshll.u32 %v705, 16
      %v971 = vrot.slane %v969, 5
      %v972 = vsel %vm732, %v967, %v971
      %v974 = vshrl.u32 %v706, 16
      %v976 = vrot.slane %v974, 4
      %v977 = vshll.u32 %v706, 16
      %v979 = vrot.slane %v977, 5
      %v980 = vor.u32 %v976, %v979
      %v981 = vrot.slane %v980, 4
      %v983 = vshll.u32 %v707, 16
      %v985 = vrot.slane %v983, 5
      %v986 = vsel %vm732, %v981, %v985
      %v987 = vshrl.u32 %v707, 16
      %v989 = vrot.slane %v987, 4
      %v990 = vor.u32 %v989, %v985
      %v991 = vrot.slane %v990, 4
      %v993 = vshll.u32 %v708, 16
      %v995 = vrot.slane %v993, 5
      %v996 = vsel %vm732, %v991, %v995
      %v998 = vshrl.u32 %v709, 16
      %v1000 = vrot.slane %v998, 4
      %v1001 = vshll.u32 %v709, 16
      %v1003 = vrot.slane %v1001, 5
      %v1004 = vor.u32 %v1000, %v1003
      %v1005 = vrot.slane %v1004, 4
      %v1007 = vshll.u32 %v710, 16
      %v1009 = vrot.slane %v1007, 5
      %v1010 = vsel %vm732, %v1005, %v1009
      %v1011 = vshrl.u32 %v710, 16
      %v1013 = vrot.slane %v1011, 4
      %v1014 = vor.u32 %v1013, %v1009
      %v1015 = vrot.slane %v1014, 4
      %v1017 = vshll.u32 %v711, 16
      %v1019 = vrot.slane %v1017, 5
      %v1020 = vsel %vm732, %v1015, %v1019
      %v1022 = vshrl.u32 %v712, 16
      %v1024 = vrot.slane %v1022, 4
      %v1025 = vshll.u32 %v712, 16
      %v1027 = vrot.slane %v1025, 5
      %v1028 = vor.u32 %v1024, %v1027
      %v1029 = vrot.slane %v1028, 4
      %v1031 = vshll.u32 %v713, 16
      %v1033 = vrot.slane %v1031, 5
      %v1034 = vsel %vm732, %v1029, %v1033
      %v1035 = vshrl.u32 %v713, 16
      %v1037 = vrot.slane %v1035, 4
      %v1038 = vor.u32 %v1037, %v1033
      %v1039 = vrot.slane %v1038, 4
      %v1041 = vshll.u32 %v714, 16
      %v1043 = vrot.slane %v1041, 5
      %v1044 = vsel %vm732, %v1039, %v1043
      %v1046 = vshrl.u32 %v715, 16
      %v1048 = vrot.slane %v1046, 4
      %v1049 = vshll.u32 %v715, 16
      %v1051 = vrot.slane %v1049, 5
      %v1052 = vor.u32 %v1048, %v1051
      %v1053 = vrot.slane %v1052, 4
      %v1055 = vshll.u32 %v716, 16
      %v1057 = vrot.slane %v1055, 5
      %v1058 = vsel %vm732, %v1053, %v1057
      %v1059 = vshrl.u32 %v716, 16
      %v1061 = vrot.slane %v1059, 4
      %v1062 = vor.u32 %v1061, %v1057
      %v1063 = vrot.slane %v1062, 4
      %v1065 = vshll.u32 %v717, 16
      %v1067 = vrot.slane %v1065, 5
      %v1068 = vsel %vm732, %v1063, %v1067
      %v1070 = vshrl.u32 %v718, 16
      %v1072 = vrot.slane %v1070, 4
      %v1073 = vshll.u32 %v718, 16
      %v1075 = vrot.slane %v1073, 5
      %v1076 = vor.u32 %v1072, %v1075
      %v1077 = vrot.slane %v1076, 4
      %v1079 = vshll.u32 %v719, 16
      %v1081 = vrot.slane %v1079, 5
      %v1082 = vsel %vm732, %v1077, %v1081
      %v1083 = vshrl.u32 %v719, 16
      %v1085 = vrot.slane %v1083, 4
      %v1086 = vor.u32 %v1085, %v1081
      %v1087 = vrot.slane %v1086, 4
      %v1089 = vshll.u32 %v720, 16
      %v1091 = vrot.slane %v1089, 5
      %v1092 = vsel %vm732, %v1087, %v1091
      %v1094 = vshrl.u32 %v721, 16
      %v1096 = vrot.slane %v1094, 4
      %v1097 = vshll.u32 %v721, 16
      %v1099 = vrot.slane %v1097, 5
      %v1100 = vor.u32 %v1096, %v1099
      %v1101 = vrot.slane %v1100, 4
      %v1103 = vshll.u32 %v722, 16
      %v1105 = vrot.slane %v1103, 5
      %v1106 = vsel %vm732, %v1101, %v1105
      %v1107 = vshrl.u32 %v722, 16
      %v1109 = vrot.slane %v1107, 4
      %v1110 = vor.u32 %v1109, %v1105
      %v1111 = vrot.slane %v1110, 4
      %v1113 = vshll.u32 %v723, 16
      %v1115 = vrot.slane %v1113, 5
      %v1116 = vsel %vm732, %v1111, %v1115
      %vm1165 = vcmask 1042432
      %vm1166 = vcmask 1046532
      %vm1167 = vmor %vm1165, %vm1166
      %v1168 = vrot.slane %v676, 5
      %v1169 = vrot.slane %v1168, 4
      %v1170 = vrot.slane %v677, 5
      %v1171 = vsel %vm1167, %v1169, %v1170
      %v1172 = vrot.slane %v1170, 4
      %v1173 = vrot.slane %v678, 5
      %v1174 = vsel %vm1167, %v1172, %v1173
      %v1175 = vrot.slane %v679, 5
      %v1176 = vrot.slane %v1175, 4
      %v1177 = vrot.slane %v680, 5
      %v1178 = vsel %vm1167, %v1176, %v1177
      %v1179 = vrot.slane %v1177, 4
      %v1180 = vrot.slane %v681, 5
      %v1181 = vsel %vm1167, %v1179, %v1180
      %v1182 = vrot.slane %v682, 5
      %v1183 = vrot.slane %v1182, 4
      %v1184 = vrot.slane %v683, 5
      %v1185 = vsel %vm1167, %v1183, %v1184
      %v1186 = vrot.slane %v1184, 4
      %v1187 = vrot.slane %v684, 5
      %v1188 = vsel %vm1167, %v1186, %v1187
      %v1189 = vrot.slane %v685, 5
      %v1190 = vrot.slane %v1189, 4
      %v1191 = vrot.slane %v686, 5
      %v1192 = vsel %vm1167, %v1190, %v1191
      %v1193 = vrot.slane %v1191, 4
      %v1194 = vrot.slane %v687, 5
      %v1195 = vsel %vm1167, %v1193, %v1194
      %v1196 = vrot.slane %v688, 5
      %v1197 = vrot.slane %v1196, 4
      %v1198 = vrot.slane %v689, 5
      %v1199 = vsel %vm1167, %v1197, %v1198
      %v1200 = vrot.slane %v1198, 4
      %v1201 = vrot.slane %v690, 5
      %v1202 = vsel %vm1167, %v1200, %v1201
      %v1203 = vrot.slane %v691, 5
      %v1204 = vrot.slane %v1203, 4
      %v1205 = vrot.slane %v692, 5
      %v1206 = vsel %vm1167, %v1204, %v1205
      %v1207 = vrot.slane %v1205, 4
      %v1208 = vrot.slane %v693, 5
      %v1209 = vsel %vm1167, %v1207, %v1208
      %v1210 = vrot.slane %v694, 5
      %v1211 = vrot.slane %v1210, 4
      %v1212 = vrot.slane %v695, 5
      %v1213 = vsel %vm1167, %v1211, %v1212
      %v1214 = vrot.slane %v1212, 4
      %v1215 = vrot.slane %v696, 5
      %v1216 = vsel %vm1167, %v1214, %v1215
      %v1217 = vrot.slane %v697, 5
      %v1218 = vrot.slane %v1217, 4
      %v1219 = vrot.slane %v698, 5
      %v1220 = vsel %vm1167, %v1218, %v1219
      %v1221 = vrot.slane %v1219, 4
      %v1222 = vrot.slane %v699, 5
      %v1223 = vsel %vm1167, %v1221, %v1222
      %v1224 = vrot.slane %v700, 5
      %v1225 = vrot.slane %v1224, 4
      %v1226 = vrot.slane %v701, 5
      %v1227 = vsel %vm1167, %v1225, %v1226
      %v1228 = vrot.slane %v1226, 4
      %v1229 = vrot.slane %v702, 5
      %v1230 = vsel %vm1167, %v1228, %v1229
      %v1231 = vrot.slane %v703, 5
      %v1232 = vrot.slane %v1231, 4
      %v1233 = vrot.slane %v704, 5
      %v1234 = vsel %vm1167, %v1232, %v1233
      %v1235 = vrot.slane %v1233, 4
      %v1236 = vrot.slane %v705, 5
      %v1237 = vsel %vm1167, %v1235, %v1236
      %v1238 = vrot.slane %v706, 5
      %v1239 = vrot.slane %v1238, 4
      %v1240 = vrot.slane %v707, 5
      %v1241 = vsel %vm1167, %v1239, %v1240
      %v1242 = vrot.slane %v1240, 4
      %v1243 = vrot.slane %v708, 5
      %v1244 = vsel %vm1167, %v1242, %v1243
      %v1245 = vrot.slane %v709, 5
      %v1246 = vrot.slane %v1245, 4
      %v1247 = vrot.slane %v710, 5
      %v1248 = vsel %vm1167, %v1246, %v1247
      %v1249 = vrot.slane %v1247, 4
      %v1250 = vrot.slane %v711, 5
      %v1251 = vsel %vm1167, %v1249, %v1250
      %v1252 = vrot.slane %v712, 5
      %v1253 = vrot.slane %v1252, 4
      %v1254 = vrot.slane %v713, 5
      %v1255 = vsel %vm1167, %v1253, %v1254
      %v1256 = vrot.slane %v1254, 4
      %v1257 = vrot.slane %v714, 5
      %v1258 = vsel %vm1167, %v1256, %v1257
      %v1259 = vrot.slane %v715, 5
      %v1260 = vrot.slane %v1259, 4
      %v1261 = vrot.slane %v716, 5
      %v1262 = vsel %vm1167, %v1260, %v1261
      %v1263 = vrot.slane %v1261, 4
      %v1264 = vrot.slane %v717, 5
      %v1265 = vsel %vm1167, %v1263, %v1264
      %v1266 = vrot.slane %v718, 5
      %v1267 = vrot.slane %v1266, 4
      %v1268 = vrot.slane %v719, 5
      %v1269 = vsel %vm1167, %v1267, %v1268
      %v1270 = vrot.slane %v1268, 4
      %v1271 = vrot.slane %v720, 5
      %v1272 = vsel %vm1167, %v1270, %v1271
      %v1273 = vrot.slane %v721, 5
      %v1274 = vrot.slane %v1273, 4
      %v1275 = vrot.slane %v722, 5
      %v1276 = vsel %vm1167, %v1274, %v1275
      %v1277 = vrot.slane %v1275, 4
      %v1278 = vrot.slane %v723, 5
      %v1279 = vsel %vm1167, %v1277, %v1278
      %v1281 = vshrl.u32 %v724, 16
      %v1283 = vrot.slane %v1281, 4
      %v1284 = vshll.u32 %v724, 16
      %v1286 = vrot.slane %v1284, 5
      %v1287 = vor.u32 %v1283, %v1286
      %v1288 = vrot.slane %v1287, 4
      %v1290 = vshll.u32 %v725, 16
      %v1292 = vrot.slane %v1290, 5
      %v1293 = vsel %vm732, %v1288, %v1292
      %v1294 = vshrl.u32 %v725, 16
      %v1296 = vrot.slane %v1294, 4
      %v1297 = vor.u32 %v1296, %v1292
      %v1298 = vrot.slane %v1297, 4
      %v1300 = vshll.u32 %v726, 16
      %v1302 = vrot.slane %v1300, 5
      %v1303 = vsel %vm732, %v1298, %v1302
      %v1307 = vrot.slane %v724, 5
      %v1308 = vrot.slane %v1307, 4
      %v1309 = vrot.slane %v725, 5
      %v1310 = vsel %vm1167, %v1308, %v1309
      %v1311 = vrot.slane %v1309, 4
      %v1312 = vrot.slane %v726, 5
      %v1313 = vsel %vm1167, %v1311, %v1312
      %v1315 = vshrl.u32 %v727, 16
      %v1317 = vrot.slane %v1315, 4
      %v1318 = vshll.u32 %v727, 16
      %v1320 = vrot.slane %v1318, 5
      %v1321 = vor.u32 %v1317, %v1320
      %v1322 = vrot.slane %v1321, 4
      %v1324 = vshll.u32 %v728, 16
      %v1326 = vrot.slane %v1324, 5
      %v1327 = vsel %vm732, %v1322, %v1326
      %v1328 = vshrl.u32 %v728, 16
      %v1330 = vrot.slane %v1328, 4
      %v1331 = vor.u32 %v1330, %v1326
      %v1332 = vrot.slane %v1331, 4
      %v1334 = vshll.u32 %v729, 16
      %v1336 = vrot.slane %v1334, 5
      %v1337 = vsel %vm732, %v1332, %v1336
      %v1341 = vrot.slane %v727, 5
      %v1342 = vrot.slane %v1341, 4
      %v1343 = vrot.slane %v728, 5
      %v1344 = vsel %vm1167, %v1342, %v1343
      %v1345 = vrot.slane %v1343, 4
      %v1346 = vrot.slane %v729, 5
      %v1347 = vsel %vm1167, %v1345, %v1346
      %v1348 = vunpack.c.l.b16 %v676
      %v1349 = vunpack.c.l.b16 %v677
      %v1350 = vunpack.c.l.b16 %v679
      %v1351 = vunpack.c.l.b16 %v680
      %v1352 = vunpack.c.l.b16 %v682
      %v1353 = vunpack.c.l.b16 %v683
      %v1354 = vunpack.c.l.b16 %v685
      %v1355 = vunpack.c.l.b16 %v686
      %v1356 = vunpack.c.l.b16 %v688
      %v1357 = vunpack.c.l.b16 %v689
      %v1358 = vunpack.c.l.b16 %v691
      %v1359 = vunpack.c.l.b16 %v692
      %v1360 = vunpack.c.l.b16 %v694
      %v1361 = vunpack.c.l.b16 %v695
      %v1362 = vunpack.c.l.b16 %v697
      %v1363 = vunpack.c.l.b16 %v698
      %v1364 = vunpack.c.l.b16 %v700
      %v1365 = vunpack.c.l.b16 %v701
      %v1366 = vunpack.c.l.b16 %v703
      %v1367 = vunpack.c.l.b16 %v704
      %v1368 = vunpack.c.l.b16 %v706
      %v1369 = vunpack.c.l.b16 %v707
      %v1370 = vunpack.c.l.b16 %v709
      %v1371 = vunpack.c.l.b16 %v710
      %v1372 = vunpack.c.l.b16 %v712
      %v1373 = vunpack.c.l.b16 %v713
      %v1374 = vunpack.c.l.b16 %v715
      %v1375 = vunpack.c.l.b16 %v716
      %v1376 = vunpack.c.l.b16 %v718
      %v1377 = vunpack.c.l.b16 %v719
      %v1378 = vunpack.c.l.b16 %v721
      %v1379 = vunpack.c.l.b16 %v722
      %v1380 = vpack.c.b16 %v1349, %v1348
      %v1381 = vpack.c.b16 %v1351, %v1350
      %v1382 = vpack.c.b16 %v1353, %v1352
      %v1383 = vpack.c.b16 %v1355, %v1354
      %v1384 = vpack.c.b16 %v1357, %v1356
      %v1385 = vpack.c.b16 %v1359, %v1358
      %v1386 = vpack.c.b16 %v1361, %v1360
      %v1387 = vpack.c.b16 %v1363, %v1362
      %v1388 = vpack.c.b16 %v1365, %v1364
      %v1389 = vpack.c.b16 %v1367, %v1366
      %v1390 = vpack.c.b16 %v1369, %v1368
      %v1391 = vpack.c.b16 %v1371, %v1370
      %v1392 = vpack.c.b16 %v1373, %v1372
      %v1393 = vpack.c.b16 %v1375, %v1374
      %v1394 = vpack.c.b16 %v1377, %v1376
      %v1395 = vpack.c.b16 %v1379, %v1378
      %v1412 = vunpack.c.l.b16 %v746
      %v1413 = vunpack.c.l.b16 %v756
      %v1414 = vunpack.c.l.b16 %v770
      %v1415 = vunpack.c.l.b16 %v780
      %v1416 = vunpack.c.l.b16 %v794
      %v1417 = vunpack.c.l.b16 %v804
      %v1418 = vunpack.c.l.b16 %v818
      %v1419 = vunpack.c.l.b16 %v828
      %v1420 = vunpack.c.l.b16 %v842
      %v1421 = vunpack.c.l.b16 %v852
      %v1422 = vunpack.c.l.b16 %v866
      %v1423 = vunpack.c.l.b16 %v876
      %v1424 = vunpack.c.l.b16 %v890
      %v1425 = vunpack.c.l.b16 %v900
      %v1426 = vunpack.c.l.b16 %v914
      %v1427 = vunpack.c.l.b16 %v924
      %v1428 = vunpack.c.l.b16 %v938
      %v1429 = vunpack.c.l.b16 %v948
      %v1430 = vunpack.c.l.b16 %v962
      %v1431 = vunpack.c.l.b16 %v972
      %v1432 = vunpack.c.l.b16 %v986
      %v1433 = vunpack.c.l.b16 %v996
      %v1434 = vunpack.c.l.b16 %v1010
      %v1435 = vunpack.c.l.b16 %v1020
      %v1436 = vunpack.c.l.b16 %v1034
      %v1437 = vunpack.c.l.b16 %v1044
      %v1438 = vunpack.c.l.b16 %v1058
      %v1439 = vunpack.c.l.b16 %v1068
      %v1440 = vunpack.c.l.b16 %v1082
      %v1441 = vunpack.c.l.b16 %v1092
      %v1442 = vunpack.c.l.b16 %v1106
      %v1443 = vunpack.c.l.b16 %v1116
      %v1444 = vpack.c.b16 %v1413, %v1412
      %v1445 = vpack.c.b16 %v1415, %v1414
      %v1446 = vpack.c.b16 %v1417, %v1416
      %v1447 = vpack.c.b16 %v1419, %v1418
      %v1448 = vpack.c.b16 %v1421, %v1420
      %v1449 = vpack.c.b16 %v1423, %v1422
      %v1450 = vpack.c.b16 %v1425, %v1424
      %v1451 = vpack.c.b16 %v1427, %v1426
      %v1452 = vpack.c.b16 %v1429, %v1428
      %v1453 = vpack.c.b16 %v1431, %v1430
      %v1454 = vpack.c.b16 %v1433, %v1432
      %v1455 = vpack.c.b16 %v1435, %v1434
      %v1456 = vpack.c.b16 %v1437, %v1436
      %v1457 = vpack.c.b16 %v1439, %v1438
      %v1458 = vpack.c.b16 %v1441, %v1440
      %v1459 = vpack.c.b16 %v1443, %v1442
      %v1476 = vunpack.c.l.b16 %v1171
      %v1477 = vunpack.c.l.b16 %v1174
      %v1478 = vunpack.c.l.b16 %v1178
      %v1479 = vunpack.c.l.b16 %v1181
      %v1480 = vunpack.c.l.b16 %v1185
      %v1481 = vunpack.c.l.b16 %v1188
      %v1482 = vunpack.c.l.b16 %v1192
      %v1483 = vunpack.c.l.b16 %v1195
      %v1484 = vunpack.c.l.b16 %v1199
      %v1485 = vunpack.c.l.b16 %v1202
      %v1486 = vunpack.c.l.b16 %v1206
      %v1487 = vunpack.c.l.b16 %v1209
      %v1488 = vunpack.c.l.b16 %v1213
      %v1489 = vunpack.c.l.b16 %v1216
      %v1490 = vunpack.c.l.b16 %v1220
      %v1491 = vunpack.c.l.b16 %v1223
      %v1492 = vunpack.c.l.b16 %v1227
      %v1493 = vunpack.c.l.b16 %v1230
      %v1494 = vunpack.c.l.b16 %v1234
      %v1495 = vunpack.c.l.b16 %v1237
      %v1496 = vunpack.c.l.b16 %v1241
      %v1497 = vunpack.c.l.b16 %v1244
      %v1498 = vunpack.c.l.b16 %v1248
      %v1499 = vunpack.c.l.b16 %v1251
      %v1500 = vunpack.c.l.b16 %v1255
      %v1501 = vunpack.c.l.b16 %v1258
      %v1502 = vunpack.c.l.b16 %v1262
      %v1503 = vunpack.c.l.b16 %v1265
      %v1504 = vunpack.c.l.b16 %v1269
      %v1505 = vunpack.c.l.b16 %v1272
      %v1506 = vunpack.c.l.b16 %v1276
      %v1507 = vunpack.c.l.b16 %v1279
      %v1508 = vpack.c.b16 %v1477, %v1476
      %v1509 = vpack.c.b16 %v1479, %v1478
      %v1510 = vpack.c.b16 %v1481, %v1480
      %v1511 = vpack.c.b16 %v1483, %v1482
      %v1512 = vpack.c.b16 %v1485, %v1484
      %v1513 = vpack.c.b16 %v1487, %v1486
      %v1514 = vpack.c.b16 %v1489, %v1488
      %v1515 = vpack.c.b16 %v1491, %v1490
      %v1516 = vpack.c.b16 %v1493, %v1492
      %v1517 = vpack.c.b16 %v1495, %v1494
      %v1518 = vpack.c.b16 %v1497, %v1496
      %v1519 = vpack.c.b16 %v1499, %v1498
      %v1520 = vpack.c.b16 %v1501, %v1500
      %v1521 = vpack.c.b16 %v1503, %v1502
      %v1522 = vpack.c.b16 %v1505, %v1504
      %v1523 = vpack.c.b16 %v1507, %v1506
      %v1540 = vunpack.c.l.b16 %v724
      %v1541 = vunpack.c.l.b16 %v725
      %v1542 = vpack.c.b16 %v1541, %v1540
      %v1544 = vunpack.c.l.b16 %v1293
      %v1545 = vunpack.c.l.b16 %v1303
      %v1546 = vpack.c.b16 %v1545, %v1544
      %v1548 = vunpack.c.l.b16 %v1310
      %v1549 = vunpack.c.l.b16 %v1313
      %v1550 = vpack.c.b16 %v1549, %v1548
      %v1552 = vunpack.c.l.b16 %v727
      %v1553 = vunpack.c.l.b16 %v728
      %v1554 = vpack.c.b16 %v1553, %v1552
      %v1556 = vunpack.c.l.b16 %v1327
      %v1557 = vunpack.c.l.b16 %v1337
      %v1558 = vpack.c.b16 %v1557, %v1556
      %v1560 = vunpack.c.l.b16 %v1344
      %v1561 = vunpack.c.l.b16 %v1347
      %v1562 = vpack.c.b16 %v1561, %v1560
      %v1564 = vld [vmem:[%s301] sm:$0xf]
      %v1565 = vld [vmem:[%s301 + $0x4] sm:$0xf]
      %v1566 = vld [vmem:[%s301 + $0x8] sm:$0xf]
      %v1567 = vld [vmem:[%s301 + $0xc] sm:$0xf]
      %v1568 = vld [vmem:[%s301 + $0x10] sm:$0xf]
      %v1569 = vld [vmem:[%s301 + $0x14] sm:$0xf]
      %v1570 = vld [vmem:[%s301 + $0x18] sm:$0xf]
      %v1571 = vld [vmem:[%s301 + $0x1c] sm:$0xf]
      %v1572 = vld [vmem:[%s301 + $0x20] sm:$0xf]
      %v1573 = vld [vmem:[%s301 + $0x24] sm:$0xf]
      %v1574 = vld [vmem:[%s301 + $0x28] sm:$0xf]
      %v1575 = vld [vmem:[%s301 + $0x2c] sm:$0xf]
      %v1576 = vld [vmem:[%s301 + $0x30] sm:$0xf]
      %v1577 = vld [vmem:[%s301 + $0x34] sm:$0xf]
      %v1578 = vld [vmem:[%s301 + $0x38] sm:$0xf]
      %v1579 = vld [vmem:[%s301 + $0x3c] sm:$0xf]
      %v1580 = vld [vmem:[%s301 + $0x40] sm:$0xf]
      %v1581 = vld [vmem:[%s301 + $0x44] sm:$0xf]
      %v1582 = vld [vmem:[%s301 + $0x48] sm:$0xf]
      %v1583 = vld [vmem:[%s301 + $0x4c] sm:$0xf]
      %v1584 = vld [vmem:[%s301 + $0x50] sm:$0xf]
      %v1585 = vld [vmem:[%s301 + $0x54] sm:$0xf]
      %v1586 = vld [vmem:[%s301 + $0x58] sm:$0xf]
      %v1587 = vld [vmem:[%s301 + $0x5c] sm:$0xf]
      %v1588 = vld [vmem:[%s301 + $0x60] sm:$0xf]
      %v1589 = vld [vmem:[%s301 + $0x64] sm:$0xf]
      %v1590 = vld [vmem:[%s301 + $0x68] sm:$0xf]
      %v1591 = vld [vmem:[%s301 + $0x6c] sm:$0xf]
      %v1592 = vld [vmem:[%s301 + $0x70] sm:$0xf]
      %v1593 = vld [vmem:[%s301 + $0x74] sm:$0xf]
      %v1594 = vld [vmem:[%s301 + $0x78] sm:$0xf]
      %v1595 = vld [vmem:[%s301 + $0x7c] sm:$0xf]
      %v1596 = vld [vmem:[%s301 + $0x80] sm:$0xf]
      %v1597 = vld [vmem:[%s301 + $0x84] sm:$0xf]
      %v1598 = vld [vmem:[%s301 + $0x88] sm:$0xf]
      %v1599 = vld [vmem:[%s301 + $0x8c] sm:$0xf]
      %v1600 = vld [vmem:[%s301 + $0x90] sm:$0xf]
      %v1601 = vld [vmem:[%s301 + $0x94] sm:$0xf]
      %v1602 = vld [vmem:[%s301 + $0x98] sm:$0xf]
      %v1603 = vld [vmem:[%s301 + $0x9c] sm:$0xf]
      %v1604 = vld [vmem:[%s301 + $0xa0] sm:$0xf]
      %v1605 = vld [vmem:[%s301 + $0xa4] sm:$0xf]
      %v1606 = vld [vmem:[%s301 + $0xa8] sm:$0xf]
      %v1607 = vld [vmem:[%s301 + $0xac] sm:$0xf]
      %v1608 = vld [vmem:[%s301 + $0xb0] sm:$0xf]
      %v1609 = vld [vmem:[%s301 + $0xb4] sm:$0xf]
      %v1610 = vld [vmem:[%s301 + $0xb8] sm:$0xf]
      %v1611 = vld [vmem:[%s301 + $0xbc] sm:$0xf]
      %v1612 = vld [vmem:[%s301 + $0xc0] sm:$0xf]
      %v1613 = vld [vmem:[%s301 + $0xc4] sm:$0xf]
      %v1614 = vld [vmem:[%s301 + $0xc8] sm:$0xf]
      %v1615 = vld [vmem:[%s301 + $0xcc] sm:$0xf]
      %v1616 = vld [vmem:[%s301 + $0xd0] sm:$0xf]
      %v1617 = vld [vmem:[%s301 + $0xd4] sm:$0xf]
      %v1618 = vld [vmem:[%s301 + $0xd8] sm:$0xf]
      %v1619 = vld [vmem:[%s301 + $0xdc] sm:$0xf]
      %v1620 = vld [vmem:[%s301 + $0xe0] sm:$0xf]
      %v1621 = vld [vmem:[%s301 + $0xe4] sm:$0xf]
      %v1622 = vld [vmem:[%s301 + $0xe8] sm:$0xf]
      %v1623 = vld [vmem:[%s301 + $0xec] sm:$0xf]
      %v1624 = vld [vmem:[%s301 + $0xf0] sm:$0xf]
      %v1625 = vld [vmem:[%s301 + $0xf4] sm:$0xf]
      %v1626 = vld [vmem:[%s301 + $0xf8] sm:$0xf]
      %v1627 = vld [vmem:[%s301 + $0xfc] sm:$0xf]
      %v1628 = vld [vmem:[%s301 + $0x100] sm:$0xf]
      %v1629 = vld [vmem:[%s301 + $0x104] sm:$0xf]
      %v1630 = vld [vmem:[%s301 + $0x108] sm:$0xf]
      %v1631 = vld [vmem:[%s301 + $0x10c] sm:$0xf]
      %v1632 = vld [vmem:[%s301 + $0x110] sm:$0xf]
      %v1633 = vld [vmem:[%s301 + $0x114] sm:$0xf]
      %v1634 = vld [vmem:[%s301 + $0x118] sm:$0xf]
      %v1635 = vld [vmem:[%s301 + $0x11c] sm:$0xf]
      %v1636 = vld [vmem:[%s301 + $0x120] sm:$0xf]
      %v1637 = vld [vmem:[%s301 + $0x124] sm:$0xf]
      %v1638 = vld [vmem:[%s301 + $0x128] sm:$0xf]
      %v1639 = vld [vmem:[%s301 + $0x12c] sm:$0xf]
      %v1640 = vld [vmem:[%s301 + $0x130] sm:$0xf]
      %v1641 = vld [vmem:[%s301 + $0x134] sm:$0xf]
      %v1642 = vld [vmem:[%s301 + $0x138] sm:$0xf]
      %v1643 = vld [vmem:[%s301 + $0x13c] sm:$0xf]
      %v1644 = vld [vmem:[%s301 + $0x140] sm:$0xf]
      %v1645 = vld [vmem:[%s301 + $0x144] sm:$0xf]
      %v1646 = vld [vmem:[%s301 + $0x148] sm:$0xf]
      %v1647 = vld [vmem:[%s301 + $0x14c] sm:$0xf]
      %v1648 = vld [vmem:[%s301 + $0x150] sm:$0xf]
      %v1649 = vld [vmem:[%s301 + $0x154] sm:$0xf]
      %v1650 = vld [vmem:[%s301 + $0x158] sm:$0xf]
      %v1651 = vld [vmem:[%s301 + $0x15c] sm:$0xf]
      %v1652 = vld [vmem:[%s301 + $0x160] sm:$0xf]
      %v1653 = vld [vmem:[%s301 + $0x164] sm:$0xf]
      %v1654 = vld [vmem:[%s301 + $0x168] sm:$0xf]
      %v1655 = vld [vmem:[%s301 + $0x16c] sm:$0xf]
      %v1656 = vld [vmem:[%s301 + $0x170] sm:$0xf]
      %v1657 = vld [vmem:[%s301 + $0x174] sm:$0xf]
      %v1658 = vld [vmem:[%s301 + $0x178] sm:$0xf]
      %v1659 = vld [vmem:[%s301 + $0x17c] sm:$0xf]
      %v1660 = vld [vmem:[%s301 + $0x180] sm:$0xf]
      %v1661 = vld [vmem:[%s301 + $0x184] sm:$0xf]
      %v1662 = vld [vmem:[%s301 + $0x188] sm:$0xf]
      %v1663 = vld [vmem:[%s301 + $0x18c] sm:$0xf]
      %v1664 = vld [vmem:[%s301 + $0x190] sm:$0xf]
      %v1665 = vld [vmem:[%s301 + $0x194] sm:$0xf]
      %v1666 = vld [vmem:[%s301 + $0x198] sm:$0xf]
      %v1667 = vld [vmem:[%s301 + $0x19c] sm:$0xf]
      %v1668 = vld [vmem:[%s301 + $0x1a0] sm:$0xf]
      %v1669 = vld [vmem:[%s301 + $0x1a4] sm:$0xf]
      %v1670 = vld [vmem:[%s301 + $0x1a8] sm:$0xf]
      %v1671 = vld [vmem:[%s301 + $0x1ac] sm:$0xf]
      %v1672 = vld [vmem:[%s301 + $0x1b0] sm:$0xf]
      %v1673 = vld [vmem:[%s301 + $0x1b4] sm:$0xf]
      %v1674 = vld [vmem:[%s301 + $0x1b8] sm:$0xf]
      %v1675 = vld [vmem:[%s301 + $0x1bc] sm:$0xf]
      %v1676 = vld [vmem:[%s301 + $0x1c0] sm:$0xf]
      %v1677 = vld [vmem:[%s301 + $0x1c4] sm:$0xf]
      %v1678 = vld [vmem:[%s301 + $0x1c8] sm:$0xf]
      %v1679 = vld [vmem:[%s301 + $0x1cc] sm:$0xf]
      %v1680 = vld [vmem:[%s301 + $0x1d0] sm:$0xf]
      %v1681 = vld [vmem:[%s301 + $0x1d4] sm:$0xf]
      %v1682 = vld [vmem:[%s301 + $0x1d8] sm:$0xf]
      %v1683 = vld [vmem:[%s301 + $0x1dc] sm:$0xf]
      %v1684 = vld [vmem:[%s301 + $0x1e0] sm:$0xf]
      %v1685 = vld [vmem:[%s301 + $0x1e4] sm:$0xf]
      %v1686 = vld [vmem:[%s301 + $0x1e8] sm:$0xf]
      %v1687 = vld [vmem:[%s301 + $0x1ec] sm:$0xf]
      %v1688 = vld [vmem:[%s301 + $0x1f0] sm:$0xf]
      %v1689 = vld [vmem:[%s301 + $0x1f4] sm:$0xf]
      %v1690 = vld [vmem:[%s301 + $0x1f8] sm:$0xf]
      %v1691 = vld [vmem:[%s301 + $0x1fc] sm:$0xf]
      %v1692 = vld [vmem:[%s301 + $0x200] sm:$0xf]
      %v1693 = vld [vmem:[%s301 + $0x204] sm:$0xf]
      %v1694 = vld [vmem:[%s301 + $0x208] sm:$0xf]
      %v1695 = vld [vmem:[%s301 + $0x20c] sm:$0xf]
      %v1696 = vld [vmem:[%s301 + $0x210] sm:$0xf]
      %v1697 = vld [vmem:[%s301 + $0x214] sm:$0xf]
      %v1698 = vld [vmem:[%s301 + $0x218] sm:$0xf]
      %v1699 = vld [vmem:[%s301 + $0x21c] sm:$0xf]
      %v1700 = vld [vmem:[%s301 + $0x220] sm:$0xf]
      %v1701 = vld [vmem:[%s301 + $0x224] sm:$0xf]
      %v1702 = vld [vmem:[%s301 + $0x228] sm:$0xf]
      %v1703 = vld [vmem:[%s301 + $0x22c] sm:$0xf]
      %v1704 = vld [vmem:[%s301 + $0x230] sm:$0xf]
      %v1705 = vld [vmem:[%s301 + $0x234] sm:$0xf]
      %v1706 = vld [vmem:[%s301 + $0x238] sm:$0xf]
      %v1707 = vld [vmem:[%s301 + $0x23c] sm:$0xf]
      %v1852 = vunpack.c.l.b16 %v1564
      %v1853 = vunpack.c.l.b16 %v1565
      %v1854 = vunpack.c.l.b16 %v1566
      %v1855 = vunpack.c.l.b16 %v1567
      %v1856 = vunpack.c.l.b16 %v1568
      %v1857 = vunpack.c.l.b16 %v1569
      %v1858 = vunpack.c.l.b16 %v1570
      %v1859 = vunpack.c.l.b16 %v1571
      %v1860 = vunpack.c.l.b16 %v1572
      %v1861 = vunpack.c.l.b16 %v1573
      %v1862 = vunpack.c.l.b16 %v1574
      %v1863 = vunpack.c.l.b16 %v1575
      %v1864 = vunpack.c.l.b16 %v1576
      %v1865 = vunpack.c.l.b16 %v1577
      %v1866 = vunpack.c.l.b16 %v1578
      %v1867 = vunpack.c.l.b16 %v1579
      %v1868 = vunpack.c.l.b16 %v1580
      %v1869 = vunpack.c.l.b16 %v1581
      %v1870 = vunpack.c.l.b16 %v1582
      %v1871 = vunpack.c.l.b16 %v1583
      %v1872 = vunpack.c.l.b16 %v1584
      %v1873 = vunpack.c.l.b16 %v1585
      %v1874 = vunpack.c.l.b16 %v1586
      %v1875 = vunpack.c.l.b16 %v1587
      %v1876 = vunpack.c.l.b16 %v1588
      %v1877 = vunpack.c.l.b16 %v1589
      %v1878 = vunpack.c.l.b16 %v1590
      %v1879 = vunpack.c.l.b16 %v1591
      %v1880 = vunpack.c.l.b16 %v1592
      %v1881 = vunpack.c.l.b16 %v1593
      %v1882 = vunpack.c.l.b16 %v1594
      %v1883 = vunpack.c.l.b16 %v1595
      %v1884 = vunpack.c.l.b16 %v1596
      %v1885 = vunpack.c.l.b16 %v1597
      %v1886 = vunpack.c.l.b16 %v1598
      %v1887 = vunpack.c.l.b16 %v1599
      %v1888 = vunpack.c.l.b16 %v1600
      %v1889 = vunpack.c.l.b16 %v1601
      %v1890 = vunpack.c.l.b16 %v1602
      %v1891 = vunpack.c.l.b16 %v1603
      %v1892 = vunpack.c.l.b16 %v1604
      %v1893 = vunpack.c.l.b16 %v1605
      %v1894 = vunpack.c.l.b16 %v1606
      %v1895 = vunpack.c.l.b16 %v1607
      %v1896 = vunpack.c.l.b16 %v1608
      %v1897 = vunpack.c.l.b16 %v1609
      %v1898 = vunpack.c.l.b16 %v1610
      %v1899 = vunpack.c.l.b16 %v1611
      %v1900 = vunpack.c.l.b16 %v1612
      %v1901 = vunpack.c.l.b16 %v1613
      %v1902 = vunpack.c.l.b16 %v1614
      %v1903 = vunpack.c.l.b16 %v1615
      %v1904 = vunpack.c.l.b16 %v1616
      %v1905 = vunpack.c.l.b16 %v1617
      %v1906 = vunpack.c.l.b16 %v1618
      %v1907 = vunpack.c.l.b16 %v1619
      %v1908 = vunpack.c.l.b16 %v1620
      %v1909 = vunpack.c.l.b16 %v1621
      %v1910 = vunpack.c.l.b16 %v1622
      %v1911 = vunpack.c.l.b16 %v1623
      %v1912 = vunpack.c.l.b16 %v1624
      %v1913 = vunpack.c.l.b16 %v1625
      %v1914 = vunpack.c.l.b16 %v1626
      %v1915 = vunpack.c.l.b16 %v1627
      %v1916 = vunpack.c.l.b16 %v1628
      %v1917 = vunpack.c.l.b16 %v1629
      %v1918 = vunpack.c.l.b16 %v1630
      %v1919 = vunpack.c.l.b16 %v1631
      %v1920 = vunpack.c.l.b16 %v1632
      %v1921 = vunpack.c.l.b16 %v1633
      %v1922 = vunpack.c.l.b16 %v1634
      %v1923 = vunpack.c.l.b16 %v1635
      %v1924 = vunpack.c.l.b16 %v1636
      %v1925 = vunpack.c.l.b16 %v1637
      %v1926 = vunpack.c.l.b16 %v1638
      %v1927 = vunpack.c.l.b16 %v1639
      %v1928 = vunpack.c.l.b16 %v1640
      %v1929 = vunpack.c.l.b16 %v1641
      %v1930 = vunpack.c.l.b16 %v1642
      %v1931 = vunpack.c.l.b16 %v1643
      %v1932 = vunpack.c.l.b16 %v1644
      %v1933 = vunpack.c.l.b16 %v1645
      %v1934 = vunpack.c.l.b16 %v1646
      %v1935 = vunpack.c.l.b16 %v1647
      %v1936 = vunpack.c.l.b16 %v1648
      %v1937 = vunpack.c.l.b16 %v1649
      %v1938 = vunpack.c.l.b16 %v1650
      %v1939 = vunpack.c.l.b16 %v1651
      %v1940 = vunpack.c.l.b16 %v1652
      %v1941 = vunpack.c.l.b16 %v1653
      %v1942 = vunpack.c.l.b16 %v1654
      %v1943 = vunpack.c.l.b16 %v1655
      %v1944 = vunpack.c.l.b16 %v1656
      %v1945 = vunpack.c.l.b16 %v1657
      %v1946 = vunpack.c.l.b16 %v1658
      %v1947 = vunpack.c.l.b16 %v1659
      %v1948 = vunpack.c.l.b16 %v1660
      %v1949 = vunpack.c.l.b16 %v1661
      %v1950 = vunpack.c.l.b16 %v1662
      %v1951 = vunpack.c.l.b16 %v1663
      %v1952 = vunpack.c.l.b16 %v1664
      %v1953 = vunpack.c.l.b16 %v1665
      %v1954 = vunpack.c.l.b16 %v1666
      %v1955 = vunpack.c.l.b16 %v1667
      %v1956 = vunpack.c.l.b16 %v1668
      %v1957 = vunpack.c.l.b16 %v1669
      %v1958 = vunpack.c.l.b16 %v1670
      %v1959 = vunpack.c.l.b16 %v1671
      %v1960 = vunpack.c.l.b16 %v1672
      %v1961 = vunpack.c.l.b16 %v1673
      %v1962 = vunpack.c.l.b16 %v1674
      %v1963 = vunpack.c.l.b16 %v1675
      %v1964 = vunpack.c.l.b16 %v1676
      %v1965 = vunpack.c.l.b16 %v1677
      %v1966 = vunpack.c.l.b16 %v1678
      %v1967 = vunpack.c.l.b16 %v1679
      %v1968 = vunpack.c.l.b16 %v1680
      %v1969 = vunpack.c.l.b16 %v1681
      %v1970 = vunpack.c.l.b16 %v1682
      %v1971 = vunpack.c.l.b16 %v1683
      %v1972 = vunpack.c.l.b16 %v1684
      %v1973 = vunpack.c.l.b16 %v1685
      %v1974 = vunpack.c.l.b16 %v1686
      %v1975 = vunpack.c.l.b16 %v1687
      %v1976 = vunpack.c.l.b16 %v1688
      %v1977 = vunpack.c.l.b16 %v1689
      %v1978 = vunpack.c.l.b16 %v1690
      %v1979 = vunpack.c.l.b16 %v1691
      %v1980 = vunpack.c.l.b16 %v1692
      %v1981 = vunpack.c.l.b16 %v1693
      %v1982 = vunpack.c.l.b16 %v1694
      %v1983 = vunpack.c.l.b16 %v1695
      %v1984 = vunpack.c.l.b16 %v1696
      %v1985 = vunpack.c.l.b16 %v1697
      %v1986 = vunpack.c.l.b16 %v1698
      %v1987 = vunpack.c.l.b16 %v1699
      %v1988 = vunpack.c.l.b16 %v1700
      %v1989 = vunpack.c.l.b16 %v1701
      %v1990 = vunpack.c.l.b16 %v1702
      %v1991 = vunpack.c.l.b16 %v1703
      %v1992 = vunpack.c.l.b16 %v1704
      %v1993 = vunpack.c.l.b16 %v1705
      %v1994 = vunpack.c.l.b16 %v1706
      %v1995 = vunpack.c.l.b16 %v1707
      %v1996 = vpack.c.b16 %v1853, %v1852
      %v1997 = vpack.c.b16 %v1855, %v1854
      %v1998 = vpack.c.b16 %v1857, %v1856
      %v1999 = vpack.c.b16 %v1859, %v1858
      %v2000 = vpack.c.b16 %v1861, %v1860
      %v2001 = vpack.c.b16 %v1863, %v1862
      %v2002 = vpack.c.b16 %v1865, %v1864
      %v2003 = vpack.c.b16 %v1867, %v1866
      %v2004 = vpack.c.b16 %v1869, %v1868
      %v2005 = vpack.c.b16 %v1871, %v1870
      %v2006 = vpack.c.b16 %v1873, %v1872
      %v2007 = vpack.c.b16 %v1875, %v1874
      %v2008 = vpack.c.b16 %v1877, %v1876
      %v2009 = vpack.c.b16 %v1879, %v1878
      %v2010 = vpack.c.b16 %v1881, %v1880
      %v2011 = vpack.c.b16 %v1883, %v1882
      %v2012 = vpack.c.b16 %v1885, %v1884
      %v2013 = vpack.c.b16 %v1887, %v1886
      %v2014 = vpack.c.b16 %v1889, %v1888
      %v2015 = vpack.c.b16 %v1891, %v1890
      %v2016 = vpack.c.b16 %v1893, %v1892
      %v2017 = vpack.c.b16 %v1895, %v1894
      %v2018 = vpack.c.b16 %v1897, %v1896
      %v2019 = vpack.c.b16 %v1899, %v1898
      %v2020 = vpack.c.b16 %v1901, %v1900
      %v2021 = vpack.c.b16 %v1903, %v1902
      %v2022 = vpack.c.b16 %v1905, %v1904
      %v2023 = vpack.c.b16 %v1907, %v1906
      %v2024 = vpack.c.b16 %v1909, %v1908
      %v2025 = vpack.c.b16 %v1911, %v1910
      %v2026 = vpack.c.b16 %v1913, %v1912
      %v2027 = vpack.c.b16 %v1915, %v1914
      %v2028 = vpack.c.b16 %v1917, %v1916
      %v2029 = vpack.c.b16 %v1919, %v1918
      %v2030 = vpack.c.b16 %v1921, %v1920
      %v2031 = vpack.c.b16 %v1923, %v1922
      %v2032 = vpack.c.b16 %v1925, %v1924
      %v2033 = vpack.c.b16 %v1927, %v1926
      %v2034 = vpack.c.b16 %v1929, %v1928
      %v2035 = vpack.c.b16 %v1931, %v1930
      %v2036 = vpack.c.b16 %v1933, %v1932
      %v2037 = vpack.c.b16 %v1935, %v1934
      %v2038 = vpack.c.b16 %v1937, %v1936
      %v2039 = vpack.c.b16 %v1939, %v1938
      %v2040 = vpack.c.b16 %v1941, %v1940
      %v2041 = vpack.c.b16 %v1943, %v1942
      %v2042 = vpack.c.b16 %v1945, %v1944
      %v2043 = vpack.c.b16 %v1947, %v1946
      %v2044 = vpack.c.b16 %v1949, %v1948
      %v2045 = vpack.c.b16 %v1951, %v1950
      %v2046 = vpack.c.b16 %v1953, %v1952
      %v2047 = vpack.c.b16 %v1955, %v1954
      %v2048 = vpack.c.b16 %v1957, %v1956
      %v2049 = vpack.c.b16 %v1959, %v1958
      %v2050 = vpack.c.b16 %v1961, %v1960
      %v2051 = vpack.c.b16 %v1963, %v1962
      %v2052 = vpack.c.b16 %v1965, %v1964
      %v2053 = vpack.c.b16 %v1967, %v1966
      %v2054 = vpack.c.b16 %v1969, %v1968
      %v2055 = vpack.c.b16 %v1971, %v1970
      %v2056 = vpack.c.b16 %v1973, %v1972
      %v2057 = vpack.c.b16 %v1975, %v1974
      %v2058 = vpack.c.b16 %v1977, %v1976
      %v2059 = vpack.c.b16 %v1979, %v1978
      %v2060 = vpack.c.b16 %v1981, %v1980
      %v2061 = vpack.c.b16 %v1983, %v1982
      %v2062 = vpack.c.b16 %v1985, %v1984
      %v2063 = vpack.c.b16 %v1987, %v1986
      %v2064 = vpack.c.b16 %v1989, %v1988
      %v2065 = vpack.c.b16 %v1991, %v1990
      %v2066 = vpack.c.b16 %v1993, %v1992
      %v2067 = vpack.c.b16 %v1995, %v1994
      %2140 = vmatpush.bf16.msra.mxu0 %v2003
      %2141 = vmatpush.bf16.msra.mxu0 %v2002
      %2142 = vmatpush.bf16.msra.mxu0 %v2001
      %2143 = vmatpush.bf16.msra.mxu0 %v2000
      %2144 = vmatpush.bf16.msra.mxu0 %v1999
      %2145 = vmatpush.bf16.msra.mxu0 %v1998
      %2146 = vmatpush.bf16.msra.mxu0 %v1997
      %2147 = vmatpush.bf16.msra.mxu0 %v1996
      %2148 = vmatmul.bf16.gmra.mxu0 %v1380
      %v2149 = vpop.f32.mrf.mxu0
      %v2150 = vadd.f32 0.0, %v2149
      %v2151 = vpop.f32.mrf.mxu0
      %v2152 = vadd.f32 0.0, %v2151
      %2153 = vmatmul.bf16.gmra.mxu0 %v1381
      %v2154 = vpop.f32.mrf.mxu0
      %v2155 = vadd.f32 0.0, %v2154
      %v2156 = vpop.f32.mrf.mxu0
      %v2157 = vadd.f32 0.0, %v2156
      %2158 = vmatmul.bf16.gmra.mxu0 %v1382
      %v2159 = vpop.f32.mrf.mxu0
      %v2160 = vadd.f32 0.0, %v2159
      %v2161 = vpop.f32.mrf.mxu0
      %v2162 = vadd.f32 0.0, %v2161
      %2163 = vmatmul.bf16.gmra.mxu0 %v1383
      %v2164 = vpop.f32.mrf.mxu0
      %v2165 = vadd.f32 0.0, %v2164
      %v2166 = vpop.f32.mrf.mxu0
      %v2167 = vadd.f32 0.0, %v2166
      %2168 = vmatmul.bf16.gmra.mxu0 %v1384
      %v2169 = vpop.f32.mrf.mxu0
      %v2170 = vadd.f32 0.0, %v2169
      %v2171 = vpop.f32.mrf.mxu0
      %v2172 = vadd.f32 0.0, %v2171
      %2173 = vmatmul.bf16.gmra.mxu0 %v1385
      %v2174 = vpop.f32.mrf.mxu0
      %v2175 = vadd.f32 0.0, %v2174
      %v2176 = vpop.f32.mrf.mxu0
      %v2177 = vadd.f32 0.0, %v2176
      %2178 = vmatmul.bf16.gmra.mxu0 %v1386
      %v2179 = vpop.f32.mrf.mxu0
      %v2180 = vadd.f32 0.0, %v2179
      %v2181 = vpop.f32.mrf.mxu0
      %v2182 = vadd.f32 0.0, %v2181
      %2183 = vmatmul.bf16.gmra.mxu0 %v1387
      %v2184 = vpop.f32.mrf.mxu0
      %v2185 = vadd.f32 0.0, %v2184
      %v2186 = vpop.f32.mrf.mxu0
      %v2187 = vadd.f32 0.0, %v2186
      %2188 = vmatmul.bf16.gmra.mxu0 %v1388
      %v2189 = vpop.f32.mrf.mxu0
      %v2190 = vadd.f32 0.0, %v2189
      %v2191 = vpop.f32.mrf.mxu0
      %v2192 = vadd.f32 0.0, %v2191
      %2193 = vmatmul.bf16.gmra.mxu0 %v1389
      %v2194 = vpop.f32.mrf.mxu0
      %v2195 = vadd.f32 0.0, %v2194
      %v2196 = vpop.f32.mrf.mxu0
      %v2197 = vadd.f32 0.0, %v2196
      %2198 = vmatmul.bf16.gmra.mxu0 %v1390
      %v2199 = vpop.f32.mrf.mxu0
      %v2200 = vadd.f32 0.0, %v2199
      %v2201 = vpop.f32.mrf.mxu0
      %v2202 = vadd.f32 0.0, %v2201
      %2203 = vmatmul.bf16.gmra.mxu0 %v1391
      %v2204 = vpop.f32.mrf.mxu0
      %v2205 = vadd.f32 0.0, %v2204
      %v2206 = vpop.f32.mrf.mxu0
      %v2207 = vadd.f32 0.0, %v2206
      %2208 = vmatmul.bf16.gmra.mxu0 %v1392
      %v2209 = vpop.f32.mrf.mxu0
      %v2210 = vadd.f32 0.0, %v2209
      %v2211 = vpop.f32.mrf.mxu0
      %v2212 = vadd.f32 0.0, %v2211
      %2213 = vmatmul.bf16.gmra.mxu0 %v1393
      %v2214 = vpop.f32.mrf.mxu0
      %v2215 = vadd.f32 0.0, %v2214
      %v2216 = vpop.f32.mrf.mxu0
      %v2217 = vadd.f32 0.0, %v2216
      %2218 = vmatmul.bf16.gmra.mxu0 %v1394
      %v2219 = vpop.f32.mrf.mxu0
      %v2220 = vadd.f32 0.0, %v2219
      %v2221 = vpop.f32.mrf.mxu0
      %v2222 = vadd.f32 0.0, %v2221
      %2223 = vmatmul.bf16.gmra.mxu0 %v1395
      %v2224 = vpop.f32.mrf.mxu0
      %v2225 = vadd.f32 0.0, %v2224
      %v2226 = vpop.f32.mrf.mxu0
      %v2227 = vadd.f32 0.0, %v2226
      %2228 = vdwg.mxu0
      %2229 = vmatpush.bf16.msra.mxu0 %v2011
      %2230 = vmatpush.bf16.msra.mxu0 %v2010
      %2231 = vmatpush.bf16.msra.mxu0 %v2009
      %2232 = vmatpush.bf16.msra.mxu0 %v2008
      %2233 = vmatpush.bf16.msra.mxu0 %v2007
      %2234 = vmatpush.bf16.msra.mxu0 %v2006
      %2235 = vmatpush.bf16.msra.mxu0 %v2005
      %2236 = vmatpush.bf16.msra.mxu0 %v2004
      %2237 = vmatmul.bf16.gmra.mxu0 %v1444
      %v2238 = vpop.f32.mrf.mxu0
      %v2239 = vadd.f32 %v2150, %v2238
      %v2240 = vpop.f32.mrf.mxu0
      %v2241 = vadd.f32 %v2152, %v2240
      %2242 = vmatmul.bf16.gmra.mxu0 %v1445
      %v2243 = vpop.f32.mrf.mxu0
      %v2244 = vadd.f32 %v2155, %v2243
      %v2245 = vpop.f32.mrf.mxu0
      %v2246 = vadd.f32 %v2157, %v2245
      %2247 = vmatmul.bf16.gmra.mxu0 %v1446
      %v2248 = vpop.f32.mrf.mxu0
      %v2249 = vadd.f32 %v2160, %v2248
      %v2250 = vpop.f32.mrf.mxu0
      %v2251 = vadd.f32 %v2162, %v2250
      %2252 = vmatmul.bf16.gmra.mxu0 %v1447
      %v2253 = vpop.f32.mrf.mxu0
      %v2254 = vadd.f32 %v2165, %v2253
      %v2255 = vpop.f32.mrf.mxu0
      %v2256 = vadd.f32 %v2167, %v2255
      %2257 = vmatmul.bf16.gmra.mxu0 %v1448
      %v2258 = vpop.f32.mrf.mxu0
      %v2259 = vadd.f32 %v2170, %v2258
      %v2260 = vpop.f32.mrf.mxu0
      %v2261 = vadd.f32 %v2172, %v2260
      %2262 = vmatmul.bf16.gmra.mxu0 %v1449
      %v2263 = vpop.f32.mrf.mxu0
      %v2264 = vadd.f32 %v2175, %v2263
      %v2265 = vpop.f32.mrf.mxu0
      %v2266 = vadd.f32 %v2177, %v2265
      %2267 = vmatmul.bf16.gmra.mxu0 %v1450
      %v2268 = vpop.f32.mrf.mxu0
      %v2269 = vadd.f32 %v2180, %v2268
      %v2270 = vpop.f32.mrf.mxu0
      %v2271 = vadd.f32 %v2182, %v2270
      %2272 = vmatmul.bf16.gmra.mxu0 %v1451
      %v2273 = vpop.f32.mrf.mxu0
      %v2274 = vadd.f32 %v2185, %v2273
      %v2275 = vpop.f32.mrf.mxu0
      %v2276 = vadd.f32 %v2187, %v2275
      %2277 = vmatmul.bf16.gmra.mxu0 %v1452
      %v2278 = vpop.f32.mrf.mxu0
      %v2279 = vadd.f32 %v2190, %v2278
      %v2280 = vpop.f32.mrf.mxu0
      %v2281 = vadd.f32 %v2192, %v2280
      %2282 = vmatmul.bf16.gmra.mxu0 %v1453
      %v2283 = vpop.f32.mrf.mxu0
      %v2284 = vadd.f32 %v2195, %v2283
      %v2285 = vpop.f32.mrf.mxu0
      %v2286 = vadd.f32 %v2197, %v2285
      %2287 = vmatmul.bf16.gmra.mxu0 %v1454
      %v2288 = vpop.f32.mrf.mxu0
      %v2289 = vadd.f32 %v2200, %v2288
      %v2290 = vpop.f32.mrf.mxu0
      %v2291 = vadd.f32 %v2202, %v2290
      %2292 = vmatmul.bf16.gmra.mxu0 %v1455
      %v2293 = vpop.f32.mrf.mxu0
      %v2294 = vadd.f32 %v2205, %v2293
      %v2295 = vpop.f32.mrf.mxu0
      %v2296 = vadd.f32 %v2207, %v2295
      %2297 = vmatmul.bf16.gmra.mxu0 %v1456
      %v2298 = vpop.f32.mrf.mxu0
      %v2299 = vadd.f32 %v2210, %v2298
      %v2300 = vpop.f32.mrf.mxu0
      %v2301 = vadd.f32 %v2212, %v2300
      %2302 = vmatmul.bf16.gmra.mxu0 %v1457
      %v2303 = vpop.f32.mrf.mxu0
      %v2304 = vadd.f32 %v2215, %v2303
      %v2305 = vpop.f32.mrf.mxu0
      %v2306 = vadd.f32 %v2217, %v2305
      %2307 = vmatmul.bf16.gmra.mxu0 %v1458
      %v2308 = vpop.f32.mrf.mxu0
      %v2309 = vadd.f32 %v2220, %v2308
      %v2310 = vpop.f32.mrf.mxu0
      %v2311 = vadd.f32 %v2222, %v2310
      %2312 = vmatmul.bf16.gmra.mxu0 %v1459
      %v2313 = vpop.f32.mrf.mxu0
      %v2314 = vadd.f32 %v2225, %v2313
      %v2315 = vpop.f32.mrf.mxu0
      %v2316 = vadd.f32 %v2227, %v2315
      %2317 = vdwg.mxu0
      %2318 = vmatpush.bf16.msra.mxu0 %v2019
      %2319 = vmatpush.bf16.msra.mxu0 %v2018
      %2320 = vmatpush.bf16.msra.mxu0 %v2017
      %2321 = vmatpush.bf16.msra.mxu0 %v2016
      %2322 = vmatpush.bf16.msra.mxu0 %v2015
      %2323 = vmatpush.bf16.msra.mxu0 %v2014
      %2324 = vmatpush.bf16.msra.mxu0 %v2013
      %2325 = vmatpush.bf16.msra.mxu0 %v2012
      %2326 = vmatmul.bf16.gmra.mxu0 %v1508
      %v2327 = vpop.f32.mrf.mxu0
      %v2328 = vadd.f32 %v2239, %v2327
      %v2329 = vpop.f32.mrf.mxu0
      %v2330 = vadd.f32 %v2241, %v2329
      %2331 = vmatmul.bf16.gmra.mxu0 %v1509
      %v2332 = vpop.f32.mrf.mxu0
      %v2333 = vadd.f32 %v2244, %v2332
      %v2334 = vpop.f32.mrf.mxu0
      %v2335 = vadd.f32 %v2246, %v2334
      %2336 = vmatmul.bf16.gmra.mxu0 %v1510
      %v2337 = vpop.f32.mrf.mxu0
      %v2338 = vadd.f32 %v2249, %v2337
      %v2339 = vpop.f32.mrf.mxu0
      %v2340 = vadd.f32 %v2251, %v2339
      %2341 = vmatmul.bf16.gmra.mxu0 %v1511
      %v2342 = vpop.f32.mrf.mxu0
      %v2343 = vadd.f32 %v2254, %v2342
      %v2344 = vpop.f32.mrf.mxu0
      %v2345 = vadd.f32 %v2256, %v2344
      %2346 = vmatmul.bf16.gmra.mxu0 %v1512
      %v2347 = vpop.f32.mrf.mxu0
      %v2348 = vadd.f32 %v2259, %v2347
      %v2349 = vpop.f32.mrf.mxu0
      %v2350 = vadd.f32 %v2261, %v2349
      %2351 = vmatmul.bf16.gmra.mxu0 %v1513
      %v2352 = vpop.f32.mrf.mxu0
      %v2353 = vadd.f32 %v2264, %v2352
      %v2354 = vpop.f32.mrf.mxu0
      %v2355 = vadd.f32 %v2266, %v2354
      %2356 = vmatmul.bf16.gmra.mxu0 %v1514
      %v2357 = vpop.f32.mrf.mxu0
      %v2358 = vadd.f32 %v2269, %v2357
      %v2359 = vpop.f32.mrf.mxu0
      %v2360 = vadd.f32 %v2271, %v2359
      %2361 = vmatmul.bf16.gmra.mxu0 %v1515
      %v2362 = vpop.f32.mrf.mxu0
      %v2363 = vadd.f32 %v2274, %v2362
      %v2364 = vpop.f32.mrf.mxu0
      %v2365 = vadd.f32 %v2276, %v2364
      %2366 = vmatmul.bf16.gmra.mxu0 %v1516
      %v2367 = vpop.f32.mrf.mxu0
      %v2368 = vadd.f32 %v2279, %v2367
      %v2369 = vpop.f32.mrf.mxu0
      %v2370 = vadd.f32 %v2281, %v2369
      %2371 = vmatmul.bf16.gmra.mxu0 %v1517
      %v2372 = vpop.f32.mrf.mxu0
      %v2373 = vadd.f32 %v2284, %v2372
      %v2374 = vpop.f32.mrf.mxu0
      %v2375 = vadd.f32 %v2286, %v2374
      %2376 = vmatmul.bf16.gmra.mxu0 %v1518
      %v2377 = vpop.f32.mrf.mxu0
      %v2378 = vadd.f32 %v2289, %v2377
      %v2379 = vpop.f32.mrf.mxu0
      %v2380 = vadd.f32 %v2291, %v2379
      %2381 = vmatmul.bf16.gmra.mxu0 %v1519
      %v2382 = vpop.f32.mrf.mxu0
      %v2383 = vadd.f32 %v2294, %v2382
      %v2384 = vpop.f32.mrf.mxu0
      %v2385 = vadd.f32 %v2296, %v2384
      %2386 = vmatmul.bf16.gmra.mxu0 %v1520
      %v2387 = vpop.f32.mrf.mxu0
      %v2388 = vadd.f32 %v2299, %v2387
      %v2389 = vpop.f32.mrf.mxu0
      %v2390 = vadd.f32 %v2301, %v2389
      %2391 = vmatmul.bf16.gmra.mxu0 %v1521
      %v2392 = vpop.f32.mrf.mxu0
      %v2393 = vadd.f32 %v2304, %v2392
      %v2394 = vpop.f32.mrf.mxu0
      %v2395 = vadd.f32 %v2306, %v2394
      %2396 = vmatmul.bf16.gmra.mxu0 %v1522
      %v2397 = vpop.f32.mrf.mxu0
      %v2398 = vadd.f32 %v2309, %v2397
      %v2399 = vpop.f32.mrf.mxu0
      %v2400 = vadd.f32 %v2311, %v2399
      %2401 = vmatmul.bf16.gmra.mxu0 %v1523
      %v2402 = vpop.f32.mrf.mxu0
      %v2403 = vadd.f32 %v2314, %v2402
      %v2404 = vpop.f32.mrf.mxu0
      %v2405 = vadd.f32 %v2316, %v2404
      %2406 = vdwg.mxu0
      %2407 = vmatpush.bf16.msra.mxu0 %v2027
      %2408 = vmatpush.bf16.msra.mxu0 %v2026
      %2409 = vmatpush.bf16.msra.mxu0 %v2025
      %2410 = vmatpush.bf16.msra.mxu0 %v2024
      %2411 = vmatpush.bf16.msra.mxu0 %v2023
      %2412 = vmatpush.bf16.msra.mxu0 %v2022
      %2413 = vmatpush.bf16.msra.mxu0 %v2021
      %2414 = vmatpush.bf16.msra.mxu0 %v2020
      %2415 = vmatmul.bf16.gmra.mxu0 %v1381
      %v2416 = vpop.f32.mrf.mxu0
      %v2417 = vadd.f32 %v2328, %v2416
      %v2418 = vpop.f32.mrf.mxu0
      %v2419 = vadd.f32 %v2330, %v2418
      %2420 = vmatmul.bf16.gmra.mxu0 %v1382
      %v2421 = vpop.f32.mrf.mxu0
      %v2422 = vadd.f32 %v2333, %v2421
      %v2423 = vpop.f32.mrf.mxu0
      %v2424 = vadd.f32 %v2335, %v2423
      %2425 = vmatmul.bf16.gmra.mxu0 %v1383
      %v2426 = vpop.f32.mrf.mxu0
      %v2427 = vadd.f32 %v2338, %v2426
      %v2428 = vpop.f32.mrf.mxu0
      %v2429 = vadd.f32 %v2340, %v2428
      %2430 = vmatmul.bf16.gmra.mxu0 %v1384
      %v2431 = vpop.f32.mrf.mxu0
      %v2432 = vadd.f32 %v2343, %v2431
      %v2433 = vpop.f32.mrf.mxu0
      %v2434 = vadd.f32 %v2345, %v2433
      %2435 = vmatmul.bf16.gmra.mxu0 %v1385
      %v2436 = vpop.f32.mrf.mxu0
      %v2437 = vadd.f32 %v2348, %v2436
      %v2438 = vpop.f32.mrf.mxu0
      %v2439 = vadd.f32 %v2350, %v2438
      %2440 = vmatmul.bf16.gmra.mxu0 %v1386
      %v2441 = vpop.f32.mrf.mxu0
      %v2442 = vadd.f32 %v2353, %v2441
      %v2443 = vpop.f32.mrf.mxu0
      %v2444 = vadd.f32 %v2355, %v2443
      %2445 = vmatmul.bf16.gmra.mxu0 %v1387
      %v2446 = vpop.f32.mrf.mxu0
      %v2447 = vadd.f32 %v2358, %v2446
      %v2448 = vpop.f32.mrf.mxu0
      %v2449 = vadd.f32 %v2360, %v2448
      %2450 = vmatmul.bf16.gmra.mxu0 %v1388
      %v2451 = vpop.f32.mrf.mxu0
      %v2452 = vadd.f32 %v2363, %v2451
      %v2453 = vpop.f32.mrf.mxu0
      %v2454 = vadd.f32 %v2365, %v2453
      %2455 = vmatmul.bf16.gmra.mxu0 %v1389
      %v2456 = vpop.f32.mrf.mxu0
      %v2457 = vadd.f32 %v2368, %v2456
      %v2458 = vpop.f32.mrf.mxu0
      %v2459 = vadd.f32 %v2370, %v2458
      %2460 = vmatmul.bf16.gmra.mxu0 %v1390
      %v2461 = vpop.f32.mrf.mxu0
      %v2462 = vadd.f32 %v2373, %v2461
      %v2463 = vpop.f32.mrf.mxu0
      %v2464 = vadd.f32 %v2375, %v2463
      %2465 = vmatmul.bf16.gmra.mxu0 %v1391
      %v2466 = vpop.f32.mrf.mxu0
      %v2467 = vadd.f32 %v2378, %v2466
      %v2468 = vpop.f32.mrf.mxu0
      %v2469 = vadd.f32 %v2380, %v2468
      %2470 = vmatmul.bf16.gmra.mxu0 %v1392
      %v2471 = vpop.f32.mrf.mxu0
      %v2472 = vadd.f32 %v2383, %v2471
      %v2473 = vpop.f32.mrf.mxu0
      %v2474 = vadd.f32 %v2385, %v2473
      %2475 = vmatmul.bf16.gmra.mxu0 %v1393
      %v2476 = vpop.f32.mrf.mxu0
      %v2477 = vadd.f32 %v2388, %v2476
      %v2478 = vpop.f32.mrf.mxu0
      %v2479 = vadd.f32 %v2390, %v2478
      %2480 = vmatmul.bf16.gmra.mxu0 %v1394
      %v2481 = vpop.f32.mrf.mxu0
      %v2482 = vadd.f32 %v2393, %v2481
      %v2483 = vpop.f32.mrf.mxu0
      %v2484 = vadd.f32 %v2395, %v2483
      %2485 = vmatmul.bf16.gmra.mxu0 %v1395
      %v2486 = vpop.f32.mrf.mxu0
      %v2487 = vadd.f32 %v2398, %v2486
      %v2488 = vpop.f32.mrf.mxu0
      %v2489 = vadd.f32 %v2400, %v2488
      %2490 = vmatmul.bf16.gmra.mxu0 %v1542
      %v2491 = vpop.f32.mrf.mxu0
      %v2492 = vadd.f32 %v2403, %v2491
      %v2493 = vpop.f32.mrf.mxu0
      %v2494 = vadd.f32 %v2405, %v2493
      %2495 = vdwg.mxu0
      %2496 = vmatpush.bf16.msra.mxu0 %v2035
      %2497 = vmatpush.bf16.msra.mxu0 %v2034
      %2498 = vmatpush.bf16.msra.mxu0 %v2033
      %2499 = vmatpush.bf16.msra.mxu0 %v2032
      %2500 = vmatpush.bf16.msra.mxu0 %v2031
      %2501 = vmatpush.bf16.msra.mxu0 %v2030
      %2502 = vmatpush.bf16.msra.mxu0 %v2029
      %2503 = vmatpush.bf16.msra.mxu0 %v2028
      %2504 = vmatmul.bf16.gmra.mxu0 %v1445
      %v2505 = vpop.f32.mrf.mxu0
      %v2506 = vadd.f32 %v2417, %v2505
      %v2507 = vpop.f32.mrf.mxu0
      %v2508 = vadd.f32 %v2419, %v2507
      %2509 = vmatmul.bf16.gmra.mxu0 %v1446
      %v2510 = vpop.f32.mrf.mxu0
      %v2511 = vadd.f32 %v2422, %v2510
      %v2512 = vpop.f32.mrf.mxu0
      %v2513 = vadd.f32 %v2424, %v2512
      %2514 = vmatmul.bf16.gmra.mxu0 %v1447
      %v2515 = vpop.f32.mrf.mxu0
      %v2516 = vadd.f32 %v2427, %v2515
      %v2517 = vpop.f32.mrf.mxu0
      %v2518 = vadd.f32 %v2429, %v2517
      %2519 = vmatmul.bf16.gmra.mxu0 %v1448
      %v2520 = vpop.f32.mrf.mxu0
      %v2521 = vadd.f32 %v2432, %v2520
      %v2522 = vpop.f32.mrf.mxu0
      %v2523 = vadd.f32 %v2434, %v2522
      %2524 = vmatmul.bf16.gmra.mxu0 %v1449
      %v2525 = vpop.f32.mrf.mxu0
      %v2526 = vadd.f32 %v2437, %v2525
      %v2527 = vpop.f32.mrf.mxu0
      %v2528 = vadd.f32 %v2439, %v2527
      %2529 = vmatmul.bf16.gmra.mxu0 %v1450
      %v2530 = vpop.f32.mrf.mxu0
      %v2531 = vadd.f32 %v2442, %v2530
      %v2532 = vpop.f32.mrf.mxu0
      %v2533 = vadd.f32 %v2444, %v2532
      %2534 = vmatmul.bf16.gmra.mxu0 %v1451
      %v2535 = vpop.f32.mrf.mxu0
      %v2536 = vadd.f32 %v2447, %v2535
      %v2537 = vpop.f32.mrf.mxu0
      %v2538 = vadd.f32 %v2449, %v2537
      %2539 = vmatmul.bf16.gmra.mxu0 %v1452
      %v2540 = vpop.f32.mrf.mxu0
      %v2541 = vadd.f32 %v2452, %v2540
      %v2542 = vpop.f32.mrf.mxu0
      %v2543 = vadd.f32 %v2454, %v2542
      %2544 = vmatmul.bf16.gmra.mxu0 %v1453
      %v2545 = vpop.f32.mrf.mxu0
      %v2546 = vadd.f32 %v2457, %v2545
      %v2547 = vpop.f32.mrf.mxu0
      %v2548 = vadd.f32 %v2459, %v2547
      %2549 = vmatmul.bf16.gmra.mxu0 %v1454
      %v2550 = vpop.f32.mrf.mxu0
      %v2551 = vadd.f32 %v2462, %v2550
      %v2552 = vpop.f32.mrf.mxu0
      %v2553 = vadd.f32 %v2464, %v2552
      %2554 = vmatmul.bf16.gmra.mxu0 %v1455
      %v2555 = vpop.f32.mrf.mxu0
      %v2556 = vadd.f32 %v2467, %v2555
      %v2557 = vpop.f32.mrf.mxu0
      %v2558 = vadd.f32 %v2469, %v2557
      %2559 = vmatmul.bf16.gmra.mxu0 %v1456
      %v2560 = vpop.f32.mrf.mxu0
      %v2561 = vadd.f32 %v2472, %v2560
      %v2562 = vpop.f32.mrf.mxu0
      %v2563 = vadd.f32 %v2474, %v2562
      %2564 = vmatmul.bf16.gmra.mxu0 %v1457
      %v2565 = vpop.f32.mrf.mxu0
      %v2566 = vadd.f32 %v2477, %v2565
      %v2567 = vpop.f32.mrf.mxu0
      %v2568 = vadd.f32 %v2479, %v2567
      %2569 = vmatmul.bf16.gmra.mxu0 %v1458
      %v2570 = vpop.f32.mrf.mxu0
      %v2571 = vadd.f32 %v2482, %v2570
      %v2572 = vpop.f32.mrf.mxu0
      %v2573 = vadd.f32 %v2484, %v2572
      %2574 = vmatmul.bf16.gmra.mxu0 %v1459
      %v2575 = vpop.f32.mrf.mxu0
      %v2576 = vadd.f32 %v2487, %v2575
      %v2577 = vpop.f32.mrf.mxu0
      %v2578 = vadd.f32 %v2489, %v2577
      %2579 = vmatmul.bf16.gmra.mxu0 %v1546
      %v2580 = vpop.f32.mrf.mxu0
      %v2581 = vadd.f32 %v2492, %v2580
      %v2582 = vpop.f32.mrf.mxu0
      %v2583 = vadd.f32 %v2494, %v2582
      %2584 = vdwg.mxu0
      %2585 = vmatpush.bf16.msra.mxu0 %v2043
      %2586 = vmatpush.bf16.msra.mxu0 %v2042
      %2587 = vmatpush.bf16.msra.mxu0 %v2041
      %2588 = vmatpush.bf16.msra.mxu0 %v2040
      %2589 = vmatpush.bf16.msra.mxu0 %v2039
      %2590 = vmatpush.bf16.msra.mxu0 %v2038
      %2591 = vmatpush.bf16.msra.mxu0 %v2037
      %2592 = vmatpush.bf16.msra.mxu0 %v2036
      %2593 = vmatmul.bf16.gmra.mxu0 %v1509
      %v2594 = vpop.f32.mrf.mxu0
      %v2595 = vadd.f32 %v2506, %v2594
      %v2596 = vpop.f32.mrf.mxu0
      %v2597 = vadd.f32 %v2508, %v2596
      %2598 = vmatmul.bf16.gmra.mxu0 %v1510
      %v2599 = vpop.f32.mrf.mxu0
      %v2600 = vadd.f32 %v2511, %v2599
      %v2601 = vpop.f32.mrf.mxu0
      %v2602 = vadd.f32 %v2513, %v2601
      %2603 = vmatmul.bf16.gmra.mxu0 %v1511
      %v2604 = vpop.f32.mrf.mxu0
      %v2605 = vadd.f32 %v2516, %v2604
      %v2606 = vpop.f32.mrf.mxu0
      %v2607 = vadd.f32 %v2518, %v2606
      %2608 = vmatmul.bf16.gmra.mxu0 %v1512
      %v2609 = vpop.f32.mrf.mxu0
      %v2610 = vadd.f32 %v2521, %v2609
      %v2611 = vpop.f32.mrf.mxu0
      %v2612 = vadd.f32 %v2523, %v2611
      %2613 = vmatmul.bf16.gmra.mxu0 %v1513
      %v2614 = vpop.f32.mrf.mxu0
      %v2615 = vadd.f32 %v2526, %v2614
      %v2616 = vpop.f32.mrf.mxu0
      %v2617 = vadd.f32 %v2528, %v2616
      %2618 = vmatmul.bf16.gmra.mxu0 %v1514
      %v2619 = vpop.f32.mrf.mxu0
      %v2620 = vadd.f32 %v2531, %v2619
      %v2621 = vpop.f32.mrf.mxu0
      %v2622 = vadd.f32 %v2533, %v2621
      %2623 = vmatmul.bf16.gmra.mxu0 %v1515
      %v2624 = vpop.f32.mrf.mxu0
      %v2625 = vadd.f32 %v2536, %v2624
      %v2626 = vpop.f32.mrf.mxu0
      %v2627 = vadd.f32 %v2538, %v2626
      %2628 = vmatmul.bf16.gmra.mxu0 %v1516
      %v2629 = vpop.f32.mrf.mxu0
      %v2630 = vadd.f32 %v2541, %v2629
      %v2631 = vpop.f32.mrf.mxu0
      %v2632 = vadd.f32 %v2543, %v2631
      %2633 = vmatmul.bf16.gmra.mxu0 %v1517
      %v2634 = vpop.f32.mrf.mxu0
      %v2635 = vadd.f32 %v2546, %v2634
      %v2636 = vpop.f32.mrf.mxu0
      %v2637 = vadd.f32 %v2548, %v2636
      %2638 = vmatmul.bf16.gmra.mxu0 %v1518
      %v2639 = vpop.f32.mrf.mxu0
      %v2640 = vadd.f32 %v2551, %v2639
      %v2641 = vpop.f32.mrf.mxu0
      %v2642 = vadd.f32 %v2553, %v2641
      %2643 = vmatmul.bf16.gmra.mxu0 %v1519
      %v2644 = vpop.f32.mrf.mxu0
      %v2645 = vadd.f32 %v2556, %v2644
      %v2646 = vpop.f32.mrf.mxu0
      %v2647 = vadd.f32 %v2558, %v2646
      %2648 = vmatmul.bf16.gmra.mxu0 %v1520
      %v2649 = vpop.f32.mrf.mxu0
      %v2650 = vadd.f32 %v2561, %v2649
      %v2651 = vpop.f32.mrf.mxu0
      %v2652 = vadd.f32 %v2563, %v2651
      %2653 = vmatmul.bf16.gmra.mxu0 %v1521
      %v2654 = vpop.f32.mrf.mxu0
      %v2655 = vadd.f32 %v2566, %v2654
      %v2656 = vpop.f32.mrf.mxu0
      %v2657 = vadd.f32 %v2568, %v2656
      %2658 = vmatmul.bf16.gmra.mxu0 %v1522
      %v2659 = vpop.f32.mrf.mxu0
      %v2660 = vadd.f32 %v2571, %v2659
      %v2661 = vpop.f32.mrf.mxu0
      %v2662 = vadd.f32 %v2573, %v2661
      %2663 = vmatmul.bf16.gmra.mxu0 %v1523
      %v2664 = vpop.f32.mrf.mxu0
      %v2665 = vadd.f32 %v2576, %v2664
      %v2666 = vpop.f32.mrf.mxu0
      %v2667 = vadd.f32 %v2578, %v2666
      %2668 = vmatmul.bf16.gmra.mxu0 %v1550
      %v2669 = vpop.f32.mrf.mxu0
      %v2670 = vadd.f32 %v2581, %v2669
      %v2671 = vpop.f32.mrf.mxu0
      %v2672 = vadd.f32 %v2583, %v2671
      %2673 = vdwg.mxu0
      %2674 = vmatpush.bf16.msra.mxu0 %v2051
      %2675 = vmatpush.bf16.msra.mxu0 %v2050
      %2676 = vmatpush.bf16.msra.mxu0 %v2049
      %2677 = vmatpush.bf16.msra.mxu0 %v2048
      %2678 = vmatpush.bf16.msra.mxu0 %v2047
      %2679 = vmatpush.bf16.msra.mxu0 %v2046
      %2680 = vmatpush.bf16.msra.mxu0 %v2045
      %2681 = vmatpush.bf16.msra.mxu0 %v2044
      %2682 = vmatmul.bf16.gmra.mxu0 %v1382
      %v2683 = vpop.f32.mrf.mxu0
      %v2684 = vadd.f32 %v2595, %v2683
      %v2685 = vpop.f32.mrf.mxu0
      %v2686 = vadd.f32 %v2597, %v2685
      %2687 = vmatmul.bf16.gmra.mxu0 %v1383
      %v2688 = vpop.f32.mrf.mxu0
      %v2689 = vadd.f32 %v2600, %v2688
      %v2690 = vpop.f32.mrf.mxu0
      %v2691 = vadd.f32 %v2602, %v2690
      %2692 = vmatmul.bf16.gmra.mxu0 %v1384
      %v2693 = vpop.f32.mrf.mxu0
      %v2694 = vadd.f32 %v2605, %v2693
      %v2695 = vpop.f32.mrf.mxu0
      %v2696 = vadd.f32 %v2607, %v2695
      %2697 = vmatmul.bf16.gmra.mxu0 %v1385
      %v2698 = vpop.f32.mrf.mxu0
      %v2699 = vadd.f32 %v2610, %v2698
      %v2700 = vpop.f32.mrf.mxu0
      %v2701 = vadd.f32 %v2612, %v2700
      %2702 = vmatmul.bf16.gmra.mxu0 %v1386
      %v2703 = vpop.f32.mrf.mxu0
      %v2704 = vadd.f32 %v2615, %v2703
      %v2705 = vpop.f32.mrf.mxu0
      %v2706 = vadd.f32 %v2617, %v2705
      %2707 = vmatmul.bf16.gmra.mxu0 %v1387
      %v2708 = vpop.f32.mrf.mxu0
      %v2709 = vadd.f32 %v2620, %v2708
      %v2710 = vpop.f32.mrf.mxu0
      %v2711 = vadd.f32 %v2622, %v2710
      %2712 = vmatmul.bf16.gmra.mxu0 %v1388
      %v2713 = vpop.f32.mrf.mxu0
      %v2714 = vadd.f32 %v2625, %v2713
      %v2715 = vpop.f32.mrf.mxu0
      %v2716 = vadd.f32 %v2627, %v2715
      %2717 = vmatmul.bf16.gmra.mxu0 %v1389
      %v2718 = vpop.f32.mrf.mxu0
      %v2719 = vadd.f32 %v2630, %v2718
      %v2720 = vpop.f32.mrf.mxu0
      %v2721 = vadd.f32 %v2632, %v2720
      %2722 = vmatmul.bf16.gmra.mxu0 %v1390
      %v2723 = vpop.f32.mrf.mxu0
      %v2724 = vadd.f32 %v2635, %v2723
      %v2725 = vpop.f32.mrf.mxu0
      %v2726 = vadd.f32 %v2637, %v2725
      %2727 = vmatmul.bf16.gmra.mxu0 %v1391
      %v2728 = vpop.f32.mrf.mxu0
      %v2729 = vadd.f32 %v2640, %v2728
      %v2730 = vpop.f32.mrf.mxu0
      %v2731 = vadd.f32 %v2642, %v2730
      %2732 = vmatmul.bf16.gmra.mxu0 %v1392
      %v2733 = vpop.f32.mrf.mxu0
      %v2734 = vadd.f32 %v2645, %v2733
      %v2735 = vpop.f32.mrf.mxu0
      %v2736 = vadd.f32 %v2647, %v2735
      %2737 = vmatmul.bf16.gmra.mxu0 %v1393
      %v2738 = vpop.f32.mrf.mxu0
      %v2739 = vadd.f32 %v2650, %v2738
      %v2740 = vpop.f32.mrf.mxu0
      %v2741 = vadd.f32 %v2652, %v2740
      %2742 = vmatmul.bf16.gmra.mxu0 %v1394
      %v2743 = vpop.f32.mrf.mxu0
      %v2744 = vadd.f32 %v2655, %v2743
      %v2745 = vpop.f32.mrf.mxu0
      %v2746 = vadd.f32 %v2657, %v2745
      %2747 = vmatmul.bf16.gmra.mxu0 %v1395
      %v2748 = vpop.f32.mrf.mxu0
      %v2749 = vadd.f32 %v2660, %v2748
      %v2750 = vpop.f32.mrf.mxu0
      %v2751 = vadd.f32 %v2662, %v2750
      %2752 = vmatmul.bf16.gmra.mxu0 %v1542
      %v2753 = vpop.f32.mrf.mxu0
      %v2754 = vadd.f32 %v2665, %v2753
      %v2755 = vpop.f32.mrf.mxu0
      %v2756 = vadd.f32 %v2667, %v2755
      %2757 = vmatmul.bf16.gmra.mxu0 %v1554
      %v2758 = vpop.f32.mrf.mxu0
      %v2759 = vadd.f32 %v2670, %v2758
      %v2760 = vpop.f32.mrf.mxu0
      %v2761 = vadd.f32 %v2672, %v2760
      %2762 = vdwg.mxu0
      %2763 = vmatpush.bf16.msra.mxu0 %v2059
      %2764 = vmatpush.bf16.msra.mxu0 %v2058
      %2765 = vmatpush.bf16.msra.mxu0 %v2057
      %2766 = vmatpush.bf16.msra.mxu0 %v2056
      %2767 = vmatpush.bf16.msra.mxu0 %v2055
      %2768 = vmatpush.bf16.msra.mxu0 %v2054
      %2769 = vmatpush.bf16.msra.mxu0 %v2053
      %2770 = vmatpush.bf16.msra.mxu0 %v2052
      %2771 = vmatmul.bf16.gmra.mxu0 %v1446
      %v2772 = vpop.f32.mrf.mxu0
      %v2773 = vadd.f32 %v2684, %v2772
      %v2774 = vpop.f32.mrf.mxu0
      %v2775 = vadd.f32 %v2686, %v2774
      %2776 = vmatmul.bf16.gmra.mxu0 %v1447
      %v2777 = vpop.f32.mrf.mxu0
      %v2778 = vadd.f32 %v2689, %v2777
      %v2779 = vpop.f32.mrf.mxu0
      %v2780 = vadd.f32 %v2691, %v2779
      %2781 = vmatmul.bf16.gmra.mxu0 %v1448
      %v2782 = vpop.f32.mrf.mxu0
      %v2783 = vadd.f32 %v2694, %v2782
      %v2784 = vpop.f32.mrf.mxu0
      %v2785 = vadd.f32 %v2696, %v2784
      %2786 = vmatmul.bf16.gmra.mxu0 %v1449
      %v2787 = vpop.f32.mrf.mxu0
      %v2788 = vadd.f32 %v2699, %v2787
      %v2789 = vpop.f32.mrf.mxu0
      %v2790 = vadd.f32 %v2701, %v2789
      %2791 = vmatmul.bf16.gmra.mxu0 %v1450
      %v2792 = vpop.f32.mrf.mxu0
      %v2793 = vadd.f32 %v2704, %v2792
      %v2794 = vpop.f32.mrf.mxu0
      %v2795 = vadd.f32 %v2706, %v2794
      %2796 = vmatmul.bf16.gmra.mxu0 %v1451
      %v2797 = vpop.f32.mrf.mxu0
      %v2798 = vadd.f32 %v2709, %v2797
      %v2799 = vpop.f32.mrf.mxu0
      %v2800 = vadd.f32 %v2711, %v2799
      %2801 = vmatmul.bf16.gmra.mxu0 %v1452
      %v2802 = vpop.f32.mrf.mxu0
      %v2803 = vadd.f32 %v2714, %v2802
      %v2804 = vpop.f32.mrf.mxu0
      %v2805 = vadd.f32 %v2716, %v2804
      %2806 = vmatmul.bf16.gmra.mxu0 %v1453
      %v2807 = vpop.f32.mrf.mxu0
      %v2808 = vadd.f32 %v2719, %v2807
      %v2809 = vpop.f32.mrf.mxu0
      %v2810 = vadd.f32 %v2721, %v2809
      %2811 = vmatmul.bf16.gmra.mxu0 %v1454
      %v2812 = vpop.f32.mrf.mxu0
      %v2813 = vadd.f32 %v2724, %v2812
      %v2814 = vpop.f32.mrf.mxu0
      %v2815 = vadd.f32 %v2726, %v2814
      %2816 = vmatmul.bf16.gmra.mxu0 %v1455
      %v2817 = vpop.f32.mrf.mxu0
      %v2818 = vadd.f32 %v2729, %v2817
      %v2819 = vpop.f32.mrf.mxu0
      %v2820 = vadd.f32 %v2731, %v2819
      %2821 = vmatmul.bf16.gmra.mxu0 %v1456
      %v2822 = vpop.f32.mrf.mxu0
      %v2823 = vadd.f32 %v2734, %v2822
      %v2824 = vpop.f32.mrf.mxu0
      %v2825 = vadd.f32 %v2736, %v2824
      %2826 = vmatmul.bf16.gmra.mxu0 %v1457
      %v2827 = vpop.f32.mrf.mxu0
      %v2828 = vadd.f32 %v2739, %v2827
      %v2829 = vpop.f32.mrf.mxu0
      %v2830 = vadd.f32 %v2741, %v2829
      %2831 = vmatmul.bf16.gmra.mxu0 %v1458
      %v2832 = vpop.f32.mrf.mxu0
      %v2833 = vadd.f32 %v2744, %v2832
      %v2834 = vpop.f32.mrf.mxu0
      %v2835 = vadd.f32 %v2746, %v2834
      %2836 = vmatmul.bf16.gmra.mxu0 %v1459
      %v2837 = vpop.f32.mrf.mxu0
      %v2838 = vadd.f32 %v2749, %v2837
      %v2839 = vpop.f32.mrf.mxu0
      %v2840 = vadd.f32 %v2751, %v2839
      %2841 = vmatmul.bf16.gmra.mxu0 %v1546
      %v2842 = vpop.f32.mrf.mxu0
      %v2843 = vadd.f32 %v2754, %v2842
      %v2844 = vpop.f32.mrf.mxu0
      %v2845 = vadd.f32 %v2756, %v2844
      %2846 = vmatmul.bf16.gmra.mxu0 %v1558
      %v2847 = vpop.f32.mrf.mxu0
      %v2848 = vadd.f32 %v2759, %v2847
      %v2849 = vpop.f32.mrf.mxu0
      %v2850 = vadd.f32 %v2761, %v2849
      %2851 = vdwg.mxu0
      %2852 = vmatpush.bf16.msra.mxu0 %v2067
      %2853 = vmatpush.bf16.msra.mxu0 %v2066
      %2854 = vmatpush.bf16.msra.mxu0 %v2065
      %2855 = vmatpush.bf16.msra.mxu0 %v2064
      %2856 = vmatpush.bf16.msra.mxu0 %v2063
      %2857 = vmatpush.bf16.msra.mxu0 %v2062
      %2858 = vmatpush.bf16.msra.mxu0 %v2061
      %2859 = vmatpush.bf16.msra.mxu0 %v2060
      %2860 = vmatmul.bf16.gmra.mxu0 %v1510
      %v2861 = vpop.f32.mrf.mxu0
      %v2862 = vadd.f32 %v2773, %v2861
      %v2863 = vpop.f32.mrf.mxu0
      %v2864 = vadd.f32 %v2775, %v2863
      %2865 = vmatmul.bf16.gmra.mxu0 %v1511
      %v2866 = vpop.f32.mrf.mxu0
      %v2867 = vadd.f32 %v2778, %v2866
      %v2868 = vpop.f32.mrf.mxu0
      %v2869 = vadd.f32 %v2780, %v2868
      %2870 = vmatmul.bf16.gmra.mxu0 %v1512
      %v2871 = vpop.f32.mrf.mxu0
      %v2872 = vadd.f32 %v2783, %v2871
      %v2873 = vpop.f32.mrf.mxu0
      %v2874 = vadd.f32 %v2785, %v2873
      %2875 = vmatmul.bf16.gmra.mxu0 %v1513
      %v2876 = vpop.f32.mrf.mxu0
      %v2877 = vadd.f32 %v2788, %v2876
      %v2878 = vpop.f32.mrf.mxu0
      %v2879 = vadd.f32 %v2790, %v2878
      %2880 = vmatmul.bf16.gmra.mxu0 %v1514
      %v2881 = vpop.f32.mrf.mxu0
      %v2882 = vadd.f32 %v2793, %v2881
      %v2883 = vpop.f32.mrf.mxu0
      %v2884 = vadd.f32 %v2795, %v2883
      %2885 = vmatmul.bf16.gmra.mxu0 %v1515
      %v2886 = vpop.f32.mrf.mxu0
      %v2887 = vadd.f32 %v2798, %v2886
      %v2888 = vpop.f32.mrf.mxu0
      %v2889 = vadd.f32 %v2800, %v2888
      %2890 = vmatmul.bf16.gmra.mxu0 %v1516
      %v2891 = vpop.f32.mrf.mxu0
      %v2892 = vadd.f32 %v2803, %v2891
      %v2893 = vpop.f32.mrf.mxu0
      %v2894 = vadd.f32 %v2805, %v2893
      %2895 = vmatmul.bf16.gmra.mxu0 %v1517
      %v2896 = vpop.f32.mrf.mxu0
      %v2897 = vadd.f32 %v2808, %v2896
      %v2898 = vpop.f32.mrf.mxu0
      %v2899 = vadd.f32 %v2810, %v2898
      %2900 = vmatmul.bf16.gmra.mxu0 %v1518
      %v2901 = vpop.f32.mrf.mxu0
      %v2902 = vadd.f32 %v2813, %v2901
      %v2903 = vpop.f32.mrf.mxu0
      %v2904 = vadd.f32 %v2815, %v2903
      %2905 = vmatmul.bf16.gmra.mxu0 %v1519
      %v2906 = vpop.f32.mrf.mxu0
      %v2907 = vadd.f32 %v2818, %v2906
      %v2908 = vpop.f32.mrf.mxu0
      %v2909 = vadd.f32 %v2820, %v2908
      %2910 = vmatmul.bf16.gmra.mxu0 %v1520
      %v2911 = vpop.f32.mrf.mxu0
      %v2912 = vadd.f32 %v2823, %v2911
      %v2913 = vpop.f32.mrf.mxu0
      %v2914 = vadd.f32 %v2825, %v2913
      %2915 = vmatmul.bf16.gmra.mxu0 %v1521
      %v2916 = vpop.f32.mrf.mxu0
      %v2917 = vadd.f32 %v2828, %v2916
      %v2918 = vpop.f32.mrf.mxu0
      %v2919 = vadd.f32 %v2830, %v2918
      %2920 = vmatmul.bf16.gmra.mxu0 %v1522
      %v2921 = vpop.f32.mrf.mxu0
      %v2922 = vadd.f32 %v2833, %v2921
      %v2923 = vpop.f32.mrf.mxu0
      %v2924 = vadd.f32 %v2835, %v2923
      %2925 = vmatmul.bf16.gmra.mxu0 %v1523
      %v2926 = vpop.f32.mrf.mxu0
      %v2927 = vadd.f32 %v2838, %v2926
      %v2928 = vpop.f32.mrf.mxu0
      %v2929 = vadd.f32 %v2840, %v2928
      %2930 = vmatmul.bf16.gmra.mxu0 %v1550
      %v2931 = vpop.f32.mrf.mxu0
      %v2932 = vadd.f32 %v2843, %v2931
      %v2933 = vpop.f32.mrf.mxu0
      %v2934 = vadd.f32 %v2845, %v2933
      %2935 = vmatmul.bf16.gmra.mxu0 %v1562
      %v2936 = vpop.f32.mrf.mxu0
      %v2937 = vadd.f32 %v2848, %v2936
      %v2938 = vpop.f32.mrf.mxu0
      %v2939 = vadd.f32 %v2850, %v2938
      %2940 = vdwg.mxu0
      %v2941 = vadd.f32 %v2862, %v2864
      %v2942 = vadd.f32 %v2941, %v2867
      %v2943 = vadd.f32 %v2942, %v2869
      %v2944 = vadd.f32 %v2943, %v2872
      %v2945 = vadd.f32 %v2944, %v2874
      %v2946 = vadd.f32 %v2945, %v2877
      %v2947 = vadd.f32 %v2946, %v2879
      %v2948 = vadd.f32 %v2947, %v2882
      %v2949 = vadd.f32 %v2948, %v2884
      %v2950 = vadd.f32 %v2949, %v2887
      %v2951 = vadd.f32 %v2950, %v2889
      %v2952 = vadd.f32 %v2951, %v2892
      %v2953 = vadd.f32 %v2952, %v2894
      %v2954 = vadd.f32 %v2953, %v2897
      %v2955 = vadd.f32 %v2954, %v2899
      %v2956 = vadd.f32 %v2955, %v2902
      %v2957 = vadd.f32 %v2956, %v2904
      %v2958 = vadd.f32 %v2957, %v2907
      %v2959 = vadd.f32 %v2958, %v2909
      %v2960 = vadd.f32 %v2959, %v2912
      %v2961 = vadd.f32 %v2960, %v2914
      %v2962 = vadd.f32 %v2961, %v2917
      %v2963 = vadd.f32 %v2962, %v2919
      %v2964 = vadd.f32 %v2963, %v2922
      %v2965 = vadd.f32 %v2964, %v2924
      %v2966 = vadd.f32 %v2965, %v2927
      %v2967 = vadd.f32 %v2966, %v2929
      %v2968 = vadd.f32 %v2967, %v2932
      %v2969 = vadd.f32 %v2968, %v2934
      %v2970 = vadd.f32 %v2969, %v2937
      %v2971 = vadd.f32 %v2970, %v2939
      %v2972 = vrot.slane %v2971, 4
      %v2973 = vadd.f32 %v2971, %v2972
      %v2974 = vrot.slane %v2973, 2
      %v2975 = vadd.f32 %v2973, %v2974
      %v2976 = vrot.slane %v2975, 1
      %v2977 = vadd.f32 %v2975, %v2976
      %2978 = vst [vmem:[%s315] sm:$0x1] %v2977
      %v2979 = vmul.f32 %v2862, %v2862
      %v2980 = vmul.f32 %v2864, %v2864
      %v2981 = vmul.f32 %v2867, %v2867
      %v2982 = vmul.f32 %v2869, %v2869
      %v2983 = vmul.f32 %v2872, %v2872
      %v2984 = vmul.f32 %v2874, %v2874
      %v2985 = vmul.f32 %v2877, %v2877
      %v2986 = vmul.f32 %v2879, %v2879
      %v2987 = vmul.f32 %v2882, %v2882
      %v2988 = vmul.f32 %v2884, %v2884
      %v2989 = vmul.f32 %v2887, %v2887
      %v2990 = vmul.f32 %v2889, %v2889
      %v2991 = vmul.f32 %v2892, %v2892
      %v2992 = vmul.f32 %v2894, %v2894
      %v2993 = vmul.f32 %v2897, %v2897
      %v2994 = vmul.f32 %v2899, %v2899
      %v2995 = vmul.f32 %v2902, %v2902
      %v2996 = vmul.f32 %v2904, %v2904
      %v2997 = vmul.f32 %v2907, %v2907
      %v2998 = vmul.f32 %v2909, %v2909
      %v2999 = vmul.f32 %v2912, %v2912
      %v3000 = vmul.f32 %v2914, %v2914
      %v3001 = vmul.f32 %v2917, %v2917
      %v3002 = vmul.f32 %v2919, %v2919
      %v3003 = vmul.f32 %v2922, %v2922
      %v3004 = vmul.f32 %v2924, %v2924
      %v3005 = vmul.f32 %v2927, %v2927
      %v3006 = vmul.f32 %v2929, %v2929
      %v3007 = vmul.f32 %v2932, %v2932
      %v3008 = vmul.f32 %v2934, %v2934
      %v3009 = vmul.f32 %v2937, %v2937
      %v3010 = vmul.f32 %v2939, %v2939
      %v3011 = vadd.f32 %v2979, %v2980
      %v3012 = vadd.f32 %v3011, %v2981
      %v3013 = vadd.f32 %v3012, %v2982
      %v3014 = vadd.f32 %v3013, %v2983
      %v3015 = vadd.f32 %v3014, %v2984
      %v3016 = vadd.f32 %v3015, %v2985
      %v3017 = vadd.f32 %v3016, %v2986
      %v3018 = vadd.f32 %v3017, %v2987
      %v3019 = vadd.f32 %v3018, %v2988
      %v3020 = vadd.f32 %v3019, %v2989
      %v3021 = vadd.f32 %v3020, %v2990
      %v3022 = vadd.f32 %v3021, %v2991
      %v3023 = vadd.f32 %v3022, %v2992
      %v3024 = vadd.f32 %v3023, %v2993
      %v3025 = vadd.f32 %v3024, %v2994
      %v3026 = vadd.f32 %v3025, %v2995
      %v3027 = vadd.f32 %v3026, %v2996
      %v3028 = vadd.f32 %v3027, %v2997
      %v3029 = vadd.f32 %v3028, %v2998
      %v3030 = vadd.f32 %v3029, %v2999
      %v3031 = vadd.f32 %v3030, %v3000
      %v3032 = vadd.f32 %v3031, %v3001
      %v3033 = vadd.f32 %v3032, %v3002
      %v3034 = vadd.f32 %v3033, %v3003
      %v3035 = vadd.f32 %v3034, %v3004
      %v3036 = vadd.f32 %v3035, %v3005
      %v3037 = vadd.f32 %v3036, %v3006
      %v3038 = vadd.f32 %v3037, %v3007
      %v3039 = vadd.f32 %v3038, %v3008
      %v3040 = vadd.f32 %v3039, %v3009
      %v3041 = vadd.f32 %v3040, %v3010
      %v3042 = vrot.slane %v3041, 4
      %v3043 = vadd.f32 %v3041, %v3042
      %v3044 = vrot.slane %v3043, 2
      %v3045 = vadd.f32 %v3043, %v3044
      %v3046 = vrot.slane %v3045, 1
      %v3047 = vadd.f32 %v3045, %v3046
      %3048 = vst [vmem:[%s321] sm:$0x1] %v3047
      %v3049 = vpack.c.bf16 %v2862, %v2862
      %v3050 = vpack.c.bf16 %v2864, %v2864
      %v3051 = vpack.c.bf16 %v2867, %v2867
      %v3052 = vpack.c.bf16 %v2869, %v2869
      %v3053 = vpack.c.bf16 %v2872, %v2872
      %v3054 = vpack.c.bf16 %v2874, %v2874
      %v3055 = vpack.c.bf16 %v2877, %v2877
      %v3056 = vpack.c.bf16 %v2879, %v2879
      %v3057 = vpack.c.bf16 %v2882, %v2882
      %v3058 = vpack.c.bf16 %v2884, %v2884
      %v3059 = vpack.c.bf16 %v2887, %v2887
      %v3060 = vpack.c.bf16 %v2889, %v2889
      %v3061 = vpack.c.bf16 %v2892, %v2892
      %v3062 = vpack.c.bf16 %v2894, %v2894
      %v3063 = vpack.c.bf16 %v2897, %v2897
      %v3064 = vpack.c.bf16 %v2899, %v2899
      %v3065 = vpack.c.bf16 %v2902, %v2902
      %v3066 = vpack.c.bf16 %v2904, %v2904
      %v3067 = vpack.c.bf16 %v2907, %v2907
      %v3068 = vpack.c.bf16 %v2909, %v2909
      %v3069 = vpack.c.bf16 %v2912, %v2912
      %v3070 = vpack.c.bf16 %v2914, %v2914
      %v3071 = vpack.c.bf16 %v2917, %v2917
      %v3072 = vpack.c.bf16 %v2919, %v2919
      %v3073 = vpack.c.bf16 %v2922, %v2922
      %v3074 = vpack.c.bf16 %v2924, %v2924
      %v3075 = vpack.c.bf16 %v2927, %v2927
      %v3076 = vpack.c.bf16 %v2929, %v2929
      %v3077 = vpack.c.bf16 %v2932, %v2932
      %v3078 = vpack.c.bf16 %v2934, %v2934
      %v3079 = vpack.c.bf16 %v2937, %v2937
      %v3080 = vpack.c.bf16 %v2939, %v2939
      %3081 = vst [vmem:[%s309] sm:$0xf] %v3049
      %3082 = vst [vmem:[%s309 + $0x4] sm:$0xf] %v3050
      %3083 = vst [vmem:[%s309 + $0x8] sm:$0xf] %v3051
      %3084 = vst [vmem:[%s309 + $0xc] sm:$0xf] %v3052
      %3085 = vst [vmem:[%s309 + $0x10] sm:$0xf] %v3053
      %3086 = vst [vmem:[%s309 + $0x14] sm:$0xf] %v3054
      %3087 = vst [vmem:[%s309 + $0x18] sm:$0xf] %v3055
      %3088 = vst [vmem:[%s309 + $0x1c] sm:$0xf] %v3056
      %3089 = vst [vmem:[%s309 + $0x20] sm:$0xf] %v3057
      %3090 = vst [vmem:[%s309 + $0x24] sm:$0xf] %v3058
      %3091 = vst [vmem:[%s309 + $0x28] sm:$0xf] %v3059
      %3092 = vst [vmem:[%s309 + $0x2c] sm:$0xf] %v3060
      %3093 = vst [vmem:[%s309 + $0x30] sm:$0xf] %v3061
      %3094 = vst [vmem:[%s309 + $0x34] sm:$0xf] %v3062
      %3095 = vst [vmem:[%s309 + $0x38] sm:$0xf] %v3063
      %3096 = vst [vmem:[%s309 + $0x3c] sm:$0xf] %v3064
      %3097 = vst [vmem:[%s309 + $0x40] sm:$0xf] %v3065
      %3098 = vst [vmem:[%s309 + $0x44] sm:$0xf] %v3066
      %3099 = vst [vmem:[%s309 + $0x48] sm:$0xf] %v3067
      %3100 = vst [vmem:[%s309 + $0x4c] sm:$0xf] %v3068
      %3101 = vst [vmem:[%s309 + $0x50] sm:$0xf] %v3069
      %3102 = vst [vmem:[%s309 + $0x54] sm:$0xf] %v3070
      %3103 = vst [vmem:[%s309 + $0x58] sm:$0xf] %v3071
      %3104 = vst [vmem:[%s309 + $0x5c] sm:$0xf] %v3072
      %3105 = vst [vmem:[%s309 + $0x60] sm:$0xf] %v3073
      %3106 = vst [vmem:[%s309 + $0x64] sm:$0xf] %v3074
      %3107 = vst [vmem:[%s309 + $0x68] sm:$0xf] %v3075
      %3108 = vst [vmem:[%s309 + $0x6c] sm:$0xf] %v3076
      %3109 = vst [vmem:[%s309 + $0x70] sm:$0xf] %v3077
      %3110 = vst [vmem:[%s309 + $0x74] sm:$0xf] %v3078
      %3111 = vst [vmem:[%s309 + $0x78] sm:$0xf] %v3079
      %3112 = vst [vmem:[%s309 + $0x7c] sm:$0xf] %v3080
      %p3113 = scmp.lt.s32.totalorder %s22, 1
      %s3114 = scalar_select %p3113, %s22, 1
      %p3115 = scmp.lt.s32.totalorder %s23, 0
      %s3116 = scalar_select %p3115, %s23, 0
      %s3117 = smul.addr %s3114, 32
      %s3118 = sadd.s32 %s3116, %s3117
      %s3119 = smul.addr %s3118, 4
      %s3120 = scalar_lea.vmem %s4, %s3119
      %p3121 = scmp.lt.s32.totalorder %s22, 1
      %s3122 = scalar_select %p3121, %s22, 1
      %p3123 = scmp.lt.s32.totalorder %s23, 0
      %s3124 = scalar_select %p3123, %s23, 0
      %s3125 = sadd.s32 %s3124, %s3122
      %s3126 = scalar_lea.vmem %s5, %s3125
      %p3127 = scmp.lt.s32.totalorder %s22, 1
      %s3128 = scalar_select %p3127, %s22, 1
      %p3129 = scmp.lt.s32.totalorder %s23, 0
      %s3130 = scalar_select %p3129, %s23, 0
      %s3131 = sadd.s32 %s3130, %s3128
      %s3132 = scalar_lea.vmem %s6, %s3131
      // Predicated region
      $region37: #{_lambda_.4} parent=35 // pred_check
        %p3133 = pneg %p144
      $region38: #{_lambda_.4} parent=35 // pred_check_branch
        %3135 = sbr.rel (%p3133) target = $region40
      $region39: #{_lambda_.4} parent=35 // pred_region
        _
      $region40: #{_lambda_.4} parent=35 // pred_fallthru
        _
      // Predicated region
      $region41: #{_lambda_.4} parent=35 // pred_check
        %p3136 = pneg %p172
      $region42: #{_lambda_.4} parent=35 // pred_check_branch
        %3138 = sbr.rel (%p3136) target = $region44
      $region43: #{_lambda_.4} parent=35 // pred_region
        _
      $region44: #{_lambda_.4} parent=35 // pred_fallthru
        _
      // Predicated region
      $region45: #{_lambda_.4} parent=35 // pred_check
        %p3139 = pneg %p200
      $region46: #{_lambda_.4} parent=35 // pred_check_branch
        %3141 = sbr.rel (%p3139) target = $region48
      $region47: #{_lambda_.4} parent=35 // pred_region
        _
      $region48: #{_lambda_.4} parent=35 // pred_fallthru
        _
    $region36: #{_lambda_.4} parent=5 // pred_fallthru
      _
    %p3142 = scmp.le.s32.totalorder 2, %s13
    // Predicated region
    $region49: #{_lambda_.4} parent=5 // pred_check
      %p3143 = pneg %p3142
    $region50: #{_lambda_.4} parent=5 // pred_check_branch
      %3145 = sbr.rel (%p3143) target = $region52
    $region51: #{_lambda_.4} parent=5 // pred_region
      %s3146 = ssub.s32 %s13, 2
      // Predicated region
      $region53: #{_lambda_.4} parent=51 // pred_check
        %p3147 = pneg %p150
      $region54: #{_lambda_.4} parent=51 // pred_check_branch
        %3149 = sbr.rel (%p3147) target = $region56
      $region55: #{_lambda_.4} parent=51 // pred_region
        %p3150 = scmp.lt.s32.totalorder %s24, 1
        %s3151 = scalar_select %p3150, %s24, 1
        %p3152 = scmp.lt.s32.totalorder %s25, 0
        %s3153 = scalar_select %p3152, %s25, 0
        %s3154 = smul.addr %s3151, 32
        %s3155 = sadd.s32 %s3153, %s3154
        %s3156 = smul.addr %s3155, 4
        %s3157 = scalar_lea.vmem %s4, %s3156
      $region56: #{_lambda_.4} parent=51 // pred_fallthru
        _
      // Predicated region
      $region57: #{_lambda_.4} parent=51 // pred_check
        %p3158 = pneg %p178
      $region58: #{_lambda_.4} parent=51 // pred_check_branch
        %3160 = sbr.rel (%p3158) target = $region60
      $region59: #{_lambda_.4} parent=51 // pred_region
        %p3161 = scmp.lt.s32.totalorder %s24, 1
        %s3162 = scalar_select %p3161, %s24, 1
        %p3163 = scmp.lt.s32.totalorder %s25, 0
        %s3164 = scalar_select %p3163, %s25, 0
        %s3165 = sadd.s32 %s3164, %s3162
        %s3166 = scalar_lea.vmem %s5, %s3165
      $region60: #{_lambda_.4} parent=51 // pred_fallthru
        _
      // Predicated region
      $region61: #{_lambda_.4} parent=51 // pred_check
        %p3167 = pneg %p206
      $region62: #{_lambda_.4} parent=51 // pred_check_branch
        %3169 = sbr.rel (%p3167) target = $region64
      $region63: #{_lambda_.4} parent=51 // pred_region
        %p3170 = scmp.lt.s32.totalorder %s24, 1
        %s3171 = scalar_select %p3170, %s24, 1
        %p3172 = scmp.lt.s32.totalorder %s25, 0
        %s3173 = scalar_select %p3172, %s25, 0
        %s3174 = sadd.s32 %s3173, %s3171
        %s3175 = scalar_lea.vmem %s6, %s3174
      $region64: #{_lambda_.4} parent=51 // pred_fallthru
        _
    $region52: #{_lambda_.4} parent=5 // pred_fallthru
      _
  $region6: #{_lambda_.4} parent=0 // loop_footer
    %s17 = sadd.s32 1, %s13
  $region7: #{_lambda_.4} parent=0 // loop_footer_branch
    %12 = sbr.rel target = $region3
  $region8: #{_lambda_.4} parent=0 // loop_exit
    _

// kernel: _lambda_.3
$region0: #{_lambda_.3}
  #allocation0 [shape = 'u32[]', space=smem, size = 0x4, offset = 0x4, fixed_abs, tag = 'smem constant byte address 0x4 - core index']
  #allocation1 [shape = 'u32[72,128]{1,0:T(1,128)}', space=vmem, size = 0x9000, scoped, tag = 'internal scratch']
  %s0 = inlined_call_operand.vmem [shape: bf16[2,18,18,128], index: 0, kind: input, shape index: {}]
  %s1 = inlined_call_operand.vmem [shape: bf16[1152,128], index: 1, kind: input, shape index: {}]
  %s2 = inlined_call_operand.vmem [shape: f32[1,1,128], index: 2, kind: input, shape index: {}, may-alias: {2,3}]
  %s3 = inlined_call_operand.vmem [shape: f32[1,1,128], index: 3, kind: input, shape index: {}, may-alias: {2,3}]
  %s4 = inlined_call_operand.vmem [shape: bf16[2,18,18,128], index: 4, kind: output, shape index: {0}]
  %s5 = inlined_call_operand.vmem [shape: f32[2,1,128], index: 5, kind: output, shape index: {1}]
  %s6 = inlined_call_operand.vmem [shape: f32[2,1,128], index: 6, kind: output, shape index: {2}]
  %7 = xla_tuple %s4, %s5, %s6
  %s8 = sld [smem:[#allocation0]]
  $region65: #{_lambda_.3} parent=0
    _
  %s10 = ssub.s32 1, %s8
  %s11 = scalar_select 0, %s10, %s8
  loop: start=0, step=1, limit=4
  $region2: #{_lambda_.3} parent=0 // loop_pre_header
    _
  $region3: #{_lambda_.3} parent=0 // loop_header
    %s13 = sphi 0, %s17
    %p14 = scmp.ge.s32.totalorder %s13, 4
    %s20 = sphi 0, %s32
    %s21 = sphi 0, %s28
    %s22 = sphi 0, %s20
    %s23 = sphi 0, %s21
    %s24 = sphi 0, %s22
    %s25 = sphi 0, %s23
    %s35 = sphi 0, %s37
    %s38 = sphi 0, %s35
    %s39 = sphi 0, %s38
    %s55 = sphi 0, %s39
    %s61 = sphi 0, %s63
    %s64 = sphi 0, %s61
    %s65 = sphi 0, %s64
    %s81 = sphi 0, %s65
    %s85 = sphi 0, %s85
    %s87 = sphi 0, %s85
    %s88 = sphi 0, %s87
    %s102 = sphi 0, %s88
    %s106 = sphi 0, %s106
    %s108 = sphi 0, %s106
    %s109 = sphi 0, %s108
    %s123 = sphi 0, %s109
    %s131 = sphi 0, %s133
    %s134 = sphi 0, %s131
    %s135 = sphi 0, %s134
    %s151 = sphi 0, %s135
    %s159 = sphi 0, %s161
    %s162 = sphi 0, %s159
    %s163 = sphi 0, %s162
    %s179 = sphi 0, %s163
    %s187 = sphi 0, %s189
    %s190 = sphi 0, %s187
    %s191 = sphi 0, %s190
    %s207 = sphi 0, %s191
  $region4: #{_lambda_.3} parent=0 // loop_header_branch
    %16 = sbr.rel (%p14) target = $region8
  $region5: #{_lambda_.3} parent=0 // loop_body
    %s18 = ssub.s32 %s13, 1
    %s19 = ssub.s32 %s13, 2
    %s26 = sadd.s32 1, %s21
    %p27 = scmp.ge.s32.totalorder %s26, 1
    %s28 = scalar_select %p27, 0, %s26
    %s29 = sadd.s32 1, %s20
    %s30 = scalar_select %p27, %s29, %s20
    %p31 = scmp.ge.s32.totalorder %s30, 2
    %s32 = scalar_select %p31, 0, %s30
    %s33 = ssub.s32 %s20, %s32
    %p34 = scmp.eq.s32.totalorder %s33, 0
    %s36 = sadd.s32 %s35, 1
    %s37 = scalar_select %p34, %s35, %s36
    %p40 = pneg %p34
    %p41 = scmp.eq.s32.totalorder %s13, 1
    %p42 = por %p40, %p41
    %p43 = scmp.ne.s32.totalorder %s35, %s38
    %p44 = scmp.eq.s32.totalorder %s13, 0
    %p45 = por %p43, %p44
    %p46 = scmp.ne.s32.totalorder %s35, %s38
    %p47 = scmp.eq.s32.totalorder %s18, 1
    %p48 = por %p46, %p47
    %p49 = scmp.ne.s32.totalorder %s38, %s39
    %p50 = scmp.eq.s32.totalorder %s18, 0
    %p51 = por %p49, %p50
    %p52 = scmp.ne.s32.totalorder %s38, %s39
    %p53 = scmp.eq.s32.totalorder %s19, 1
    %p54 = por %p52, %p53
    %p56 = scmp.ne.s32.totalorder %s39, %s55
    %p57 = scmp.eq.s32.totalorder %s19, 0
    %p58 = por %p56, %p57
    %s59 = ssub.s32 %s21, %s28
    %p60 = scmp.eq.s32.totalorder %s59, 0
    %s62 = sadd.s32 %s61, 1
    %s63 = scalar_select %p60, %s61, %s62
    %p66 = pneg %p60
    %p67 = scmp.eq.s32.totalorder %s13, 1
    %p68 = por %p66, %p67
    %p69 = scmp.ne.s32.totalorder %s61, %s64
    %p70 = scmp.eq.s32.totalorder %s13, 0
    %p71 = por %p69, %p70
    %p72 = scmp.ne.s32.totalorder %s61, %s64
    %p73 = scmp.eq.s32.totalorder %s18, 1
    %p74 = por %p72, %p73
    %p75 = scmp.ne.s32.totalorder %s64, %s65
    %p76 = scmp.eq.s32.totalorder %s18, 0
    %p77 = por %p75, %p76
    %p78 = scmp.ne.s32.totalorder %s64, %s65
    %p79 = scmp.eq.s32.totalorder %s19, 1
    %p80 = por %p78, %p79
    %p82 = scmp.ne.s32.totalorder %s65, %s81
    %p83 = scmp.eq.s32.totalorder %s19, 0
    %p84 = por %p82, %p83
    %s86 = sadd.s32 %s85, 1
    %p89 = scmp.eq.s32.totalorder %s13, 1
    %p90 = scmp.ne.s32.totalorder %s85, %s87
    %p91 = scmp.eq.s32.totalorder %s13, 0
    %p92 = por %p90, %p91
    %p93 = scmp.ne.s32.totalorder %s85, %s87
    %p94 = scmp.eq.s32.totalorder %s18, 1
    %p95 = por %p93, %p94
    %p96 = scmp.ne.s32.totalorder %s87, %s88
    %p97 = scmp.eq.s32.totalorder %s18, 0
    %p98 = por %p96, %p97
    %p99 = scmp.ne.s32.totalorder %s87, %s88
    %p100 = scmp.eq.s32.totalorder %s19, 1
    %p101 = por %p99, %p100
    %p103 = scmp.ne.s32.totalorder %s88, %s102
    %p104 = scmp.eq.s32.totalorder %s19, 0
    %p105 = por %p103, %p104
    %s107 = sadd.s32 %s106, 1
    %p110 = scmp.eq.s32.totalorder %s13, 1
    %p111 = scmp.ne.s32.totalorder %s106, %s108
    %p112 = scmp.eq.s32.totalorder %s13, 0
    %p113 = por %p111, %p112
    %p114 = scmp.ne.s32.totalorder %s106, %s108
    %p115 = scmp.eq.s32.totalorder %s18, 1
    %p116 = por %p114, %p115
    %p117 = scmp.ne.s32.totalorder %s108, %s109
    %p118 = scmp.eq.s32.totalorder %s18, 0
    %p119 = por %p117, %p118
    %p120 = scmp.ne.s32.totalorder %s108, %s109
    %p121 = scmp.eq.s32.totalorder %s19, 1
    %p122 = por %p120, %p121
    %p124 = scmp.ne.s32.totalorder %s109, %s123
    %p125 = scmp.eq.s32.totalorder %s19, 0
    %p126 = por %p124, %p125
    %s127 = ssub.s32 %s20, %s32
    %s128 = ssub.s32 %s21, %s28
    %s129 = sor.u32 %s127, %s128
    %p130 = scmp.eq.s32.totalorder %s129, 0
    %s132 = sadd.s32 %s131, 1
    %s133 = scalar_select %p130, %s131, %s132
    %p136 = pneg %p130
    %p137 = scmp.eq.s32.totalorder %s13, 1
    %p138 = por %p136, %p137
    %p139 = scmp.ne.s32.totalorder %s131, %s134
    %p140 = scmp.eq.s32.totalorder %s13, 0
    %p141 = por %p139, %p140
    %p142 = scmp.ne.s32.totalorder %s131, %s134
    %p143 = scmp.eq.s32.totalorder %s18, 1
    %p144 = por %p142, %p143
    %p145 = scmp.ne.s32.totalorder %s134, %s135
    %p146 = scmp.eq.s32.totalorder %s18, 0
    %p147 = por %p145, %p146
    %p148 = scmp.ne.s32.totalorder %s134, %s135
    %p149 = scmp.eq.s32.totalorder %s19, 1
    %p150 = por %p148, %p149
    %p152 = scmp.ne.s32.totalorder %s135, %s151
    %p153 = scmp.eq.s32.totalorder %s19, 0
    %p154 = por %p152, %p153
    %s155 = ssub.s32 %s20, %s32
    %s156 = ssub.s32 %s21, %s28
    %s157 = sor.u32 %s155, %s156
    %p158 = scmp.eq.s32.totalorder %s157, 0
    %s160 = sadd.s32 %s159, 1
    %s161 = scalar_select %p158, %s159, %s160
    %p164 = pneg %p158
    %p165 = scmp.eq.s32.totalorder %s13, 1
    %p166 = por %p164, %p165
    %p167 = scmp.ne.s32.totalorder %s159, %s162
    %p168 = scmp.eq.s32.totalorder %s13, 0
    %p169 = por %p167, %p168
    %p170 = scmp.ne.s32.totalorder %s159, %s162
    %p171 = scmp.eq.s32.totalorder %s18, 1
    %p172 = por %p170, %p171
    %p173 = scmp.ne.s32.totalorder %s162, %s163
    %p174 = scmp.eq.s32.totalorder %s18, 0
    %p175 = por %p173, %p174
    %p176 = scmp.ne.s32.totalorder %s162, %s163
    %p177 = scmp.eq.s32.totalorder %s19, 1
    %p178 = por %p176, %p177
    %p180 = scmp.ne.s32.totalorder %s163, %s179
    %p181 = scmp.eq.s32.totalorder %s19, 0
    %p182 = por %p180, %p181
    %s183 = ssub.s32 %s20, %s32
    %s184 = ssub.s32 %s21, %s28
    %s185 = sor.u32 %s183, %s184
    %p186 = scmp.eq.s32.totalorder %s185, 0
    %s188 = sadd.s32 %s187, 1
    %s189 = scalar_select %p186, %s187, %s188
    %p192 = pneg %p186
    %p193 = scmp.eq.s32.totalorder %s13, 1
    %p194 = por %p192, %p193
    %p195 = scmp.ne.s32.totalorder %s187, %s190
    %p196 = scmp.eq.s32.totalorder %s13, 0
    %p197 = por %p195, %p196
    %p198 = scmp.ne.s32.totalorder %s187, %s190
    %p199 = scmp.eq.s32.totalorder %s18, 1
    %p200 = por %p198, %p199
    %p201 = scmp.ne.s32.totalorder %s190, %s191
    %p202 = scmp.eq.s32.totalorder %s18, 0
    %p203 = por %p201, %p202
    %p204 = scmp.ne.s32.totalorder %s190, %s191
    %p205 = scmp.eq.s32.totalorder %s19, 1
    %p206 = por %p204, %p205
    %p208 = scmp.ne.s32.totalorder %s191, %s207
    %p209 = scmp.eq.s32.totalorder %s19, 0
    %p210 = por %p208, %p209
    %p211 = scmp.le.s32.totalorder 1, %s13
    %p212 = scmp.lt.s32.totalorder %s13, 3
    %p213 = pnand %p211, %p212
    %p214 = pneg %p213
    // Predicated region
    $region9: #{_lambda_.3} parent=5 // pred_check
      _
    $region10: #{_lambda_.3} parent=5 // pred_check_branch
      %216 = sbr.rel (%p213) target = $region12
    $region11: #{_lambda_.3} parent=5 // pred_region
      %s217 = ssub.s32 %s13, 1
      // Predicated region
      $region13: #{_lambda_.3} parent=11 // pred_check
        %p218 = pneg %p77
      $region14: #{_lambda_.3} parent=11 // pred_check_branch
        %220 = sbr.rel (%p218) target = $region16
      $region15: #{_lambda_.3} parent=11 // pred_region
        %p221 = scmp.lt.s32.totalorder %s23, 0
        %s222 = scalar_select %p221, %s23, 0
        %s223 = smul.addr %s222, 4
        %s224 = scalar_lea.vmem %s1, %s223
      $region16: #{_lambda_.3} parent=11 // pred_fallthru
        _
      // Predicated region
      $region17: #{_lambda_.3} parent=11 // pred_check
        %p225 = pneg %p98
      $region18: #{_lambda_.3} parent=11 // pred_check_branch
        %227 = sbr.rel (%p225) target = $region20
      $region19: #{_lambda_.3} parent=11 // pred_region
        _
      $region20: #{_lambda_.3} parent=11 // pred_fallthru
        _
      // Predicated region
      $region21: #{_lambda_.3} parent=11 // pred_check
        %p228 = pneg %p119
      $region22: #{_lambda_.3} parent=11 // pred_check_branch
        %230 = sbr.rel (%p228) target = $region24
      $region23: #{_lambda_.3} parent=11 // pred_region
        _
      $region24: #{_lambda_.3} parent=11 // pred_fallthru
        _
    $region12: #{_lambda_.3} parent=5 // pred_fallthru
      _
    %p231 = scmp.lt.s32.totalorder %s13, 2
    // Predicated region
    $region25: #{_lambda_.3} parent=5 // pred_check
      %p232 = pneg %p231
    $region26: #{_lambda_.3} parent=5 // pred_check_branch
      %234 = sbr.rel (%p232) target = $region28
    $region27: #{_lambda_.3} parent=5 // pred_region
      // Predicated region
      $region29: #{_lambda_.3} parent=27 // pred_check
        %p235 = pneg %p45
      $region30: #{_lambda_.3} parent=27 // pred_check_branch
        %237 = sbr.rel (%p235) target = $region32
      $region31: #{_lambda_.3} parent=27 // pred_region
        %p238 = scmp.lt.s32.totalorder %s20, 1
        %s239 = scalar_select %p238, %s20, 1
        %s240 = smul.addr %s239, 54
        %s241 = smul.addr %s240, 4
        %s242 = scalar_lea.vmem %s0, %s241
      $region32: #{_lambda_.3} parent=27 // pred_fallthru
        _
    $region28: #{_lambda_.3} parent=5 // pred_fallthru
      _
    %p243 = scmp.le.s32.totalorder 1, %s13
    %p244 = scmp.lt.s32.totalorder %s13, 3
    %p245 = pnand %p243, %p244
    %p246 = pneg %p245
    // Predicated region
    $region33: #{_lambda_.3} parent=5 // pred_check
      _
    $region34: #{_lambda_.3} parent=5 // pred_check_branch
      %248 = sbr.rel (%p245) target = $region36
    $region35: #{_lambda_.3} parent=5 // pred_region
      %s249 = ssub.s32 %s13, 1
      %p250 = scmp.lt.s32.totalorder %s22, 1
      %s251 = scalar_select %p250, %s22, 1
      %s252 = smul.addr %s251, 54
      %s253 = smul.addr %s252, 4
      %s254 = scalar_lea.vmem %s0, %s253
      %p255 = pneg %p51
      %p256 = pneg %p48
      %p257 = scmp.lt.s32.totalorder %s23, 0
      %s258 = scalar_select %p257, %s23, 0
      %s259 = smul.addr %s258, 4
      %s260 = scalar_lea.vmem %s1, %s259
      %p261 = pneg %p77
      %p262 = pneg %p74
      %p263 = pneg %p98
      %p264 = pneg %p95
      %p265 = pneg %p119
      %p266 = pneg %p116
      %p267 = pneg %p147
      %p268 = pneg %p144
      %p269 = scmp.lt.s32.totalorder %s22, 1
      %s270 = scalar_select %p269, %s22, 1
      %p271 = scmp.lt.s32.totalorder %s23, 0
      %s272 = scalar_select %p271, %s23, 0
      %s273 = smul.addr %s270, 54
      %s274 = sadd.s32 %s272, %s273
      %s275 = smul.addr %s274, 4
      %s276 = scalar_lea.vmem %s4, %s275
      %p277 = pneg %p175
      %p278 = pneg %p172
      %p279 = scmp.lt.s32.totalorder %s22, 1
      %s280 = scalar_select %p279, %s22, 1
      %p281 = scmp.lt.s32.totalorder %s23, 0
      %s282 = scalar_select %p281, %s23, 0
      %s283 = sadd.s32 %s282, %s280
      %s284 = scalar_lea.vmem %s5, %s283
      %p285 = pneg %p203
      %p286 = pneg %p200
      %p287 = scmp.lt.s32.totalorder %s22, 1
      %s288 = scalar_select %p287, %s22, 1
      %p289 = scmp.lt.s32.totalorder %s23, 0
      %s290 = scalar_select %p289, %s23, 0
      %s291 = sadd.s32 %s290, %s288
      %s292 = scalar_lea.vmem %s6, %s291
      %p293 = scmp.lt.s32.totalorder %s22, 1
      %s294 = scalar_select %p293, %s22, 1
      %s295 = smul.addr %s294, 54
      %s296 = smul.addr %s295, 4
      %s297 = scalar_lea.vmem %s0, %s296
      %p298 = scmp.lt.s32.totalorder %s23, 0
      %s299 = scalar_select %p298, %s23, 0
      %s300 = smul.addr %s299, 4
      %s301 = scalar_lea.vmem %s1, %s300
      %p302 = scmp.lt.s32.totalorder %s22, 1
      %s303 = scalar_select %p302, %s22, 1
      %p304 = scmp.lt.s32.totalorder %s23, 0
      %s305 = scalar_select %p304, %s23, 0
      %s306 = smul.addr %s303, 54
      %s307 = sadd.s32 %s305, %s306
      %s308 = smul.addr %s307, 4
      %s309 = scalar_lea.vmem %s4, %s308
      %p310 = scmp.lt.s32.totalorder %s22, 1
      %s311 = scalar_select %p310, %s22, 1
      %p312 = scmp.lt.s32.totalorder %s23, 0
      %s313 = scalar_select %p312, %s23, 0
      %s314 = sadd.s32 %s313, %s311
      %s315 = scalar_lea.vmem %s5, %s314
      %p316 = scmp.lt.s32.totalorder %s22, 1
      %s317 = scalar_select %p316, %s22, 1
      %p318 = scmp.lt.s32.totalorder %s23, 0
      %s319 = scalar_select %p318, %s23, 0
      %s320 = sadd.s32 %s319, %s317
      %s321 = scalar_lea.vmem %s6, %s320
      %v323 = vld [vmem:[%s297] sm:$0xf]
      %v324 = vld [vmem:[%s297 + $0x4] sm:$0xf]
      %v325 = vld [vmem:[%s297 + $0x8] sm:$0x1]
      %v326 = vld [vmem:[%s297 + $0xc] sm:$0xf]
      %v327 = vld [vmem:[%s297 + $0x10] sm:$0xf]
      %v328 = vld [vmem:[%s297 + $0x14] sm:$0x1]
      %v329 = vld [vmem:[%s297 + $0x18] sm:$0xf]
      %v330 = vld [vmem:[%s297 + $0x1c] sm:$0xf]
      %v331 = vld [vmem:[%s297 + $0x20] sm:$0x1]
      %v332 = vld [vmem:[%s297 + $0x24] sm:$0xf]
      %v333 = vld [vmem:[%s297 + $0x28] sm:$0xf]
      %v334 = vld [vmem:[%s297 + $0x2c] sm:$0x1]
      %v335 = vld [vmem:[%s297 + $0x30] sm:$0xf]
      %v336 = vld [vmem:[%s297 + $0x34] sm:$0xf]
      %v337 = vld [vmem:[%s297 + $0x38] sm:$0x1]
      %v338 = vld [vmem:[%s297 + $0x3c] sm:$0xf]
      %v339 = vld [vmem:[%s297 + $0x40] sm:$0xf]
      %v340 = vld [vmem:[%s297 + $0x44] sm:$0x1]
      %v341 = vld [vmem:[%s297 + $0x48] sm:$0xf]
      %v342 = vld [vmem:[%s297 + $0x4c] sm:$0xf]
      %v343 = vld [vmem:[%s297 + $0x50] sm:$0x1]
      %v344 = vld [vmem:[%s297 + $0x54] sm:$0xf]
      %v345 = vld [vmem:[%s297 + $0x58] sm:$0xf]
      %v346 = vld [vmem:[%s297 + $0x5c] sm:$0x1]
      %v347 = vld [vmem:[%s297 + $0x60] sm:$0xf]
      %v348 = vld [vmem:[%s297 + $0x64] sm:$0xf]
      %v349 = vld [vmem:[%s297 + $0x68] sm:$0x1]
      %v350 = vld [vmem:[%s297 + $0x6c] sm:$0xf]
      %v351 = vld [vmem:[%s297 + $0x70] sm:$0xf]
      %v352 = vld [vmem:[%s297 + $0x74] sm:$0x1]
      %v353 = vld [vmem:[%s297 + $0x78] sm:$0xf]
      %v354 = vld [vmem:[%s297 + $0x7c] sm:$0xf]
      %v355 = vld [vmem:[%s297 + $0x80] sm:$0x1]
      %v356 = vld [vmem:[%s297 + $0x84] sm:$0xf]
      %v357 = vld [vmem:[%s297 + $0x88] sm:$0xf]
      %v358 = vld [vmem:[%s297 + $0x8c] sm:$0x1]
      %v359 = vld [vmem:[%s297 + $0x90] sm:$0xf]
      %v360 = vld [vmem:[%s297 + $0x94] sm:$0xf]
      %v361 = vld [vmem:[%s297 + $0x98] sm:$0x1]
      %v362 = vld [vmem:[%s297 + $0x9c] sm:$0xf]
      %v363 = vld [vmem:[%s297 + $0xa0] sm:$0xf]
      %v364 = vld [vmem:[%s297 + $0xa4] sm:$0x1]
      %v365 = vld [vmem:[%s297 + $0xa8] sm:$0xf]
      %v366 = vld [vmem:[%s297 + $0xac] sm:$0xf]
      %v367 = vld [vmem:[%s297 + $0xb0] sm:$0x1]
      %v368 = vld [vmem:[%s297 + $0xb4] sm:$0xf]
      %v369 = vld [vmem:[%s297 + $0xb8] sm:$0xf]
      %v370 = vld [vmem:[%s297 + $0xbc] sm:$0x1]
      %v371 = vld [vmem:[%s297 + $0xc0] sm:$0xf]
      %v372 = vld [vmem:[%s297 + $0xc4] sm:$0xf]
      %v373 = vld [vmem:[%s297 + $0xc8] sm:$0x1]
      %v374 = vld [vmem:[%s297 + $0xcc] sm:$0xf]
      %v375 = vld [vmem:[%s297 + $0xd0] sm:$0xf]
      %v376 = vld [vmem:[%s297 + $0xd4] sm:$0x1]
      %vm377 = vsmask.f32 3328
      %vm378 = vsmask.f32 7440
      %vm379 = vmor %vm377, %vm378
      %v381 = vshrl.u32 %v323, 16
      %v383 = vrot.slane %v381, 4
      %v384 = vshll.u32 %v323, 16
      %v386 = vrot.slane %v384, 5
      %v387 = vor.u32 %v383, %v386
      %v388 = vrot.slane %v387, 4
      %v390 = vshll.u32 %v324, 16
      %v392 = vrot.slane %v390, 5
      %v393 = vsel %vm379, %v388, %v392
      %v394 = vshrl.u32 %v324, 16
      %v396 = vrot.slane %v394, 4
      %v397 = vor.u32 %v396, %v392
      %v398 = vrot.slane %v397, 4
      %v400 = vshll.u32 %v325, 16
      %v402 = vrot.slane %v400, 5
      %v403 = vsel %vm379, %v398, %v402
      %v405 = vshrl.u32 %v326, 16
      %v407 = vrot.slane %v405, 4
      %v408 = vshll.u32 %v326, 16
      %v410 = vrot.slane %v408, 5
      %v411 = vor.u32 %v407, %v410
      %v412 = vrot.slane %v411, 4
      %v414 = vshll.u32 %v327, 16
      %v416 = vrot.slane %v414, 5
      %v417 = vsel %vm379, %v412, %v416
      %v418 = vshrl.u32 %v327, 16
      %v420 = vrot.slane %v418, 4
      %v421 = vor.u32 %v420, %v416
      %v422 = vrot.slane %v421, 4
      %v424 = vshll.u32 %v328, 16
      %v426 = vrot.slane %v424, 5
      %v427 = vsel %vm379, %v422, %v426
      %v429 = vshrl.u32 %v329, 16
      %v431 = vrot.slane %v429, 4
      %v432 = vshll.u32 %v329, 16
      %v434 = vrot.slane %v432, 5
      %v435 = vor.u32 %v431, %v434
      %v436 = vrot.slane %v435, 4
      %v438 = vshll.u32 %v330, 16
      %v440 = vrot.slane %v438, 5
      %v441 = vsel %vm379, %v436, %v440
      %v442 = vshrl.u32 %v330, 16
      %v444 = vrot.slane %v442, 4
      %v445 = vor.u32 %v444, %v440
      %v446 = vrot.slane %v445, 4
      %v448 = vshll.u32 %v331, 16
      %v450 = vrot.slane %v448, 5
      %v451 = vsel %vm379, %v446, %v450
      %v453 = vshrl.u32 %v332, 16
      %v455 = vrot.slane %v453, 4
      %v456 = vshll.u32 %v332, 16
      %v458 = vrot.slane %v456, 5
      %v459 = vor.u32 %v455, %v458
      %v460 = vrot.slane %v459, 4
      %v462 = vshll.u32 %v333, 16
      %v464 = vrot.slane %v462, 5
      %v465 = vsel %vm379, %v460, %v464
      %v466 = vshrl.u32 %v333, 16
      %v468 = vrot.slane %v466, 4
      %v469 = vor.u32 %v468, %v464
      %v470 = vrot.slane %v469, 4
      %v472 = vshll.u32 %v334, 16
      %v474 = vrot.slane %v472, 5
      %v475 = vsel %vm379, %v470, %v474
      %v477 = vshrl.u32 %v335, 16
      %v479 = vrot.slane %v477, 4
      %v480 = vshll.u32 %v335, 16
      %v482 = vrot.slane %v480, 5
      %v483 = vor.u32 %v479, %v482
      %v484 = vrot.slane %v483, 4
      %v486 = vshll.u32 %v336, 16
      %v488 = vrot.slane %v486, 5
      %v489 = vsel %vm379, %v484, %v488
      %v490 = vshrl.u32 %v336, 16
      %v492 = vrot.slane %v490, 4
      %v493 = vor.u32 %v492, %v488
      %v494 = vrot.slane %v493, 4
      %v496 = vshll.u32 %v337, 16
      %v498 = vrot.slane %v496, 5
      %v499 = vsel %vm379, %v494, %v498
      %v501 = vshrl.u32 %v338, 16
      %v503 = vrot.slane %v501, 4
      %v504 = vshll.u32 %v338, 16
      %v506 = vrot.slane %v504, 5
      %v507 = vor.u32 %v503, %v506
      %v508 = vrot.slane %v507, 4
      %v510 = vshll.u32 %v339, 16
      %v512 = vrot.slane %v510, 5
      %v513 = vsel %vm379, %v508, %v512
      %v514 = vshrl.u32 %v339, 16
      %v516 = vrot.slane %v514, 4
      %v517 = vor.u32 %v516, %v512
      %v518 = vrot.slane %v517, 4
      %v520 = vshll.u32 %v340, 16
      %v522 = vrot.slane %v520, 5
      %v523 = vsel %vm379, %v518, %v522
      %v525 = vshrl.u32 %v341, 16
      %v527 = vrot.slane %v525, 4
      %v528 = vshll.u32 %v341, 16
      %v530 = vrot.slane %v528, 5
      %v531 = vor.u32 %v527, %v530
      %v532 = vrot.slane %v531, 4
      %v534 = vshll.u32 %v342, 16
      %v536 = vrot.slane %v534, 5
      %v537 = vsel %vm379, %v532, %v536
      %v538 = vshrl.u32 %v342, 16
      %v540 = vrot.slane %v538, 4
      %v541 = vor.u32 %v540, %v536
      %v542 = vrot.slane %v541, 4
      %v544 = vshll.u32 %v343, 16
      %v546 = vrot.slane %v544, 5
      %v547 = vsel %vm379, %v542, %v546
      %v549 = vshrl.u32 %v344, 16
      %v551 = vrot.slane %v549, 4
      %v552 = vshll.u32 %v344, 16
      %v554 = vrot.slane %v552, 5
      %v555 = vor.u32 %v551, %v554
      %v556 = vrot.slane %v555, 4
      %v558 = vshll.u32 %v345, 16
      %v560 = vrot.slane %v558, 5
      %v561 = vsel %vm379, %v556, %v560
      %v562 = vshrl.u32 %v345, 16
      %v564 = vrot.slane %v562, 4
      %v565 = vor.u32 %v564, %v560
      %v566 = vrot.slane %v565, 4
      %v568 = vshll.u32 %v346, 16
      %v570 = vrot.slane %v568, 5
      %v571 = vsel %vm379, %v566, %v570
      %v573 = vshrl.u32 %v347, 16
      %v575 = vrot.slane %v573, 4
      %v576 = vshll.u32 %v347, 16
      %v578 = vrot.slane %v576, 5
      %v579 = vor.u32 %v575, %v578
      %v580 = vrot.slane %v579, 4
      %v582 = vshll.u32 %v348, 16
      %v584 = vrot.slane %v582, 5
      %v585 = vsel %vm379, %v580, %v584
      %v586 = vshrl.u32 %v348, 16
      %v588 = vrot.slane %v586, 4
      %v589 = vor.u32 %v588, %v584
      %v590 = vrot.slane %v589, 4
      %v592 = vshll.u32 %v349, 16
      %v594 = vrot.slane %v592, 5
      %v595 = vsel %vm379, %v590, %v594
      %v597 = vshrl.u32 %v350, 16
      %v599 = vrot.slane %v597, 4
      %v600 = vshll.u32 %v350, 16
      %v602 = vrot.slane %v600, 5
      %v603 = vor.u32 %v599, %v602
      %v604 = vrot.slane %v603, 4
      %v606 = vshll.u32 %v351, 16
      %v608 = vrot.slane %v606, 5
      %v609 = vsel %vm379, %v604, %v608
      %v610 = vshrl.u32 %v351, 16
      %v612 = vrot.slane %v610, 4
      %v613 = vor.u32 %v612, %v608
      %v614 = vrot.slane %v613, 4
      %v616 = vshll.u32 %v352, 16
      %v618 = vrot.slane %v616, 5
      %v619 = vsel %vm379, %v614, %v618
      %v621 = vshrl.u32 %v353, 16
      %v623 = vrot.slane %v621, 4
      %v624 = vshll.u32 %v353, 16
      %v626 = vrot.slane %v624, 5
      %v627 = vor.u32 %v623, %v626
      %v628 = vrot.slane %v627, 4
      %v630 = vshll.u32 %v354, 16
      %v632 = vrot.slane %v630, 5
      %v633 = vsel %vm379, %v628, %v632
      %v634 = vshrl.u32 %v354, 16
      %v636 = vrot.slane %v634, 4
      %v637 = vor.u32 %v636, %v632
      %v638 = vrot.slane %v637, 4
      %v640 = vshll.u32 %v355, 16
      %v642 = vrot.slane %v640, 5
      %v643 = vsel %vm379, %v638, %v642
      %v645 = vshrl.u32 %v356, 16
      %v647 = vrot.slane %v645, 4
      %v648 = vshll.u32 %v356, 16
      %v650 = vrot.slane %v648, 5
      %v651 = vor.u32 %v647, %v650
      %v652 = vrot.slane %v651, 4
      %v654 = vshll.u32 %v357, 16
      %v656 = vrot.slane %v654, 5
      %v657 = vsel %vm379, %v652, %v656
      %v658 = vshrl.u32 %v357, 16
      %v660 = vrot.slane %v658, 4
      %v661 = vor.u32 %v660, %v656
      %v662 = vrot.slane %v661, 4
      %v664 = vshll.u32 %v358, 16
      %v666 = vrot.slane %v664, 5
      %v667 = vsel %vm379, %v662, %v666
      %v669 = vshrl.u32 %v359, 16
      %v671 = vrot.slane %v669, 4
      %v672 = vshll.u32 %v359, 16
      %v674 = vrot.slane %v672, 5
      %v675 = vor.u32 %v671, %v674
      %v676 = vrot.slane %v675, 4
      %v678 = vshll.u32 %v360, 16
      %v680 = vrot.slane %v678, 5
      %v681 = vsel %vm379, %v676, %v680
      %v682 = vshrl.u32 %v360, 16
      %v684 = vrot.slane %v682, 4
      %v685 = vor.u32 %v684, %v680
      %v686 = vrot.slane %v685, 4
      %v688 = vshll.u32 %v361, 16
      %v690 = vrot.slane %v688, 5
      %v691 = vsel %vm379, %v686, %v690
      %v693 = vshrl.u32 %v362, 16
      %v695 = vrot.slane %v693, 4
      %v696 = vshll.u32 %v362, 16
      %v698 = vrot.slane %v696, 5
      %v699 = vor.u32 %v695, %v698
      %v700 = vrot.slane %v699, 4
      %v702 = vshll.u32 %v363, 16
      %v704 = vrot.slane %v702, 5
      %v705 = vsel %vm379, %v700, %v704
      %v706 = vshrl.u32 %v363, 16
      %v708 = vrot.slane %v706, 4
      %v709 = vor.u32 %v708, %v704
      %v710 = vrot.slane %v709, 4
      %v712 = vshll.u32 %v364, 16
      %v714 = vrot.slane %v712, 5
      %v715 = vsel %vm379, %v710, %v714
      %v717 = vshrl.u32 %v365, 16
      %v719 = vrot.slane %v717, 4
      %v720 = vshll.u32 %v365, 16
      %v722 = vrot.slane %v720, 5
      %v723 = vor.u32 %v719, %v722
      %v724 = vrot.slane %v723, 4
      %v726 = vshll.u32 %v366, 16
      %v728 = vrot.slane %v726, 5
      %v729 = vsel %vm379, %v724, %v728
      %v730 = vshrl.u32 %v366, 16
      %v732 = vrot.slane %v730, 4
      %v733 = vor.u32 %v732, %v728
      %v734 = vrot.slane %v733, 4
      %v736 = vshll.u32 %v367, 16
      %v738 = vrot.slane %v736, 5
      %v739 = vsel %vm379, %v734, %v738
      %v741 = vshrl.u32 %v368, 16
      %v743 = vrot.slane %v741, 4
      %v744 = vshll.u32 %v368, 16
      %v746 = vrot.slane %v744, 5
      %v747 = vor.u32 %v743, %v746
      %v748 = vrot.slane %v747, 4
      %v750 = vshll.u32 %v369, 16
      %v752 = vrot.slane %v750, 5
      %v753 = vsel %vm379, %v748, %v752
      %v754 = vshrl.u32 %v369, 16
      %v756 = vrot.slane %v754, 4
      %v757 = vor.u32 %v756, %v752
      %v758 = vrot.slane %v757, 4
      %v760 = vshll.u32 %v370, 16
      %v762 = vrot.slane %v760, 5
      %v763 = vsel %vm379, %v758, %v762
      %vm812 = vcmask 1042432
      %vm813 = vcmask 1046532
      %vm814 = vmor %vm812, %vm813
      %v815 = vrot.slane %v323, 5
      %v816 = vrot.slane %v815, 4
      %v817 = vrot.slane %v324, 5
      %v818 = vsel %vm814, %v816, %v817
      %v819 = vrot.slane %v817, 4
      %v820 = vrot.slane %v325, 5
      %v821 = vsel %vm814, %v819, %v820
      %v822 = vrot.slane %v326, 5
      %v823 = vrot.slane %v822, 4
      %v824 = vrot.slane %v327, 5
      %v825 = vsel %vm814, %v823, %v824
      %v826 = vrot.slane %v824, 4
      %v827 = vrot.slane %v328, 5
      %v828 = vsel %vm814, %v826, %v827
      %v829 = vrot.slane %v329, 5
      %v830 = vrot.slane %v829, 4
      %v831 = vrot.slane %v330, 5
      %v832 = vsel %vm814, %v830, %v831
      %v833 = vrot.slane %v831, 4
      %v834 = vrot.slane %v331, 5
      %v835 = vsel %vm814, %v833, %v834
      %v836 = vrot.slane %v332, 5
      %v837 = vrot.slane %v836, 4
      %v838 = vrot.slane %v333, 5
      %v839 = vsel %vm814, %v837, %v838
      %v840 = vrot.slane %v838, 4
      %v841 = vrot.slane %v334, 5
      %v842 = vsel %vm814, %v840, %v841
      %v843 = vrot.slane %v335, 5
      %v844 = vrot.slane %v843, 4
      %v845 = vrot.slane %v336, 5
      %v846 = vsel %vm814, %v844, %v845
      %v847 = vrot.slane %v845, 4
      %v848 = vrot.slane %v337, 5
      %v849 = vsel %vm814, %v847, %v848
      %v850 = vrot.slane %v338, 5
      %v851 = vrot.slane %v850, 4
      %v852 = vrot.slane %v339, 5
      %v853 = vsel %vm814, %v851, %v852
      %v854 = vrot.slane %v852, 4
      %v855 = vrot.slane %v340, 5
      %v856 = vsel %vm814, %v854, %v855
      %v857 = vrot.slane %v341, 5
      %v858 = vrot.slane %v857, 4
      %v859 = vrot.slane %v342, 5
      %v860 = vsel %vm814, %v858, %v859
      %v861 = vrot.slane %v859, 4
      %v862 = vrot.slane %v343, 5
      %v863 = vsel %vm814, %v861, %v862
      %v864 = vrot.slane %v344, 5
      %v865 = vrot.slane %v864, 4
      %v866 = vrot.slane %v345, 5
      %v867 = vsel %vm814, %v865, %v866
      %v868 = vrot.slane %v866, 4
      %v869 = vrot.slane %v346, 5
      %v870 = vsel %vm814, %v868, %v869
      %v871 = vrot.slane %v347, 5
      %v872 = vrot.slane %v871, 4
      %v873 = vrot.slane %v348, 5
      %v874 = vsel %vm814, %v872, %v873
      %v875 = vrot.slane %v873, 4
      %v876 = vrot.slane %v349, 5
      %v877 = vsel %vm814, %v875, %v876
      %v878 = vrot.slane %v350, 5
      %v879 = vrot.slane %v878, 4
      %v880 = vrot.slane %v351, 5
      %v881 = vsel %vm814, %v879, %v880
      %v882 = vrot.slane %v880, 4
      %v883 = vrot.slane %v352, 5
      %v884 = vsel %vm814, %v882, %v883
      %v885 = vrot.slane %v353, 5
      %v886 = vrot.slane %v885, 4
      %v887 = vrot.slane %v354, 5
      %v888 = vsel %vm814, %v886, %v887
      %v889 = vrot.slane %v887, 4
      %v890 = vrot.slane %v355, 5
      %v891 = vsel %vm814, %v889, %v890
      %v892 = vrot.slane %v356, 5
      %v893 = vrot.slane %v892, 4
      %v894 = vrot.slane %v357, 5
      %v895 = vsel %vm814, %v893, %v894
      %v896 = vrot.slane %v894, 4
      %v897 = vrot.slane %v358, 5
      %v898 = vsel %vm814, %v896, %v897
      %v899 = vrot.slane %v359, 5
      %v900 = vrot.slane %v899, 4
      %v901 = vrot.slane %v360, 5
      %v902 = vsel %vm814, %v900, %v901
      %v903 = vrot.slane %v901, 4
      %v904 = vrot.slane %v361, 5
      %v905 = vsel %vm814, %v903, %v904
      %v906 = vrot.slane %v362, 5
      %v907 = vrot.slane %v906, 4
      %v908 = vrot.slane %v363, 5
      %v909 = vsel %vm814, %v907, %v908
      %v910 = vrot.slane %v908, 4
      %v911 = vrot.slane %v364, 5
      %v912 = vsel %vm814, %v910, %v911
      %v913 = vrot.slane %v365, 5
      %v914 = vrot.slane %v913, 4
      %v915 = vrot.slane %v366, 5
      %v916 = vsel %vm814, %v914, %v915
      %v917 = vrot.slane %v915, 4
      %v918 = vrot.slane %v367, 5
      %v919 = vsel %vm814, %v917, %v918
      %v920 = vrot.slane %v368, 5
      %v921 = vrot.slane %v920, 4
      %v922 = vrot.slane %v369, 5
      %v923 = vsel %vm814, %v921, %v922
      %v924 = vrot.slane %v922, 4
      %v925 = vrot.slane %v370, 5
      %v926 = vsel %vm814, %v924, %v925
      %v928 = vshrl.u32 %v371, 16
      %v930 = vrot.slane %v928, 4
      %v931 = vshll.u32 %v371, 16
      %v933 = vrot.slane %v931, 5
      %v934 = vor.u32 %v930, %v933
      %v935 = vrot.slane %v934, 4
      %v937 = vshll.u32 %v372, 16
      %v939 = vrot.slane %v937, 5
      %v940 = vsel %vm379, %v935, %v939
      %v941 = vshrl.u32 %v372, 16
      %v943 = vrot.slane %v941, 4
      %v944 = vor.u32 %v943, %v939
      %v945 = vrot.slane %v944, 4
      %v947 = vshll.u32 %v373, 16
      %v949 = vrot.slane %v947, 5
      %v950 = vsel %vm379, %v945, %v949
      %v954 = vrot.slane %v371, 5
      %v955 = vrot.slane %v954, 4
      %v956 = vrot.slane %v372, 5
      %v957 = vsel %vm814, %v955, %v956
      %v958 = vrot.slane %v956, 4
      %v959 = vrot.slane %v373, 5
      %v960 = vsel %vm814, %v958, %v959
      %v962 = vshrl.u32 %v374, 16
      %v964 = vrot.slane %v962, 4
      %v965 = vshll.u32 %v374, 16
      %v967 = vrot.slane %v965, 5
      %v968 = vor.u32 %v964, %v967
      %v969 = vrot.slane %v968, 4
      %v971 = vshll.u32 %v375, 16
      %v973 = vrot.slane %v971, 5
      %v974 = vsel %vm379, %v969, %v973
      %v975 = vshrl.u32 %v375, 16
      %v977 = vrot.slane %v975, 4
      %v978 = vor.u32 %v977, %v973
      %v979 = vrot.slane %v978, 4
      %v981 = vshll.u32 %v376, 16
      %v983 = vrot.slane %v981, 5
      %v984 = vsel %vm379, %v979, %v983
      %v988 = vrot.slane %v374, 5
      %v989 = vrot.slane %v988, 4
      %v990 = vrot.slane %v375, 5
      %v991 = vsel %vm814, %v989, %v990
      %v992 = vrot.slane %v990, 4
      %v993 = vrot.slane %v376, 5
      %v994 = vsel %vm814, %v992, %v993
      %v995 = vunpack.c.l.b16 %v323
      %v996 = vunpack.c.l.b16 %v324
      %v997 = vunpack.c.l.b16 %v326
      %v998 = vunpack.c.l.b16 %v327
      %v999 = vunpack.c.l.b16 %v329
      %v1000 = vunpack.c.l.b16 %v330
      %v1001 = vunpack.c.l.b16 %v332
      %v1002 = vunpack.c.l.b16 %v333
      %v1003 = vunpack.c.l.b16 %v335
      %v1004 = vunpack.c.l.b16 %v336
      %v1005 = vunpack.c.l.b16 %v338
      %v1006 = vunpack.c.l.b16 %v339
      %v1007 = vunpack.c.l.b16 %v341
      %v1008 = vunpack.c.l.b16 %v342
      %v1009 = vunpack.c.l.b16 %v344
      %v1010 = vunpack.c.l.b16 %v345
      %v1011 = vunpack.c.l.b16 %v347
      %v1012 = vunpack.c.l.b16 %v348
      %v1013 = vunpack.c.l.b16 %v350
      %v1014 = vunpack.c.l.b16 %v351
      %v1015 = vunpack.c.l.b16 %v353
      %v1016 = vunpack.c.l.b16 %v354
      %v1017 = vunpack.c.l.b16 %v356
      %v1018 = vunpack.c.l.b16 %v357
      %v1019 = vunpack.c.l.b16 %v359
      %v1020 = vunpack.c.l.b16 %v360
      %v1021 = vunpack.c.l.b16 %v362
      %v1022 = vunpack.c.l.b16 %v363
      %v1023 = vunpack.c.l.b16 %v365
      %v1024 = vunpack.c.l.b16 %v366
      %v1025 = vunpack.c.l.b16 %v368
      %v1026 = vunpack.c.l.b16 %v369
      %v1027 = vpack.c.b16 %v996, %v995
      %v1028 = vpack.c.b16 %v998, %v997
      %v1029 = vpack.c.b16 %v1000, %v999
      %v1030 = vpack.c.b16 %v1002, %v1001
      %v1031 = vpack.c.b16 %v1004, %v1003
      %v1032 = vpack.c.b16 %v1006, %v1005
      %v1033 = vpack.c.b16 %v1008, %v1007
      %v1034 = vpack.c.b16 %v1010, %v1009
      %v1035 = vpack.c.b16 %v1012, %v1011
      %v1036 = vpack.c.b16 %v1014, %v1013
      %v1037 = vpack.c.b16 %v1016, %v1015
      %v1038 = vpack.c.b16 %v1018, %v1017
      %v1039 = vpack.c.b16 %v1020, %v1019
      %v1040 = vpack.c.b16 %v1022, %v1021
      %v1041 = vpack.c.b16 %v1024, %v1023
      %v1042 = vpack.c.b16 %v1026, %v1025
      %v1059 = vunpack.c.l.b16 %v393
      %v1060 = vunpack.c.l.b16 %v403
      %v1061 = vunpack.c.l.b16 %v417
      %v1062 = vunpack.c.l.b16 %v427
      %v1063 = vunpack.c.l.b16 %v441
      %v1064 = vunpack.c.l.b16 %v451
      %v1065 = vunpack.c.l.b16 %v465
      %v1066 = vunpack.c.l.b16 %v475
      %v1067 = vunpack.c.l.b16 %v489
      %v1068 = vunpack.c.l.b16 %v499
      %v1069 = vunpack.c.l.b16 %v513
      %v1070 = vunpack.c.l.b16 %v523
      %v1071 = vunpack.c.l.b16 %v537
      %v1072 = vunpack.c.l.b16 %v547
      %v1073 = vunpack.c.l.b16 %v561
      %v1074 = vunpack.c.l.b16 %v571
      %v1075 = vunpack.c.l.b16 %v585
      %v1076 = vunpack.c.l.b16 %v595
      %v1077 = vunpack.c.l.b16 %v609
      %v1078 = vunpack.c.l.b16 %v619
      %v1079 = vunpack.c.l.b16 %v633
      %v1080 = vunpack.c.l.b16 %v643
      %v1081 = vunpack.c.l.b16 %v657
      %v1082 = vunpack.c.l.b16 %v667
      %v1083 = vunpack.c.l.b16 %v681
      %v1084 = vunpack.c.l.b16 %v691
      %v1085 = vunpack.c.l.b16 %v705
      %v1086 = vunpack.c.l.b16 %v715
      %v1087 = vunpack.c.l.b16 %v729
      %v1088 = vunpack.c.l.b16 %v739
      %v1089 = vunpack.c.l.b16 %v753
      %v1090 = vunpack.c.l.b16 %v763
      %v1091 = vpack.c.b16 %v1060, %v1059
      %v1092 = vpack.c.b16 %v1062, %v1061
      %v1093 = vpack.c.b16 %v1064, %v1063
      %v1094 = vpack.c.b16 %v1066, %v1065
      %v1095 = vpack.c.b16 %v1068, %v1067
      %v1096 = vpack.c.b16 %v1070, %v1069
      %v1097 = vpack.c.b16 %v1072, %v1071
      %v1098 = vpack.c.b16 %v1074, %v1073
      %v1099 = vpack.c.b16 %v1076, %v1075
      %v1100 = vpack.c.b16 %v1078, %v1077
      %v1101 = vpack.c.b16 %v1080, %v1079
      %v1102 = vpack.c.b16 %v1082, %v1081
      %v1103 = vpack.c.b16 %v1084, %v1083
      %v1104 = vpack.c.b16 %v1086, %v1085
      %v1105 = vpack.c.b16 %v1088, %v1087
      %v1106 = vpack.c.b16 %v1090, %v1089
      %v1123 = vunpack.c.l.b16 %v818
      %v1124 = vunpack.c.l.b16 %v821
      %v1125 = vunpack.c.l.b16 %v825
      %v1126 = vunpack.c.l.b16 %v828
      %v1127 = vunpack.c.l.b16 %v832
      %v1128 = vunpack.c.l.b16 %v835
      %v1129 = vunpack.c.l.b16 %v839
      %v1130 = vunpack.c.l.b16 %v842
      %v1131 = vunpack.c.l.b16 %v846
      %v1132 = vunpack.c.l.b16 %v849
      %v1133 = vunpack.c.l.b16 %v853
      %v1134 = vunpack.c.l.b16 %v856
      %v1135 = vunpack.c.l.b16 %v860
      %v1136 = vunpack.c.l.b16 %v863
      %v1137 = vunpack.c.l.b16 %v867
      %v1138 = vunpack.c.l.b16 %v870
      %v1139 = vunpack.c.l.b16 %v874
      %v1140 = vunpack.c.l.b16 %v877
      %v1141 = vunpack.c.l.b16 %v881
      %v1142 = vunpack.c.l.b16 %v884
      %v1143 = vunpack.c.l.b16 %v888
      %v1144 = vunpack.c.l.b16 %v891
      %v1145 = vunpack.c.l.b16 %v895
      %v1146 = vunpack.c.l.b16 %v898
      %v1147 = vunpack.c.l.b16 %v902
      %v1148 = vunpack.c.l.b16 %v905
      %v1149 = vunpack.c.l.b16 %v909
      %v1150 = vunpack.c.l.b16 %v912
      %v1151 = vunpack.c.l.b16 %v916
      %v1152 = vunpack.c.l.b16 %v919
      %v1153 = vunpack.c.l.b16 %v923
      %v1154 = vunpack.c.l.b16 %v926
      %v1155 = vpack.c.b16 %v1124, %v1123
      %v1156 = vpack.c.b16 %v1126, %v1125
      %v1157 = vpack.c.b16 %v1128, %v1127
      %v1158 = vpack.c.b16 %v1130, %v1129
      %v1159 = vpack.c.b16 %v1132, %v1131
      %v1160 = vpack.c.b16 %v1134, %v1133
      %v1161 = vpack.c.b16 %v1136, %v1135
      %v1162 = vpack.c.b16 %v1138, %v1137
      %v1163 = vpack.c.b16 %v1140, %v1139
      %v1164 = vpack.c.b16 %v1142, %v1141
      %v1165 = vpack.c.b16 %v1144, %v1143
      %v1166 = vpack.c.b16 %v1146, %v1145
      %v1167 = vpack.c.b16 %v1148, %v1147
      %v1168 = vpack.c.b16 %v1150, %v1149
      %v1169 = vpack.c.b16 %v1152, %v1151
      %v1170 = vpack.c.b16 %v1154, %v1153
      %v1187 = vunpack.c.l.b16 %v371
      %v1188 = vunpack.c.l.b16 %v372
      %v1189 = vpack.c.b16 %v1188, %v1187
      %v1191 = vunpack.c.l.b16 %v940
      %v1192 = vunpack.c.l.b16 %v950
      %v1193 = vpack.c.b16 %v1192, %v1191
      %v1195 = vunpack.c.l.b16 %v957
      %v1196 = vunpack.c.l.b16 %v960
      %v1197 = vpack.c.b16 %v1196, %v1195
      %v1199 = vunpack.c.l.b16 %v374
      %v1200 = vunpack.c.l.b16 %v375
      %v1201 = vpack.c.b16 %v1200, %v1199
      %v1203 = vunpack.c.l.b16 %v974
      %v1204 = vunpack.c.l.b16 %v984
      %v1205 = vpack.c.b16 %v1204, %v1203
      %v1207 = vunpack.c.l.b16 %v991
      %v1208 = vunpack.c.l.b16 %v994
      %v1209 = vpack.c.b16 %v1208, %v1207
      %v1211 = vld [vmem:[%s301] sm:$0xf]
      %v1212 = vld [vmem:[%s301 + $0x4] sm:$0xf]
      %v1213 = vld [vmem:[%s301 + $0x8] sm:$0xf]
      %v1214 = vld [vmem:[%s301 + $0xc] sm:$0xf]
      %v1215 = vld [vmem:[%s301 + $0x10] sm:$0xf]
      %v1216 = vld [vmem:[%s301 + $0x14] sm:$0xf]
      %v1217 = vld [vmem:[%s301 + $0x18] sm:$0xf]
      %v1218 = vld [vmem:[%s301 + $0x1c] sm:$0xf]
      %v1219 = vld [vmem:[%s301 + $0x20] sm:$0xf]
      %v1220 = vld [vmem:[%s301 + $0x24] sm:$0xf]
      %v1221 = vld [vmem:[%s301 + $0x28] sm:$0xf]
      %v1222 = vld [vmem:[%s301 + $0x2c] sm:$0xf]
      %v1223 = vld [vmem:[%s301 + $0x30] sm:$0xf]
      %v1224 = vld [vmem:[%s301 + $0x34] sm:$0xf]
      %v1225 = vld [vmem:[%s301 + $0x38] sm:$0xf]
      %v1226 = vld [vmem:[%s301 + $0x3c] sm:$0xf]
      %v1227 = vld [vmem:[%s301 + $0x40] sm:$0xf]
      %v1228 = vld [vmem:[%s301 + $0x44] sm:$0xf]
      %v1229 = vld [vmem:[%s301 + $0x48] sm:$0xf]
      %v1230 = vld [vmem:[%s301 + $0x4c] sm:$0xf]
      %v1231 = vld [vmem:[%s301 + $0x50] sm:$0xf]
      %v1232 = vld [vmem:[%s301 + $0x54] sm:$0xf]
      %v1233 = vld [vmem:[%s301 + $0x58] sm:$0xf]
      %v1234 = vld [vmem:[%s301 + $0x5c] sm:$0xf]
      %v1235 = vld [vmem:[%s301 + $0x60] sm:$0xf]
      %v1236 = vld [vmem:[%s301 + $0x64] sm:$0xf]
      %v1237 = vld [vmem:[%s301 + $0x68] sm:$0xf]
      %v1238 = vld [vmem:[%s301 + $0x6c] sm:$0xf]
      %v1239 = vld [vmem:[%s301 + $0x70] sm:$0xf]
      %v1240 = vld [vmem:[%s301 + $0x74] sm:$0xf]
      %v1241 = vld [vmem:[%s301 + $0x78] sm:$0xf]
      %v1242 = vld [vmem:[%s301 + $0x7c] sm:$0xf]
      %v1243 = vld [vmem:[%s301 + $0x80] sm:$0xf]
      %v1244 = vld [vmem:[%s301 + $0x84] sm:$0xf]
      %v1245 = vld [vmem:[%s301 + $0x88] sm:$0xf]
      %v1246 = vld [vmem:[%s301 + $0x8c] sm:$0xf]
      %v1247 = vld [vmem:[%s301 + $0x90] sm:$0xf]
      %v1248 = vld [vmem:[%s301 + $0x94] sm:$0xf]
      %v1249 = vld [vmem:[%s301 + $0x98] sm:$0xf]
      %v1250 = vld [vmem:[%s301 + $0x9c] sm:$0xf]
      %v1251 = vld [vmem:[%s301 + $0xa0] sm:$0xf]
      %v1252 = vld [vmem:[%s301 + $0xa4] sm:$0xf]
      %v1253 = vld [vmem:[%s301 + $0xa8] sm:$0xf]
      %v1254 = vld [vmem:[%s301 + $0xac] sm:$0xf]
      %v1255 = vld [vmem:[%s301 + $0xb0] sm:$0xf]
      %v1256 = vld [vmem:[%s301 + $0xb4] sm:$0xf]
      %v1257 = vld [vmem:[%s301 + $0xb8] sm:$0xf]
      %v1258 = vld [vmem:[%s301 + $0xbc] sm:$0xf]
      %v1259 = vld [vmem:[%s301 + $0xc0] sm:$0xf]
      %v1260 = vld [vmem:[%s301 + $0xc4] sm:$0xf]
      %v1261 = vld [vmem:[%s301 + $0xc8] sm:$0xf]
      %v1262 = vld [vmem:[%s301 + $0xcc] sm:$0xf]
      %v1263 = vld [vmem:[%s301 + $0xd0] sm:$0xf]
      %v1264 = vld [vmem:[%s301 + $0xd4] sm:$0xf]
      %v1265 = vld [vmem:[%s301 + $0xd8] sm:$0xf]
      %v1266 = vld [vmem:[%s301 + $0xdc] sm:$0xf]
      %v1267 = vld [vmem:[%s301 + $0xe0] sm:$0xf]
      %v1268 = vld [vmem:[%s301 + $0xe4] sm:$0xf]
      %v1269 = vld [vmem:[%s301 + $0xe8] sm:$0xf]
      %v1270 = vld [vmem:[%s301 + $0xec] sm:$0xf]
      %v1271 = vld [vmem:[%s301 + $0xf0] sm:$0xf]
      %v1272 = vld [vmem:[%s301 + $0xf4] sm:$0xf]
      %v1273 = vld [vmem:[%s301 + $0xf8] sm:$0xf]
      %v1274 = vld [vmem:[%s301 + $0xfc] sm:$0xf]
      %v1275 = vld [vmem:[%s301 + $0x100] sm:$0xf]
      %v1276 = vld [vmem:[%s301 + $0x104] sm:$0xf]
      %v1277 = vld [vmem:[%s301 + $0x108] sm:$0xf]
      %v1278 = vld [vmem:[%s301 + $0x10c] sm:$0xf]
      %v1279 = vld [vmem:[%s301 + $0x110] sm:$0xf]
      %v1280 = vld [vmem:[%s301 + $0x114] sm:$0xf]
      %v1281 = vld [vmem:[%s301 + $0x118] sm:$0xf]
      %v1282 = vld [vmem:[%s301 + $0x11c] sm:$0xf]
      %v1283 = vld [vmem:[%s301 + $0x120] sm:$0xf]
      %v1284 = vld [vmem:[%s301 + $0x124] sm:$0xf]
      %v1285 = vld [vmem:[%s301 + $0x128] sm:$0xf]
      %v1286 = vld [vmem:[%s301 + $0x12c] sm:$0xf]
      %v1287 = vld [vmem:[%s301 + $0x130] sm:$0xf]
      %v1288 = vld [vmem:[%s301 + $0x134] sm:$0xf]
      %v1289 = vld [vmem:[%s301 + $0x138] sm:$0xf]
      %v1290 = vld [vmem:[%s301 + $0x13c] sm:$0xf]
      %v1291 = vld [vmem:[%s301 + $0x140] sm:$0xf]
      %v1292 = vld [vmem:[%s301 + $0x144] sm:$0xf]
      %v1293 = vld [vmem:[%s301 + $0x148] sm:$0xf]
      %v1294 = vld [vmem:[%s301 + $0x14c] sm:$0xf]
      %v1295 = vld [vmem:[%s301 + $0x150] sm:$0xf]
      %v1296 = vld [vmem:[%s301 + $0x154] sm:$0xf]
      %v1297 = vld [vmem:[%s301 + $0x158] sm:$0xf]
      %v1298 = vld [vmem:[%s301 + $0x15c] sm:$0xf]
      %v1299 = vld [vmem:[%s301 + $0x160] sm:$0xf]
      %v1300 = vld [vmem:[%s301 + $0x164] sm:$0xf]
      %v1301 = vld [vmem:[%s301 + $0x168] sm:$0xf]
      %v1302 = vld [vmem:[%s301 + $0x16c] sm:$0xf]
      %v1303 = vld [vmem:[%s301 + $0x170] sm:$0xf]
      %v1304 = vld [vmem:[%s301 + $0x174] sm:$0xf]
      %v1305 = vld [vmem:[%s301 + $0x178] sm:$0xf]
      %v1306 = vld [vmem:[%s301 + $0x17c] sm:$0xf]
      %v1307 = vld [vmem:[%s301 + $0x180] sm:$0xf]
      %v1308 = vld [vmem:[%s301 + $0x184] sm:$0xf]
      %v1309 = vld [vmem:[%s301 + $0x188] sm:$0xf]
      %v1310 = vld [vmem:[%s301 + $0x18c] sm:$0xf]
      %v1311 = vld [vmem:[%s301 + $0x190] sm:$0xf]
      %v1312 = vld [vmem:[%s301 + $0x194] sm:$0xf]
      %v1313 = vld [vmem:[%s301 + $0x198] sm:$0xf]
      %v1314 = vld [vmem:[%s301 + $0x19c] sm:$0xf]
      %v1315 = vld [vmem:[%s301 + $0x1a0] sm:$0xf]
      %v1316 = vld [vmem:[%s301 + $0x1a4] sm:$0xf]
      %v1317 = vld [vmem:[%s301 + $0x1a8] sm:$0xf]
      %v1318 = vld [vmem:[%s301 + $0x1ac] sm:$0xf]
      %v1319 = vld [vmem:[%s301 + $0x1b0] sm:$0xf]
      %v1320 = vld [vmem:[%s301 + $0x1b4] sm:$0xf]
      %v1321 = vld [vmem:[%s301 + $0x1b8] sm:$0xf]
      %v1322 = vld [vmem:[%s301 + $0x1bc] sm:$0xf]
      %v1323 = vld [vmem:[%s301 + $0x1c0] sm:$0xf]
      %v1324 = vld [vmem:[%s301 + $0x1c4] sm:$0xf]
      %v1325 = vld [vmem:[%s301 + $0x1c8] sm:$0xf]
      %v1326 = vld [vmem:[%s301 + $0x1cc] sm:$0xf]
      %v1327 = vld [vmem:[%s301 + $0x1d0] sm:$0xf]
      %v1328 = vld [vmem:[%s301 + $0x1d4] sm:$0xf]
      %v1329 = vld [vmem:[%s301 + $0x1d8] sm:$0xf]
      %v1330 = vld [vmem:[%s301 + $0x1dc] sm:$0xf]
      %v1331 = vld [vmem:[%s301 + $0x1e0] sm:$0xf]
      %v1332 = vld [vmem:[%s301 + $0x1e4] sm:$0xf]
      %v1333 = vld [vmem:[%s301 + $0x1e8] sm:$0xf]
      %v1334 = vld [vmem:[%s301 + $0x1ec] sm:$0xf]
      %v1335 = vld [vmem:[%s301 + $0x1f0] sm:$0xf]
      %v1336 = vld [vmem:[%s301 + $0x1f4] sm:$0xf]
      %v1337 = vld [vmem:[%s301 + $0x1f8] sm:$0xf]
      %v1338 = vld [vmem:[%s301 + $0x1fc] sm:$0xf]
      %v1339 = vld [vmem:[%s301 + $0x200] sm:$0xf]
      %v1340 = vld [vmem:[%s301 + $0x204] sm:$0xf]
      %v1341 = vld [vmem:[%s301 + $0x208] sm:$0xf]
      %v1342 = vld [vmem:[%s301 + $0x20c] sm:$0xf]
      %v1343 = vld [vmem:[%s301 + $0x210] sm:$0xf]
      %v1344 = vld [vmem:[%s301 + $0x214] sm:$0xf]
      %v1345 = vld [vmem:[%s301 + $0x218] sm:$0xf]
      %v1346 = vld [vmem:[%s301 + $0x21c] sm:$0xf]
      %v1347 = vld [vmem:[%s301 + $0x220] sm:$0xf]
      %v1348 = vld [vmem:[%s301 + $0x224] sm:$0xf]
      %v1349 = vld [vmem:[%s301 + $0x228] sm:$0xf]
      %v1350 = vld [vmem:[%s301 + $0x22c] sm:$0xf]
      %v1351 = vld [vmem:[%s301 + $0x230] sm:$0xf]
      %v1352 = vld [vmem:[%s301 + $0x234] sm:$0xf]
      %v1353 = vld [vmem:[%s301 + $0x238] sm:$0xf]
      %v1354 = vld [vmem:[%s301 + $0x23c] sm:$0xf]
      %v1499 = vunpack.c.l.b16 %v1211
      %v1500 = vunpack.c.l.b16 %v1212
      %v1501 = vunpack.c.l.b16 %v1213
      %v1502 = vunpack.c.l.b16 %v1214
      %v1503 = vunpack.c.l.b16 %v1215
      %v1504 = vunpack.c.l.b16 %v1216
      %v1505 = vunpack.c.l.b16 %v1217
      %v1506 = vunpack.c.l.b16 %v1218
      %v1507 = vunpack.c.l.b16 %v1219
      %v1508 = vunpack.c.l.b16 %v1220
      %v1509 = vunpack.c.l.b16 %v1221
      %v1510 = vunpack.c.l.b16 %v1222
      %v1511 = vunpack.c.l.b16 %v1223
      %v1512 = vunpack.c.l.b16 %v1224
      %v1513 = vunpack.c.l.b16 %v1225
      %v1514 = vunpack.c.l.b16 %v1226
      %v1515 = vunpack.c.l.b16 %v1227
      %v1516 = vunpack.c.l.b16 %v1228
      %v1517 = vunpack.c.l.b16 %v1229
      %v1518 = vunpack.c.l.b16 %v1230
      %v1519 = vunpack.c.l.b16 %v1231
      %v1520 = vunpack.c.l.b16 %v1232
      %v1521 = vunpack.c.l.b16 %v1233
      %v1522 = vunpack.c.l.b16 %v1234
      %v1523 = vunpack.c.l.b16 %v1235
      %v1524 = vunpack.c.l.b16 %v1236
      %v1525 = vunpack.c.l.b16 %v1237
      %v1526 = vunpack.c.l.b16 %v1238
      %v1527 = vunpack.c.l.b16 %v1239
      %v1528 = vunpack.c.l.b16 %v1240
      %v1529 = vunpack.c.l.b16 %v1241
      %v1530 = vunpack.c.l.b16 %v1242
      %v1531 = vunpack.c.l.b16 %v1243
      %v1532 = vunpack.c.l.b16 %v1244
      %v1533 = vunpack.c.l.b16 %v1245
      %v1534 = vunpack.c.l.b16 %v1246
      %v1535 = vunpack.c.l.b16 %v1247
      %v1536 = vunpack.c.l.b16 %v1248
      %v1537 = vunpack.c.l.b16 %v1249
      %v1538 = vunpack.c.l.b16 %v1250
      %v1539 = vunpack.c.l.b16 %v1251
      %v1540 = vunpack.c.l.b16 %v1252
      %v1541 = vunpack.c.l.b16 %v1253
      %v1542 = vunpack.c.l.b16 %v1254
      %v1543 = vunpack.c.l.b16 %v1255
      %v1544 = vunpack.c.l.b16 %v1256
      %v1545 = vunpack.c.l.b16 %v1257
      %v1546 = vunpack.c.l.b16 %v1258
      %v1547 = vunpack.c.l.b16 %v1259
      %v1548 = vunpack.c.l.b16 %v1260
      %v1549 = vunpack.c.l.b16 %v1261
      %v1550 = vunpack.c.l.b16 %v1262
      %v1551 = vunpack.c.l.b16 %v1263
      %v1552 = vunpack.c.l.b16 %v1264
      %v1553 = vunpack.c.l.b16 %v1265
      %v1554 = vunpack.c.l.b16 %v1266
      %v1555 = vunpack.c.l.b16 %v1267
      %v1556 = vunpack.c.l.b16 %v1268
      %v1557 = vunpack.c.l.b16 %v1269
      %v1558 = vunpack.c.l.b16 %v1270
      %v1559 = vunpack.c.l.b16 %v1271
      %v1560 = vunpack.c.l.b16 %v1272
      %v1561 = vunpack.c.l.b16 %v1273
      %v1562 = vunpack.c.l.b16 %v1274
      %v1563 = vunpack.c.l.b16 %v1275
      %v1564 = vunpack.c.l.b16 %v1276
      %v1565 = vunpack.c.l.b16 %v1277
      %v1566 = vunpack.c.l.b16 %v1278
      %v1567 = vunpack.c.l.b16 %v1279
      %v1568 = vunpack.c.l.b16 %v1280
      %v1569 = vunpack.c.l.b16 %v1281
      %v1570 = vunpack.c.l.b16 %v1282
      %v1571 = vunpack.c.l.b16 %v1283
      %v1572 = vunpack.c.l.b16 %v1284
      %v1573 = vunpack.c.l.b16 %v1285
      %v1574 = vunpack.c.l.b16 %v1286
      %v1575 = vunpack.c.l.b16 %v1287
      %v1576 = vunpack.c.l.b16 %v1288
      %v1577 = vunpack.c.l.b16 %v1289
      %v1578 = vunpack.c.l.b16 %v1290
      %v1579 = vunpack.c.l.b16 %v1291
      %v1580 = vunpack.c.l.b16 %v1292
      %v1581 = vunpack.c.l.b16 %v1293
      %v1582 = vunpack.c.l.b16 %v1294
      %v1583 = vunpack.c.l.b16 %v1295
      %v1584 = vunpack.c.l.b16 %v1296
      %v1585 = vunpack.c.l.b16 %v1297
      %v1586 = vunpack.c.l.b16 %v1298
      %v1587 = vunpack.c.l.b16 %v1299
      %v1588 = vunpack.c.l.b16 %v1300
      %v1589 = vunpack.c.l.b16 %v1301
      %v1590 = vunpack.c.l.b16 %v1302
      %v1591 = vunpack.c.l.b16 %v1303
      %v1592 = vunpack.c.l.b16 %v1304
      %v1593 = vunpack.c.l.b16 %v1305
      %v1594 = vunpack.c.l.b16 %v1306
      %v1595 = vunpack.c.l.b16 %v1307
      %v1596 = vunpack.c.l.b16 %v1308
      %v1597 = vunpack.c.l.b16 %v1309
      %v1598 = vunpack.c.l.b16 %v1310
      %v1599 = vunpack.c.l.b16 %v1311
      %v1600 = vunpack.c.l.b16 %v1312
      %v1601 = vunpack.c.l.b16 %v1313
      %v1602 = vunpack.c.l.b16 %v1314
      %v1603 = vunpack.c.l.b16 %v1315
      %v1604 = vunpack.c.l.b16 %v1316
      %v1605 = vunpack.c.l.b16 %v1317
      %v1606 = vunpack.c.l.b16 %v1318
      %v1607 = vunpack.c.l.b16 %v1319
      %v1608 = vunpack.c.l.b16 %v1320
      %v1609 = vunpack.c.l.b16 %v1321
      %v1610 = vunpack.c.l.b16 %v1322
      %v1611 = vunpack.c.l.b16 %v1323
      %v1612 = vunpack.c.l.b16 %v1324
      %v1613 = vunpack.c.l.b16 %v1325
      %v1614 = vunpack.c.l.b16 %v1326
      %v1615 = vunpack.c.l.b16 %v1327
      %v1616 = vunpack.c.l.b16 %v1328
      %v1617 = vunpack.c.l.b16 %v1329
      %v1618 = vunpack.c.l.b16 %v1330
      %v1619 = vunpack.c.l.b16 %v1331
      %v1620 = vunpack.c.l.b16 %v1332
      %v1621 = vunpack.c.l.b16 %v1333
      %v1622 = vunpack.c.l.b16 %v1334
      %v1623 = vunpack.c.l.b16 %v1335
      %v1624 = vunpack.c.l.b16 %v1336
      %v1625 = vunpack.c.l.b16 %v1337
      %v1626 = vunpack.c.l.b16 %v1338
      %v1627 = vunpack.c.l.b16 %v1339
      %v1628 = vunpack.c.l.b16 %v1340
      %v1629 = vunpack.c.l.b16 %v1341
      %v1630 = vunpack.c.l.b16 %v1342
      %v1631 = vunpack.c.l.b16 %v1343
      %v1632 = vunpack.c.l.b16 %v1344
      %v1633 = vunpack.c.l.b16 %v1345
      %v1634 = vunpack.c.l.b16 %v1346
      %v1635 = vunpack.c.l.b16 %v1347
      %v1636 = vunpack.c.l.b16 %v1348
      %v1637 = vunpack.c.l.b16 %v1349
      %v1638 = vunpack.c.l.b16 %v1350
      %v1639 = vunpack.c.l.b16 %v1351
      %v1640 = vunpack.c.l.b16 %v1352
      %v1641 = vunpack.c.l.b16 %v1353
      %v1642 = vunpack.c.l.b16 %v1354
      %v1643 = vpack.c.b16 %v1500, %v1499
      %v1644 = vpack.c.b16 %v1502, %v1501
      %v1645 = vpack.c.b16 %v1504, %v1503
      %v1646 = vpack.c.b16 %v1506, %v1505
      %v1647 = vpack.c.b16 %v1508, %v1507
      %v1648 = vpack.c.b16 %v1510, %v1509
      %v1649 = vpack.c.b16 %v1512, %v1511
      %v1650 = vpack.c.b16 %v1514, %v1513
      %v1651 = vpack.c.b16 %v1516, %v1515
      %v1652 = vpack.c.b16 %v1518, %v1517
      %v1653 = vpack.c.b16 %v1520, %v1519
      %v1654 = vpack.c.b16 %v1522, %v1521
      %v1655 = vpack.c.b16 %v1524, %v1523
      %v1656 = vpack.c.b16 %v1526, %v1525
      %v1657 = vpack.c.b16 %v1528, %v1527
      %v1658 = vpack.c.b16 %v1530, %v1529
      %v1659 = vpack.c.b16 %v1532, %v1531
      %v1660 = vpack.c.b16 %v1534, %v1533
      %v1661 = vpack.c.b16 %v1536, %v1535
      %v1662 = vpack.c.b16 %v1538, %v1537
      %v1663 = vpack.c.b16 %v1540, %v1539
      %v1664 = vpack.c.b16 %v1542, %v1541
      %v1665 = vpack.c.b16 %v1544, %v1543
      %v1666 = vpack.c.b16 %v1546, %v1545
      %v1667 = vpack.c.b16 %v1548, %v1547
      %v1668 = vpack.c.b16 %v1550, %v1549
      %v1669 = vpack.c.b16 %v1552, %v1551
      %v1670 = vpack.c.b16 %v1554, %v1553
      %v1671 = vpack.c.b16 %v1556, %v1555
      %v1672 = vpack.c.b16 %v1558, %v1557
      %v1673 = vpack.c.b16 %v1560, %v1559
      %v1674 = vpack.c.b16 %v1562, %v1561
      %v1675 = vpack.c.b16 %v1564, %v1563
      %v1676 = vpack.c.b16 %v1566, %v1565
      %v1677 = vpack.c.b16 %v1568, %v1567
      %v1678 = vpack.c.b16 %v1570, %v1569
      %v1679 = vpack.c.b16 %v1572, %v1571
      %v1680 = vpack.c.b16 %v1574, %v1573
      %v1681 = vpack.c.b16 %v1576, %v1575
      %v1682 = vpack.c.b16 %v1578, %v1577
      %v1683 = vpack.c.b16 %v1580, %v1579
      %v1684 = vpack.c.b16 %v1582, %v1581
      %v1685 = vpack.c.b16 %v1584, %v1583
      %v1686 = vpack.c.b16 %v1586, %v1585
      %v1687 = vpack.c.b16 %v1588, %v1587
      %v1688 = vpack.c.b16 %v1590, %v1589
      %v1689 = vpack.c.b16 %v1592, %v1591
      %v1690 = vpack.c.b16 %v1594, %v1593
      %v1691 = vpack.c.b16 %v1596, %v1595
      %v1692 = vpack.c.b16 %v1598, %v1597
      %v1693 = vpack.c.b16 %v1600, %v1599
      %v1694 = vpack.c.b16 %v1602, %v1601
      %v1695 = vpack.c.b16 %v1604, %v1603
      %v1696 = vpack.c.b16 %v1606, %v1605
      %v1697 = vpack.c.b16 %v1608, %v1607
      %v1698 = vpack.c.b16 %v1610, %v1609
      %v1699 = vpack.c.b16 %v1612, %v1611
      %v1700 = vpack.c.b16 %v1614, %v1613
      %v1701 = vpack.c.b16 %v1616, %v1615
      %v1702 = vpack.c.b16 %v1618, %v1617
      %v1703 = vpack.c.b16 %v1620, %v1619
      %v1704 = vpack.c.b16 %v1622, %v1621
      %v1705 = vpack.c.b16 %v1624, %v1623
      %v1706 = vpack.c.b16 %v1626, %v1625
      %v1707 = vpack.c.b16 %v1628, %v1627
      %v1708 = vpack.c.b16 %v1630, %v1629
      %v1709 = vpack.c.b16 %v1632, %v1631
      %v1710 = vpack.c.b16 %v1634, %v1633
      %v1711 = vpack.c.b16 %v1636, %v1635
      %v1712 = vpack.c.b16 %v1638, %v1637
      %v1713 = vpack.c.b16 %v1640, %v1639
      %v1714 = vpack.c.b16 %v1642, %v1641
      %1787 = vmatpush.bf16.msra.mxu0 %v1650
      %1788 = vmatpush.bf16.msra.mxu0 %v1649
      %1789 = vmatpush.bf16.msra.mxu0 %v1648
      %1790 = vmatpush.bf16.msra.mxu0 %v1647
      %1791 = vmatpush.bf16.msra.mxu0 %v1646
      %1792 = vmatpush.bf16.msra.mxu0 %v1645
      %1793 = vmatpush.bf16.msra.mxu0 %v1644
      %1794 = vmatpush.bf16.msra.mxu0 %v1643
      %1795 = vmatmul.bf16.gmra.mxu0 %v1027
      %v1796 = vpop.f32.mrf.mxu0
      %v1797 = vadd.f32 0.0, %v1796
      %v1798 = vpop.f32.mrf.mxu0
      %v1799 = vadd.f32 0.0, %v1798
      %1800 = vmatmul.bf16.gmra.mxu0 %v1028
      %v1801 = vpop.f32.mrf.mxu0
      %v1802 = vadd.f32 0.0, %v1801
      %v1803 = vpop.f32.mrf.mxu0
      %v1804 = vadd.f32 0.0, %v1803
      %1805 = vmatmul.bf16.gmra.mxu0 %v1029
      %v1806 = vpop.f32.mrf.mxu0
      %v1807 = vadd.f32 0.0, %v1806
      %v1808 = vpop.f32.mrf.mxu0
      %v1809 = vadd.f32 0.0, %v1808
      %1810 = vmatmul.bf16.gmra.mxu0 %v1030
      %v1811 = vpop.f32.mrf.mxu0
      %v1812 = vadd.f32 0.0, %v1811
      %v1813 = vpop.f32.mrf.mxu0
      %v1814 = vadd.f32 0.0, %v1813
      %1815 = vmatmul.bf16.gmra.mxu0 %v1031
      %v1816 = vpop.f32.mrf.mxu0
      %v1817 = vadd.f32 0.0, %v1816
      %v1818 = vpop.f32.mrf.mxu0
      %v1819 = vadd.f32 0.0, %v1818
      %1820 = vmatmul.bf16.gmra.mxu0 %v1032
      %v1821 = vpop.f32.mrf.mxu0
      %v1822 = vadd.f32 0.0, %v1821
      %v1823 = vpop.f32.mrf.mxu0
      %v1824 = vadd.f32 0.0, %v1823
      %1825 = vmatmul.bf16.gmra.mxu0 %v1033
      %v1826 = vpop.f32.mrf.mxu0
      %v1827 = vadd.f32 0.0, %v1826
      %v1828 = vpop.f32.mrf.mxu0
      %v1829 = vadd.f32 0.0, %v1828
      %1830 = vmatmul.bf16.gmra.mxu0 %v1034
      %v1831 = vpop.f32.mrf.mxu0
      %v1832 = vadd.f32 0.0, %v1831
      %v1833 = vpop.f32.mrf.mxu0
      %v1834 = vadd.f32 0.0, %v1833
      %1835 = vmatmul.bf16.gmra.mxu0 %v1035
      %v1836 = vpop.f32.mrf.mxu0
      %v1837 = vadd.f32 0.0, %v1836
      %v1838 = vpop.f32.mrf.mxu0
      %v1839 = vadd.f32 0.0, %v1838
      %1840 = vmatmul.bf16.gmra.mxu0 %v1036
      %v1841 = vpop.f32.mrf.mxu0
      %v1842 = vadd.f32 0.0, %v1841
      %v1843 = vpop.f32.mrf.mxu0
      %v1844 = vadd.f32 0.0, %v1843
      %1845 = vmatmul.bf16.gmra.mxu0 %v1037
      %v1846 = vpop.f32.mrf.mxu0
      %v1847 = vadd.f32 0.0, %v1846
      %v1848 = vpop.f32.mrf.mxu0
      %v1849 = vadd.f32 0.0, %v1848
      %1850 = vmatmul.bf16.gmra.mxu0 %v1038
      %v1851 = vpop.f32.mrf.mxu0
      %v1852 = vadd.f32 0.0, %v1851
      %v1853 = vpop.f32.mrf.mxu0
      %v1854 = vadd.f32 0.0, %v1853
      %1855 = vmatmul.bf16.gmra.mxu0 %v1039
      %v1856 = vpop.f32.mrf.mxu0
      %v1857 = vadd.f32 0.0, %v1856
      %v1858 = vpop.f32.mrf.mxu0
      %v1859 = vadd.f32 0.0, %v1858
      %1860 = vmatmul.bf16.gmra.mxu0 %v1040
      %v1861 = vpop.f32.mrf.mxu0
      %v1862 = vadd.f32 0.0, %v1861
      %v1863 = vpop.f32.mrf.mxu0
      %v1864 = vadd.f32 0.0, %v1863
      %1865 = vmatmul.bf16.gmra.mxu0 %v1041
      %v1866 = vpop.f32.mrf.mxu0
      %v1867 = vadd.f32 0.0, %v1866
      %v1868 = vpop.f32.mrf.mxu0
      %v1869 = vadd.f32 0.0, %v1868
      %1870 = vmatmul.bf16.gmra.mxu0 %v1042
      %v1871 = vpop.f32.mrf.mxu0
      %v1872 = vadd.f32 0.0, %v1871
      %v1873 = vpop.f32.mrf.mxu0
      %v1874 = vadd.f32 0.0, %v1873
      %1875 = vdwg.mxu0
      %1876 = vmatpush.bf16.msra.mxu0 %v1658
      %1877 = vmatpush.bf16.msra.mxu0 %v1657
      %1878 = vmatpush.bf16.msra.mxu0 %v1656
      %1879 = vmatpush.bf16.msra.mxu0 %v1655
      %1880 = vmatpush.bf16.msra.mxu0 %v1654
      %1881 = vmatpush.bf16.msra.mxu0 %v1653
      %1882 = vmatpush.bf16.msra.mxu0 %v1652
      %1883 = vmatpush.bf16.msra.mxu0 %v1651
      %1884 = vmatmul.bf16.gmra.mxu0 %v1091
      %v1885 = vpop.f32.mrf.mxu0
      %v1886 = vadd.f32 %v1797, %v1885
      %v1887 = vpop.f32.mrf.mxu0
      %v1888 = vadd.f32 %v1799, %v1887
      %1889 = vmatmul.bf16.gmra.mxu0 %v1092
      %v1890 = vpop.f32.mrf.mxu0
      %v1891 = vadd.f32 %v1802, %v1890
      %v1892 = vpop.f32.mrf.mxu0
      %v1893 = vadd.f32 %v1804, %v1892
      %1894 = vmatmul.bf16.gmra.mxu0 %v1093
      %v1895 = vpop.f32.mrf.mxu0
      %v1896 = vadd.f32 %v1807, %v1895
      %v1897 = vpop.f32.mrf.mxu0
      %v1898 = vadd.f32 %v1809, %v1897
      %1899 = vmatmul.bf16.gmra.mxu0 %v1094
      %v1900 = vpop.f32.mrf.mxu0
      %v1901 = vadd.f32 %v1812, %v1900
      %v1902 = vpop.f32.mrf.mxu0
      %v1903 = vadd.f32 %v1814, %v1902
      %1904 = vmatmul.bf16.gmra.mxu0 %v1095
      %v1905 = vpop.f32.mrf.mxu0
      %v1906 = vadd.f32 %v1817, %v1905
      %v1907 = vpop.f32.mrf.mxu0
      %v1908 = vadd.f32 %v1819, %v1907
      %1909 = vmatmul.bf16.gmra.mxu0 %v1096
      %v1910 = vpop.f32.mrf.mxu0
      %v1911 = vadd.f32 %v1822, %v1910
      %v1912 = vpop.f32.mrf.mxu0
      %v1913 = vadd.f32 %v1824, %v1912
      %1914 = vmatmul.bf16.gmra.mxu0 %v1097
      %v1915 = vpop.f32.mrf.mxu0
      %v1916 = vadd.f32 %v1827, %v1915
      %v1917 = vpop.f32.mrf.mxu0
      %v1918 = vadd.f32 %v1829, %v1917
      %1919 = vmatmul.bf16.gmra.mxu0 %v1098
      %v1920 = vpop.f32.mrf.mxu0
      %v1921 = vadd.f32 %v1832, %v1920
      %v1922 = vpop.f32.mrf.mxu0
      %v1923 = vadd.f32 %v1834, %v1922
      %1924 = vmatmul.bf16.gmra.mxu0 %v1099
      %v1925 = vpop.f32.mrf.mxu0
      %v1926 = vadd.f32 %v1837, %v1925
      %v1927 = vpop.f32.mrf.mxu0
      %v1928 = vadd.f32 %v1839, %v1927
      %1929 = vmatmul.bf16.gmra.mxu0 %v1100
      %v1930 = vpop.f32.mrf.mxu0
      %v1931 = vadd.f32 %v1842, %v1930
      %v1932 = vpop.f32.mrf.mxu0
      %v1933 = vadd.f32 %v1844, %v1932
      %1934 = vmatmul.bf16.gmra.mxu0 %v1101
      %v1935 = vpop.f32.mrf.mxu0
      %v1936 = vadd.f32 %v1847, %v1935
      %v1937 = vpop.f32.mrf.mxu0
      %v1938 = vadd.f32 %v1849, %v1937
      %1939 = vmatmul.bf16.gmra.mxu0 %v1102
      %v1940 = vpop.f32.mrf.mxu0
      %v1941 = vadd.f32 %v1852, %v1940
      %v1942 = vpop.f32.mrf.mxu0
      %v1943 = vadd.f32 %v1854, %v1942
      %1944 = vmatmul.bf16.gmra.mxu0 %v1103
      %v1945 = vpop.f32.mrf.mxu0
      %v1946 = vadd.f32 %v1857, %v1945
      %v1947 = vpop.f32.mrf.mxu0
      %v1948 = vadd.f32 %v1859, %v1947
      %1949 = vmatmul.bf16.gmra.mxu0 %v1104
      %v1950 = vpop.f32.mrf.mxu0
      %v1951 = vadd.f32 %v1862, %v1950
      %v1952 = vpop.f32.mrf.mxu0
      %v1953 = vadd.f32 %v1864, %v1952
      %1954 = vmatmul.bf16.gmra.mxu0 %v1105
      %v1955 = vpop.f32.mrf.mxu0
      %v1956 = vadd.f32 %v1867, %v1955
      %v1957 = vpop.f32.mrf.mxu0
      %v1958 = vadd.f32 %v1869, %v1957
      %1959 = vmatmul.bf16.gmra.mxu0 %v1106
      %v1960 = vpop.f32.mrf.mxu0
      %v1961 = vadd.f32 %v1872, %v1960
      %v1962 = vpop.f32.mrf.mxu0
      %v1963 = vadd.f32 %v1874, %v1962
      %1964 = vdwg.mxu0
      %1965 = vmatpush.bf16.msra.mxu0 %v1666
      %1966 = vmatpush.bf16.msra.mxu0 %v1665
      %1967 = vmatpush.bf16.msra.mxu0 %v1664
      %1968 = vmatpush.bf16.msra.mxu0 %v1663
      %1969 = vmatpush.bf16.msra.mxu0 %v1662
      %1970 = vmatpush.bf16.msra.mxu0 %v1661
      %1971 = vmatpush.bf16.msra.mxu0 %v1660
      %1972 = vmatpush.bf16.msra.mxu0 %v1659
      %1973 = vmatmul.bf16.gmra.mxu0 %v1155
      %v1974 = vpop.f32.mrf.mxu0
      %v1975 = vadd.f32 %v1886, %v1974
      %v1976 = vpop.f32.mrf.mxu0
      %v1977 = vadd.f32 %v1888, %v1976
      %1978 = vmatmul.bf16.gmra.mxu0 %v1156
      %v1979 = vpop.f32.mrf.mxu0
      %v1980 = vadd.f32 %v1891, %v1979
      %v1981 = vpop.f32.mrf.mxu0
      %v1982 = vadd.f32 %v1893, %v1981
      %1983 = vmatmul.bf16.gmra.mxu0 %v1157
      %v1984 = vpop.f32.mrf.mxu0
      %v1985 = vadd.f32 %v1896, %v1984
      %v1986 = vpop.f32.mrf.mxu0
      %v1987 = vadd.f32 %v1898, %v1986
      %1988 = vmatmul.bf16.gmra.mxu0 %v1158
      %v1989 = vpop.f32.mrf.mxu0
      %v1990 = vadd.f32 %v1901, %v1989
      %v1991 = vpop.f32.mrf.mxu0
      %v1992 = vadd.f32 %v1903, %v1991
      %1993 = vmatmul.bf16.gmra.mxu0 %v1159
      %v1994 = vpop.f32.mrf.mxu0
      %v1995 = vadd.f32 %v1906, %v1994
      %v1996 = vpop.f32.mrf.mxu0
      %v1997 = vadd.f32 %v1908, %v1996
      %1998 = vmatmul.bf16.gmra.mxu0 %v1160
      %v1999 = vpop.f32.mrf.mxu0
      %v2000 = vadd.f32 %v1911, %v1999
      %v2001 = vpop.f32.mrf.mxu0
      %v2002 = vadd.f32 %v1913, %v2001
      %2003 = vmatmul.bf16.gmra.mxu0 %v1161
      %v2004 = vpop.f32.mrf.mxu0
      %v2005 = vadd.f32 %v1916, %v2004
      %v2006 = vpop.f32.mrf.mxu0
      %v2007 = vadd.f32 %v1918, %v2006
      %2008 = vmatmul.bf16.gmra.mxu0 %v1162
      %v2009 = vpop.f32.mrf.mxu0
      %v2010 = vadd.f32 %v1921, %v2009
      %v2011 = vpop.f32.mrf.mxu0
      %v2012 = vadd.f32 %v1923, %v2011
      %2013 = vmatmul.bf16.gmra.mxu0 %v1163
      %v2014 = vpop.f32.mrf.mxu0
      %v2015 = vadd.f32 %v1926, %v2014
      %v2016 = vpop.f32.mrf.mxu0
      %v2017 = vadd.f32 %v1928, %v2016
      %2018 = vmatmul.bf16.gmra.mxu0 %v1164
      %v2019 = vpop.f32.mrf.mxu0
      %v2020 = vadd.f32 %v1931, %v2019
      %v2021 = vpop.f32.mrf.mxu0
      %v2022 = vadd.f32 %v1933, %v2021
      %2023 = vmatmul.bf16.gmra.mxu0 %v1165
      %v2024 = vpop.f32.mrf.mxu0
      %v2025 = vadd.f32 %v1936, %v2024
      %v2026 = vpop.f32.mrf.mxu0
      %v2027 = vadd.f32 %v1938, %v2026
      %2028 = vmatmul.bf16.gmra.mxu0 %v1166
      %v2029 = vpop.f32.mrf.mxu0
      %v2030 = vadd.f32 %v1941, %v2029
      %v2031 = vpop.f32.mrf.mxu0
      %v2032 = vadd.f32 %v1943, %v2031
      %2033 = vmatmul.bf16.gmra.mxu0 %v1167
      %v2034 = vpop.f32.mrf.mxu0
      %v2035 = vadd.f32 %v1946, %v2034
      %v2036 = vpop.f32.mrf.mxu0
      %v2037 = vadd.f32 %v1948, %v2036
      %2038 = vmatmul.bf16.gmra.mxu0 %v1168
      %v2039 = vpop.f32.mrf.mxu0
      %v2040 = vadd.f32 %v1951, %v2039
      %v2041 = vpop.f32.mrf.mxu0
      %v2042 = vadd.f32 %v1953, %v2041
      %2043 = vmatmul.bf16.gmra.mxu0 %v1169
      %v2044 = vpop.f32.mrf.mxu0
      %v2045 = vadd.f32 %v1956, %v2044
      %v2046 = vpop.f32.mrf.mxu0
      %v2047 = vadd.f32 %v1958, %v2046
      %2048 = vmatmul.bf16.gmra.mxu0 %v1170
      %v2049 = vpop.f32.mrf.mxu0
      %v2050 = vadd.f32 %v1961, %v2049
      %v2051 = vpop.f32.mrf.mxu0
      %v2052 = vadd.f32 %v1963, %v2051
      %2053 = vdwg.mxu0
      %2054 = vmatpush.bf16.msra.mxu0 %v1674
      %2055 = vmatpush.bf16.msra.mxu0 %v1673
      %2056 = vmatpush.bf16.msra.mxu0 %v1672
      %2057 = vmatpush.bf16.msra.mxu0 %v1671
      %2058 = vmatpush.bf16.msra.mxu0 %v1670
      %2059 = vmatpush.bf16.msra.mxu0 %v1669
      %2060 = vmatpush.bf16.msra.mxu0 %v1668
      %2061 = vmatpush.bf16.msra.mxu0 %v1667
      %2062 = vmatmul.bf16.gmra.mxu0 %v1028
      %v2063 = vpop.f32.mrf.mxu0
      %v2064 = vadd.f32 %v1975, %v2063
      %v2065 = vpop.f32.mrf.mxu0
      %v2066 = vadd.f32 %v1977, %v2065
      %2067 = vmatmul.bf16.gmra.mxu0 %v1029
      %v2068 = vpop.f32.mrf.mxu0
      %v2069 = vadd.f32 %v1980, %v2068
      %v2070 = vpop.f32.mrf.mxu0
      %v2071 = vadd.f32 %v1982, %v2070
      %2072 = vmatmul.bf16.gmra.mxu0 %v1030
      %v2073 = vpop.f32.mrf.mxu0
      %v2074 = vadd.f32 %v1985, %v2073
      %v2075 = vpop.f32.mrf.mxu0
      %v2076 = vadd.f32 %v1987, %v2075
      %2077 = vmatmul.bf16.gmra.mxu0 %v1031
      %v2078 = vpop.f32.mrf.mxu0
      %v2079 = vadd.f32 %v1990, %v2078
      %v2080 = vpop.f32.mrf.mxu0
      %v2081 = vadd.f32 %v1992, %v2080
      %2082 = vmatmul.bf16.gmra.mxu0 %v1032
      %v2083 = vpop.f32.mrf.mxu0
      %v2084 = vadd.f32 %v1995, %v2083
      %v2085 = vpop.f32.mrf.mxu0
      %v2086 = vadd.f32 %v1997, %v2085
      %2087 = vmatmul.bf16.gmra.mxu0 %v1033
      %v2088 = vpop.f32.mrf.mxu0
      %v2089 = vadd.f32 %v2000, %v2088
      %v2090 = vpop.f32.mrf.mxu0
      %v2091 = vadd.f32 %v2002, %v2090
      %2092 = vmatmul.bf16.gmra.mxu0 %v1034
      %v2093 = vpop.f32.mrf.mxu0
      %v2094 = vadd.f32 %v2005, %v2093
      %v2095 = vpop.f32.mrf.mxu0
      %v2096 = vadd.f32 %v2007, %v2095
      %2097 = vmatmul.bf16.gmra.mxu0 %v1035
      %v2098 = vpop.f32.mrf.mxu0
      %v2099 = vadd.f32 %v2010, %v2098
      %v2100 = vpop.f32.mrf.mxu0
      %v2101 = vadd.f32 %v2012, %v2100
      %2102 = vmatmul.bf16.gmra.mxu0 %v1036
      %v2103 = vpop.f32.mrf.mxu0
      %v2104 = vadd.f32 %v2015, %v2103
      %v2105 = vpop.f32.mrf.mxu0
      %v2106 = vadd.f32 %v2017, %v2105
      %2107 = vmatmul.bf16.gmra.mxu0 %v1037
      %v2108 = vpop.f32.mrf.mxu0
      %v2109 = vadd.f32 %v2020, %v2108
      %v2110 = vpop.f32.mrf.mxu0
      %v2111 = vadd.f32 %v2022, %v2110
      %2112 = vmatmul.bf16.gmra.mxu0 %v1038
      %v2113 = vpop.f32.mrf.mxu0
      %v2114 = vadd.f32 %v2025, %v2113
      %v2115 = vpop.f32.mrf.mxu0
      %v2116 = vadd.f32 %v2027, %v2115
      %2117 = vmatmul.bf16.gmra.mxu0 %v1039
      %v2118 = vpop.f32.mrf.mxu0
      %v2119 = vadd.f32 %v2030, %v2118
      %v2120 = vpop.f32.mrf.mxu0
      %v2121 = vadd.f32 %v2032, %v2120
      %2122 = vmatmul.bf16.gmra.mxu0 %v1040
      %v2123 = vpop.f32.mrf.mxu0
      %v2124 = vadd.f32 %v2035, %v2123
      %v2125 = vpop.f32.mrf.mxu0
      %v2126 = vadd.f32 %v2037, %v2125
      %2127 = vmatmul.bf16.gmra.mxu0 %v1041
      %v2128 = vpop.f32.mrf.mxu0
      %v2129 = vadd.f32 %v2040, %v2128
      %v2130 = vpop.f32.mrf.mxu0
      %v2131 = vadd.f32 %v2042, %v2130
      %2132 = vmatmul.bf16.gmra.mxu0 %v1042
      %v2133 = vpop.f32.mrf.mxu0
      %v2134 = vadd.f32 %v2045, %v2133
      %v2135 = vpop.f32.mrf.mxu0
      %v2136 = vadd.f32 %v2047, %v2135
      %2137 = vmatmul.bf16.gmra.mxu0 %v1189
      %v2138 = vpop.f32.mrf.mxu0
      %v2139 = vadd.f32 %v2050, %v2138
      %v2140 = vpop.f32.mrf.mxu0
      %v2141 = vadd.f32 %v2052, %v2140
      %2142 = vdwg.mxu0
      %2143 = vmatpush.bf16.msra.mxu0 %v1682
      %2144 = vmatpush.bf16.msra.mxu0 %v1681
      %2145 = vmatpush.bf16.msra.mxu0 %v1680
      %2146 = vmatpush.bf16.msra.mxu0 %v1679
      %2147 = vmatpush.bf16.msra.mxu0 %v1678
      %2148 = vmatpush.bf16.msra.mxu0 %v1677
      %2149 = vmatpush.bf16.msra.mxu0 %v1676
      %2150 = vmatpush.bf16.msra.mxu0 %v1675
      %2151 = vmatmul.bf16.gmra.mxu0 %v1092
      %v2152 = vpop.f32.mrf.mxu0
      %v2153 = vadd.f32 %v2064, %v2152
      %v2154 = vpop.f32.mrf.mxu0
      %v2155 = vadd.f32 %v2066, %v2154
      %2156 = vmatmul.bf16.gmra.mxu0 %v1093
      %v2157 = vpop.f32.mrf.mxu0
      %v2158 = vadd.f32 %v2069, %v2157
      %v2159 = vpop.f32.mrf.mxu0
      %v2160 = vadd.f32 %v2071, %v2159
      %2161 = vmatmul.bf16.gmra.mxu0 %v1094
      %v2162 = vpop.f32.mrf.mxu0
      %v2163 = vadd.f32 %v2074, %v2162
      %v2164 = vpop.f32.mrf.mxu0
      %v2165 = vadd.f32 %v2076, %v2164
      %2166 = vmatmul.bf16.gmra.mxu0 %v1095
      %v2167 = vpop.f32.mrf.mxu0
      %v2168 = vadd.f32 %v2079, %v2167
      %v2169 = vpop.f32.mrf.mxu0
      %v2170 = vadd.f32 %v2081, %v2169
      %2171 = vmatmul.bf16.gmra.mxu0 %v1096
      %v2172 = vpop.f32.mrf.mxu0
      %v2173 = vadd.f32 %v2084, %v2172
      %v2174 = vpop.f32.mrf.mxu0
      %v2175 = vadd.f32 %v2086, %v2174
      %2176 = vmatmul.bf16.gmra.mxu0 %v1097
      %v2177 = vpop.f32.mrf.mxu0
      %v2178 = vadd.f32 %v2089, %v2177
      %v2179 = vpop.f32.mrf.mxu0
      %v2180 = vadd.f32 %v2091, %v2179
      %2181 = vmatmul.bf16.gmra.mxu0 %v1098
      %v2182 = vpop.f32.mrf.mxu0
      %v2183 = vadd.f32 %v2094, %v2182
      %v2184 = vpop.f32.mrf.mxu0
      %v2185 = vadd.f32 %v2096, %v2184
      %2186 = vmatmul.bf16.gmra.mxu0 %v1099
      %v2187 = vpop.f32.mrf.mxu0
      %v2188 = vadd.f32 %v2099, %v2187
      %v2189 = vpop.f32.mrf.mxu0
      %v2190 = vadd.f32 %v2101, %v2189
      %2191 = vmatmul.bf16.gmra.mxu0 %v1100
      %v2192 = vpop.f32.mrf.mxu0
      %v2193 = vadd.f32 %v2104, %v2192
      %v2194 = vpop.f32.mrf.mxu0
      %v2195 = vadd.f32 %v2106, %v2194
      %2196 = vmatmul.bf16.gmra.mxu0 %v1101
      %v2197 = vpop.f32.mrf.mxu0
      %v2198 = vadd.f32 %v2109, %v2197
      %v2199 = vpop.f32.mrf.mxu0
      %v2200 = vadd.f32 %v2111, %v2199
      %2201 = vmatmul.bf16.gmra.mxu0 %v1102
      %v2202 = vpop.f32.mrf.mxu0
      %v2203 = vadd.f32 %v2114, %v2202
      %v2204 = vpop.f32.mrf.mxu0
      %v2205 = vadd.f32 %v2116, %v2204
      %2206 = vmatmul.bf16.gmra.mxu0 %v1103
      %v2207 = vpop.f32.mrf.mxu0
      %v2208 = vadd.f32 %v2119, %v2207
      %v2209 = vpop.f32.mrf.mxu0
      %v2210 = vadd.f32 %v2121, %v2209
      %2211 = vmatmul.bf16.gmra.mxu0 %v1104
      %v2212 = vpop.f32.mrf.mxu0
      %v2213 = vadd.f32 %v2124, %v2212
      %v2214 = vpop.f32.mrf.mxu0
      %v2215 = vadd.f32 %v2126, %v2214
      %2216 = vmatmul.bf16.gmra.mxu0 %v1105
      %v2217 = vpop.f32.mrf.mxu0
      %v2218 = vadd.f32 %v2129, %v2217
      %v2219 = vpop.f32.mrf.mxu0
      %v2220 = vadd.f32 %v2131, %v2219
      %2221 = vmatmul.bf16.gmra.mxu0 %v1106
      %v2222 = vpop.f32.mrf.mxu0
      %v2223 = vadd.f32 %v2134, %v2222
      %v2224 = vpop.f32.mrf.mxu0
      %v2225 = vadd.f32 %v2136, %v2224
      %2226 = vmatmul.bf16.gmra.mxu0 %v1193
      %v2227 = vpop.f32.mrf.mxu0
      %v2228 = vadd.f32 %v2139, %v2227
      %v2229 = vpop.f32.mrf.mxu0
      %v2230 = vadd.f32 %v2141, %v2229
      %2231 = vdwg.mxu0
      %2232 = vmatpush.bf16.msra.mxu0 %v1690
      %2233 = vmatpush.bf16.msra.mxu0 %v1689
      %2234 = vmatpush.bf16.msra.mxu0 %v1688
      %2235 = vmatpush.bf16.msra.mxu0 %v1687
      %2236 = vmatpush.bf16.msra.mxu0 %v1686
      %2237 = vmatpush.bf16.msra.mxu0 %v1685
      %2238 = vmatpush.bf16.msra.mxu0 %v1684
      %2239 = vmatpush.bf16.msra.mxu0 %v1683
      %2240 = vmatmul.bf16.gmra.mxu0 %v1156
      %v2241 = vpop.f32.mrf.mxu0
      %v2242 = vadd.f32 %v2153, %v2241
      %v2243 = vpop.f32.mrf.mxu0
      %v2244 = vadd.f32 %v2155, %v2243
      %2245 = vmatmul.bf16.gmra.mxu0 %v1157
      %v2246 = vpop.f32.mrf.mxu0
      %v2247 = vadd.f32 %v2158, %v2246
      %v2248 = vpop.f32.mrf.mxu0
      %v2249 = vadd.f32 %v2160, %v2248
      %2250 = vmatmul.bf16.gmra.mxu0 %v1158
      %v2251 = vpop.f32.mrf.mxu0
      %v2252 = vadd.f32 %v2163, %v2251
      %v2253 = vpop.f32.mrf.mxu0
      %v2254 = vadd.f32 %v2165, %v2253
      %2255 = vmatmul.bf16.gmra.mxu0 %v1159
      %v2256 = vpop.f32.mrf.mxu0
      %v2257 = vadd.f32 %v2168, %v2256
      %v2258 = vpop.f32.mrf.mxu0
      %v2259 = vadd.f32 %v2170, %v2258
      %2260 = vmatmul.bf16.gmra.mxu0 %v1160
      %v2261 = vpop.f32.mrf.mxu0
      %v2262 = vadd.f32 %v2173, %v2261
      %v2263 = vpop.f32.mrf.mxu0
      %v2264 = vadd.f32 %v2175, %v2263
      %2265 = vmatmul.bf16.gmra.mxu0 %v1161
      %v2266 = vpop.f32.mrf.mxu0
      %v2267 = vadd.f32 %v2178, %v2266
      %v2268 = vpop.f32.mrf.mxu0
      %v2269 = vadd.f32 %v2180, %v2268
      %2270 = vmatmul.bf16.gmra.mxu0 %v1162
      %v2271 = vpop.f32.mrf.mxu0
      %v2272 = vadd.f32 %v2183, %v2271
      %v2273 = vpop.f32.mrf.mxu0
      %v2274 = vadd.f32 %v2185, %v2273
      %2275 = vmatmul.bf16.gmra.mxu0 %v1163
      %v2276 = vpop.f32.mrf.mxu0
      %v2277 = vadd.f32 %v2188, %v2276
      %v2278 = vpop.f32.mrf.mxu0
      %v2279 = vadd.f32 %v2190, %v2278
      %2280 = vmatmul.bf16.gmra.mxu0 %v1164
      %v2281 = vpop.f32.mrf.mxu0
      %v2282 = vadd.f32 %v2193, %v2281
      %v2283 = vpop.f32.mrf.mxu0
      %v2284 = vadd.f32 %v2195, %v2283
      %2285 = vmatmul.bf16.gmra.mxu0 %v1165
      %v2286 = vpop.f32.mrf.mxu0
      %v2287 = vadd.f32 %v2198, %v2286
      %v2288 = vpop.f32.mrf.mxu0
      %v2289 = vadd.f32 %v2200, %v2288
      %2290 = vmatmul.bf16.gmra.mxu0 %v1166
      %v2291 = vpop.f32.mrf.mxu0
      %v2292 = vadd.f32 %v2203, %v2291
      %v2293 = vpop.f32.mrf.mxu0
      %v2294 = vadd.f32 %v2205, %v2293
      %2295 = vmatmul.bf16.gmra.mxu0 %v1167
      %v2296 = vpop.f32.mrf.mxu0
      %v2297 = vadd.f32 %v2208, %v2296
      %v2298 = vpop.f32.mrf.mxu0
      %v2299 = vadd.f32 %v2210, %v2298
      %2300 = vmatmul.bf16.gmra.mxu0 %v1168
      %v2301 = vpop.f32.mrf.mxu0
      %v2302 = vadd.f32 %v2213, %v2301
      %v2303 = vpop.f32.mrf.mxu0
      %v2304 = vadd.f32 %v2215, %v2303
      %2305 = vmatmul.bf16.gmra.mxu0 %v1169
      %v2306 = vpop.f32.mrf.mxu0
      %v2307 = vadd.f32 %v2218, %v2306
      %v2308 = vpop.f32.mrf.mxu0
      %v2309 = vadd.f32 %v2220, %v2308
      %2310 = vmatmul.bf16.gmra.mxu0 %v1170
      %v2311 = vpop.f32.mrf.mxu0
      %v2312 = vadd.f32 %v2223, %v2311
      %v2313 = vpop.f32.mrf.mxu0
      %v2314 = vadd.f32 %v2225, %v2313
      %2315 = vmatmul.bf16.gmra.mxu0 %v1197
      %v2316 = vpop.f32.mrf.mxu0
      %v2317 = vadd.f32 %v2228, %v2316
      %v2318 = vpop.f32.mrf.mxu0
      %v2319 = vadd.f32 %v2230, %v2318
      %2320 = vdwg.mxu0
      %2321 = vmatpush.bf16.msra.mxu0 %v1698
      %2322 = vmatpush.bf16.msra.mxu0 %v1697
      %2323 = vmatpush.bf16.msra.mxu0 %v1696
      %2324 = vmatpush.bf16.msra.mxu0 %v1695
      %2325 = vmatpush.bf16.msra.mxu0 %v1694
      %2326 = vmatpush.bf16.msra.mxu0 %v1693
      %2327 = vmatpush.bf16.msra.mxu0 %v1692
      %2328 = vmatpush.bf16.msra.mxu0 %v1691
      %2329 = vmatmul.bf16.gmra.mxu0 %v1029
      %v2330 = vpop.f32.mrf.mxu0
      %v2331 = vadd.f32 %v2242, %v2330
      %v2332 = vpop.f32.mrf.mxu0
      %v2333 = vadd.f32 %v2244, %v2332
      %2334 = vmatmul.bf16.gmra.mxu0 %v1030
      %v2335 = vpop.f32.mrf.mxu0
      %v2336 = vadd.f32 %v2247, %v2335
      %v2337 = vpop.f32.mrf.mxu0
      %v2338 = vadd.f32 %v2249, %v2337
      %2339 = vmatmul.bf16.gmra.mxu0 %v1031
      %v2340 = vpop.f32.mrf.mxu0
      %v2341 = vadd.f32 %v2252, %v2340
      %v2342 = vpop.f32.mrf.mxu0
      %v2343 = vadd.f32 %v2254, %v2342
      %2344 = vmatmul.bf16.gmra.mxu0 %v1032
      %v2345 = vpop.f32.mrf.mxu0
      %v2346 = vadd.f32 %v2257, %v2345
      %v2347 = vpop.f32.mrf.mxu0
      %v2348 = vadd.f32 %v2259, %v2347
      %2349 = vmatmul.bf16.gmra.mxu0 %v1033
      %v2350 = vpop.f32.mrf.mxu0
      %v2351 = vadd.f32 %v2262, %v2350
      %v2352 = vpop.f32.mrf.mxu0
      %v2353 = vadd.f32 %v2264, %v2352
      %2354 = vmatmul.bf16.gmra.mxu0 %v1034
      %v2355 = vpop.f32.mrf.mxu0
      %v2356 = vadd.f32 %v2267, %v2355
      %v2357 = vpop.f32.mrf.mxu0
      %v2358 = vadd.f32 %v2269, %v2357
      %2359 = vmatmul.bf16.gmra.mxu0 %v1035
      %v2360 = vpop.f32.mrf.mxu0
      %v2361 = vadd.f32 %v2272, %v2360
      %v2362 = vpop.f32.mrf.mxu0
      %v2363 = vadd.f32 %v2274, %v2362
      %2364 = vmatmul.bf16.gmra.mxu0 %v1036
      %v2365 = vpop.f32.mrf.mxu0
      %v2366 = vadd.f32 %v2277, %v2365
      %v2367 = vpop.f32.mrf.mxu0
      %v2368 = vadd.f32 %v2279, %v2367
      %2369 = vmatmul.bf16.gmra.mxu0 %v1037
      %v2370 = vpop.f32.mrf.mxu0
      %v2371 = vadd.f32 %v2282, %v2370
      %v2372 = vpop.f32.mrf.mxu0
      %v2373 = vadd.f32 %v2284, %v2372
      %2374 = vmatmul.bf16.gmra.mxu0 %v1038
      %v2375 = vpop.f32.mrf.mxu0
      %v2376 = vadd.f32 %v2287, %v2375
      %v2377 = vpop.f32.mrf.mxu0
      %v2378 = vadd.f32 %v2289, %v2377
      %2379 = vmatmul.bf16.gmra.mxu0 %v1039
      %v2380 = vpop.f32.mrf.mxu0
      %v2381 = vadd.f32 %v2292, %v2380
      %v2382 = vpop.f32.mrf.mxu0
      %v2383 = vadd.f32 %v2294, %v2382
      %2384 = vmatmul.bf16.gmra.mxu0 %v1040
      %v2385 = vpop.f32.mrf.mxu0
      %v2386 = vadd.f32 %v2297, %v2385
      %v2387 = vpop.f32.mrf.mxu0
      %v2388 = vadd.f32 %v2299, %v2387
      %2389 = vmatmul.bf16.gmra.mxu0 %v1041
      %v2390 = vpop.f32.mrf.mxu0
      %v2391 = vadd.f32 %v2302, %v2390
      %v2392 = vpop.f32.mrf.mxu0
      %v2393 = vadd.f32 %v2304, %v2392
      %2394 = vmatmul.bf16.gmra.mxu0 %v1042
      %v2395 = vpop.f32.mrf.mxu0
      %v2396 = vadd.f32 %v2307, %v2395
      %v2397 = vpop.f32.mrf.mxu0
      %v2398 = vadd.f32 %v2309, %v2397
      %2399 = vmatmul.bf16.gmra.mxu0 %v1189
      %v2400 = vpop.f32.mrf.mxu0
      %v2401 = vadd.f32 %v2312, %v2400
      %v2402 = vpop.f32.mrf.mxu0
      %v2403 = vadd.f32 %v2314, %v2402
      %2404 = vmatmul.bf16.gmra.mxu0 %v1201
      %v2405 = vpop.f32.mrf.mxu0
      %v2406 = vadd.f32 %v2317, %v2405
      %v2407 = vpop.f32.mrf.mxu0
      %v2408 = vadd.f32 %v2319, %v2407
      %2409 = vdwg.mxu0
      %2410 = vmatpush.bf16.msra.mxu0 %v1706
      %2411 = vmatpush.bf16.msra.mxu0 %v1705
      %2412 = vmatpush.bf16.msra.mxu0 %v1704
      %2413 = vmatpush.bf16.msra.mxu0 %v1703
      %2414 = vmatpush.bf16.msra.mxu0 %v1702
      %2415 = vmatpush.bf16.msra.mxu0 %v1701
      %2416 = vmatpush.bf16.msra.mxu0 %v1700
      %2417 = vmatpush.bf16.msra.mxu0 %v1699
      %2418 = vmatmul.bf16.gmra.mxu0 %v1093
      %v2419 = vpop.f32.mrf.mxu0
      %v2420 = vadd.f32 %v2331, %v2419
      %v2421 = vpop.f32.mrf.mxu0
      %v2422 = vadd.f32 %v2333, %v2421
      %2423 = vmatmul.bf16.gmra.mxu0 %v1094
      %v2424 = vpop.f32.mrf.mxu0
      %v2425 = vadd.f32 %v2336, %v2424
      %v2426 = vpop.f32.mrf.mxu0
      %v2427 = vadd.f32 %v2338, %v2426
      %2428 = vmatmul.bf16.gmra.mxu0 %v1095
      %v2429 = vpop.f32.mrf.mxu0
      %v2430 = vadd.f32 %v2341, %v2429
      %v2431 = vpop.f32.mrf.mxu0
      %v2432 = vadd.f32 %v2343, %v2431
      %2433 = vmatmul.bf16.gmra.mxu0 %v1096
      %v2434 = vpop.f32.mrf.mxu0
      %v2435 = vadd.f32 %v2346, %v2434
      %v2436 = vpop.f32.mrf.mxu0
      %v2437 = vadd.f32 %v2348, %v2436
      %2438 = vmatmul.bf16.gmra.mxu0 %v1097
      %v2439 = vpop.f32.mrf.mxu0
      %v2440 = vadd.f32 %v2351, %v2439
      %v2441 = vpop.f32.mrf.mxu0
      %v2442 = vadd.f32 %v2353, %v2441
      %2443 = vmatmul.bf16.gmra.mxu0 %v1098
      %v2444 = vpop.f32.mrf.mxu0
      %v2445 = vadd.f32 %v2356, %v2444
      %v2446 = vpop.f32.mrf.mxu0
      %v2447 = vadd.f32 %v2358, %v2446
      %2448 = vmatmul.bf16.gmra.mxu0 %v1099
      %v2449 = vpop.f32.mrf.mxu0
      %v2450 = vadd.f32 %v2361, %v2449
      %v2451 = vpop.f32.mrf.mxu0
      %v2452 = vadd.f32 %v2363, %v2451
      %2453 = vmatmul.bf16.gmra.mxu0 %v1100
      %v2454 = vpop.f32.mrf.mxu0
      %v2455 = vadd.f32 %v2366, %v2454
      %v2456 = vpop.f32.mrf.mxu0
      %v2457 = vadd.f32 %v2368, %v2456
      %2458 = vmatmul.bf16.gmra.mxu0 %v1101
      %v2459 = vpop.f32.mrf.mxu0
      %v2460 = vadd.f32 %v2371, %v2459
      %v2461 = vpop.f32.mrf.mxu0
      %v2462 = vadd.f32 %v2373, %v2461
      %2463 = vmatmul.bf16.gmra.mxu0 %v1102
      %v2464 = vpop.f32.mrf.mxu0
      %v2465 = vadd.f32 %v2376, %v2464
      %v2466 = vpop.f32.mrf.mxu0
      %v2467 = vadd.f32 %v2378, %v2466
      %2468 = vmatmul.bf16.gmra.mxu0 %v1103
      %v2469 = vpop.f32.mrf.mxu0
      %v2470 = vadd.f32 %v2381, %v2469
      %v2471 = vpop.f32.mrf.mxu0
      %v2472 = vadd.f32 %v2383, %v2471
      %2473 = vmatmul.bf16.gmra.mxu0 %v1104
      %v2474 = vpop.f32.mrf.mxu0
      %v2475 = vadd.f32 %v2386, %v2474
      %v2476 = vpop.f32.mrf.mxu0
      %v2477 = vadd.f32 %v2388, %v2476
      %2478 = vmatmul.bf16.gmra.mxu0 %v1105
      %v2479 = vpop.f32.mrf.mxu0
      %v2480 = vadd.f32 %v2391, %v2479
      %v2481 = vpop.f32.mrf.mxu0
      %v2482 = vadd.f32 %v2393, %v2481
      %2483 = vmatmul.bf16.gmra.mxu0 %v1106
      %v2484 = vpop.f32.mrf.mxu0
      %v2485 = vadd.f32 %v2396, %v2484
      %v2486 = vpop.f32.mrf.mxu0
      %v2487 = vadd.f32 %v2398, %v2486
      %2488 = vmatmul.bf16.gmra.mxu0 %v1193
      %v2489 = vpop.f32.mrf.mxu0
      %v2490 = vadd.f32 %v2401, %v2489
      %v2491 = vpop.f32.mrf.mxu0
      %v2492 = vadd.f32 %v2403, %v2491
      %2493 = vmatmul.bf16.gmra.mxu0 %v1205
      %v2494 = vpop.f32.mrf.mxu0
      %v2495 = vadd.f32 %v2406, %v2494
      %v2496 = vpop.f32.mrf.mxu0
      %v2497 = vadd.f32 %v2408, %v2496
      %2498 = vdwg.mxu0
      %2499 = vmatpush.bf16.msra.mxu0 %v1714
      %2500 = vmatpush.bf16.msra.mxu0 %v1713
      %2501 = vmatpush.bf16.msra.mxu0 %v1712
      %2502 = vmatpush.bf16.msra.mxu0 %v1711
      %2503 = vmatpush.bf16.msra.mxu0 %v1710
      %2504 = vmatpush.bf16.msra.mxu0 %v1709
      %2505 = vmatpush.bf16.msra.mxu0 %v1708
      %2506 = vmatpush.bf16.msra.mxu0 %v1707
      %2507 = vmatmul.bf16.gmra.mxu0 %v1157
      %v2508 = vpop.f32.mrf.mxu0
      %v2509 = vadd.f32 %v2420, %v2508
      %v2510 = vpop.f32.mrf.mxu0
      %v2511 = vadd.f32 %v2422, %v2510
      %2512 = vmatmul.bf16.gmra.mxu0 %v1158
      %v2513 = vpop.f32.mrf.mxu0
      %v2514 = vadd.f32 %v2425, %v2513
      %v2515 = vpop.f32.mrf.mxu0
      %v2516 = vadd.f32 %v2427, %v2515
      %2517 = vmatmul.bf16.gmra.mxu0 %v1159
      %v2518 = vpop.f32.mrf.mxu0
      %v2519 = vadd.f32 %v2430, %v2518
      %v2520 = vpop.f32.mrf.mxu0
      %v2521 = vadd.f32 %v2432, %v2520
      %2522 = vmatmul.bf16.gmra.mxu0 %v1160
      %v2523 = vpop.f32.mrf.mxu0
      %v2524 = vadd.f32 %v2435, %v2523
      %v2525 = vpop.f32.mrf.mxu0
      %v2526 = vadd.f32 %v2437, %v2525
      %2527 = vmatmul.bf16.gmra.mxu0 %v1161
      %v2528 = vpop.f32.mrf.mxu0
      %v2529 = vadd.f32 %v2440, %v2528
      %v2530 = vpop.f32.mrf.mxu0
      %v2531 = vadd.f32 %v2442, %v2530
      %2532 = vmatmul.bf16.gmra.mxu0 %v1162
      %v2533 = vpop.f32.mrf.mxu0
      %v2534 = vadd.f32 %v2445, %v2533
      %v2535 = vpop.f32.mrf.mxu0
      %v2536 = vadd.f32 %v2447, %v2535
      %2537 = vmatmul.bf16.gmra.mxu0 %v1163
      %v2538 = vpop.f32.mrf.mxu0
      %v2539 = vadd.f32 %v2450, %v2538
      %v2540 = vpop.f32.mrf.mxu0
      %v2541 = vadd.f32 %v2452, %v2540
      %2542 = vmatmul.bf16.gmra.mxu0 %v1164
      %v2543 = vpop.f32.mrf.mxu0
      %v2544 = vadd.f32 %v2455, %v2543
      %v2545 = vpop.f32.mrf.mxu0
      %v2546 = vadd.f32 %v2457, %v2545
      %2547 = vmatmul.bf16.gmra.mxu0 %v1165
      %v2548 = vpop.f32.mrf.mxu0
      %v2549 = vadd.f32 %v2460, %v2548
      %v2550 = vpop.f32.mrf.mxu0
      %v2551 = vadd.f32 %v2462, %v2550
      %2552 = vmatmul.bf16.gmra.mxu0 %v1166
      %v2553 = vpop.f32.mrf.mxu0
      %v2554 = vadd.f32 %v2465, %v2553
      %v2555 = vpop.f32.mrf.mxu0
      %v2556 = vadd.f32 %v2467, %v2555
      %2557 = vmatmul.bf16.gmra.mxu0 %v1167
      %v2558 = vpop.f32.mrf.mxu0
      %v2559 = vadd.f32 %v2470, %v2558
      %v2560 = vpop.f32.mrf.mxu0
      %v2561 = vadd.f32 %v2472, %v2560
      %2562 = vmatmul.bf16.gmra.mxu0 %v1168
      %v2563 = vpop.f32.mrf.mxu0
      %v2564 = vadd.f32 %v2475, %v2563
      %v2565 = vpop.f32.mrf.mxu0
      %v2566 = vadd.f32 %v2477, %v2565
      %2567 = vmatmul.bf16.gmra.mxu0 %v1169
      %v2568 = vpop.f32.mrf.mxu0
      %v2569 = vadd.f32 %v2480, %v2568
      %v2570 = vpop.f32.mrf.mxu0
      %v2571 = vadd.f32 %v2482, %v2570
      %2572 = vmatmul.bf16.gmra.mxu0 %v1170
      %v2573 = vpop.f32.mrf.mxu0
      %v2574 = vadd.f32 %v2485, %v2573
      %v2575 = vpop.f32.mrf.mxu0
      %v2576 = vadd.f32 %v2487, %v2575
      %2577 = vmatmul.bf16.gmra.mxu0 %v1197
      %v2578 = vpop.f32.mrf.mxu0
      %v2579 = vadd.f32 %v2490, %v2578
      %v2580 = vpop.f32.mrf.mxu0
      %v2581 = vadd.f32 %v2492, %v2580
      %2582 = vmatmul.bf16.gmra.mxu0 %v1209
      %v2583 = vpop.f32.mrf.mxu0
      %v2584 = vadd.f32 %v2495, %v2583
      %v2585 = vpop.f32.mrf.mxu0
      %v2586 = vadd.f32 %v2497, %v2585
      %2587 = vdwg.mxu0
      %v2588 = vadd.f32 %v2509, %v2511
      %v2589 = vadd.f32 %v2588, %v2514
      %v2590 = vadd.f32 %v2589, %v2516
      %v2591 = vadd.f32 %v2590, %v2519
      %v2592 = vadd.f32 %v2591, %v2521
      %v2593 = vadd.f32 %v2592, %v2524
      %v2594 = vadd.f32 %v2593, %v2526
      %v2595 = vadd.f32 %v2594, %v2529
      %v2596 = vadd.f32 %v2595, %v2531
      %v2597 = vadd.f32 %v2596, %v2534
      %v2598 = vadd.f32 %v2597, %v2536
      %v2599 = vadd.f32 %v2598, %v2539
      %v2600 = vadd.f32 %v2599, %v2541
      %v2601 = vadd.f32 %v2600, %v2544
      %v2602 = vadd.f32 %v2601, %v2546
      %v2603 = vadd.f32 %v2602, %v2549
      %v2604 = vadd.f32 %v2603, %v2551
      %v2605 = vadd.f32 %v2604, %v2554
      %v2606 = vadd.f32 %v2605, %v2556
      %v2607 = vadd.f32 %v2606, %v2559
      %v2608 = vadd.f32 %v2607, %v2561
      %v2609 = vadd.f32 %v2608, %v2564
      %v2610 = vadd.f32 %v2609, %v2566
      %v2611 = vadd.f32 %v2610, %v2569
      %v2612 = vadd.f32 %v2611, %v2571
      %v2613 = vadd.f32 %v2612, %v2574
      %v2614 = vadd.f32 %v2613, %v2576
      %v2615 = vadd.f32 %v2614, %v2579
      %v2616 = vadd.f32 %v2615, %v2581
      %v2617 = vadd.f32 %v2616, %v2584
      %v2618 = vadd.f32 %v2617, %v2586
      %v2619 = vrot.slane %v2618, 4
      %v2620 = vadd.f32 %v2618, %v2619
      %v2621 = vrot.slane %v2620, 2
      %v2622 = vadd.f32 %v2620, %v2621
      %v2623 = vrot.slane %v2622, 1
      %v2624 = vadd.f32 %v2622, %v2623
      %2625 = vst [vmem:[%s315] sm:$0x1] %v2624
      %v2626 = vmul.f32 %v2509, %v2509
      %v2627 = vmul.f32 %v2511, %v2511
      %v2628 = vmul.f32 %v2514, %v2514
      %v2629 = vmul.f32 %v2516, %v2516
      %v2630 = vmul.f32 %v2519, %v2519
      %v2631 = vmul.f32 %v2521, %v2521
      %v2632 = vmul.f32 %v2524, %v2524
      %v2633 = vmul.f32 %v2526, %v2526
      %v2634 = vmul.f32 %v2529, %v2529
      %v2635 = vmul.f32 %v2531, %v2531
      %v2636 = vmul.f32 %v2534, %v2534
      %v2637 = vmul.f32 %v2536, %v2536
      %v2638 = vmul.f32 %v2539, %v2539
      %v2639 = vmul.f32 %v2541, %v2541
      %v2640 = vmul.f32 %v2544, %v2544
      %v2641 = vmul.f32 %v2546, %v2546
      %v2642 = vmul.f32 %v2549, %v2549
      %v2643 = vmul.f32 %v2551, %v2551
      %v2644 = vmul.f32 %v2554, %v2554
      %v2645 = vmul.f32 %v2556, %v2556
      %v2646 = vmul.f32 %v2559, %v2559
      %v2647 = vmul.f32 %v2561, %v2561
      %v2648 = vmul.f32 %v2564, %v2564
      %v2649 = vmul.f32 %v2566, %v2566
      %v2650 = vmul.f32 %v2569, %v2569
      %v2651 = vmul.f32 %v2571, %v2571
      %v2652 = vmul.f32 %v2574, %v2574
      %v2653 = vmul.f32 %v2576, %v2576
      %v2654 = vmul.f32 %v2579, %v2579
      %v2655 = vmul.f32 %v2581, %v2581
      %v2656 = vmul.f32 %v2584, %v2584
      %v2657 = vmul.f32 %v2586, %v2586
      %v2658 = vadd.f32 %v2626, %v2627
      %v2659 = vadd.f32 %v2658, %v2628
      %v2660 = vadd.f32 %v2659, %v2629
      %v2661 = vadd.f32 %v2660, %v2630
      %v2662 = vadd.f32 %v2661, %v2631
      %v2663 = vadd.f32 %v2662, %v2632
      %v2664 = vadd.f32 %v2663, %v2633
      %v2665 = vadd.f32 %v2664, %v2634
      %v2666 = vadd.f32 %v2665, %v2635
      %v2667 = vadd.f32 %v2666, %v2636
      %v2668 = vadd.f32 %v2667, %v2637
      %v2669 = vadd.f32 %v2668, %v2638
      %v2670 = vadd.f32 %v2669, %v2639
      %v2671 = vadd.f32 %v2670, %v2640
      %v2672 = vadd.f32 %v2671, %v2641
      %v2673 = vadd.f32 %v2672, %v2642
      %v2674 = vadd.f32 %v2673, %v2643
      %v2675 = vadd.f32 %v2674, %v2644
      %v2676 = vadd.f32 %v2675, %v2645
      %v2677 = vadd.f32 %v2676, %v2646
      %v2678 = vadd.f32 %v2677, %v2647
      %v2679 = vadd.f32 %v2678, %v2648
      %v2680 = vadd.f32 %v2679, %v2649
      %v2681 = vadd.f32 %v2680, %v2650
      %v2682 = vadd.f32 %v2681, %v2651
      %v2683 = vadd.f32 %v2682, %v2652
      %v2684 = vadd.f32 %v2683, %v2653
      %v2685 = vadd.f32 %v2684, %v2654
      %v2686 = vadd.f32 %v2685, %v2655
      %v2687 = vadd.f32 %v2686, %v2656
      %v2688 = vadd.f32 %v2687, %v2657
      %v2689 = vrot.slane %v2688, 4
      %v2690 = vadd.f32 %v2688, %v2689
      %v2691 = vrot.slane %v2690, 2
      %v2692 = vadd.f32 %v2690, %v2691
      %v2693 = vrot.slane %v2692, 1
      %v2694 = vadd.f32 %v2692, %v2693
      %2695 = vst [vmem:[%s321] sm:$0x1] %v2694
      %v2696 = vpack.c.bf16 %v2509, %v2509
      %v2697 = vpack.c.bf16 %v2511, %v2511
      %v2698 = vpack.c.bf16 %v2514, %v2514
      %v2699 = vpack.c.bf16 %v2516, %v2516
      %v2700 = vpack.c.bf16 %v2519, %v2519
      %v2701 = vpack.c.bf16 %v2521, %v2521
      %v2702 = vpack.c.bf16 %v2524, %v2524
      %v2703 = vpack.c.bf16 %v2526, %v2526
      %v2704 = vpack.c.bf16 %v2529, %v2529
      %v2705 = vpack.c.bf16 %v2531, %v2531
      %v2706 = vpack.c.bf16 %v2534, %v2534
      %v2707 = vpack.c.bf16 %v2536, %v2536
      %v2708 = vpack.c.bf16 %v2539, %v2539
      %v2709 = vpack.c.bf16 %v2541, %v2541
      %v2710 = vpack.c.bf16 %v2544, %v2544
      %v2711 = vpack.c.bf16 %v2546, %v2546
      %v2712 = vpack.c.bf16 %v2549, %v2549
      %v2713 = vpack.c.bf16 %v2551, %v2551
      %v2714 = vpack.c.bf16 %v2554, %v2554
      %v2715 = vpack.c.bf16 %v2556, %v2556
      %v2716 = vpack.c.bf16 %v2559, %v2559
      %v2717 = vpack.c.bf16 %v2561, %v2561
      %v2718 = vpack.c.bf16 %v2564, %v2564
      %v2719 = vpack.c.bf16 %v2566, %v2566
      %v2720 = vpack.c.bf16 %v2569, %v2569
      %v2721 = vpack.c.bf16 %v2571, %v2571
      %v2722 = vpack.c.bf16 %v2574, %v2574
      %v2723 = vpack.c.bf16 %v2576, %v2576
      %v2724 = vpack.c.bf16 %v2579, %v2579
      %v2725 = vpack.c.bf16 %v2581, %v2581
      %v2726 = vpack.c.bf16 %v2584, %v2584
      %v2727 = vpack.c.bf16 %v2586, %v2586
      %2728 = vst [vmem:[%s309] sm:$0xf] 0
      %2729 = vst [vmem:[%s309 + $0x4] sm:$0xf] 0
      %2730 = vst [vmem:[%s309 + $0x8] sm:$0x1] 0
      %2731 = vst [vmem:[%s309 + $0xc] sm:$0xf] 0
      %2732 = vst [vmem:[%s309 + $0x10] sm:$0xf] 0
      %2733 = vst [vmem:[%s309 + $0x14] sm:$0x1] 0
      %2734 = vst [vmem:[%s309 + $0x18] sm:$0xf] 0
      %2735 = vst [vmem:[%s309 + $0x1c] sm:$0xf] 0
      %2736 = vst [vmem:[%s309 + $0x20] sm:$0x1] 0
      %2737 = vst [vmem:[%s309 + $0x24] sm:$0xf] 0
      %2738 = vst [vmem:[%s309 + $0x28] sm:$0xf] 0
      %2739 = vst [vmem:[%s309 + $0x2c] sm:$0x1] 0
      %2740 = vst [vmem:[%s309 + $0x30] sm:$0xf] 0
      %2741 = vst [vmem:[%s309 + $0x34] sm:$0xf] 0
      %2742 = vst [vmem:[%s309 + $0x38] sm:$0x1] 0
      %2743 = vst [vmem:[%s309 + $0x3c] sm:$0xf] 0
      %2744 = vst [vmem:[%s309 + $0x40] sm:$0xf] 0
      %2745 = vst [vmem:[%s309 + $0x44] sm:$0x1] 0
      %2746 = vst [vmem:[%s309 + $0x48] sm:$0xf] 0
      %2747 = vst [vmem:[%s309 + $0x4c] sm:$0xf] 0
      %2748 = vst [vmem:[%s309 + $0x50] sm:$0x1] 0
      %2749 = vst [vmem:[%s309 + $0x54] sm:$0xf] 0
      %2750 = vst [vmem:[%s309 + $0x58] sm:$0xf] 0
      %2751 = vst [vmem:[%s309 + $0x5c] sm:$0x1] 0
      %2752 = vst [vmem:[%s309 + $0x60] sm:$0xf] 0
      %2753 = vst [vmem:[%s309 + $0x64] sm:$0xf] 0
      %2754 = vst [vmem:[%s309 + $0x68] sm:$0x1] 0
      %2755 = vst [vmem:[%s309 + $0x6c] sm:$0xf] 0
      %2756 = vst [vmem:[%s309 + $0x70] sm:$0xf] 0
      %2757 = vst [vmem:[%s309 + $0x74] sm:$0x1] 0
      %2758 = vst [vmem:[%s309 + $0x78] sm:$0xf] 0
      %2759 = vst [vmem:[%s309 + $0x7c] sm:$0xf] 0
      %2760 = vst [vmem:[%s309 + $0x80] sm:$0x1] 0
      %2761 = vst [vmem:[%s309 + $0x84] sm:$0xf] 0
      %2762 = vst [vmem:[%s309 + $0x88] sm:$0xf] 0
      %2763 = vst [vmem:[%s309 + $0x8c] sm:$0x1] 0
      %2764 = vst [vmem:[%s309 + $0x90] sm:$0xf] 0
      %2765 = vst [vmem:[%s309 + $0x94] sm:$0xf] 0
      %2766 = vst [vmem:[%s309 + $0x98] sm:$0x1] 0
      %2767 = vst [vmem:[%s309 + $0x9c] sm:$0xf] 0
      %2768 = vst [vmem:[%s309 + $0xa0] sm:$0xf] 0
      %2769 = vst [vmem:[%s309 + $0xa4] sm:$0x1] 0
      %2770 = vst [vmem:[%s309 + $0xa8] sm:$0xf] 0
      %2771 = vst [vmem:[%s309 + $0xac] sm:$0xf] 0
      %2772 = vst [vmem:[%s309 + $0xb0] sm:$0x1] 0
      %2773 = vst [vmem:[%s309 + $0xb4] sm:$0xf] 0
      %2774 = vst [vmem:[%s309 + $0xb8] sm:$0xf] 0
      %2775 = vst [vmem:[%s309 + $0xbc] sm:$0x1] 0
      %2776 = vst [vmem:[%s309 + $0xc0] sm:$0xf] 0
      %2777 = vst [vmem:[%s309 + $0xc4] sm:$0xf] 0
      %2778 = vst [vmem:[%s309 + $0xc8] sm:$0x1] 0
      %2779 = vst [vmem:[%s309 + $0xcc] sm:$0xf] 0
      %2780 = vst [vmem:[%s309 + $0xd0] sm:$0xf] 0
      %2781 = vst [vmem:[%s309 + $0xd4] sm:$0x1] 0
      %vm2782 = vsmask.f32 256
      %vm2783 = vsmask.f32 4368
      %vm2784 = vmor %vm2782, %vm2783
      %v2786 = vshrl.u32 %v2696, 16
      %v2788 = vrot.slane %v2786, 7
      %v2789 = vshll.u32 %v2696, 16
      %v2791 = vor.u32 %v2788, %v2789
      %v2792 = vrot.slane %v2788, 4
      %v2794 = vshrl.u32 %v2697, 16
      %v2796 = vrot.slane %v2794, 7
      %v2797 = vshll.u32 %v2697, 16
      %v2799 = vor.u32 %v2796, %v2797
      %v2800 = vsel %vm2784, %v2792, %v2799
      %v2801 = vrot.slane %v2796, 4
      %v2803 = vshrl.u32 %v2698, 16
      %v2805 = vrot.slane %v2803, 7
      %v2806 = vshll.u32 %v2698, 16
      %v2808 = vor.u32 %v2805, %v2806
      %v2809 = vrot.slane %v2805, 4
      %v2811 = vshrl.u32 %v2699, 16
      %v2813 = vrot.slane %v2811, 7
      %v2814 = vshll.u32 %v2699, 16
      %v2816 = vor.u32 %v2813, %v2814
      %v2817 = vsel %vm2784, %v2809, %v2816
      %v2818 = vrot.slane %v2813, 4
      %v2820 = vshrl.u32 %v2700, 16
      %v2822 = vrot.slane %v2820, 7
      %v2823 = vshll.u32 %v2700, 16
      %v2825 = vor.u32 %v2822, %v2823
      %v2826 = vrot.slane %v2822, 4
      %v2828 = vshrl.u32 %v2701, 16
      %v2830 = vrot.slane %v2828, 7
      %v2831 = vshll.u32 %v2701, 16
      %v2833 = vor.u32 %v2830, %v2831
      %v2834 = vsel %vm2784, %v2826, %v2833
      %v2835 = vrot.slane %v2830, 4
      %v2837 = vshrl.u32 %v2702, 16
      %v2839 = vrot.slane %v2837, 7
      %v2840 = vshll.u32 %v2702, 16
      %v2842 = vor.u32 %v2839, %v2840
      %v2843 = vrot.slane %v2839, 4
      %v2845 = vshrl.u32 %v2703, 16
      %v2847 = vrot.slane %v2845, 7
      %v2848 = vshll.u32 %v2703, 16
      %v2850 = vor.u32 %v2847, %v2848
      %v2851 = vsel %vm2784, %v2843, %v2850
      %v2852 = vrot.slane %v2847, 4
      %v2854 = vshrl.u32 %v2704, 16
      %v2856 = vrot.slane %v2854, 7
      %v2857 = vshll.u32 %v2704, 16
      %v2859 = vor.u32 %v2856, %v2857
      %v2860 = vrot.slane %v2856, 4
      %v2862 = vshrl.u32 %v2705, 16
      %v2864 = vrot.slane %v2862, 7
      %v2865 = vshll.u32 %v2705, 16
      %v2867 = vor.u32 %v2864, %v2865
      %v2868 = vsel %vm2784, %v2860, %v2867
      %v2869 = vrot.slane %v2864, 4
      %v2871 = vshrl.u32 %v2706, 16
      %v2873 = vrot.slane %v2871, 7
      %v2874 = vshll.u32 %v2706, 16
      %v2876 = vor.u32 %v2873, %v2874
      %v2877 = vrot.slane %v2873, 4
      %v2879 = vshrl.u32 %v2707, 16
      %v2881 = vrot.slane %v2879, 7
      %v2882 = vshll.u32 %v2707, 16
      %v2884 = vor.u32 %v2881, %v2882
      %v2885 = vsel %vm2784, %v2877, %v2884
      %v2886 = vrot.slane %v2881, 4
      %v2888 = vshrl.u32 %v2708, 16
      %v2890 = vrot.slane %v2888, 7
      %v2891 = vshll.u32 %v2708, 16
      %v2893 = vor.u32 %v2890, %v2891
      %v2894 = vrot.slane %v2890, 4
      %v2896 = vshrl.u32 %v2709, 16
      %v2898 = vrot.slane %v2896, 7
      %v2899 = vshll.u32 %v2709, 16
      %v2901 = vor.u32 %v2898, %v2899
      %v2902 = vsel %vm2784, %v2894, %v2901
      %v2903 = vrot.slane %v2898, 4
      %v2905 = vshrl.u32 %v2710, 16
      %v2907 = vrot.slane %v2905, 7
      %v2908 = vshll.u32 %v2710, 16
      %v2910 = vor.u32 %v2907, %v2908
      %v2911 = vrot.slane %v2907, 4
      %v2913 = vshrl.u32 %v2711, 16
      %v2915 = vrot.slane %v2913, 7
      %v2916 = vshll.u32 %v2711, 16
      %v2918 = vor.u32 %v2915, %v2916
      %v2919 = vsel %vm2784, %v2911, %v2918
      %v2920 = vrot.slane %v2915, 4
      %v2922 = vshrl.u32 %v2712, 16
      %v2924 = vrot.slane %v2922, 7
      %v2925 = vshll.u32 %v2712, 16
      %v2927 = vor.u32 %v2924, %v2925
      %v2928 = vrot.slane %v2924, 4
      %v2930 = vshrl.u32 %v2713, 16
      %v2932 = vrot.slane %v2930, 7
      %v2933 = vshll.u32 %v2713, 16
      %v2935 = vor.u32 %v2932, %v2933
      %v2936 = vsel %vm2784, %v2928, %v2935
      %v2937 = vrot.slane %v2932, 4
      %v2939 = vshrl.u32 %v2714, 16
      %v2941 = vrot.slane %v2939, 7
      %v2942 = vshll.u32 %v2714, 16
      %v2944 = vor.u32 %v2941, %v2942
      %v2945 = vrot.slane %v2941, 4
      %v2947 = vshrl.u32 %v2715, 16
      %v2949 = vrot.slane %v2947, 7
      %v2950 = vshll.u32 %v2715, 16
      %v2952 = vor.u32 %v2949, %v2950
      %v2953 = vsel %vm2784, %v2945, %v2952
      %v2954 = vrot.slane %v2949, 4
      %v2956 = vshrl.u32 %v2716, 16
      %v2958 = vrot.slane %v2956, 7
      %v2959 = vshll.u32 %v2716, 16
      %v2961 = vor.u32 %v2958, %v2959
      %v2962 = vrot.slane %v2958, 4
      %v2964 = vshrl.u32 %v2717, 16
      %v2966 = vrot.slane %v2964, 7
      %v2967 = vshll.u32 %v2717, 16
      %v2969 = vor.u32 %v2966, %v2967
      %v2970 = vsel %vm2784, %v2962, %v2969
      %v2971 = vrot.slane %v2966, 4
      %v2973 = vshrl.u32 %v2718, 16
      %v2975 = vrot.slane %v2973, 7
      %v2976 = vshll.u32 %v2718, 16
      %v2978 = vor.u32 %v2975, %v2976
      %v2979 = vrot.slane %v2975, 4
      %v2981 = vshrl.u32 %v2719, 16
      %v2983 = vrot.slane %v2981, 7
      %v2984 = vshll.u32 %v2719, 16
      %v2986 = vor.u32 %v2983, %v2984
      %v2987 = vsel %vm2784, %v2979, %v2986
      %v2988 = vrot.slane %v2983, 4
      %v2990 = vshrl.u32 %v2720, 16
      %v2992 = vrot.slane %v2990, 7
      %v2993 = vshll.u32 %v2720, 16
      %v2995 = vor.u32 %v2992, %v2993
      %v2996 = vrot.slane %v2992, 4
      %v2998 = vshrl.u32 %v2721, 16
      %v3000 = vrot.slane %v2998, 7
      %v3001 = vshll.u32 %v2721, 16
      %v3003 = vor.u32 %v3000, %v3001
      %v3004 = vsel %vm2784, %v2996, %v3003
      %v3005 = vrot.slane %v3000, 4
      %v3007 = vshrl.u32 %v2722, 16
      %v3009 = vrot.slane %v3007, 7
      %v3010 = vshll.u32 %v2722, 16
      %v3012 = vor.u32 %v3009, %v3010
      %v3013 = vrot.slane %v3009, 4
      %v3015 = vshrl.u32 %v2723, 16
      %v3017 = vrot.slane %v3015, 7
      %v3018 = vshll.u32 %v2723, 16
      %v3020 = vor.u32 %v3017, %v3018
      %v3021 = vsel %vm2784, %v3013, %v3020
      %v3022 = vrot.slane %v3017, 4
      %v3024 = vshrl.u32 %v2724, 16
      %v3026 = vrot.slane %v3024, 7
      %v3027 = vshll.u32 %v2724, 16
      %v3029 = vor.u32 %v3026, %v3027
      %v3030 = vrot.slane %v3026, 4
      %v3032 = vshrl.u32 %v2725, 16
      %v3034 = vrot.slane %v3032, 7
      %v3035 = vshll.u32 %v2725, 16
      %v3037 = vor.u32 %v3034, %v3035
      %v3038 = vsel %vm2784, %v3030, %v3037
      %v3039 = vrot.slane %v3034, 4
      %v3041 = vshrl.u32 %v2726, 16
      %v3043 = vrot.slane %v3041, 7
      %v3044 = vshll.u32 %v2726, 16
      %v3046 = vor.u32 %v3043, %v3044
      %v3047 = vrot.slane %v3043, 4
      %v3049 = vshrl.u32 %v2727, 16
      %v3051 = vrot.slane %v3049, 7
      %v3052 = vshll.u32 %v2727, 16
      %v3054 = vor.u32 %v3051, %v3052
      %v3055 = vsel %vm2784, %v3047, %v3054
      %v3056 = vrot.slane %v3051, 4
      %s3105 = scalar_lea.vmem %s309, 12
      %vm3106 = vcmask 1043456
      %vm3107 = vsmask.f32 7938
      %vm3108 = vmand %vm3106, %vm3107
      %v3109 = vld [vmem:[%s3105] sm:$0xf]
      %v3110 = vsel %vm3108, %v2791, %v3109
      %3111 = vst [vmem:[%s3105] sm:$0xf] %v3110
      %3112 = vst [vmem:[%s3105 + $0x4] sm:$0xf] %v2800
      %vm3113 = vcmask 1040384
      %vm3114 = vmand %vm3113, %vm2782
      %v3115 = vld [vmem:[%s3105 + $0x8] sm:$0x1]
      %v3116 = vsel %vm3114, %v2801, %v3115
      %3117 = vst [vmem:[%s3105 + $0x8] sm:$0x1] %v3116
      %v3118 = vld [vmem:[%s3105 + $0xc] sm:$0xf]
      %v3119 = vsel %vm3108, %v2808, %v3118
      %3120 = vst [vmem:[%s3105 + $0xc] sm:$0xf] %v3119
      %3121 = vst [vmem:[%s3105 + $0x10] sm:$0xf] %v2817
      %v3122 = vld [vmem:[%s3105 + $0x14] sm:$0x1]
      %v3123 = vsel %vm3114, %v2818, %v3122
      %3124 = vst [vmem:[%s3105 + $0x14] sm:$0x1] %v3123
      %v3125 = vld [vmem:[%s3105 + $0x18] sm:$0xf]
      %v3126 = vsel %vm3108, %v2825, %v3125
      %3127 = vst [vmem:[%s3105 + $0x18] sm:$0xf] %v3126
      %3128 = vst [vmem:[%s3105 + $0x1c] sm:$0xf] %v2834
      %v3129 = vld [vmem:[%s3105 + $0x20] sm:$0x1]
      %v3130 = vsel %vm3114, %v2835, %v3129
      %3131 = vst [vmem:[%s3105 + $0x20] sm:$0x1] %v3130
      %v3132 = vld [vmem:[%s3105 + $0x24] sm:$0xf]
      %v3133 = vsel %vm3108, %v2842, %v3132
      %3134 = vst [vmem:[%s3105 + $0x24] sm:$0xf] %v3133
      %3135 = vst [vmem:[%s3105 + $0x28] sm:$0xf] %v2851
      %v3136 = vld [vmem:[%s3105 + $0x2c] sm:$0x1]
      %v3137 = vsel %vm3114, %v2852, %v3136
      %3138 = vst [vmem:[%s3105 + $0x2c] sm:$0x1] %v3137
      %v3139 = vld [vmem:[%s3105 + $0x30] sm:$0xf]
      %v3140 = vsel %vm3108, %v2859, %v3139
      %3141 = vst [vmem:[%s3105 + $0x30] sm:$0xf] %v3140
      %3142 = vst [vmem:[%s3105 + $0x34] sm:$0xf] %v2868
      %v3143 = vld [vmem:[%s3105 + $0x38] sm:$0x1]
      %v3144 = vsel %vm3114, %v2869, %v3143
      %3145 = vst [vmem:[%s3105 + $0x38] sm:$0x1] %v3144
      %v3146 = vld [vmem:[%s3105 + $0x3c] sm:$0xf]
      %v3147 = vsel %vm3108, %v2876, %v3146
      %3148 = vst [vmem:[%s3105 + $0x3c] sm:$0xf] %v3147
      %3149 = vst [vmem:[%s3105 + $0x40] sm:$0xf] %v2885
      %v3150 = vld [vmem:[%s3105 + $0x44] sm:$0x1]
      %v3151 = vsel %vm3114, %v2886, %v3150
      %3152 = vst [vmem:[%s3105 + $0x44] sm:$0x1] %v3151
      %v3153 = vld [vmem:[%s3105 + $0x48] sm:$0xf]
      %v3154 = vsel %vm3108, %v2893, %v3153
      %3155 = vst [vmem:[%s3105 + $0x48] sm:$0xf] %v3154
      %3156 = vst [vmem:[%s3105 + $0x4c] sm:$0xf] %v2902
      %v3157 = vld [vmem:[%s3105 + $0x50] sm:$0x1]
      %v3158 = vsel %vm3114, %v2903, %v3157
      %3159 = vst [vmem:[%s3105 + $0x50] sm:$0x1] %v3158
      %v3160 = vld [vmem:[%s3105 + $0x54] sm:$0xf]
      %v3161 = vsel %vm3108, %v2910, %v3160
      %3162 = vst [vmem:[%s3105 + $0x54] sm:$0xf] %v3161
      %3163 = vst [vmem:[%s3105 + $0x58] sm:$0xf] %v2919
      %v3164 = vld [vmem:[%s3105 + $0x5c] sm:$0x1]
      %v3165 = vsel %vm3114, %v2920, %v3164
      %3166 = vst [vmem:[%s3105 + $0x5c] sm:$0x1] %v3165
      %v3167 = vld [vmem:[%s3105 + $0x60] sm:$0xf]
      %v3168 = vsel %vm3108, %v2927, %v3167
      %3169 = vst [vmem:[%s3105 + $0x60] sm:$0xf] %v3168
      %3170 = vst [vmem:[%s3105 + $0x64] sm:$0xf] %v2936
      %v3171 = vld [vmem:[%s3105 + $0x68] sm:$0x1]
      %v3172 = vsel %vm3114, %v2937, %v3171
      %3173 = vst [vmem:[%s3105 + $0x68] sm:$0x1] %v3172
      %v3174 = vld [vmem:[%s3105 + $0x6c] sm:$0xf]
      %v3175 = vsel %vm3108, %v2944, %v3174
      %3176 = vst [vmem:[%s3105 + $0x6c] sm:$0xf] %v3175
      %3177 = vst [vmem:[%s3105 + $0x70] sm:$0xf] %v2953
      %v3178 = vld [vmem:[%s3105 + $0x74] sm:$0x1]
      %v3179 = vsel %vm3114, %v2954, %v3178
      %3180 = vst [vmem:[%s3105 + $0x74] sm:$0x1] %v3179
      %v3181 = vld [vmem:[%s3105 + $0x78] sm:$0xf]
      %v3182 = vsel %vm3108, %v2961, %v3181
      %3183 = vst [vmem:[%s3105 + $0x78] sm:$0xf] %v3182
      %3184 = vst [vmem:[%s3105 + $0x7c] sm:$0xf] %v2970
      %v3185 = vld [vmem:[%s3105 + $0x80] sm:$0x1]
      %v3186 = vsel %vm3114, %v2971, %v3185
      %3187 = vst [vmem:[%s3105 + $0x80] sm:$0x1] %v3186
      %v3188 = vld [vmem:[%s3105 + $0x84] sm:$0xf]
      %v3189 = vsel %vm3108, %v2978, %v3188
      %3190 = vst [vmem:[%s3105 + $0x84] sm:$0xf] %v3189
      %3191 = vst [vmem:[%s3105 + $0x88] sm:$0xf] %v2987
      %v3192 = vld [vmem:[%s3105 + $0x8c] sm:$0x1]
      %v3193 = vsel %vm3114, %v2988, %v3192
      %3194 = vst [vmem:[%s3105 + $0x8c] sm:$0x1] %v3193
      %v3195 = vld [vmem:[%s3105 + $0x90] sm:$0xf]
      %v3196 = vsel %vm3108, %v2995, %v3195
      %3197 = vst [vmem:[%s3105 + $0x90] sm:$0xf] %v3196
      %3198 = vst [vmem:[%s3105 + $0x94] sm:$0xf] %v3004
      %v3199 = vld [vmem:[%s3105 + $0x98] sm:$0x1]
      %v3200 = vsel %vm3114, %v3005, %v3199
      %3201 = vst [vmem:[%s3105 + $0x98] sm:$0x1] %v3200
      %v3202 = vld [vmem:[%s3105 + $0x9c] sm:$0xf]
      %v3203 = vsel %vm3108, %v3012, %v3202
      %3204 = vst [vmem:[%s3105 + $0x9c] sm:$0xf] %v3203
      %3205 = vst [vmem:[%s3105 + $0xa0] sm:$0xf] %v3021
      %v3206 = vld [vmem:[%s3105 + $0xa4] sm:$0x1]
      %v3207 = vsel %vm3114, %v3022, %v3206
      %3208 = vst [vmem:[%s3105 + $0xa4] sm:$0x1] %v3207
      %v3209 = vld [vmem:[%s3105 + $0xa8] sm:$0xf]
      %v3210 = vsel %vm3108, %v3029, %v3209
      %3211 = vst [vmem:[%s3105 + $0xa8] sm:$0xf] %v3210
      %3212 = vst [vmem:[%s3105 + $0xac] sm:$0xf] %v3038
      %v3213 = vld [vmem:[%s3105 + $0xb0] sm:$0x1]
      %v3214 = vsel %vm3114, %v3039, %v3213
      %3215 = vst [vmem:[%s3105 + $0xb0] sm:$0x1] %v3214
      %v3216 = vld [vmem:[%s3105 + $0xb4] sm:$0xf]
      %v3217 = vsel %vm3108, %v3046, %v3216
      %3218 = vst [vmem:[%s3105 + $0xb4] sm:$0xf] %v3217
      %3219 = vst [vmem:[%s3105 + $0xb8] sm:$0xf] %v3055
      %v3220 = vld [vmem:[%s3105 + $0xbc] sm:$0x1]
      %v3221 = vsel %vm3114, %v3056, %v3220
      %3222 = vst [vmem:[%s3105 + $0xbc] sm:$0x1] %v3221
      %p3223 = scmp.lt.s32.totalorder %s22, 1
      %s3224 = scalar_select %p3223, %s22, 1
      %p3225 = scmp.lt.s32.totalorder %s23, 0
      %s3226 = scalar_select %p3225, %s23, 0
      %s3227 = smul.addr %s3224, 54
      %s3228 = sadd.s32 %s3226, %s3227
      %s3229 = smul.addr %s3228, 4
      %s3230 = scalar_lea.vmem %s4, %s3229
      %p3231 = scmp.lt.s32.totalorder %s22, 1
      %s3232 = scalar_select %p3231, %s22, 1
      %p3233 = scmp.lt.s32.totalorder %s23, 0
      %s3234 = scalar_select %p3233, %s23, 0
      %s3235 = sadd.s32 %s3234, %s3232
      %s3236 = scalar_lea.vmem %s5, %s3235
      %p3237 = scmp.lt.s32.totalorder %s22, 1
      %s3238 = scalar_select %p3237, %s22, 1
      %p3239 = scmp.lt.s32.totalorder %s23, 0
      %s3240 = scalar_select %p3239, %s23, 0
      %s3241 = sadd.s32 %s3240, %s3238
      %s3242 = scalar_lea.vmem %s6, %s3241
      // Predicated region
      $region37: #{_lambda_.3} parent=35 // pred_check
        %p3243 = pneg %p144
      $region38: #{_lambda_.3} parent=35 // pred_check_branch
        %3245 = sbr.rel (%p3243) target = $region40
      $region39: #{_lambda_.3} parent=35 // pred_region
        _
      $region40: #{_lambda_.3} parent=35 // pred_fallthru
        _
      // Predicated region
      $region41: #{_lambda_.3} parent=35 // pred_check
        %p3246 = pneg %p172
      $region42: #{_lambda_.3} parent=35 // pred_check_branch
        %3248 = sbr.rel (%p3246) target = $region44
      $region43: #{_lambda_.3} parent=35 // pred_region
        _
      $region44: #{_lambda_.3} parent=35 // pred_fallthru
        _
      // Predicated region
      $region45: #{_lambda_.3} parent=35 // pred_check
        %p3249 = pneg %p200
      $region46: #{_lambda_.3} parent=35 // pred_check_branch
        %3251 = sbr.rel (%p3249) target = $region48
      $region47: #{_lambda_.3} parent=35 // pred_region
        _
      $region48: #{_lambda_.3} parent=35 // pred_fallthru
        _
    $region36: #{_lambda_.3} parent=5 // pred_fallthru
      _
    %p3252 = scmp.le.s32.totalorder 2, %s13
    // Predicated region
    $region49: #{_lambda_.3} parent=5 // pred_check
      %p3253 = pneg %p3252
    $region50: #{_lambda_.3} parent=5 // pred_check_branch
      %3255 = sbr.rel (%p3253) target = $region52
    $region51: #{_lambda_.3} parent=5 // pred_region
      %s3256 = ssub.s32 %s13, 2
      // Predicated region
      $region53: #{_lambda_.3} parent=51 // pred_check
        %p3257 = pneg %p150
      $region54: #{_lambda_.3} parent=51 // pred_check_branch
        %3259 = sbr.rel (%p3257) target = $region56
      $region55: #{_lambda_.3} parent=51 // pred_region
        %p3260 = scmp.lt.s32.totalorder %s24, 1
        %s3261 = scalar_select %p3260, %s24, 1
        %p3262 = scmp.lt.s32.totalorder %s25, 0
        %s3263 = scalar_select %p3262, %s25, 0
        %s3264 = smul.addr %s3261, 54
        %s3265 = sadd.s32 %s3263, %s3264
        %s3266 = smul.addr %s3265, 4
        %s3267 = scalar_lea.vmem %s4, %s3266
      $region56: #{_lambda_.3} parent=51 // pred_fallthru
        _
      // Predicated region
      $region57: #{_lambda_.3} parent=51 // pred_check
        %p3268 = pneg %p178
      $region58: #{_lambda_.3} parent=51 // pred_check_branch
        %3270 = sbr.rel (%p3268) target = $region60
      $region59: #{_lambda_.3} parent=51 // pred_region
        %p3271 = scmp.lt.s32.totalorder %s24, 1
        %s3272 = scalar_select %p3271, %s24, 1
        %p3273 = scmp.lt.s32.totalorder %s25, 0
        %s3274 = scalar_select %p3273, %s25, 0
        %s3275 = sadd.s32 %s3274, %s3272
        %s3276 = scalar_lea.vmem %s5, %s3275
      $region60: #{_lambda_.3} parent=51 // pred_fallthru
        _
      // Predicated region
      $region61: #{_lambda_.3} parent=51 // pred_check
        %p3277 = pneg %p206
      $region62: #{_lambda_.3} parent=51 // pred_check_branch
        %3279 = sbr.rel (%p3277) target = $region64
      $region63: #{_lambda_.3} parent=51 // pred_region
        %p3280 = scmp.lt.s32.totalorder %s24, 1
        %s3281 = scalar_select %p3280, %s24, 1
        %p3282 = scmp.lt.s32.totalorder %s25, 0
        %s3283 = scalar_select %p3282, %s25, 0
        %s3284 = sadd.s32 %s3283, %s3281
        %s3285 = scalar_lea.vmem %s6, %s3284
      $region64: #{_lambda_.3} parent=51 // pred_fallthru
        _
    $region52: #{_lambda_.3} parent=5 // pred_fallthru
      _
  $region6: #{_lambda_.3} parent=0 // loop_footer
    %s17 = sadd.s32 1, %s13
  $region7: #{_lambda_.3} parent=0 // loop_footer_branch
    %12 = sbr.rel target = $region3
  $region8: #{_lambda_.3} parent=0 // loop_exit
    _

</llo_original>
